<compile_context>
chip_gen: v7x
topology: tpu7x:2x2x1
jax: 0.10.0
libtpu: 0.0.40
codegen_flags: <defaults>
</compile_context>

<pallas_src>
import math
from functools import partial

import jax
import jax.numpy as jnp
from jax.experimental import pallas as pl
from jax.experimental.pallas import tpu as pltpu


# ----------------------------- shared math helpers (used in-kernel and in the reference) ---

def _layer_norm(v, g, b, eps=1e-5):
    mu = jnp.mean(v, axis=-1, keepdims=True)
    vc = v - mu
    var = jnp.mean(vc * vc, axis=-1, keepdims=True)
    return vc * jax.lax.rsqrt(var + eps) * g + b


def _gelu(v):
    # TODO(synk): PyTorch F.gelu defaults to the exact erf form; tanh approximation used here
    # (EUP-friendly) and in the in-script reference, so both sides match.
    c = 0.7978845608028654  # sqrt(2/pi)
    return 0.5 * v * (1.0 + jnp.tanh(c * (v + 0.044715 * v * v * v)))


def _sigmoid(v):
    return 1.0 / (1.0 + jnp.exp(-v))


# ----------------------------- the fused Pallas kernel -------------------------------------

def _make_kernel(T, H, nh, L, Hg):
    hd = H // nh
    sm_scale = 1.0 / math.sqrt(hd)
    attn_scale = 1.0 / math.sqrt(H)

    def kernel(x_ref, w_in_ref, pos_ref,
               w_qkv_ref, b_qkv_ref, w_o_ref, b_o_ref, ln1_g_ref, ln1_b_ref,
               w_ff1_ref, b_ff1_ref, w_ff2_ref, b_ff2_ref, ln2_g_ref, ln2_b_ref,
               wc1_ref, bc1_ref, wc2_ref, bc2_ref,
               w_ih_ref, w_hh_ref, b_ih_ref, b_hh_ref,
               wa_enc_ref, wa_trend_ref, wa_vol_ref, b_agg_ref, lnf_g_ref, lnf_b_ref,
               final_ref, attn_ref):
        f32 = jnp.float32
        x = x_ref[0]                                                        # (T, D)

        # --- input projection; positional encoding + linear bias pre-folded into pos_ref ---
        h = jnp.dot(x, w_in_ref[...], preferred_element_type=f32) + pos_ref[...]   # (T, H)

        # --- transformer encoder stack (post-LN, eval mode) ---
        for l in range(L):
            qkv = jnp.dot(h, w_qkv_ref[l], preferred_element_type=f32) + b_qkv_ref[l]  # (T, 3H)
            # head-major (nh, T, hd) via static lane slices stacked on a new leading axis
            q3 = jnp.stack([qkv[:, i * hd:(i + 1) * hd] for i in range(nh)], axis=0)
            k3 = jnp.stack([qkv[:, H + i * hd:H + (i + 1) * hd] for i in range(nh)], axis=0)
            v3 = jnp.stack([qkv[:, 2 * H + i * hd:2 * H + (i + 1) * hd] for i in range(nh)], axis=0)
            s = jnp.einsum('hqd,hkd->hqk', q3, k3, preferred_element_type=f32) * sm_scale
            s = s - jnp.max(s, axis=-1, keepdims=True)        # softmax over the lane axis
            p = jnp.exp(s)
            att = p / jnp.sum(p, axis=-1, keepdims=True)      # (nh, T, T)
            ctx3 = jnp.einsum('hqk,hkd->hqd', att, v3, preferred_element_type=f32)
            ctx = jnp.concatenate([ctx3[i] for i in range(nh)], axis=1)     # (T, H)
            sa = jnp.dot(ctx, w_o_ref[l], preferred_element_type=f32) + b_o_ref[l]
            h = _layer_norm(h + sa, ln1_g_ref[l], ln1_b_ref[l])
            ff = _gelu(jnp.dot(h, w_ff1_ref[l], preferred_element_type=f32) + b_ff1_ref[l])
            ff = jnp.dot(ff, w_ff2_ref[l], preferred_element_type=f32) + b_ff2_ref[l]
            h = _layer_norm(h + ff, ln2_g_ref[l], ln2_b_ref[l])

        enc = h                                                             # (T, H)

        # --- volatility extractor: both Conv1d layers as single im2col matmuls ---
        z2 = jnp.zeros((2, H), f32)
        enc_pad = jnp.concatenate([z2, enc, z2], axis=0)                    # (T+4, H)
        xcol = jnp.concatenate([enc_pad[t:t + T, :] for t in range(5)], axis=1)   # (T, 5H)
        y1 = jnp.maximum(
            jnp.dot(xcol, wc1_ref[...], preferred_element_type=f32) + bc1_ref[...], 0.0)   # (T, Hg)
        z1 = jnp.zeros((1, Hg), f32)
        y1_pad = jnp.concatenate([z1, y1, z1], axis=0)                      # (T+2, Hg)
        ycol = jnp.concatenate([y1_pad[t:t + T, :] for t in range(3)], axis=1)    # (T, 3*Hg)
        y2 = jnp.maximum(
            jnp.dot(ycol, wc2_ref[...], preferred_element_type=f32) + bc2_ref[...], 0.0)   # (T, H//4)
        vol_mean = jnp.mean(y2, axis=-1, keepdims=True)                     # (T, 1)

        # --- trend extractor: 2-layer bidirectional GRU, recurrence unrolled (T small/static) ---
        def gru_dir(seq, idx, reverse):
            gi = jnp.dot(seq, w_ih_ref[idx], preferred_element_type=f32) + b_ih_ref[idx]  # (T, 3Hg)
            w_hh = w_hh_ref[idx]
            b_hh = b_hh_ref[idx]
            hcur = jnp.zeros((1, Hg), f32)
            hs = [None] * T
            order = range(T - 1, -1, -1) if reverse else range(T)
            for t in order:
                gh = jnp.dot(hcur, w_hh, preferred_element_type=f32) + b_hh  # (1, 3Hg)
                gi_t = gi[t:t + 1, :]
                r = _sigmoid(gi_t[:, :Hg] + gh[:, :Hg])
                zz = _sigmoid(gi_t[:, Hg:2 * Hg] + gh[:, Hg:2 * Hg])
                n = jnp.tanh(gi_t[:, 2 * Hg:] + r * gh[:, 2 * Hg:])
                hcur = (1.0 - zz) * n + zz * hcur
                hs[t] = hcur
            return jnp.concatenate(hs, axis=0)                              # (T, Hg)

        l0 = jnp.concatenate([gru_dir(enc, 0, False), gru_dir(enc, 1, True)], axis=1)     # (T, H)
        trend = jnp.concatenate([gru_dir(l0, 2, False), gru_dir(l0, 3, True)], axis=1)    # (T, H)

        # --- feature aggregator: concat([enc, vol_bcast, trend]) @ W folded into
        #     two matmuls + a rank-1 term for the broadcast volatility mean ---
        lin = (jnp.dot(enc, wa_enc_ref[...], preferred_element_type=f32)
               + jnp.dot(trend, wa_trend_ref[...], preferred_element_type=f32)
               + vol_mean * wa_vol_ref[...]
               + b_agg_ref[...])
        final_ref[0] = _gelu(_layer_norm(lin, lnf_g_ref[...], lnf_b_ref[...])).astype(final_ref.dtype)

        # --- interpretability attention weights over the encoded sequence ---
        sc = jnp.einsum('td,sd->ts', enc, enc, preferred_element_type=f32) * attn_scale
        sc = sc - jnp.max(sc, axis=-1, keepdims=True)
        pe = jnp.exp(sc)
        attn_ref[0] = (pe / jnp.sum(pe, axis=-1, keepdims=True)).astype(attn_ref.dtype)

    return kernel


# ----------------------------- wrapper: param re-layout + pallas_call ----------------------

@partial(jax.jit, static_argnames=("num_heads",))
def market_dynamics_encoder_forward(x, p, num_heads):
    B, T, D = x.shape
    H = p['w_in'].shape[0]
    L = p['in_proj_w'].shape[0]
    Hg = H // 2

    # --- fold / transpose parameters into kernel-friendly layouts (one-time wrapper glue) ---
    w_in_t = p['w_in'].T                                           # (D, H)
    pos_bias = p['pos'] + p['b_in'][None, :]                       # (T, H): pos-enc + proj bias
    w_qkv = jnp.transpose(p['in_proj_w'], (0, 2, 1))               # (L, H, 3H)
    b_qkv = p['in_proj_b'][:, None, :]
    w_o = jnp.transpose(p['out_proj_w'], (0, 2, 1))                # (L, H, H)
    b_o = p['out_proj_b'][:, None, :]
    ln1_g = p['ln1_g'][:, None, :]
    ln1_b = p['ln1_b'][:, None, :]
    w_ff1 = jnp.transpose(p['ff_w1'], (0, 2, 1))                   # (L, H, 4H)
    b_ff1 = p['ff_b1'][:, None, :]
    w_ff2 = jnp.transpose(p['ff_w2'], (0, 2, 1))                   # (L, 4H, H)
    b_ff2 = p['ff_b2'][:, None, :]
    ln2_g = p['ln2_g'][:, None, :]
    ln2_b = p['ln2_b'][:, None, :]
    wc1 = jnp.transpose(p['conv1_w'], (2, 1, 0)).reshape(5 * H, Hg)          # im2col layout
    bc1 = p['conv1_b'][None, :]
    wc2 = jnp.transpose(p['conv2_w'], (2, 1, 0)).reshape(3 * Hg, H // 4)
    bc2 = p['conv2_b'][None, :]
    w_ih = jnp.transpose(p['gru_w_ih'], (0, 2, 1))                 # (4, H, 3Hg)
    w_hh = jnp.transpose(p['gru_w_hh'], (0, 2, 1))                 # (4, Hg, 3Hg)
    b_ih = p['gru_b_ih'][:, None, :]
    b_hh = p['gru_b_hh'][:, None, :]
    wa_enc = p['agg_w'][:, :H].T                                   # (H, H)
    wa_vol = p['agg_w'][:, H:H + H // 4].sum(axis=1)[None, :]      # (1, H) rank-1 fold
    wa_trend = p['agg_w'][:, H + H // 4:].T                        # (H, H)
    b_agg = p['agg_b'][None, :]
    lnf_g = p['lnf_g'][None, :]
    lnf_b = p['lnf_b'][None, :]

    args = [x, w_in_t, pos_bias,
            w_qkv, b_qkv, w_o, b_o, ln1_g, ln1_b,
            w_ff1, b_ff1, w_ff2, b_ff2, ln2_g, ln2_b,
            wc1, bc1, wc2, bc2,
            w_ih, w_hh, b_ih, b_hh,
            wa_enc, wa_trend, wa_vol, b_agg, lnf_g, lnf_b]

    def full_spec(a):
        nd = a.ndim
        return pl.BlockSpec(a.shape, lambda b, nd=nd: (0,) * nd)

    in_specs = ([pl.BlockSpec((1, T, D), lambda b: (b, 0, 0))]
                + [full_spec(a) for a in args[1:]])
    out_specs = (pl.BlockSpec((1, T, H), lambda b: (b, 0, 0)),
                 pl.BlockSpec((1, T, T), lambda b: (b, 0, 0)))
    out_shape = (jax.ShapeDtypeStruct((B, T, H), jnp.float32),
                 jax.ShapeDtypeStruct((B, T, T), jnp.float32))

    kernel = _make_kernel(T=T, H=H, nh=num_heads, L=L, Hg=Hg)
    return pl.pallas_call(
        kernel,
        out_shape=out_shape,
        grid=(B,),
        in_specs=in_specs,
        out_specs=out_specs,
        compiler_params=pltpu.CompilerParams(dimension_semantics=("parallel",)),
    )(*args)


# ----------------------------- deterministic parameter construction ------------------------

def init_params(key, D, H, L, T):
    Hg = H // 2
    ks = iter(jax.random.split(key, 40))

    def nrm(shape, std):
        return std * jax.random.normal(next(ks), shape, jnp.float32)

    p = {}
    p['w_in'] = nrm((H, D), 0.2)
    p['b_in'] = nrm((H,), 0.1)
    p['pos'] = 0.02 * jax.random.normal(next(ks), (T, H), jnp.float32)
    p['in_proj_w'] = nrm((L, 3 * H, H), 0.15)
    p['in_proj_b'] = nrm((L, 3 * H), 0.05)
    p['out_proj_w'] = nrm((L, H, H), 0.15)
    p['out_proj_b'] = nrm((L, H), 0.05)
    p['ln1_g'] = 1.0 + nrm((L, H), 0.05)
    p['ln1_b'] = nrm((L, H), 0.05)
    p['ff_w1'] = nrm((L, 4 * H, H), 0.1)
    p['ff_b1'] = nrm((L, 4 * H), 0.05)
    p['ff_w2'] = nrm((L, H, 4 * H), 0.1)
    p['ff_b2'] = nrm((L, H), 0.05)
    p['ln2_g'] = 1.0 + nrm((L, H), 0.05)
    p['ln2_b'] = nrm((L, H), 0.05)
    p['conv1_w'] = nrm((Hg, H, 5), 0.1)
    p['conv1_b'] = nrm((Hg,), 0.05)
    p['conv2_w'] = nrm((H // 4, Hg, 3), 0.1)
    p['conv2_b'] = nrm((H // 4,), 0.05)
    # GRU weights stacked in order [layer0 fwd, layer0 bwd, layer1 fwd, layer1 bwd]
    p['gru_w_ih'] = nrm((4, 3 * Hg, H), 0.15)
    p['gru_w_hh'] = nrm((4, 3 * Hg, Hg), 0.15)
    p['gru_b_ih'] = nrm((4, 3 * Hg), 0.05)
    p['gru_b_hh'] = nrm((4, 3 * Hg), 0.05)
    p['agg_w'] = nrm((H, H + H // 4 + H), 0.1)
    p['agg_b'] = nrm((H,), 0.05)
    p['lnf_g'] = 1.0 + nrm((H,), 0.05)
    p['lnf_b'] = nrm((H,), 0.05)
    return p


# ----------------------------- pure-JAX reference of the module forward --------------------

def reference_forward(x, p, num_heads):
    B, T, D = x.shape
    H = p['w_in'].shape[0]
    L = p['in_proj_w'].shape[0]
    Hg = H // 2
    hd = H // num_heads

    h = jnp.einsum('btd,hd->bth', x, p['w_in']) + p['b_in'] + p['pos'][None]
    for l in range(L):
        qkv = jnp.einsum('bth,oh->bto', h, p['in_proj_w'][l]) + p['in_proj_b'][l]
        q, k, v = qkv[..., :H], qkv[..., H:2 * H], qkv[..., 2 * H:]
        q = q.reshape(B, T, num_heads, hd).transpose(0, 2, 1, 3)
        k = k.reshape(B, T, num_heads, hd).transpose(0, 2, 1, 3)
        v = v.reshape(B, T, num_heads, hd).transpose(0, 2, 1, 3)
        s = jnp.einsum('bhqd,bhkd->bhqk', q, k) / math.sqrt(hd)
        att = jax.nn.softmax(s, axis=-1)
        ctx = jnp.einsum('bhqk,bhkd->bhqd', att, v).transpose(0, 2, 1, 3).reshape(B, T, H)
        sa = jnp.einsum('bth,oh->bto', ctx, p['out_proj_w'][l]) + p['out_proj_b'][l]
        h = _layer_norm(h + sa, p['ln1_g'][l], p['ln1_b'][l])
        ff = _gelu(jnp.einsum('bth,oh->bto', h, p['ff_w1'][l]) + p['ff_b1'][l])
        ff = jnp.einsum('btf,of->bto', ff, p['ff_w2'][l]) + p['ff_b2'][l]
        h = _layer_norm(h + ff, p['ln2_g'][l], p['ln2_b'][l])
    enc = h

    xpad = jnp.pad(enc, ((0, 0), (2, 2), (0, 0)))
    win = jnp.stack([xpad[:, t:t + T, :] for t in range(5)], axis=-1)
    y1 = jax.nn.relu(jnp.einsum('btck,ock->bto', win, p['conv1_w']) + p['conv1_b'])
    y1pad = jnp.pad(y1, ((0, 0), (1, 1), (0, 0)))
    win2 = jnp.stack([y1pad[:, t:t + T, :] for t in range(3)], axis=-1)
    y2 = jax.nn.relu(jnp.einsum('btck,ock->bto', win2, p['conv2_w']) + p['conv2_b'])
    vol_mean = jnp.mean(y2, axis=-1, keepdims=True)
    vol_exp = jnp.broadcast_to(vol_mean, (B, T, H // 4))

    def gru_dir(seq, idx, reverse):
        w_ih, w_hh = p['gru_w_ih'][idx], p['gru_w_hh'][idx]
        b_ih, b_hh = p['gru_b_ih'][idx], p['gru_b_hh'][idx]
        gi = jnp.einsum('bti,gi->btg', seq, w_ih) + b_ih
        hcur = jnp.zeros((B, Hg), jnp.float32)
        outs = [None] * T
        order = range(T - 1, -1, -1) if reverse else range(T)
        for t in order:
            gh = hcur @ w_hh.T + b_hh
            gt = gi[:, t, :]
            r = _sigmoid(gt[:, :Hg] + gh[:, :Hg])
            z = _sigmoid(gt[:, Hg:2 * Hg] + gh[:, Hg:2 * Hg])
            n = jnp.tanh(gt[:, 2 * Hg:] + r * gh[:, 2 * Hg:])
            hcur = (1.0 - z) * n + z * hcur
            outs[t] = hcur
        return jnp.stack(outs, axis=1)

    l0 = jnp.concatenate([gru_dir(enc, 0, False), gru_dir(enc, 1, True)], axis=-1)
    trend = jnp.concatenate([gru_dir(l0, 2, False), gru_dir(l0, 3, True)], axis=-1)

    agg = jnp.concatenate([enc, vol_exp, trend], axis=-1)
    lin = jnp.einsum('bti,oi->bto', agg, p['agg_w']) + p['agg_b']
    final = _gelu(_layer_norm(lin, p['lnf_g'], p['lnf_b']))

    scores = jnp.einsum('btd,bsd->bts', enc, enc) / math.sqrt(H)
    attn = jax.nn.softmax(scores, axis=-1)
    return final, attn


# ----------------------------- demo / self-check -------------------------------------------

if __name__ == "__main__":
    B, T, D, H, L, NH = 2, 8, 16, 32, 2, 4   # batch, window_size, input_dim, hidden, layers, heads
    assert H % NH == 0 and H % 4 == 0

    key = jax.random.PRNGKey(0)
    kp, kx = jax.random.split(key)
    params = init_params(kp, D, H, L, T)
    x = jax.random.normal(kx, (B, T, D), jnp.float32)

    final, attn = jax.block_until_ready(market_dynamics_encoder_forward(x, params, NH))
    ref_final, ref_attn = reference_forward(x, params, NH)

    assert final.shape == (B, T, H) and attn.shape == (B, T, T)
    assert jnp.allclose(final, ref_final, atol=5e-4, rtol=5e-4), (
        "final_features mismatch, max abs err %e" % float(jnp.max(jnp.abs(final - ref_final))))
    assert jnp.allclose(attn, ref_attn, atol=5e-4, rtol=5e-4), (
        "attention_weights mismatch, max abs err %e" % float(jnp.max(jnp.abs(attn - ref_attn))))
    print("KERNEL_OK")
</pallas_src>

<mosaic_0001>
module attributes {stable_mosaic.version = 11 : i64} {
  func.func @kernel(%arg0: i32, %arg1: memref<1x8x16xf32, #tpu.memory_space<vmem>>, %arg2: memref<16x32xf32, #tpu.memory_space<vmem>>, %arg3: memref<8x32xf32, #tpu.memory_space<vmem>>, %arg4: memref<2x32x96xf32, #tpu.memory_space<vmem>>, %arg5: memref<2x1x96xf32, #tpu.memory_space<vmem>>, %arg6: memref<2x32x32xf32, #tpu.memory_space<vmem>>, %arg7: memref<2x1x32xf32, #tpu.memory_space<vmem>>, %arg8: memref<2x1x32xf32, #tpu.memory_space<vmem>>, %arg9: memref<2x1x32xf32, #tpu.memory_space<vmem>>, %arg10: memref<2x32x128xf32, #tpu.memory_space<vmem>>, %arg11: memref<2x1x128xf32, #tpu.memory_space<vmem>>, %arg12: memref<2x128x32xf32, #tpu.memory_space<vmem>>, %arg13: memref<2x1x32xf32, #tpu.memory_space<vmem>>, %arg14: memref<2x1x32xf32, #tpu.memory_space<vmem>>, %arg15: memref<2x1x32xf32, #tpu.memory_space<vmem>>, %arg16: memref<160x16xf32, #tpu.memory_space<vmem>>, %arg17: memref<1x16xf32, #tpu.memory_space<vmem>>, %arg18: memref<48x8xf32, #tpu.memory_space<vmem>>, %arg19: memref<1x8xf32, #tpu.memory_space<vmem>>, %arg20: memref<4x32x48xf32, #tpu.memory_space<vmem>>, %arg21: memref<4x16x48xf32, #tpu.memory_space<vmem>>, %arg22: memref<4x1x48xf32, #tpu.memory_space<vmem>>, %arg23: memref<4x1x48xf32, #tpu.memory_space<vmem>>, %arg24: memref<32x32xf32, #tpu.memory_space<vmem>>, %arg25: memref<32x32xf32, #tpu.memory_space<vmem>>, %arg26: memref<1x32xf32, #tpu.memory_space<vmem>>, %arg27: memref<1x32xf32, #tpu.memory_space<vmem>>, %arg28: memref<1x32xf32, #tpu.memory_space<vmem>>, %arg29: memref<1x32xf32, #tpu.memory_space<vmem>>, %arg30: memref<1x8x32xf32, #tpu.memory_space<vmem>>, %arg31: memref<1x8x8xf32, #tpu.memory_space<vmem>>) attributes {dimension_semantics = [#tpu.dimension_semantics<parallel>], iteration_bounds = array<i64: 2>, scalar_prefetch = 0 : i64, scratch_operands = 0 : i64, tpu.core_type = #tpu.core_type<tc>, window_params = [{transform_indices = @transform_0, window_bounds = array<i64: 1, 8, 16>}, {pipeline_mode = #tpu.pipeline_mode<synchronous>, transform_indices = @transform_1, window_bounds = array<i64: 16, 32>}, {pipeline_mode = #tpu.pipeline_mode<synchronous>, transform_indices = @transform_2, window_bounds = array<i64: 8, 32>}, {pipeline_mode = #tpu.pipeline_mode<synchronous>, transform_indices = @transform_3, window_bounds = array<i64: 2, 32, 96>}, {pipeline_mode = #tpu.pipeline_mode<synchronous>, transform_indices = @transform_4, window_bounds = array<i64: 2, 1, 96>}, {pipeline_mode = #tpu.pipeline_mode<synchronous>, transform_indices = @transform_5, window_bounds = array<i64: 2, 32, 32>}, {pipeline_mode = #tpu.pipeline_mode<synchronous>, transform_indices = @transform_6, window_bounds = array<i64: 2, 1, 32>}, {pipeline_mode = #tpu.pipeline_mode<synchronous>, transform_indices = @transform_7, window_bounds = array<i64: 2, 1, 32>}, {pipeline_mode = #tpu.pipeline_mode<synchronous>, transform_indices = @transform_8, window_bounds = array<i64: 2, 1, 32>}, {pipeline_mode = #tpu.pipeline_mode<synchronous>, transform_indices = @transform_9, window_bounds = array<i64: 2, 32, 128>}, {pipeline_mode = #tpu.pipeline_mode<synchronous>, transform_indices = @transform_10, window_bounds = array<i64: 2, 1, 128>}, {pipeline_mode = #tpu.pipeline_mode<synchronous>, transform_indices = @transform_11, window_bounds = array<i64: 2, 128, 32>}, {pipeline_mode = #tpu.pipeline_mode<synchronous>, transform_indices = @transform_12, window_bounds = array<i64: 2, 1, 32>}, {pipeline_mode = #tpu.pipeline_mode<synchronous>, transform_indices = @transform_13, window_bounds = array<i64: 2, 1, 32>}, {pipeline_mode = #tpu.pipeline_mode<synchronous>, transform_indices = @transform_14, window_bounds = array<i64: 2, 1, 32>}, {pipeline_mode = #tpu.pipeline_mode<synchronous>, transform_indices = @transform_15, window_bounds = array<i64: 160, 16>}, {pipeline_mode = #tpu.pipeline_mode<synchronous>, transform_indices = @transform_16, window_bounds = array<i64: 1, 16>}, {pipeline_mode = #tpu.pipeline_mode<synchronous>, transform_indices = @transform_17, window_bounds = array<i64: 48, 8>}, {pipeline_mode = #tpu.pipeline_mode<synchronous>, transform_indices = @transform_18, window_bounds = array<i64: 1, 8>}, {pipeline_mode = #tpu.pipeline_mode<synchronous>, transform_indices = @transform_19, window_bounds = array<i64: 4, 32, 48>}, {pipeline_mode = #tpu.pipeline_mode<synchronous>, transform_indices = @transform_20, window_bounds = array<i64: 4, 16, 48>}, {pipeline_mode = #tpu.pipeline_mode<synchronous>, transform_indices = @transform_21, window_bounds = array<i64: 4, 1, 48>}, {pipeline_mode = #tpu.pipeline_mode<synchronous>, transform_indices = @transform_22, window_bounds = array<i64: 4, 1, 48>}, {pipeline_mode = #tpu.pipeline_mode<synchronous>, transform_indices = @transform_23, window_bounds = array<i64: 32, 32>}, {pipeline_mode = #tpu.pipeline_mode<synchronous>, transform_indices = @transform_24, window_bounds = array<i64: 32, 32>}, {pipeline_mode = #tpu.pipeline_mode<synchronous>, transform_indices = @transform_25, window_bounds = array<i64: 1, 32>}, {pipeline_mode = #tpu.pipeline_mode<synchronous>, transform_indices = @transform_26, window_bounds = array<i64: 1, 32>}, {pipeline_mode = #tpu.pipeline_mode<synchronous>, transform_indices = @transform_27, window_bounds = array<i64: 1, 32>}, {pipeline_mode = #tpu.pipeline_mode<synchronous>, transform_indices = @transform_28, window_bounds = array<i64: 1, 32>}, {transform_indices = @transform_29, window_bounds = array<i64: 1, 8, 32>}, {transform_indices = @transform_30, window_bounds = array<i64: 1, 8, 8>}]} {
    %c0 = arith.constant 0 : index
    %c0_0 = arith.constant 0 : index
    %c0_1 = arith.constant 0 : index
    %0 = vector.load %arg1[%c0, %c0_0, %c0_1] : memref<1x8x16xf32, #tpu.memory_space<vmem>>, vector<1x8x16xf32>
    %1 = vector.shape_cast %0 : vector<1x8x16xf32> to vector<8x16xf32>
    %c0_2 = arith.constant 0 : index
    %c0_3 = arith.constant 0 : index
    %2 = vector.load %arg2[%c0_2, %c0_3] : memref<16x32xf32, #tpu.memory_space<vmem>>, vector<16x32xf32>
    %cst = arith.constant dense<0.000000e+00> : vector<8x32xf32>
    %3 = tpu.matmul %1, %2, %cst {dimension_numbers = #tpu.dot_dimension_numbers<[1], [0], [0], [1], [0, 0, 1, 1], [], []>} : vector<8x16xf32>, vector<16x32xf32>, vector<8x32xf32> -> vector<8x32xf32>
    %c0_4 = arith.constant 0 : index
    %c0_5 = arith.constant 0 : index
    %4 = vector.load %arg3[%c0_4, %c0_5] : memref<8x32xf32, #tpu.memory_space<vmem>>, vector<8x32xf32>
    %5 = arith.addf %3, %4 : vector<8x32xf32>
    %c0_6 = arith.constant 0 : index
    %c0_7 = arith.constant 0 : index
    %c0_8 = arith.constant 0 : index
    %6 = vector.load %arg4[%c0_6, %c0_7, %c0_8] : memref<2x32x96xf32, #tpu.memory_space<vmem>>, vector<1x32x96xf32>
    %7 = vector.shape_cast %6 : vector<1x32x96xf32> to vector<32x96xf32>
    %cst_9 = arith.constant dense<0.000000e+00> : vector<8x96xf32>
    %8 = tpu.matmul %5, %7, %cst_9 {dimension_numbers = #tpu.dot_dimension_numbers<[1], [0], [0], [1], [0, 0, 1, 1], [], []>} : vector<8x32xf32>, vector<32x96xf32>, vector<8x96xf32> -> vector<8x96xf32>
    %c0_10 = arith.constant 0 : index
    %c0_11 = arith.constant 0 : index
    %c0_12 = arith.constant 0 : index
    %9 = vector.load %arg5[%c0_10, %c0_11, %c0_12] : memref<2x1x96xf32, #tpu.memory_space<vmem>>, vector<1x1x96xf32>
    %10 = vector.shape_cast %9 : vector<1x1x96xf32> to vector<1x96xf32>
    %11 = vector.broadcast %10 : vector<1x96xf32> to vector<8x96xf32>
    %12 = arith.addf %8, %11 : vector<8x96xf32>
    %13 = vector.extract_strided_slice %12 {offsets = [0, 0], sizes = [8, 8], strides = [1, 1]} : vector<8x96xf32> to vector<8x8xf32>
    %14 = vector.extract_strided_slice %12 {offsets = [0, 8], sizes = [8, 8], strides = [1, 1]} : vector<8x96xf32> to vector<8x8xf32>
    %15 = vector.extract_strided_slice %12 {offsets = [0, 16], sizes = [8, 8], strides = [1, 1]} : vector<8x96xf32> to vector<8x8xf32>
    %16 = vector.extract_strided_slice %12 {offsets = [0, 24], sizes = [8, 8], strides = [1, 1]} : vector<8x96xf32> to vector<8x8xf32>
    %17 = vector.shape_cast %13 : vector<8x8xf32> to vector<1x8x8xf32>
    %18 = vector.shape_cast %14 : vector<8x8xf32> to vector<1x8x8xf32>
    %19 = vector.shape_cast %15 : vector<8x8xf32> to vector<1x8x8xf32>
    %20 = vector.shape_cast %16 : vector<8x8xf32> to vector<1x8x8xf32>
    %21 = tpu.concatenate %17, %18, %19, %20 in 0 : vector<1x8x8xf32>, vector<1x8x8xf32>, vector<1x8x8xf32>, vector<1x8x8xf32> -> vector<4x8x8xf32>
    %22 = vector.extract_strided_slice %12 {offsets = [0, 32], sizes = [8, 8], strides = [1, 1]} : vector<8x96xf32> to vector<8x8xf32>
    %23 = vector.extract_strided_slice %12 {offsets = [0, 40], sizes = [8, 8], strides = [1, 1]} : vector<8x96xf32> to vector<8x8xf32>
    %24 = vector.extract_strided_slice %12 {offsets = [0, 48], sizes = [8, 8], strides = [1, 1]} : vector<8x96xf32> to vector<8x8xf32>
    %25 = vector.extract_strided_slice %12 {offsets = [0, 56], sizes = [8, 8], strides = [1, 1]} : vector<8x96xf32> to vector<8x8xf32>
    %26 = vector.shape_cast %22 : vector<8x8xf32> to vector<1x8x8xf32>
    %27 = vector.shape_cast %23 : vector<8x8xf32> to vector<1x8x8xf32>
    %28 = vector.shape_cast %24 : vector<8x8xf32> to vector<1x8x8xf32>
    %29 = vector.shape_cast %25 : vector<8x8xf32> to vector<1x8x8xf32>
    %30 = tpu.concatenate %26, %27, %28, %29 in 0 : vector<1x8x8xf32>, vector<1x8x8xf32>, vector<1x8x8xf32>, vector<1x8x8xf32> -> vector<4x8x8xf32>
    %31 = vector.extract_strided_slice %12 {offsets = [0, 64], sizes = [8, 8], strides = [1, 1]} : vector<8x96xf32> to vector<8x8xf32>
    %32 = vector.extract_strided_slice %12 {offsets = [0, 72], sizes = [8, 8], strides = [1, 1]} : vector<8x96xf32> to vector<8x8xf32>
    %33 = vector.extract_strided_slice %12 {offsets = [0, 80], sizes = [8, 8], strides = [1, 1]} : vector<8x96xf32> to vector<8x8xf32>
    %34 = vector.extract_strided_slice %12 {offsets = [0, 88], sizes = [8, 8], strides = [1, 1]} : vector<8x96xf32> to vector<8x8xf32>
    %35 = vector.shape_cast %31 : vector<8x8xf32> to vector<1x8x8xf32>
    %36 = vector.shape_cast %32 : vector<8x8xf32> to vector<1x8x8xf32>
    %37 = vector.shape_cast %33 : vector<8x8xf32> to vector<1x8x8xf32>
    %38 = vector.shape_cast %34 : vector<8x8xf32> to vector<1x8x8xf32>
    %39 = tpu.concatenate %35, %36, %37, %38 in 0 : vector<1x8x8xf32>, vector<1x8x8xf32>, vector<1x8x8xf32>, vector<1x8x8xf32> -> vector<4x8x8xf32>
    "tpu.trace_start"() <{level = 10 : i32, message = "hqd,hkd->hqk"}> : () -> ()
    %cst_13 = arith.constant dense<0.000000e+00> : vector<4x8x8xf32>
    %40 = tpu.matmul %21, %30, %cst_13 {dimension_numbers = #tpu.dot_dimension_numbers<[2], [2], [1], [1], [0, 0, 0, 1, 1, 1], [0], [0]>} : vector<4x8x8xf32>, vector<4x8x8xf32>, vector<4x8x8xf32> -> vector<4x8x8xf32>
    "tpu.trace_stop"() : () -> ()
    %cst_14 = arith.constant 0.353553385 : f32
    %41 = vector.broadcast %cst_14 : f32 to vector<4x8x8xf32>
    %42 = arith.mulf %40, %41 : vector<4x8x8xf32>
    %cst_15 = arith.constant dense<0xFF800000> : vector<4x8xf32>
    %43 = vector.multi_reduction <maximumf>, %42, %cst_15 [2] : vector<4x8x8xf32> to vector<4x8xf32>
    %44 = vector.shape_cast %43 : vector<4x8xf32> to vector<4x8x1xf32>
    %45 = vector.broadcast %44 : vector<4x8x1xf32> to vector<4x8x8xf32>
    %46 = arith.subf %42, %45 : vector<4x8x8xf32>
    %47 = math.exp %46 : vector<4x8x8xf32>
    %cst_16 = arith.constant dense<0.000000e+00> : vector<4x8xf32>
    %48 = vector.multi_reduction <add>, %47, %cst_16 [2] : vector<4x8x8xf32> to vector<4x8xf32>
    %49 = vector.shape_cast %48 : vector<4x8xf32> to vector<4x8x1xf32>
    %50 = vector.broadcast %49 : vector<4x8x1xf32> to vector<4x8x8xf32>
    %51 = arith.divf %47, %50 : vector<4x8x8xf32>
    "tpu.trace_start"() <{level = 10 : i32, message = "hqk,hkd->hqd"}> : () -> ()
    %cst_17 = arith.constant dense<0.000000e+00> : vector<4x8x8xf32>
    %52 = tpu.matmul %51, %39, %cst_17 {dimension_numbers = #tpu.dot_dimension_numbers<[2], [1], [1], [2], [0, 0, 0, 1, 1, 2], [0], [0]>} : vector<4x8x8xf32>, vector<4x8x8xf32>, vector<4x8x8xf32> -> vector<4x8x8xf32>
    "tpu.trace_stop"() : () -> ()
    %53 = vector.extract_strided_slice %52 {offsets = [0, 0, 0], sizes = [1, 8, 8], strides = [1, 1, 1]} : vector<4x8x8xf32> to vector<1x8x8xf32>
    %54 = vector.shape_cast %53 : vector<1x8x8xf32> to vector<8x8xf32>
    %55 = vector.extract_strided_slice %52 {offsets = [1, 0, 0], sizes = [1, 8, 8], strides = [1, 1, 1]} : vector<4x8x8xf32> to vector<1x8x8xf32>
    %56 = vector.shape_cast %55 : vector<1x8x8xf32> to vector<8x8xf32>
    %57 = vector.extract_strided_slice %52 {offsets = [2, 0, 0], sizes = [1, 8, 8], strides = [1, 1, 1]} : vector<4x8x8xf32> to vector<1x8x8xf32>
    %58 = vector.shape_cast %57 : vector<1x8x8xf32> to vector<8x8xf32>
    %59 = vector.extract_strided_slice %52 {offsets = [3, 0, 0], sizes = [1, 8, 8], strides = [1, 1, 1]} : vector<4x8x8xf32> to vector<1x8x8xf32>
    %60 = vector.shape_cast %59 : vector<1x8x8xf32> to vector<8x8xf32>
    %61 = tpu.concatenate %54, %56, %58, %60 in 1 : vector<8x8xf32>, vector<8x8xf32>, vector<8x8xf32>, vector<8x8xf32> -> vector<8x32xf32>
    %c0_18 = arith.constant 0 : index
    %c0_19 = arith.constant 0 : index
    %c0_20 = arith.constant 0 : index
    %62 = vector.load %arg6[%c0_18, %c0_19, %c0_20] : memref<2x32x32xf32, #tpu.memory_space<vmem>>, vector<1x32x32xf32>
    %63 = vector.shape_cast %62 : vector<1x32x32xf32> to vector<32x32xf32>
    %cst_21 = arith.constant dense<0.000000e+00> : vector<8x32xf32>
    %64 = tpu.matmul %61, %63, %cst_21 {dimension_numbers = #tpu.dot_dimension_numbers<[1], [0], [0], [1], [0, 0, 1, 1], [], []>} : vector<8x32xf32>, vector<32x32xf32>, vector<8x32xf32> -> vector<8x32xf32>
    %c0_22 = arith.constant 0 : index
    %c0_23 = arith.constant 0 : index
    %c0_24 = arith.constant 0 : index
    %65 = vector.load %arg7[%c0_22, %c0_23, %c0_24] : memref<2x1x32xf32, #tpu.memory_space<vmem>>, vector<1x1x32xf32>
    %66 = vector.shape_cast %65 : vector<1x1x32xf32> to vector<1x32xf32>
    %67 = vector.broadcast %66 : vector<1x32xf32> to vector<8x32xf32>
    %68 = arith.addf %64, %67 : vector<8x32xf32>
    %69 = arith.addf %5, %68 : vector<8x32xf32>
    %c0_25 = arith.constant 0 : index
    %c0_26 = arith.constant 0 : index
    %c0_27 = arith.constant 0 : index
    %70 = vector.load %arg8[%c0_25, %c0_26, %c0_27] : memref<2x1x32xf32, #tpu.memory_space<vmem>>, vector<1x1x32xf32>
    %71 = vector.shape_cast %70 : vector<1x1x32xf32> to vector<1x32xf32>
    %c0_28 = arith.constant 0 : index
    %c0_29 = arith.constant 0 : index
    %c0_30 = arith.constant 0 : index
    %72 = vector.load %arg9[%c0_28, %c0_29, %c0_30] : memref<2x1x32xf32, #tpu.memory_space<vmem>>, vector<1x1x32xf32>
    %73 = vector.shape_cast %72 : vector<1x1x32xf32> to vector<1x32xf32>
    %cst_31 = arith.constant dense<0.000000e+00> : vector<8xf32>
    %74 = vector.multi_reduction <add>, %69, %cst_31 [1] : vector<8x32xf32> to vector<8xf32>
    %75 = vector.shape_cast %74 : vector<8xf32> to vector<8x1xf32>
    %cst_32 = arith.constant 3.200000e+01 : f32
    %76 = vector.broadcast %cst_32 : f32 to vector<8x1xf32>
    %77 = arith.divf %75, %76 : vector<8x1xf32>
    %78 = vector.broadcast %77 : vector<8x1xf32> to vector<8x32xf32>
    %79 = arith.subf %69, %78 : vector<8x32xf32>
    %80 = arith.mulf %79, %79 : vector<8x32xf32>
    %cst_33 = arith.constant dense<0.000000e+00> : vector<8xf32>
    %81 = vector.multi_reduction <add>, %80, %cst_33 [1] : vector<8x32xf32> to vector<8xf32>
    %82 = vector.shape_cast %81 : vector<8xf32> to vector<8x1xf32>
    %cst_34 = arith.constant 3.200000e+01 : f32
    %83 = vector.broadcast %cst_34 : f32 to vector<8x1xf32>
    %84 = arith.divf %82, %83 : vector<8x1xf32>
    %cst_35 = arith.constant 9.99999974E-6 : f32
    %85 = vector.broadcast %cst_35 : f32 to vector<8x1xf32>
    %86 = arith.addf %84, %85 : vector<8x1xf32>
    %87 = math.rsqrt %86 : vector<8x1xf32>
    %88 = vector.broadcast %87 : vector<8x1xf32> to vector<8x32xf32>
    %89 = arith.mulf %79, %88 : vector<8x32xf32>
    %90 = vector.broadcast %71 : vector<1x32xf32> to vector<8x32xf32>
    %91 = arith.mulf %89, %90 : vector<8x32xf32>
    %92 = vector.broadcast %73 : vector<1x32xf32> to vector<8x32xf32>
    %93 = arith.addf %91, %92 : vector<8x32xf32>
    %c0_36 = arith.constant 0 : index
    %c0_37 = arith.constant 0 : index
    %c0_38 = arith.constant 0 : index
    %94 = vector.load %arg10[%c0_36, %c0_37, %c0_38] : memref<2x32x128xf32, #tpu.memory_space<vmem>>, vector<1x32x128xf32>
    %95 = vector.shape_cast %94 : vector<1x32x128xf32> to vector<32x128xf32>
    %cst_39 = arith.constant dense<0.000000e+00> : vector<8x128xf32>
    %96 = tpu.matmul %93, %95, %cst_39 {dimension_numbers = #tpu.dot_dimension_numbers<[1], [0], [0], [1], [0, 0, 1, 1], [], []>} : vector<8x32xf32>, vector<32x128xf32>, vector<8x128xf32> -> vector<8x128xf32>
    %c0_40 = arith.constant 0 : index
    %c0_41 = arith.constant 0 : index
    %c0_42 = arith.constant 0 : index
    %97 = vector.load %arg11[%c0_40, %c0_41, %c0_42] : memref<2x1x128xf32, #tpu.memory_space<vmem>>, vector<1x1x128xf32>
    %98 = vector.shape_cast %97 : vector<1x1x128xf32> to vector<1x128xf32>
    %99 = vector.broadcast %98 : vector<1x128xf32> to vector<8x128xf32>
    %100 = arith.addf %96, %99 : vector<8x128xf32>
    %cst_43 = arith.constant 5.000000e-01 : f32
    %101 = vector.broadcast %cst_43 : f32 to vector<8x128xf32>
    %102 = arith.mulf %101, %100 : vector<8x128xf32>
    %cst_44 = arith.constant 4.471500e-02 : f32
    %103 = vector.broadcast %cst_44 : f32 to vector<8x128xf32>
    %104 = arith.mulf %103, %100 : vector<8x128xf32>
    %105 = arith.mulf %104, %100 : vector<8x128xf32>
    %106 = arith.mulf %105, %100 : vector<8x128xf32>
    %107 = arith.addf %100, %106 : vector<8x128xf32>
    %cst_45 = arith.constant 0.797884583 : f32
    %108 = vector.broadcast %cst_45 : f32 to vector<8x128xf32>
    %109 = arith.mulf %108, %107 : vector<8x128xf32>
    %110 = math.tanh %109 : vector<8x128xf32>
    %cst_46 = arith.constant 1.000000e+00 : f32
    %111 = vector.broadcast %cst_46 : f32 to vector<8x128xf32>
    %112 = arith.addf %111, %110 : vector<8x128xf32>
    %113 = arith.mulf %102, %112 : vector<8x128xf32>
    %c0_47 = arith.constant 0 : index
    %c0_48 = arith.constant 0 : index
    %c0_49 = arith.constant 0 : index
    %114 = vector.load %arg12[%c0_47, %c0_48, %c0_49] : memref<2x128x32xf32, #tpu.memory_space<vmem>>, vector<1x128x32xf32>
    %115 = vector.shape_cast %114 : vector<1x128x32xf32> to vector<128x32xf32>
    %cst_50 = arith.constant dense<0.000000e+00> : vector<8x32xf32>
    %116 = tpu.matmul %113, %115, %cst_50 {dimension_numbers = #tpu.dot_dimension_numbers<[1], [0], [0], [1], [0, 0, 1, 1], [], []>} : vector<8x128xf32>, vector<128x32xf32>, vector<8x32xf32> -> vector<8x32xf32>
    %c0_51 = arith.constant 0 : index
    %c0_52 = arith.constant 0 : index
    %c0_53 = arith.constant 0 : index
    %117 = vector.load %arg13[%c0_51, %c0_52, %c0_53] : memref<2x1x32xf32, #tpu.memory_space<vmem>>, vector<1x1x32xf32>
    %118 = vector.shape_cast %117 : vector<1x1x32xf32> to vector<1x32xf32>
    %119 = vector.broadcast %118 : vector<1x32xf32> to vector<8x32xf32>
    %120 = arith.addf %116, %119 : vector<8x32xf32>
    %121 = arith.addf %93, %120 : vector<8x32xf32>
    %c0_54 = arith.constant 0 : index
    %c0_55 = arith.constant 0 : index
    %c0_56 = arith.constant 0 : index
    %122 = vector.load %arg14[%c0_54, %c0_55, %c0_56] : memref<2x1x32xf32, #tpu.memory_space<vmem>>, vector<1x1x32xf32>
    %123 = vector.shape_cast %122 : vector<1x1x32xf32> to vector<1x32xf32>
    %c0_57 = arith.constant 0 : index
    %c0_58 = arith.constant 0 : index
    %c0_59 = arith.constant 0 : index
    %124 = vector.load %arg15[%c0_57, %c0_58, %c0_59] : memref<2x1x32xf32, #tpu.memory_space<vmem>>, vector<1x1x32xf32>
    %125 = vector.shape_cast %124 : vector<1x1x32xf32> to vector<1x32xf32>
    %cst_60 = arith.constant dense<0.000000e+00> : vector<8xf32>
    %126 = vector.multi_reduction <add>, %121, %cst_60 [1] : vector<8x32xf32> to vector<8xf32>
    %127 = vector.shape_cast %126 : vector<8xf32> to vector<8x1xf32>
    %cst_61 = arith.constant 3.200000e+01 : f32
    %128 = vector.broadcast %cst_61 : f32 to vector<8x1xf32>
    %129 = arith.divf %127, %128 : vector<8x1xf32>
    %130 = vector.broadcast %129 : vector<8x1xf32> to vector<8x32xf32>
    %131 = arith.subf %121, %130 : vector<8x32xf32>
    %132 = arith.mulf %131, %131 : vector<8x32xf32>
    %cst_62 = arith.constant dense<0.000000e+00> : vector<8xf32>
    %133 = vector.multi_reduction <add>, %132, %cst_62 [1] : vector<8x32xf32> to vector<8xf32>
    %134 = vector.shape_cast %133 : vector<8xf32> to vector<8x1xf32>
    %cst_63 = arith.constant 3.200000e+01 : f32
    %135 = vector.broadcast %cst_63 : f32 to vector<8x1xf32>
    %136 = arith.divf %134, %135 : vector<8x1xf32>
    %cst_64 = arith.constant 9.99999974E-6 : f32
    %137 = vector.broadcast %cst_64 : f32 to vector<8x1xf32>
    %138 = arith.addf %136, %137 : vector<8x1xf32>
    %139 = math.rsqrt %138 : vector<8x1xf32>
    %140 = vector.broadcast %139 : vector<8x1xf32> to vector<8x32xf32>
    %141 = arith.mulf %131, %140 : vector<8x32xf32>
    %142 = vector.broadcast %123 : vector<1x32xf32> to vector<8x32xf32>
    %143 = arith.mulf %141, %142 : vector<8x32xf32>
    %144 = vector.broadcast %125 : vector<1x32xf32> to vector<8x32xf32>
    %145 = arith.addf %143, %144 : vector<8x32xf32>
    %c1 = arith.constant 1 : index
    %c0_65 = arith.constant 0 : index
    %c0_66 = arith.constant 0 : index
    %146 = vector.load %arg4[%c1, %c0_65, %c0_66] : memref<2x32x96xf32, #tpu.memory_space<vmem>>, vector<1x32x96xf32>
    %147 = vector.shape_cast %146 : vector<1x32x96xf32> to vector<32x96xf32>
    %cst_67 = arith.constant dense<0.000000e+00> : vector<8x96xf32>
    %148 = tpu.matmul %145, %147, %cst_67 {dimension_numbers = #tpu.dot_dimension_numbers<[1], [0], [0], [1], [0, 0, 1, 1], [], []>} : vector<8x32xf32>, vector<32x96xf32>, vector<8x96xf32> -> vector<8x96xf32>
    %c1_68 = arith.constant 1 : index
    %c0_69 = arith.constant 0 : index
    %c0_70 = arith.constant 0 : index
    %149 = vector.load %arg5[%c1_68, %c0_69, %c0_70] : memref<2x1x96xf32, #tpu.memory_space<vmem>>, vector<1x1x96xf32>
    %150 = vector.shape_cast %149 : vector<1x1x96xf32> to vector<1x96xf32>
    %151 = vector.broadcast %150 : vector<1x96xf32> to vector<8x96xf32>
    %152 = arith.addf %148, %151 : vector<8x96xf32>
    %153 = vector.extract_strided_slice %152 {offsets = [0, 0], sizes = [8, 8], strides = [1, 1]} : vector<8x96xf32> to vector<8x8xf32>
    %154 = vector.extract_strided_slice %152 {offsets = [0, 8], sizes = [8, 8], strides = [1, 1]} : vector<8x96xf32> to vector<8x8xf32>
    %155 = vector.extract_strided_slice %152 {offsets = [0, 16], sizes = [8, 8], strides = [1, 1]} : vector<8x96xf32> to vector<8x8xf32>
    %156 = vector.extract_strided_slice %152 {offsets = [0, 24], sizes = [8, 8], strides = [1, 1]} : vector<8x96xf32> to vector<8x8xf32>
    %157 = vector.shape_cast %153 : vector<8x8xf32> to vector<1x8x8xf32>
    %158 = vector.shape_cast %154 : vector<8x8xf32> to vector<1x8x8xf32>
    %159 = vector.shape_cast %155 : vector<8x8xf32> to vector<1x8x8xf32>
    %160 = vector.shape_cast %156 : vector<8x8xf32> to vector<1x8x8xf32>
    %161 = tpu.concatenate %157, %158, %159, %160 in 0 : vector<1x8x8xf32>, vector<1x8x8xf32>, vector<1x8x8xf32>, vector<1x8x8xf32> -> vector<4x8x8xf32>
    %162 = vector.extract_strided_slice %152 {offsets = [0, 32], sizes = [8, 8], strides = [1, 1]} : vector<8x96xf32> to vector<8x8xf32>
    %163 = vector.extract_strided_slice %152 {offsets = [0, 40], sizes = [8, 8], strides = [1, 1]} : vector<8x96xf32> to vector<8x8xf32>
    %164 = vector.extract_strided_slice %152 {offsets = [0, 48], sizes = [8, 8], strides = [1, 1]} : vector<8x96xf32> to vector<8x8xf32>
    %165 = vector.extract_strided_slice %152 {offsets = [0, 56], sizes = [8, 8], strides = [1, 1]} : vector<8x96xf32> to vector<8x8xf32>
    %166 = vector.shape_cast %162 : vector<8x8xf32> to vector<1x8x8xf32>
    %167 = vector.shape_cast %163 : vector<8x8xf32> to vector<1x8x8xf32>
    %168 = vector.shape_cast %164 : vector<8x8xf32> to vector<1x8x8xf32>
    %169 = vector.shape_cast %165 : vector<8x8xf32> to vector<1x8x8xf32>
    %170 = tpu.concatenate %166, %167, %168, %169 in 0 : vector<1x8x8xf32>, vector<1x8x8xf32>, vector<1x8x8xf32>, vector<1x8x8xf32> -> vector<4x8x8xf32>
    %171 = vector.extract_strided_slice %152 {offsets = [0, 64], sizes = [8, 8], strides = [1, 1]} : vector<8x96xf32> to vector<8x8xf32>
    %172 = vector.extract_strided_slice %152 {offsets = [0, 72], sizes = [8, 8], strides = [1, 1]} : vector<8x96xf32> to vector<8x8xf32>
    %173 = vector.extract_strided_slice %152 {offsets = [0, 80], sizes = [8, 8], strides = [1, 1]} : vector<8x96xf32> to vector<8x8xf32>
    %174 = vector.extract_strided_slice %152 {offsets = [0, 88], sizes = [8, 8], strides = [1, 1]} : vector<8x96xf32> to vector<8x8xf32>
    %175 = vector.shape_cast %171 : vector<8x8xf32> to vector<1x8x8xf32>
    %176 = vector.shape_cast %172 : vector<8x8xf32> to vector<1x8x8xf32>
    %177 = vector.shape_cast %173 : vector<8x8xf32> to vector<1x8x8xf32>
    %178 = vector.shape_cast %174 : vector<8x8xf32> to vector<1x8x8xf32>
    %179 = tpu.concatenate %175, %176, %177, %178 in 0 : vector<1x8x8xf32>, vector<1x8x8xf32>, vector<1x8x8xf32>, vector<1x8x8xf32> -> vector<4x8x8xf32>
    "tpu.trace_start"() <{level = 10 : i32, message = "hqd,hkd->hqk"}> : () -> ()
    %cst_71 = arith.constant dense<0.000000e+00> : vector<4x8x8xf32>
    %180 = tpu.matmul %161, %170, %cst_71 {dimension_numbers = #tpu.dot_dimension_numbers<[2], [2], [1], [1], [0, 0, 0, 1, 1, 1], [0], [0]>} : vector<4x8x8xf32>, vector<4x8x8xf32>, vector<4x8x8xf32> -> vector<4x8x8xf32>
    "tpu.trace_stop"() : () -> ()
    %cst_72 = arith.constant 0.353553385 : f32
    %181 = vector.broadcast %cst_72 : f32 to vector<4x8x8xf32>
    %182 = arith.mulf %180, %181 : vector<4x8x8xf32>
    %cst_73 = arith.constant dense<0xFF800000> : vector<4x8xf32>
    %183 = vector.multi_reduction <maximumf>, %182, %cst_73 [2] : vector<4x8x8xf32> to vector<4x8xf32>
    %184 = vector.shape_cast %183 : vector<4x8xf32> to vector<4x8x1xf32>
    %185 = vector.broadcast %184 : vector<4x8x1xf32> to vector<4x8x8xf32>
    %186 = arith.subf %182, %185 : vector<4x8x8xf32>
    %187 = math.exp %186 : vector<4x8x8xf32>
    %cst_74 = arith.constant dense<0.000000e+00> : vector<4x8xf32>
    %188 = vector.multi_reduction <add>, %187, %cst_74 [2] : vector<4x8x8xf32> to vector<4x8xf32>
    %189 = vector.shape_cast %188 : vector<4x8xf32> to vector<4x8x1xf32>
    %190 = vector.broadcast %189 : vector<4x8x1xf32> to vector<4x8x8xf32>
    %191 = arith.divf %187, %190 : vector<4x8x8xf32>
    "tpu.trace_start"() <{level = 10 : i32, message = "hqk,hkd->hqd"}> : () -> ()
    %cst_75 = arith.constant dense<0.000000e+00> : vector<4x8x8xf32>
    %192 = tpu.matmul %191, %179, %cst_75 {dimension_numbers = #tpu.dot_dimension_numbers<[2], [1], [1], [2], [0, 0, 0, 1, 1, 2], [0], [0]>} : vector<4x8x8xf32>, vector<4x8x8xf32>, vector<4x8x8xf32> -> vector<4x8x8xf32>
    "tpu.trace_stop"() : () -> ()
    %193 = vector.extract_strided_slice %192 {offsets = [0, 0, 0], sizes = [1, 8, 8], strides = [1, 1, 1]} : vector<4x8x8xf32> to vector<1x8x8xf32>
    %194 = vector.shape_cast %193 : vector<1x8x8xf32> to vector<8x8xf32>
    %195 = vector.extract_strided_slice %192 {offsets = [1, 0, 0], sizes = [1, 8, 8], strides = [1, 1, 1]} : vector<4x8x8xf32> to vector<1x8x8xf32>
    %196 = vector.shape_cast %195 : vector<1x8x8xf32> to vector<8x8xf32>
    %197 = vector.extract_strided_slice %192 {offsets = [2, 0, 0], sizes = [1, 8, 8], strides = [1, 1, 1]} : vector<4x8x8xf32> to vector<1x8x8xf32>
    %198 = vector.shape_cast %197 : vector<1x8x8xf32> to vector<8x8xf32>
    %199 = vector.extract_strided_slice %192 {offsets = [3, 0, 0], sizes = [1, 8, 8], strides = [1, 1, 1]} : vector<4x8x8xf32> to vector<1x8x8xf32>
    %200 = vector.shape_cast %199 : vector<1x8x8xf32> to vector<8x8xf32>
    %201 = tpu.concatenate %194, %196, %198, %200 in 1 : vector<8x8xf32>, vector<8x8xf32>, vector<8x8xf32>, vector<8x8xf32> -> vector<8x32xf32>
    %c1_76 = arith.constant 1 : index
    %c0_77 = arith.constant 0 : index
    %c0_78 = arith.constant 0 : index
    %202 = vector.load %arg6[%c1_76, %c0_77, %c0_78] : memref<2x32x32xf32, #tpu.memory_space<vmem>>, vector<1x32x32xf32>
    %203 = vector.shape_cast %202 : vector<1x32x32xf32> to vector<32x32xf32>
    %cst_79 = arith.constant dense<0.000000e+00> : vector<8x32xf32>
    %204 = tpu.matmul %201, %203, %cst_79 {dimension_numbers = #tpu.dot_dimension_numbers<[1], [0], [0], [1], [0, 0, 1, 1], [], []>} : vector<8x32xf32>, vector<32x32xf32>, vector<8x32xf32> -> vector<8x32xf32>
    %c1_80 = arith.constant 1 : index
    %c0_81 = arith.constant 0 : index
    %c0_82 = arith.constant 0 : index
    %205 = vector.load %arg7[%c1_80, %c0_81, %c0_82] : memref<2x1x32xf32, #tpu.memory_space<vmem>>, vector<1x1x32xf32>
    %206 = vector.shape_cast %205 : vector<1x1x32xf32> to vector<1x32xf32>
    %207 = vector.broadcast %206 : vector<1x32xf32> to vector<8x32xf32>
    %208 = arith.addf %204, %207 : vector<8x32xf32>
    %209 = arith.addf %145, %208 : vector<8x32xf32>
    %c1_83 = arith.constant 1 : index
    %c0_84 = arith.constant 0 : index
    %c0_85 = arith.constant 0 : index
    %210 = vector.load %arg8[%c1_83, %c0_84, %c0_85] : memref<2x1x32xf32, #tpu.memory_space<vmem>>, vector<1x1x32xf32>
    %211 = vector.shape_cast %210 : vector<1x1x32xf32> to vector<1x32xf32>
    %c1_86 = arith.constant 1 : index
    %c0_87 = arith.constant 0 : index
    %c0_88 = arith.constant 0 : index
    %212 = vector.load %arg9[%c1_86, %c0_87, %c0_88] : memref<2x1x32xf32, #tpu.memory_space<vmem>>, vector<1x1x32xf32>
    %213 = vector.shape_cast %212 : vector<1x1x32xf32> to vector<1x32xf32>
    %cst_89 = arith.constant dense<0.000000e+00> : vector<8xf32>
    %214 = vector.multi_reduction <add>, %209, %cst_89 [1] : vector<8x32xf32> to vector<8xf32>
    %215 = vector.shape_cast %214 : vector<8xf32> to vector<8x1xf32>
    %cst_90 = arith.constant 3.200000e+01 : f32
    %216 = vector.broadcast %cst_90 : f32 to vector<8x1xf32>
    %217 = arith.divf %215, %216 : vector<8x1xf32>
    %218 = vector.broadcast %217 : vector<8x1xf32> to vector<8x32xf32>
    %219 = arith.subf %209, %218 : vector<8x32xf32>
    %220 = arith.mulf %219, %219 : vector<8x32xf32>
    %cst_91 = arith.constant dense<0.000000e+00> : vector<8xf32>
    %221 = vector.multi_reduction <add>, %220, %cst_91 [1] : vector<8x32xf32> to vector<8xf32>
    %222 = vector.shape_cast %221 : vector<8xf32> to vector<8x1xf32>
    %cst_92 = arith.constant 3.200000e+01 : f32
    %223 = vector.broadcast %cst_92 : f32 to vector<8x1xf32>
    %224 = arith.divf %222, %223 : vector<8x1xf32>
    %cst_93 = arith.constant 9.99999974E-6 : f32
    %225 = vector.broadcast %cst_93 : f32 to vector<8x1xf32>
    %226 = arith.addf %224, %225 : vector<8x1xf32>
    %227 = math.rsqrt %226 : vector<8x1xf32>
    %228 = vector.broadcast %227 : vector<8x1xf32> to vector<8x32xf32>
    %229 = arith.mulf %219, %228 : vector<8x32xf32>
    %230 = vector.broadcast %211 : vector<1x32xf32> to vector<8x32xf32>
    %231 = arith.mulf %229, %230 : vector<8x32xf32>
    %232 = vector.broadcast %213 : vector<1x32xf32> to vector<8x32xf32>
    %233 = arith.addf %231, %232 : vector<8x32xf32>
    %c1_94 = arith.constant 1 : index
    %c0_95 = arith.constant 0 : index
    %c0_96 = arith.constant 0 : index
    %234 = vector.load %arg10[%c1_94, %c0_95, %c0_96] : memref<2x32x128xf32, #tpu.memory_space<vmem>>, vector<1x32x128xf32>
    %235 = vector.shape_cast %234 : vector<1x32x128xf32> to vector<32x128xf32>
    %cst_97 = arith.constant dense<0.000000e+00> : vector<8x128xf32>
    %236 = tpu.matmul %233, %235, %cst_97 {dimension_numbers = #tpu.dot_dimension_numbers<[1], [0], [0], [1], [0, 0, 1, 1], [], []>} : vector<8x32xf32>, vector<32x128xf32>, vector<8x128xf32> -> vector<8x128xf32>
    %c1_98 = arith.constant 1 : index
    %c0_99 = arith.constant 0 : index
    %c0_100 = arith.constant 0 : index
    %237 = vector.load %arg11[%c1_98, %c0_99, %c0_100] : memref<2x1x128xf32, #tpu.memory_space<vmem>>, vector<1x1x128xf32>
    %238 = vector.shape_cast %237 : vector<1x1x128xf32> to vector<1x128xf32>
    %239 = vector.broadcast %238 : vector<1x128xf32> to vector<8x128xf32>
    %240 = arith.addf %236, %239 : vector<8x128xf32>
    %cst_101 = arith.constant 5.000000e-01 : f32
    %241 = vector.broadcast %cst_101 : f32 to vector<8x128xf32>
    %242 = arith.mulf %241, %240 : vector<8x128xf32>
    %cst_102 = arith.constant 4.471500e-02 : f32
    %243 = vector.broadcast %cst_102 : f32 to vector<8x128xf32>
    %244 = arith.mulf %243, %240 : vector<8x128xf32>
    %245 = arith.mulf %244, %240 : vector<8x128xf32>
    %246 = arith.mulf %245, %240 : vector<8x128xf32>
    %247 = arith.addf %240, %246 : vector<8x128xf32>
    %cst_103 = arith.constant 0.797884583 : f32
    %248 = vector.broadcast %cst_103 : f32 to vector<8x128xf32>
    %249 = arith.mulf %248, %247 : vector<8x128xf32>
    %250 = math.tanh %249 : vector<8x128xf32>
    %cst_104 = arith.constant 1.000000e+00 : f32
    %251 = vector.broadcast %cst_104 : f32 to vector<8x128xf32>
    %252 = arith.addf %251, %250 : vector<8x128xf32>
    %253 = arith.mulf %242, %252 : vector<8x128xf32>
    %c1_105 = arith.constant 1 : index
    %c0_106 = arith.constant 0 : index
    %c0_107 = arith.constant 0 : index
    %254 = vector.load %arg12[%c1_105, %c0_106, %c0_107] : memref<2x128x32xf32, #tpu.memory_space<vmem>>, vector<1x128x32xf32>
    %255 = vector.shape_cast %254 : vector<1x128x32xf32> to vector<128x32xf32>
    %cst_108 = arith.constant dense<0.000000e+00> : vector<8x32xf32>
    %256 = tpu.matmul %253, %255, %cst_108 {dimension_numbers = #tpu.dot_dimension_numbers<[1], [0], [0], [1], [0, 0, 1, 1], [], []>} : vector<8x128xf32>, vector<128x32xf32>, vector<8x32xf32> -> vector<8x32xf32>
    %c1_109 = arith.constant 1 : index
    %c0_110 = arith.constant 0 : index
    %c0_111 = arith.constant 0 : index
    %257 = vector.load %arg13[%c1_109, %c0_110, %c0_111] : memref<2x1x32xf32, #tpu.memory_space<vmem>>, vector<1x1x32xf32>
    %258 = vector.shape_cast %257 : vector<1x1x32xf32> to vector<1x32xf32>
    %259 = vector.broadcast %258 : vector<1x32xf32> to vector<8x32xf32>
    %260 = arith.addf %256, %259 : vector<8x32xf32>
    %261 = arith.addf %233, %260 : vector<8x32xf32>
    %c1_112 = arith.constant 1 : index
    %c0_113 = arith.constant 0 : index
    %c0_114 = arith.constant 0 : index
    %262 = vector.load %arg14[%c1_112, %c0_113, %c0_114] : memref<2x1x32xf32, #tpu.memory_space<vmem>>, vector<1x1x32xf32>
    %263 = vector.shape_cast %262 : vector<1x1x32xf32> to vector<1x32xf32>
    %c1_115 = arith.constant 1 : index
    %c0_116 = arith.constant 0 : index
    %c0_117 = arith.constant 0 : index
    %264 = vector.load %arg15[%c1_115, %c0_116, %c0_117] : memref<2x1x32xf32, #tpu.memory_space<vmem>>, vector<1x1x32xf32>
    %265 = vector.shape_cast %264 : vector<1x1x32xf32> to vector<1x32xf32>
    %cst_118 = arith.constant dense<0.000000e+00> : vector<8xf32>
    %266 = vector.multi_reduction <add>, %261, %cst_118 [1] : vector<8x32xf32> to vector<8xf32>
    %267 = vector.shape_cast %266 : vector<8xf32> to vector<8x1xf32>
    %cst_119 = arith.constant 3.200000e+01 : f32
    %268 = vector.broadcast %cst_119 : f32 to vector<8x1xf32>
    %269 = arith.divf %267, %268 : vector<8x1xf32>
    %270 = vector.broadcast %269 : vector<8x1xf32> to vector<8x32xf32>
    %271 = arith.subf %261, %270 : vector<8x32xf32>
    %272 = arith.mulf %271, %271 : vector<8x32xf32>
    %cst_120 = arith.constant dense<0.000000e+00> : vector<8xf32>
    %273 = vector.multi_reduction <add>, %272, %cst_120 [1] : vector<8x32xf32> to vector<8xf32>
    %274 = vector.shape_cast %273 : vector<8xf32> to vector<8x1xf32>
    %cst_121 = arith.constant 3.200000e+01 : f32
    %275 = vector.broadcast %cst_121 : f32 to vector<8x1xf32>
    %276 = arith.divf %274, %275 : vector<8x1xf32>
    %cst_122 = arith.constant 9.99999974E-6 : f32
    %277 = vector.broadcast %cst_122 : f32 to vector<8x1xf32>
    %278 = arith.addf %276, %277 : vector<8x1xf32>
    %279 = math.rsqrt %278 : vector<8x1xf32>
    %280 = vector.broadcast %279 : vector<8x1xf32> to vector<8x32xf32>
    %281 = arith.mulf %271, %280 : vector<8x32xf32>
    %282 = vector.broadcast %263 : vector<1x32xf32> to vector<8x32xf32>
    %283 = arith.mulf %281, %282 : vector<8x32xf32>
    %284 = vector.broadcast %265 : vector<1x32xf32> to vector<8x32xf32>
    %285 = arith.addf %283, %284 : vector<8x32xf32>
    %cst_123 = arith.constant 0.000000e+00 : f32
    %286 = vector.broadcast %cst_123 : f32 to vector<2x32xf32>
    %287 = tpu.concatenate %286, %285, %286 in 0 : vector<2x32xf32>, vector<8x32xf32>, vector<2x32xf32> -> vector<12x32xf32>
    %288 = vector.extract_strided_slice %287 {offsets = [0, 0], sizes = [8, 32], strides = [1, 1]} : vector<12x32xf32> to vector<8x32xf32>
    %289 = vector.extract_strided_slice %287 {offsets = [1, 0], sizes = [8, 32], strides = [1, 1]} : vector<12x32xf32> to vector<8x32xf32>
    %290 = vector.extract_strided_slice %287 {offsets = [2, 0], sizes = [8, 32], strides = [1, 1]} : vector<12x32xf32> to vector<8x32xf32>
    %291 = vector.extract_strided_slice %287 {offsets = [3, 0], sizes = [8, 32], strides = [1, 1]} : vector<12x32xf32> to vector<8x32xf32>
    %292 = vector.extract_strided_slice %287 {offsets = [4, 0], sizes = [8, 32], strides = [1, 1]} : vector<12x32xf32> to vector<8x32xf32>
    %293 = tpu.concatenate %288, %289, %290, %291, %292 in 1 : vector<8x32xf32>, vector<8x32xf32>, vector<8x32xf32>, vector<8x32xf32>, vector<8x32xf32> -> vector<8x160xf32>
    %c0_124 = arith.constant 0 : index
    %c0_125 = arith.constant 0 : index
    %294 = vector.load %arg16[%c0_124, %c0_125] : memref<160x16xf32, #tpu.memory_space<vmem>>, vector<160x16xf32>
    %cst_126 = arith.constant dense<0.000000e+00> : vector<8x16xf32>
    %295 = tpu.matmul %293, %294, %cst_126 {dimension_numbers = #tpu.dot_dimension_numbers<[1], [0], [0], [1], [0, 0, 1, 1], [], []>} : vector<8x160xf32>, vector<160x16xf32>, vector<8x16xf32> -> vector<8x16xf32>
    %c0_127 = arith.constant 0 : index
    %c0_128 = arith.constant 0 : index
    %296 = vector.load %arg17[%c0_127, %c0_128] : memref<1x16xf32, #tpu.memory_space<vmem>>, vector<1x16xf32>
    %297 = vector.broadcast %296 : vector<1x16xf32> to vector<8x16xf32>
    %298 = arith.addf %295, %297 : vector<8x16xf32>
    %cst_129 = arith.constant 0.000000e+00 : f32
    %299 = vector.broadcast %cst_129 : f32 to vector<8x16xf32>
    %300 = arith.maximumf %298, %299 : vector<8x16xf32>
    %cst_130 = arith.constant 0.000000e+00 : f32
    %301 = vector.broadcast %cst_130 : f32 to vector<1x16xf32>
    %302 = tpu.concatenate %301, %300, %301 in 0 : vector<1x16xf32>, vector<8x16xf32>, vector<1x16xf32> -> vector<10x16xf32>
    %303 = vector.extract_strided_slice %302 {offsets = [0, 0], sizes = [8, 16], strides = [1, 1]} : vector<10x16xf32> to vector<8x16xf32>
    %304 = vector.extract_strided_slice %302 {offsets = [1, 0], sizes = [8, 16], strides = [1, 1]} : vector<10x16xf32> to vector<8x16xf32>
    %305 = vector.extract_strided_slice %302 {offsets = [2, 0], sizes = [8, 16], strides = [1, 1]} : vector<10x16xf32> to vector<8x16xf32>
    %306 = tpu.concatenate %303, %304, %305 in 1 : vector<8x16xf32>, vector<8x16xf32>, vector<8x16xf32> -> vector<8x48xf32>
    %c0_131 = arith.constant 0 : index
    %c0_132 = arith.constant 0 : index
    %307 = vector.load %arg18[%c0_131, %c0_132] : memref<48x8xf32, #tpu.memory_space<vmem>>, vector<48x8xf32>
    %cst_133 = arith.constant dense<0.000000e+00> : vector<8x8xf32>
    %308 = tpu.matmul %306, %307, %cst_133 {dimension_numbers = #tpu.dot_dimension_numbers<[1], [0], [0], [1], [0, 0, 1, 1], [], []>} : vector<8x48xf32>, vector<48x8xf32>, vector<8x8xf32> -> vector<8x8xf32>
    %c0_134 = arith.constant 0 : index
    %c0_135 = arith.constant 0 : index
    %309 = vector.load %arg19[%c0_134, %c0_135] : memref<1x8xf32, #tpu.memory_space<vmem>>, vector<1x8xf32>
    %310 = vector.broadcast %309 : vector<1x8xf32> to vector<8x8xf32>
    %311 = arith.addf %308, %310 : vector<8x8xf32>
    %cst_136 = arith.constant 0.000000e+00 : f32
    %312 = vector.broadcast %cst_136 : f32 to vector<8x8xf32>
    %313 = arith.maximumf %311, %312 : vector<8x8xf32>
    %cst_137 = arith.constant dense<0.000000e+00> : vector<8xf32>
    %314 = vector.multi_reduction <add>, %313, %cst_137 [1] : vector<8x8xf32> to vector<8xf32>
    %315 = vector.shape_cast %314 : vector<8xf32> to vector<8x1xf32>
    %cst_138 = arith.constant 8.000000e+00 : f32
    %316 = vector.broadcast %cst_138 : f32 to vector<8x1xf32>
    %317 = arith.divf %315, %316 : vector<8x1xf32>
    %c0_139 = arith.constant 0 : index
    %c0_140 = arith.constant 0 : index
    %c0_141 = arith.constant 0 : index
    %318 = vector.load %arg20[%c0_139, %c0_140, %c0_141] : memref<4x32x48xf32, #tpu.memory_space<vmem>>, vector<1x32x48xf32>
    %319 = vector.shape_cast %318 : vector<1x32x48xf32> to vector<32x48xf32>
    %cst_142 = arith.constant dense<0.000000e+00> : vector<8x48xf32>
    %320 = tpu.matmul %285, %319, %cst_142 {dimension_numbers = #tpu.dot_dimension_numbers<[1], [0], [0], [1], [0, 0, 1, 1], [], []>} : vector<8x32xf32>, vector<32x48xf32>, vector<8x48xf32> -> vector<8x48xf32>
    %c0_143 = arith.constant 0 : index
    %c0_144 = arith.constant 0 : index
    %c0_145 = arith.constant 0 : index
    %321 = vector.load %arg22[%c0_143, %c0_144, %c0_145] : memref<4x1x48xf32, #tpu.memory_space<vmem>>, vector<1x1x48xf32>
    %322 = vector.shape_cast %321 : vector<1x1x48xf32> to vector<1x48xf32>
    %323 = vector.broadcast %322 : vector<1x48xf32> to vector<8x48xf32>
    %324 = arith.addf %320, %323 : vector<8x48xf32>
    %c0_146 = arith.constant 0 : index
    %c0_147 = arith.constant 0 : index
    %c0_148 = arith.constant 0 : index
    %325 = vector.load %arg21[%c0_146, %c0_147, %c0_148] : memref<4x16x48xf32, #tpu.memory_space<vmem>>, vector<1x16x48xf32>
    %326 = vector.shape_cast %325 : vector<1x16x48xf32> to vector<16x48xf32>
    %c0_149 = arith.constant 0 : index
    %c0_150 = arith.constant 0 : index
    %c0_151 = arith.constant 0 : index
    %327 = vector.load %arg23[%c0_149, %c0_150, %c0_151] : memref<4x1x48xf32, #tpu.memory_space<vmem>>, vector<1x1x48xf32>
    %328 = vector.shape_cast %327 : vector<1x1x48xf32> to vector<1x48xf32>
    %cst_152 = arith.constant 0.000000e+00 : f32
    %329 = vector.broadcast %cst_152 : f32 to vector<1x16xf32>
    %cst_153 = arith.constant dense<0.000000e+00> : vector<1x48xf32>
    %330 = tpu.matmul %329, %326, %cst_153 {dimension_numbers = #tpu.dot_dimension_numbers<[1], [0], [0], [1], [0, 0, 1, 1], [], []>} : vector<1x16xf32>, vector<16x48xf32>, vector<1x48xf32> -> vector<1x48xf32>
    %331 = arith.addf %330, %328 : vector<1x48xf32>
    %332 = vector.extract_strided_slice %324 {offsets = [0, 0], sizes = [1, 48], strides = [1, 1]} : vector<8x48xf32> to vector<1x48xf32>
    %333 = vector.extract_strided_slice %332 {offsets = [0, 0], sizes = [1, 16], strides = [1, 1]} : vector<1x48xf32> to vector<1x16xf32>
    %334 = vector.extract_strided_slice %331 {offsets = [0, 0], sizes = [1, 16], strides = [1, 1]} : vector<1x48xf32> to vector<1x16xf32>
    %335 = arith.addf %333, %334 : vector<1x16xf32>
    %cst_154 = arith.constant 0.000000e+00 : f32
    %336 = vector.broadcast %cst_154 : f32 to vector<1x16xf32>
    %337 = arith.subf %336, %335 : vector<1x16xf32>
    %338 = math.exp %337 : vector<1x16xf32>
    %cst_155 = arith.constant 1.000000e+00 : f32
    %339 = vector.broadcast %cst_155 : f32 to vector<1x16xf32>
    %340 = arith.addf %339, %338 : vector<1x16xf32>
    %cst_156 = arith.constant 1.000000e+00 : f32
    %341 = vector.broadcast %cst_156 : f32 to vector<1x16xf32>
    %342 = arith.divf %341, %340 : vector<1x16xf32>
    %343 = vector.extract_strided_slice %332 {offsets = [0, 16], sizes = [1, 16], strides = [1, 1]} : vector<1x48xf32> to vector<1x16xf32>
    %344 = vector.extract_strided_slice %331 {offsets = [0, 16], sizes = [1, 16], strides = [1, 1]} : vector<1x48xf32> to vector<1x16xf32>
    %345 = arith.addf %343, %344 : vector<1x16xf32>
    %cst_157 = arith.constant 0.000000e+00 : f32
    %346 = vector.broadcast %cst_157 : f32 to vector<1x16xf32>
    %347 = arith.subf %346, %345 : vector<1x16xf32>
    %348 = math.exp %347 : vector<1x16xf32>
    %cst_158 = arith.constant 1.000000e+00 : f32
    %349 = vector.broadcast %cst_158 : f32 to vector<1x16xf32>
    %350 = arith.addf %349, %348 : vector<1x16xf32>
    %cst_159 = arith.constant 1.000000e+00 : f32
    %351 = vector.broadcast %cst_159 : f32 to vector<1x16xf32>
    %352 = arith.divf %351, %350 : vector<1x16xf32>
    %353 = vector.extract_strided_slice %332 {offsets = [0, 32], sizes = [1, 16], strides = [1, 1]} : vector<1x48xf32> to vector<1x16xf32>
    %354 = vector.extract_strided_slice %331 {offsets = [0, 32], sizes = [1, 16], strides = [1, 1]} : vector<1x48xf32> to vector<1x16xf32>
    %355 = arith.mulf %342, %354 : vector<1x16xf32>
    %356 = arith.addf %353, %355 : vector<1x16xf32>
    %357 = math.tanh %356 : vector<1x16xf32>
    %cst_160 = arith.constant 1.000000e+00 : f32
    %358 = vector.broadcast %cst_160 : f32 to vector<1x16xf32>
    %359 = arith.subf %358, %352 : vector<1x16xf32>
    %360 = arith.mulf %359, %357 : vector<1x16xf32>
    %361 = arith.mulf %352, %329 : vector<1x16xf32>
    %362 = arith.addf %360, %361 : vector<1x16xf32>
    %cst_161 = arith.constant dense<0.000000e+00> : vector<1x48xf32>
    %363 = tpu.matmul %362, %326, %cst_161 {dimension_numbers = #tpu.dot_dimension_numbers<[1], [0], [0], [1], [0, 0, 1, 1], [], []>} : vector<1x16xf32>, vector<16x48xf32>, vector<1x48xf32> -> vector<1x48xf32>
    %364 = arith.addf %363, %328 : vector<1x48xf32>
    %365 = vector.extract_strided_slice %324 {offsets = [1, 0], sizes = [1, 48], strides = [1, 1]} : vector<8x48xf32> to vector<1x48xf32>
    %366 = vector.extract_strided_slice %365 {offsets = [0, 0], sizes = [1, 16], strides = [1, 1]} : vector<1x48xf32> to vector<1x16xf32>
    %367 = vector.extract_strided_slice %364 {offsets = [0, 0], sizes = [1, 16], strides = [1, 1]} : vector<1x48xf32> to vector<1x16xf32>
    %368 = arith.addf %366, %367 : vector<1x16xf32>
    %cst_162 = arith.constant 0.000000e+00 : f32
    %369 = vector.broadcast %cst_162 : f32 to vector<1x16xf32>
    %370 = arith.subf %369, %368 : vector<1x16xf32>
    %371 = math.exp %370 : vector<1x16xf32>
    %cst_163 = arith.constant 1.000000e+00 : f32
    %372 = vector.broadcast %cst_163 : f32 to vector<1x16xf32>
    %373 = arith.addf %372, %371 : vector<1x16xf32>
    %cst_164 = arith.constant 1.000000e+00 : f32
    %374 = vector.broadcast %cst_164 : f32 to vector<1x16xf32>
    %375 = arith.divf %374, %373 : vector<1x16xf32>
    %376 = vector.extract_strided_slice %365 {offsets = [0, 16], sizes = [1, 16], strides = [1, 1]} : vector<1x48xf32> to vector<1x16xf32>
    %377 = vector.extract_strided_slice %364 {offsets = [0, 16], sizes = [1, 16], strides = [1, 1]} : vector<1x48xf32> to vector<1x16xf32>
    %378 = arith.addf %376, %377 : vector<1x16xf32>
    %cst_165 = arith.constant 0.000000e+00 : f32
    %379 = vector.broadcast %cst_165 : f32 to vector<1x16xf32>
    %380 = arith.subf %379, %378 : vector<1x16xf32>
    %381 = math.exp %380 : vector<1x16xf32>
    %cst_166 = arith.constant 1.000000e+00 : f32
    %382 = vector.broadcast %cst_166 : f32 to vector<1x16xf32>
    %383 = arith.addf %382, %381 : vector<1x16xf32>
    %cst_167 = arith.constant 1.000000e+00 : f32
    %384 = vector.broadcast %cst_167 : f32 to vector<1x16xf32>
    %385 = arith.divf %384, %383 : vector<1x16xf32>
    %386 = vector.extract_strided_slice %365 {offsets = [0, 32], sizes = [1, 16], strides = [1, 1]} : vector<1x48xf32> to vector<1x16xf32>
    %387 = vector.extract_strided_slice %364 {offsets = [0, 32], sizes = [1, 16], strides = [1, 1]} : vector<1x48xf32> to vector<1x16xf32>
    %388 = arith.mulf %375, %387 : vector<1x16xf32>
    %389 = arith.addf %386, %388 : vector<1x16xf32>
    %390 = math.tanh %389 : vector<1x16xf32>
    %cst_168 = arith.constant 1.000000e+00 : f32
    %391 = vector.broadcast %cst_168 : f32 to vector<1x16xf32>
    %392 = arith.subf %391, %385 : vector<1x16xf32>
    %393 = arith.mulf %392, %390 : vector<1x16xf32>
    %394 = arith.mulf %385, %362 : vector<1x16xf32>
    %395 = arith.addf %393, %394 : vector<1x16xf32>
    %cst_169 = arith.constant dense<0.000000e+00> : vector<1x48xf32>
    %396 = tpu.matmul %395, %326, %cst_169 {dimension_numbers = #tpu.dot_dimension_numbers<[1], [0], [0], [1], [0, 0, 1, 1], [], []>} : vector<1x16xf32>, vector<16x48xf32>, vector<1x48xf32> -> vector<1x48xf32>
    %397 = arith.addf %396, %328 : vector<1x48xf32>
    %398 = vector.extract_strided_slice %324 {offsets = [2, 0], sizes = [1, 48], strides = [1, 1]} : vector<8x48xf32> to vector<1x48xf32>
    %399 = vector.extract_strided_slice %398 {offsets = [0, 0], sizes = [1, 16], strides = [1, 1]} : vector<1x48xf32> to vector<1x16xf32>
    %400 = vector.extract_strided_slice %397 {offsets = [0, 0], sizes = [1, 16], strides = [1, 1]} : vector<1x48xf32> to vector<1x16xf32>
    %401 = arith.addf %399, %400 : vector<1x16xf32>
    %cst_170 = arith.constant 0.000000e+00 : f32
    %402 = vector.broadcast %cst_170 : f32 to vector<1x16xf32>
    %403 = arith.subf %402, %401 : vector<1x16xf32>
    %404 = math.exp %403 : vector<1x16xf32>
    %cst_171 = arith.constant 1.000000e+00 : f32
    %405 = vector.broadcast %cst_171 : f32 to vector<1x16xf32>
    %406 = arith.addf %405, %404 : vector<1x16xf32>
    %cst_172 = arith.constant 1.000000e+00 : f32
    %407 = vector.broadcast %cst_172 : f32 to vector<1x16xf32>
    %408 = arith.divf %407, %406 : vector<1x16xf32>
    %409 = vector.extract_strided_slice %398 {offsets = [0, 16], sizes = [1, 16], strides = [1, 1]} : vector<1x48xf32> to vector<1x16xf32>
    %410 = vector.extract_strided_slice %397 {offsets = [0, 16], sizes = [1, 16], strides = [1, 1]} : vector<1x48xf32> to vector<1x16xf32>
    %411 = arith.addf %409, %410 : vector<1x16xf32>
    %cst_173 = arith.constant 0.000000e+00 : f32
    %412 = vector.broadcast %cst_173 : f32 to vector<1x16xf32>
    %413 = arith.subf %412, %411 : vector<1x16xf32>
    %414 = math.exp %413 : vector<1x16xf32>
    %cst_174 = arith.constant 1.000000e+00 : f32
    %415 = vector.broadcast %cst_174 : f32 to vector<1x16xf32>
    %416 = arith.addf %415, %414 : vector<1x16xf32>
    %cst_175 = arith.constant 1.000000e+00 : f32
    %417 = vector.broadcast %cst_175 : f32 to vector<1x16xf32>
    %418 = arith.divf %417, %416 : vector<1x16xf32>
    %419 = vector.extract_strided_slice %398 {offsets = [0, 32], sizes = [1, 16], strides = [1, 1]} : vector<1x48xf32> to vector<1x16xf32>
    %420 = vector.extract_strided_slice %397 {offsets = [0, 32], sizes = [1, 16], strides = [1, 1]} : vector<1x48xf32> to vector<1x16xf32>
    %421 = arith.mulf %408, %420 : vector<1x16xf32>
    %422 = arith.addf %419, %421 : vector<1x16xf32>
    %423 = math.tanh %422 : vector<1x16xf32>
    %cst_176 = arith.constant 1.000000e+00 : f32
    %424 = vector.broadcast %cst_176 : f32 to vector<1x16xf32>
    %425 = arith.subf %424, %418 : vector<1x16xf32>
    %426 = arith.mulf %425, %423 : vector<1x16xf32>
    %427 = arith.mulf %418, %395 : vector<1x16xf32>
    %428 = arith.addf %426, %427 : vector<1x16xf32>
    %cst_177 = arith.constant dense<0.000000e+00> : vector<1x48xf32>
    %429 = tpu.matmul %428, %326, %cst_177 {dimension_numbers = #tpu.dot_dimension_numbers<[1], [0], [0], [1], [0, 0, 1, 1], [], []>} : vector<1x16xf32>, vector<16x48xf32>, vector<1x48xf32> -> vector<1x48xf32>
    %430 = arith.addf %429, %328 : vector<1x48xf32>
    %431 = vector.extract_strided_slice %324 {offsets = [3, 0], sizes = [1, 48], strides = [1, 1]} : vector<8x48xf32> to vector<1x48xf32>
    %432 = vector.extract_strided_slice %431 {offsets = [0, 0], sizes = [1, 16], strides = [1, 1]} : vector<1x48xf32> to vector<1x16xf32>
    %433 = vector.extract_strided_slice %430 {offsets = [0, 0], sizes = [1, 16], strides = [1, 1]} : vector<1x48xf32> to vector<1x16xf32>
    %434 = arith.addf %432, %433 : vector<1x16xf32>
    %cst_178 = arith.constant 0.000000e+00 : f32
    %435 = vector.broadcast %cst_178 : f32 to vector<1x16xf32>
    %436 = arith.subf %435, %434 : vector<1x16xf32>
    %437 = math.exp %436 : vector<1x16xf32>
    %cst_179 = arith.constant 1.000000e+00 : f32
    %438 = vector.broadcast %cst_179 : f32 to vector<1x16xf32>
    %439 = arith.addf %438, %437 : vector<1x16xf32>
    %cst_180 = arith.constant 1.000000e+00 : f32
    %440 = vector.broadcast %cst_180 : f32 to vector<1x16xf32>
    %441 = arith.divf %440, %439 : vector<1x16xf32>
    %442 = vector.extract_strided_slice %431 {offsets = [0, 16], sizes = [1, 16], strides = [1, 1]} : vector<1x48xf32> to vector<1x16xf32>
    %443 = vector.extract_strided_slice %430 {offsets = [0, 16], sizes = [1, 16], strides = [1, 1]} : vector<1x48xf32> to vector<1x16xf32>
    %444 = arith.addf %442, %443 : vector<1x16xf32>
    %cst_181 = arith.constant 0.000000e+00 : f32
    %445 = vector.broadcast %cst_181 : f32 to vector<1x16xf32>
    %446 = arith.subf %445, %444 : vector<1x16xf32>
    %447 = math.exp %446 : vector<1x16xf32>
    %cst_182 = arith.constant 1.000000e+00 : f32
    %448 = vector.broadcast %cst_182 : f32 to vector<1x16xf32>
    %449 = arith.addf %448, %447 : vector<1x16xf32>
    %cst_183 = arith.constant 1.000000e+00 : f32
    %450 = vector.broadcast %cst_183 : f32 to vector<1x16xf32>
    %451 = arith.divf %450, %449 : vector<1x16xf32>
    %452 = vector.extract_strided_slice %431 {offsets = [0, 32], sizes = [1, 16], strides = [1, 1]} : vector<1x48xf32> to vector<1x16xf32>
    %453 = vector.extract_strided_slice %430 {offsets = [0, 32], sizes = [1, 16], strides = [1, 1]} : vector<1x48xf32> to vector<1x16xf32>
    %454 = arith.mulf %441, %453 : vector<1x16xf32>
    %455 = arith.addf %452, %454 : vector<1x16xf32>
    %456 = math.tanh %455 : vector<1x16xf32>
    %cst_184 = arith.constant 1.000000e+00 : f32
    %457 = vector.broadcast %cst_184 : f32 to vector<1x16xf32>
    %458 = arith.subf %457, %451 : vector<1x16xf32>
    %459 = arith.mulf %458, %456 : vector<1x16xf32>
    %460 = arith.mulf %451, %428 : vector<1x16xf32>
    %461 = arith.addf %459, %460 : vector<1x16xf32>
    %cst_185 = arith.constant dense<0.000000e+00> : vector<1x48xf32>
    %462 = tpu.matmul %461, %326, %cst_185 {dimension_numbers = #tpu.dot_dimension_numbers<[1], [0], [0], [1], [0, 0, 1, 1], [], []>} : vector<1x16xf32>, vector<16x48xf32>, vector<1x48xf32> -> vector<1x48xf32>
    %463 = arith.addf %462, %328 : vector<1x48xf32>
    %464 = vector.extract_strided_slice %324 {offsets = [4, 0], sizes = [1, 48], strides = [1, 1]} : vector<8x48xf32> to vector<1x48xf32>
    %465 = vector.extract_strided_slice %464 {offsets = [0, 0], sizes = [1, 16], strides = [1, 1]} : vector<1x48xf32> to vector<1x16xf32>
    %466 = vector.extract_strided_slice %463 {offsets = [0, 0], sizes = [1, 16], strides = [1, 1]} : vector<1x48xf32> to vector<1x16xf32>
    %467 = arith.addf %465, %466 : vector<1x16xf32>
    %cst_186 = arith.constant 0.000000e+00 : f32
    %468 = vector.broadcast %cst_186 : f32 to vector<1x16xf32>
    %469 = arith.subf %468, %467 : vector<1x16xf32>
    %470 = math.exp %469 : vector<1x16xf32>
    %cst_187 = arith.constant 1.000000e+00 : f32
    %471 = vector.broadcast %cst_187 : f32 to vector<1x16xf32>
    %472 = arith.addf %471, %470 : vector<1x16xf32>
    %cst_188 = arith.constant 1.000000e+00 : f32
    %473 = vector.broadcast %cst_188 : f32 to vector<1x16xf32>
    %474 = arith.divf %473, %472 : vector<1x16xf32>
    %475 = vector.extract_strided_slice %464 {offsets = [0, 16], sizes = [1, 16], strides = [1, 1]} : vector<1x48xf32> to vector<1x16xf32>
    %476 = vector.extract_strided_slice %463 {offsets = [0, 16], sizes = [1, 16], strides = [1, 1]} : vector<1x48xf32> to vector<1x16xf32>
    %477 = arith.addf %475, %476 : vector<1x16xf32>
    %cst_189 = arith.constant 0.000000e+00 : f32
    %478 = vector.broadcast %cst_189 : f32 to vector<1x16xf32>
    %479 = arith.subf %478, %477 : vector<1x16xf32>
    %480 = math.exp %479 : vector<1x16xf32>
    %cst_190 = arith.constant 1.000000e+00 : f32
    %481 = vector.broadcast %cst_190 : f32 to vector<1x16xf32>
    %482 = arith.addf %481, %480 : vector<1x16xf32>
    %cst_191 = arith.constant 1.000000e+00 : f32
    %483 = vector.broadcast %cst_191 : f32 to vector<1x16xf32>
    %484 = arith.divf %483, %482 : vector<1x16xf32>
    %485 = vector.extract_strided_slice %464 {offsets = [0, 32], sizes = [1, 16], strides = [1, 1]} : vector<1x48xf32> to vector<1x16xf32>
    %486 = vector.extract_strided_slice %463 {offsets = [0, 32], sizes = [1, 16], strides = [1, 1]} : vector<1x48xf32> to vector<1x16xf32>
    %487 = arith.mulf %474, %486 : vector<1x16xf32>
    %488 = arith.addf %485, %487 : vector<1x16xf32>
    %489 = math.tanh %488 : vector<1x16xf32>
    %cst_192 = arith.constant 1.000000e+00 : f32
    %490 = vector.broadcast %cst_192 : f32 to vector<1x16xf32>
    %491 = arith.subf %490, %484 : vector<1x16xf32>
    %492 = arith.mulf %491, %489 : vector<1x16xf32>
    %493 = arith.mulf %484, %461 : vector<1x16xf32>
    %494 = arith.addf %492, %493 : vector<1x16xf32>
    %cst_193 = arith.constant dense<0.000000e+00> : vector<1x48xf32>
    %495 = tpu.matmul %494, %326, %cst_193 {dimension_numbers = #tpu.dot_dimension_numbers<[1], [0], [0], [1], [0, 0, 1, 1], [], []>} : vector<1x16xf32>, vector<16x48xf32>, vector<1x48xf32> -> vector<1x48xf32>
    %496 = arith.addf %495, %328 : vector<1x48xf32>
    %497 = vector.extract_strided_slice %324 {offsets = [5, 0], sizes = [1, 48], strides = [1, 1]} : vector<8x48xf32> to vector<1x48xf32>
    %498 = vector.extract_strided_slice %497 {offsets = [0, 0], sizes = [1, 16], strides = [1, 1]} : vector<1x48xf32> to vector<1x16xf32>
    %499 = vector.extract_strided_slice %496 {offsets = [0, 0], sizes = [1, 16], strides = [1, 1]} : vector<1x48xf32> to vector<1x16xf32>
    %500 = arith.addf %498, %499 : vector<1x16xf32>
    %cst_194 = arith.constant 0.000000e+00 : f32
    %501 = vector.broadcast %cst_194 : f32 to vector<1x16xf32>
    %502 = arith.subf %501, %500 : vector<1x16xf32>
    %503 = math.exp %502 : vector<1x16xf32>
    %cst_195 = arith.constant 1.000000e+00 : f32
    %504 = vector.broadcast %cst_195 : f32 to vector<1x16xf32>
    %505 = arith.addf %504, %503 : vector<1x16xf32>
    %cst_196 = arith.constant 1.000000e+00 : f32
    %506 = vector.broadcast %cst_196 : f32 to vector<1x16xf32>
    %507 = arith.divf %506, %505 : vector<1x16xf32>
    %508 = vector.extract_strided_slice %497 {offsets = [0, 16], sizes = [1, 16], strides = [1, 1]} : vector<1x48xf32> to vector<1x16xf32>
    %509 = vector.extract_strided_slice %496 {offsets = [0, 16], sizes = [1, 16], strides = [1, 1]} : vector<1x48xf32> to vector<1x16xf32>
    %510 = arith.addf %508, %509 : vector<1x16xf32>
    %cst_197 = arith.constant 0.000000e+00 : f32
    %511 = vector.broadcast %cst_197 : f32 to vector<1x16xf32>
    %512 = arith.subf %511, %510 : vector<1x16xf32>
    %513 = math.exp %512 : vector<1x16xf32>
    %cst_198 = arith.constant 1.000000e+00 : f32
    %514 = vector.broadcast %cst_198 : f32 to vector<1x16xf32>
    %515 = arith.addf %514, %513 : vector<1x16xf32>
    %cst_199 = arith.constant 1.000000e+00 : f32
    %516 = vector.broadcast %cst_199 : f32 to vector<1x16xf32>
    %517 = arith.divf %516, %515 : vector<1x16xf32>
    %518 = vector.extract_strided_slice %497 {offsets = [0, 32], sizes = [1, 16], strides = [1, 1]} : vector<1x48xf32> to vector<1x16xf32>
    %519 = vector.extract_strided_slice %496 {offsets = [0, 32], sizes = [1, 16], strides = [1, 1]} : vector<1x48xf32> to vector<1x16xf32>
    %520 = arith.mulf %507, %519 : vector<1x16xf32>
    %521 = arith.addf %518, %520 : vector<1x16xf32>
    %522 = math.tanh %521 : vector<1x16xf32>
    %cst_200 = arith.constant 1.000000e+00 : f32
    %523 = vector.broadcast %cst_200 : f32 to vector<1x16xf32>
    %524 = arith.subf %523, %517 : vector<1x16xf32>
    %525 = arith.mulf %524, %522 : vector<1x16xf32>
    %526 = arith.mulf %517, %494 : vector<1x16xf32>
    %527 = arith.addf %525, %526 : vector<1x16xf32>
    %cst_201 = arith.constant dense<0.000000e+00> : vector<1x48xf32>
    %528 = tpu.matmul %527, %326, %cst_201 {dimension_numbers = #tpu.dot_dimension_numbers<[1], [0], [0], [1], [0, 0, 1, 1], [], []>} : vector<1x16xf32>, vector<16x48xf32>, vector<1x48xf32> -> vector<1x48xf32>
    %529 = arith.addf %528, %328 : vector<1x48xf32>
    %530 = vector.extract_strided_slice %324 {offsets = [6, 0], sizes = [1, 48], strides = [1, 1]} : vector<8x48xf32> to vector<1x48xf32>
    %531 = vector.extract_strided_slice %530 {offsets = [0, 0], sizes = [1, 16], strides = [1, 1]} : vector<1x48xf32> to vector<1x16xf32>
    %532 = vector.extract_strided_slice %529 {offsets = [0, 0], sizes = [1, 16], strides = [1, 1]} : vector<1x48xf32> to vector<1x16xf32>
    %533 = arith.addf %531, %532 : vector<1x16xf32>
    %cst_202 = arith.constant 0.000000e+00 : f32
    %534 = vector.broadcast %cst_202 : f32 to vector<1x16xf32>
    %535 = arith.subf %534, %533 : vector<1x16xf32>
    %536 = math.exp %535 : vector<1x16xf32>
    %cst_203 = arith.constant 1.000000e+00 : f32
    %537 = vector.broadcast %cst_203 : f32 to vector<1x16xf32>
    %538 = arith.addf %537, %536 : vector<1x16xf32>
    %cst_204 = arith.constant 1.000000e+00 : f32
    %539 = vector.broadcast %cst_204 : f32 to vector<1x16xf32>
    %540 = arith.divf %539, %538 : vector<1x16xf32>
    %541 = vector.extract_strided_slice %530 {offsets = [0, 16], sizes = [1, 16], strides = [1, 1]} : vector<1x48xf32> to vector<1x16xf32>
    %542 = vector.extract_strided_slice %529 {offsets = [0, 16], sizes = [1, 16], strides = [1, 1]} : vector<1x48xf32> to vector<1x16xf32>
    %543 = arith.addf %541, %542 : vector<1x16xf32>
    %cst_205 = arith.constant 0.000000e+00 : f32
    %544 = vector.broadcast %cst_205 : f32 to vector<1x16xf32>
    %545 = arith.subf %544, %543 : vector<1x16xf32>
    %546 = math.exp %545 : vector<1x16xf32>
    %cst_206 = arith.constant 1.000000e+00 : f32
    %547 = vector.broadcast %cst_206 : f32 to vector<1x16xf32>
    %548 = arith.addf %547, %546 : vector<1x16xf32>
    %cst_207 = arith.constant 1.000000e+00 : f32
    %549 = vector.broadcast %cst_207 : f32 to vector<1x16xf32>
    %550 = arith.divf %549, %548 : vector<1x16xf32>
    %551 = vector.extract_strided_slice %530 {offsets = [0, 32], sizes = [1, 16], strides = [1, 1]} : vector<1x48xf32> to vector<1x16xf32>
    %552 = vector.extract_strided_slice %529 {offsets = [0, 32], sizes = [1, 16], strides = [1, 1]} : vector<1x48xf32> to vector<1x16xf32>
    %553 = arith.mulf %540, %552 : vector<1x16xf32>
    %554 = arith.addf %551, %553 : vector<1x16xf32>
    %555 = math.tanh %554 : vector<1x16xf32>
    %cst_208 = arith.constant 1.000000e+00 : f32
    %556 = vector.broadcast %cst_208 : f32 to vector<1x16xf32>
    %557 = arith.subf %556, %550 : vector<1x16xf32>
    %558 = arith.mulf %557, %555 : vector<1x16xf32>
    %559 = arith.mulf %550, %527 : vector<1x16xf32>
    %560 = arith.addf %558, %559 : vector<1x16xf32>
    %cst_209 = arith.constant dense<0.000000e+00> : vector<1x48xf32>
    %561 = tpu.matmul %560, %326, %cst_209 {dimension_numbers = #tpu.dot_dimension_numbers<[1], [0], [0], [1], [0, 0, 1, 1], [], []>} : vector<1x16xf32>, vector<16x48xf32>, vector<1x48xf32> -> vector<1x48xf32>
    %562 = arith.addf %561, %328 : vector<1x48xf32>
    %563 = vector.extract_strided_slice %324 {offsets = [7, 0], sizes = [1, 48], strides = [1, 1]} : vector<8x48xf32> to vector<1x48xf32>
    %564 = vector.extract_strided_slice %563 {offsets = [0, 0], sizes = [1, 16], strides = [1, 1]} : vector<1x48xf32> to vector<1x16xf32>
    %565 = vector.extract_strided_slice %562 {offsets = [0, 0], sizes = [1, 16], strides = [1, 1]} : vector<1x48xf32> to vector<1x16xf32>
    %566 = arith.addf %564, %565 : vector<1x16xf32>
    %cst_210 = arith.constant 0.000000e+00 : f32
    %567 = vector.broadcast %cst_210 : f32 to vector<1x16xf32>
    %568 = arith.subf %567, %566 : vector<1x16xf32>
    %569 = math.exp %568 : vector<1x16xf32>
    %cst_211 = arith.constant 1.000000e+00 : f32
    %570 = vector.broadcast %cst_211 : f32 to vector<1x16xf32>
    %571 = arith.addf %570, %569 : vector<1x16xf32>
    %cst_212 = arith.constant 1.000000e+00 : f32
    %572 = vector.broadcast %cst_212 : f32 to vector<1x16xf32>
    %573 = arith.divf %572, %571 : vector<1x16xf32>
    %574 = vector.extract_strided_slice %563 {offsets = [0, 16], sizes = [1, 16], strides = [1, 1]} : vector<1x48xf32> to vector<1x16xf32>
    %575 = vector.extract_strided_slice %562 {offsets = [0, 16], sizes = [1, 16], strides = [1, 1]} : vector<1x48xf32> to vector<1x16xf32>
    %576 = arith.addf %574, %575 : vector<1x16xf32>
    %cst_213 = arith.constant 0.000000e+00 : f32
    %577 = vector.broadcast %cst_213 : f32 to vector<1x16xf32>
    %578 = arith.subf %577, %576 : vector<1x16xf32>
    %579 = math.exp %578 : vector<1x16xf32>
    %cst_214 = arith.constant 1.000000e+00 : f32
    %580 = vector.broadcast %cst_214 : f32 to vector<1x16xf32>
    %581 = arith.addf %580, %579 : vector<1x16xf32>
    %cst_215 = arith.constant 1.000000e+00 : f32
    %582 = vector.broadcast %cst_215 : f32 to vector<1x16xf32>
    %583 = arith.divf %582, %581 : vector<1x16xf32>
    %584 = vector.extract_strided_slice %563 {offsets = [0, 32], sizes = [1, 16], strides = [1, 1]} : vector<1x48xf32> to vector<1x16xf32>
    %585 = vector.extract_strided_slice %562 {offsets = [0, 32], sizes = [1, 16], strides = [1, 1]} : vector<1x48xf32> to vector<1x16xf32>
    %586 = arith.mulf %573, %585 : vector<1x16xf32>
    %587 = arith.addf %584, %586 : vector<1x16xf32>
    %588 = math.tanh %587 : vector<1x16xf32>
    %cst_216 = arith.constant 1.000000e+00 : f32
    %589 = vector.broadcast %cst_216 : f32 to vector<1x16xf32>
    %590 = arith.subf %589, %583 : vector<1x16xf32>
    %591 = arith.mulf %590, %588 : vector<1x16xf32>
    %592 = arith.mulf %583, %560 : vector<1x16xf32>
    %593 = arith.addf %591, %592 : vector<1x16xf32>
    %594 = tpu.concatenate %362, %395, %428, %461, %494, %527, %560, %593 in 0 : vector<1x16xf32>, vector<1x16xf32>, vector<1x16xf32>, vector<1x16xf32>, vector<1x16xf32>, vector<1x16xf32>, vector<1x16xf32>, vector<1x16xf32> -> vector<8x16xf32>
    %c1_217 = arith.constant 1 : index
    %c0_218 = arith.constant 0 : index
    %c0_219 = arith.constant 0 : index
    %595 = vector.load %arg20[%c1_217, %c0_218, %c0_219] : memref<4x32x48xf32, #tpu.memory_space<vmem>>, vector<1x32x48xf32>
    %596 = vector.shape_cast %595 : vector<1x32x48xf32> to vector<32x48xf32>
    %cst_220 = arith.constant dense<0.000000e+00> : vector<8x48xf32>
    %597 = tpu.matmul %285, %596, %cst_220 {dimension_numbers = #tpu.dot_dimension_numbers<[1], [0], [0], [1], [0, 0, 1, 1], [], []>} : vector<8x32xf32>, vector<32x48xf32>, vector<8x48xf32> -> vector<8x48xf32>
    %c1_221 = arith.constant 1 : index
    %c0_222 = arith.constant 0 : index
    %c0_223 = arith.constant 0 : index
    %598 = vector.load %arg22[%c1_221, %c0_222, %c0_223] : memref<4x1x48xf32, #tpu.memory_space<vmem>>, vector<1x1x48xf32>
    %599 = vector.shape_cast %598 : vector<1x1x48xf32> to vector<1x48xf32>
    %600 = vector.broadcast %599 : vector<1x48xf32> to vector<8x48xf32>
    %601 = arith.addf %597, %600 : vector<8x48xf32>
    %c1_224 = arith.constant 1 : index
    %c0_225 = arith.constant 0 : index
    %c0_226 = arith.constant 0 : index
    %602 = vector.load %arg21[%c1_224, %c0_225, %c0_226] : memref<4x16x48xf32, #tpu.memory_space<vmem>>, vector<1x16x48xf32>
    %603 = vector.shape_cast %602 : vector<1x16x48xf32> to vector<16x48xf32>
    %c1_227 = arith.constant 1 : index
    %c0_228 = arith.constant 0 : index
    %c0_229 = arith.constant 0 : index
    %604 = vector.load %arg23[%c1_227, %c0_228, %c0_229] : memref<4x1x48xf32, #tpu.memory_space<vmem>>, vector<1x1x48xf32>
    %605 = vector.shape_cast %604 : vector<1x1x48xf32> to vector<1x48xf32>
    %cst_230 = arith.constant 0.000000e+00 : f32
    %606 = vector.broadcast %cst_230 : f32 to vector<1x16xf32>
    %cst_231 = arith.constant dense<0.000000e+00> : vector<1x48xf32>
    %607 = tpu.matmul %606, %603, %cst_231 {dimension_numbers = #tpu.dot_dimension_numbers<[1], [0], [0], [1], [0, 0, 1, 1], [], []>} : vector<1x16xf32>, vector<16x48xf32>, vector<1x48xf32> -> vector<1x48xf32>
    %608 = arith.addf %607, %605 : vector<1x48xf32>
    %609 = vector.extract_strided_slice %601 {offsets = [7, 0], sizes = [1, 48], strides = [1, 1]} : vector<8x48xf32> to vector<1x48xf32>
    %610 = vector.extract_strided_slice %609 {offsets = [0, 0], sizes = [1, 16], strides = [1, 1]} : vector<1x48xf32> to vector<1x16xf32>
    %611 = vector.extract_strided_slice %608 {offsets = [0, 0], sizes = [1, 16], strides = [1, 1]} : vector<1x48xf32> to vector<1x16xf32>
    %612 = arith.addf %610, %611 : vector<1x16xf32>
    %cst_232 = arith.constant 0.000000e+00 : f32
    %613 = vector.broadcast %cst_232 : f32 to vector<1x16xf32>
    %614 = arith.subf %613, %612 : vector<1x16xf32>
    %615 = math.exp %614 : vector<1x16xf32>
    %cst_233 = arith.constant 1.000000e+00 : f32
    %616 = vector.broadcast %cst_233 : f32 to vector<1x16xf32>
    %617 = arith.addf %616, %615 : vector<1x16xf32>
    %cst_234 = arith.constant 1.000000e+00 : f32
    %618 = vector.broadcast %cst_234 : f32 to vector<1x16xf32>
    %619 = arith.divf %618, %617 : vector<1x16xf32>
    %620 = vector.extract_strided_slice %609 {offsets = [0, 16], sizes = [1, 16], strides = [1, 1]} : vector<1x48xf32> to vector<1x16xf32>
    %621 = vector.extract_strided_slice %608 {offsets = [0, 16], sizes = [1, 16], strides = [1, 1]} : vector<1x48xf32> to vector<1x16xf32>
    %622 = arith.addf %620, %621 : vector<1x16xf32>
    %cst_235 = arith.constant 0.000000e+00 : f32
    %623 = vector.broadcast %cst_235 : f32 to vector<1x16xf32>
    %624 = arith.subf %623, %622 : vector<1x16xf32>
    %625 = math.exp %624 : vector<1x16xf32>
    %cst_236 = arith.constant 1.000000e+00 : f32
    %626 = vector.broadcast %cst_236 : f32 to vector<1x16xf32>
    %627 = arith.addf %626, %625 : vector<1x16xf32>
    %cst_237 = arith.constant 1.000000e+00 : f32
    %628 = vector.broadcast %cst_237 : f32 to vector<1x16xf32>
    %629 = arith.divf %628, %627 : vector<1x16xf32>
    %630 = vector.extract_strided_slice %609 {offsets = [0, 32], sizes = [1, 16], strides = [1, 1]} : vector<1x48xf32> to vector<1x16xf32>
    %631 = vector.extract_strided_slice %608 {offsets = [0, 32], sizes = [1, 16], strides = [1, 1]} : vector<1x48xf32> to vector<1x16xf32>
    %632 = arith.mulf %619, %631 : vector<1x16xf32>
    %633 = arith.addf %630, %632 : vector<1x16xf32>
    %634 = math.tanh %633 : vector<1x16xf32>
    %cst_238 = arith.constant 1.000000e+00 : f32
    %635 = vector.broadcast %cst_238 : f32 to vector<1x16xf32>
    %636 = arith.subf %635, %629 : vector<1x16xf32>
    %637 = arith.mulf %636, %634 : vector<1x16xf32>
    %638 = arith.mulf %629, %606 : vector<1x16xf32>
    %639 = arith.addf %637, %638 : vector<1x16xf32>
    %cst_239 = arith.constant dense<0.000000e+00> : vector<1x48xf32>
    %640 = tpu.matmul %639, %603, %cst_239 {dimension_numbers = #tpu.dot_dimension_numbers<[1], [0], [0], [1], [0, 0, 1, 1], [], []>} : vector<1x16xf32>, vector<16x48xf32>, vector<1x48xf32> -> vector<1x48xf32>
    %641 = arith.addf %640, %605 : vector<1x48xf32>
    %642 = vector.extract_strided_slice %601 {offsets = [6, 0], sizes = [1, 48], strides = [1, 1]} : vector<8x48xf32> to vector<1x48xf32>
    %643 = vector.extract_strided_slice %642 {offsets = [0, 0], sizes = [1, 16], strides = [1, 1]} : vector<1x48xf32> to vector<1x16xf32>
    %644 = vector.extract_strided_slice %641 {offsets = [0, 0], sizes = [1, 16], strides = [1, 1]} : vector<1x48xf32> to vector<1x16xf32>
    %645 = arith.addf %643, %644 : vector<1x16xf32>
    %cst_240 = arith.constant 0.000000e+00 : f32
    %646 = vector.broadcast %cst_240 : f32 to vector<1x16xf32>
    %647 = arith.subf %646, %645 : vector<1x16xf32>
    %648 = math.exp %647 : vector<1x16xf32>
    %cst_241 = arith.constant 1.000000e+00 : f32
    %649 = vector.broadcast %cst_241 : f32 to vector<1x16xf32>
    %650 = arith.addf %649, %648 : vector<1x16xf32>
    %cst_242 = arith.constant 1.000000e+00 : f32
    %651 = vector.broadcast %cst_242 : f32 to vector<1x16xf32>
    %652 = arith.divf %651, %650 : vector<1x16xf32>
    %653 = vector.extract_strided_slice %642 {offsets = [0, 16], sizes = [1, 16], strides = [1, 1]} : vector<1x48xf32> to vector<1x16xf32>
    %654 = vector.extract_strided_slice %641 {offsets = [0, 16], sizes = [1, 16], strides = [1, 1]} : vector<1x48xf32> to vector<1x16xf32>
    %655 = arith.addf %653, %654 : vector<1x16xf32>
    %cst_243 = arith.constant 0.000000e+00 : f32
    %656 = vector.broadcast %cst_243 : f32 to vector<1x16xf32>
    %657 = arith.subf %656, %655 : vector<1x16xf32>
    %658 = math.exp %657 : vector<1x16xf32>
    %cst_244 = arith.constant 1.000000e+00 : f32
    %659 = vector.broadcast %cst_244 : f32 to vector<1x16xf32>
    %660 = arith.addf %659, %658 : vector<1x16xf32>
    %cst_245 = arith.constant 1.000000e+00 : f32
    %661 = vector.broadcast %cst_245 : f32 to vector<1x16xf32>
    %662 = arith.divf %661, %660 : vector<1x16xf32>
    %663 = vector.extract_strided_slice %642 {offsets = [0, 32], sizes = [1, 16], strides = [1, 1]} : vector<1x48xf32> to vector<1x16xf32>
    %664 = vector.extract_strided_slice %641 {offsets = [0, 32], sizes = [1, 16], strides = [1, 1]} : vector<1x48xf32> to vector<1x16xf32>
    %665 = arith.mulf %652, %664 : vector<1x16xf32>
    %666 = arith.addf %663, %665 : vector<1x16xf32>
    %667 = math.tanh %666 : vector<1x16xf32>
    %cst_246 = arith.constant 1.000000e+00 : f32
    %668 = vector.broadcast %cst_246 : f32 to vector<1x16xf32>
    %669 = arith.subf %668, %662 : vector<1x16xf32>
    %670 = arith.mulf %669, %667 : vector<1x16xf32>
    %671 = arith.mulf %662, %639 : vector<1x16xf32>
    %672 = arith.addf %670, %671 : vector<1x16xf32>
    %cst_247 = arith.constant dense<0.000000e+00> : vector<1x48xf32>
    %673 = tpu.matmul %672, %603, %cst_247 {dimension_numbers = #tpu.dot_dimension_numbers<[1], [0], [0], [1], [0, 0, 1, 1], [], []>} : vector<1x16xf32>, vector<16x48xf32>, vector<1x48xf32> -> vector<1x48xf32>
    %674 = arith.addf %673, %605 : vector<1x48xf32>
    %675 = vector.extract_strided_slice %601 {offsets = [5, 0], sizes = [1, 48], strides = [1, 1]} : vector<8x48xf32> to vector<1x48xf32>
    %676 = vector.extract_strided_slice %675 {offsets = [0, 0], sizes = [1, 16], strides = [1, 1]} : vector<1x48xf32> to vector<1x16xf32>
    %677 = vector.extract_strided_slice %674 {offsets = [0, 0], sizes = [1, 16], strides = [1, 1]} : vector<1x48xf32> to vector<1x16xf32>
    %678 = arith.addf %676, %677 : vector<1x16xf32>
    %cst_248 = arith.constant 0.000000e+00 : f32
    %679 = vector.broadcast %cst_248 : f32 to vector<1x16xf32>
    %680 = arith.subf %679, %678 : vector<1x16xf32>
    %681 = math.exp %680 : vector<1x16xf32>
    %cst_249 = arith.constant 1.000000e+00 : f32
    %682 = vector.broadcast %cst_249 : f32 to vector<1x16xf32>
    %683 = arith.addf %682, %681 : vector<1x16xf32>
    %cst_250 = arith.constant 1.000000e+00 : f32
    %684 = vector.broadcast %cst_250 : f32 to vector<1x16xf32>
    %685 = arith.divf %684, %683 : vector<1x16xf32>
    %686 = vector.extract_strided_slice %675 {offsets = [0, 16], sizes = [1, 16], strides = [1, 1]} : vector<1x48xf32> to vector<1x16xf32>
    %687 = vector.extract_strided_slice %674 {offsets = [0, 16], sizes = [1, 16], strides = [1, 1]} : vector<1x48xf32> to vector<1x16xf32>
    %688 = arith.addf %686, %687 : vector<1x16xf32>
    %cst_251 = arith.constant 0.000000e+00 : f32
    %689 = vector.broadcast %cst_251 : f32 to vector<1x16xf32>
    %690 = arith.subf %689, %688 : vector<1x16xf32>
    %691 = math.exp %690 : vector<1x16xf32>
    %cst_252 = arith.constant 1.000000e+00 : f32
    %692 = vector.broadcast %cst_252 : f32 to vector<1x16xf32>
    %693 = arith.addf %692, %691 : vector<1x16xf32>
    %cst_253 = arith.constant 1.000000e+00 : f32
    %694 = vector.broadcast %cst_253 : f32 to vector<1x16xf32>
    %695 = arith.divf %694, %693 : vector<1x16xf32>
    %696 = vector.extract_strided_slice %675 {offsets = [0, 32], sizes = [1, 16], strides = [1, 1]} : vector<1x48xf32> to vector<1x16xf32>
    %697 = vector.extract_strided_slice %674 {offsets = [0, 32], sizes = [1, 16], strides = [1, 1]} : vector<1x48xf32> to vector<1x16xf32>
    %698 = arith.mulf %685, %697 : vector<1x16xf32>
    %699 = arith.addf %696, %698 : vector<1x16xf32>
    %700 = math.tanh %699 : vector<1x16xf32>
    %cst_254 = arith.constant 1.000000e+00 : f32
    %701 = vector.broadcast %cst_254 : f32 to vector<1x16xf32>
    %702 = arith.subf %701, %695 : vector<1x16xf32>
    %703 = arith.mulf %702, %700 : vector<1x16xf32>
    %704 = arith.mulf %695, %672 : vector<1x16xf32>
    %705 = arith.addf %703, %704 : vector<1x16xf32>
    %cst_255 = arith.constant dense<0.000000e+00> : vector<1x48xf32>
    %706 = tpu.matmul %705, %603, %cst_255 {dimension_numbers = #tpu.dot_dimension_numbers<[1], [0], [0], [1], [0, 0, 1, 1], [], []>} : vector<1x16xf32>, vector<16x48xf32>, vector<1x48xf32> -> vector<1x48xf32>
    %707 = arith.addf %706, %605 : vector<1x48xf32>
    %708 = vector.extract_strided_slice %601 {offsets = [4, 0], sizes = [1, 48], strides = [1, 1]} : vector<8x48xf32> to vector<1x48xf32>
    %709 = vector.extract_strided_slice %708 {offsets = [0, 0], sizes = [1, 16], strides = [1, 1]} : vector<1x48xf32> to vector<1x16xf32>
    %710 = vector.extract_strided_slice %707 {offsets = [0, 0], sizes = [1, 16], strides = [1, 1]} : vector<1x48xf32> to vector<1x16xf32>
    %711 = arith.addf %709, %710 : vector<1x16xf32>
    %cst_256 = arith.constant 0.000000e+00 : f32
    %712 = vector.broadcast %cst_256 : f32 to vector<1x16xf32>
    %713 = arith.subf %712, %711 : vector<1x16xf32>
    %714 = math.exp %713 : vector<1x16xf32>
    %cst_257 = arith.constant 1.000000e+00 : f32
    %715 = vector.broadcast %cst_257 : f32 to vector<1x16xf32>
    %716 = arith.addf %715, %714 : vector<1x16xf32>
    %cst_258 = arith.constant 1.000000e+00 : f32
    %717 = vector.broadcast %cst_258 : f32 to vector<1x16xf32>
    %718 = arith.divf %717, %716 : vector<1x16xf32>
    %719 = vector.extract_strided_slice %708 {offsets = [0, 16], sizes = [1, 16], strides = [1, 1]} : vector<1x48xf32> to vector<1x16xf32>
    %720 = vector.extract_strided_slice %707 {offsets = [0, 16], sizes = [1, 16], strides = [1, 1]} : vector<1x48xf32> to vector<1x16xf32>
    %721 = arith.addf %719, %720 : vector<1x16xf32>
    %cst_259 = arith.constant 0.000000e+00 : f32
    %722 = vector.broadcast %cst_259 : f32 to vector<1x16xf32>
    %723 = arith.subf %722, %721 : vector<1x16xf32>
    %724 = math.exp %723 : vector<1x16xf32>
    %cst_260 = arith.constant 1.000000e+00 : f32
    %725 = vector.broadcast %cst_260 : f32 to vector<1x16xf32>
    %726 = arith.addf %725, %724 : vector<1x16xf32>
    %cst_261 = arith.constant 1.000000e+00 : f32
    %727 = vector.broadcast %cst_261 : f32 to vector<1x16xf32>
    %728 = arith.divf %727, %726 : vector<1x16xf32>
    %729 = vector.extract_strided_slice %708 {offsets = [0, 32], sizes = [1, 16], strides = [1, 1]} : vector<1x48xf32> to vector<1x16xf32>
    %730 = vector.extract_strided_slice %707 {offsets = [0, 32], sizes = [1, 16], strides = [1, 1]} : vector<1x48xf32> to vector<1x16xf32>
    %731 = arith.mulf %718, %730 : vector<1x16xf32>
    %732 = arith.addf %729, %731 : vector<1x16xf32>
    %733 = math.tanh %732 : vector<1x16xf32>
    %cst_262 = arith.constant 1.000000e+00 : f32
    %734 = vector.broadcast %cst_262 : f32 to vector<1x16xf32>
    %735 = arith.subf %734, %728 : vector<1x16xf32>
    %736 = arith.mulf %735, %733 : vector<1x16xf32>
    %737 = arith.mulf %728, %705 : vector<1x16xf32>
    %738 = arith.addf %736, %737 : vector<1x16xf32>
    %cst_263 = arith.constant dense<0.000000e+00> : vector<1x48xf32>
    %739 = tpu.matmul %738, %603, %cst_263 {dimension_numbers = #tpu.dot_dimension_numbers<[1], [0], [0], [1], [0, 0, 1, 1], [], []>} : vector<1x16xf32>, vector<16x48xf32>, vector<1x48xf32> -> vector<1x48xf32>
    %740 = arith.addf %739, %605 : vector<1x48xf32>
    %741 = vector.extract_strided_slice %601 {offsets = [3, 0], sizes = [1, 48], strides = [1, 1]} : vector<8x48xf32> to vector<1x48xf32>
    %742 = vector.extract_strided_slice %741 {offsets = [0, 0], sizes = [1, 16], strides = [1, 1]} : vector<1x48xf32> to vector<1x16xf32>
    %743 = vector.extract_strided_slice %740 {offsets = [0, 0], sizes = [1, 16], strides = [1, 1]} : vector<1x48xf32> to vector<1x16xf32>
    %744 = arith.addf %742, %743 : vector<1x16xf32>
    %cst_264 = arith.constant 0.000000e+00 : f32
    %745 = vector.broadcast %cst_264 : f32 to vector<1x16xf32>
    %746 = arith.subf %745, %744 : vector<1x16xf32>
    %747 = math.exp %746 : vector<1x16xf32>
    %cst_265 = arith.constant 1.000000e+00 : f32
    %748 = vector.broadcast %cst_265 : f32 to vector<1x16xf32>
    %749 = arith.addf %748, %747 : vector<1x16xf32>
    %cst_266 = arith.constant 1.000000e+00 : f32
    %750 = vector.broadcast %cst_266 : f32 to vector<1x16xf32>
    %751 = arith.divf %750, %749 : vector<1x16xf32>
    %752 = vector.extract_strided_slice %741 {offsets = [0, 16], sizes = [1, 16], strides = [1, 1]} : vector<1x48xf32> to vector<1x16xf32>
    %753 = vector.extract_strided_slice %740 {offsets = [0, 16], sizes = [1, 16], strides = [1, 1]} : vector<1x48xf32> to vector<1x16xf32>
    %754 = arith.addf %752, %753 : vector<1x16xf32>
    %cst_267 = arith.constant 0.000000e+00 : f32
    %755 = vector.broadcast %cst_267 : f32 to vector<1x16xf32>
    %756 = arith.subf %755, %754 : vector<1x16xf32>
    %757 = math.exp %756 : vector<1x16xf32>
    %cst_268 = arith.constant 1.000000e+00 : f32
    %758 = vector.broadcast %cst_268 : f32 to vector<1x16xf32>
    %759 = arith.addf %758, %757 : vector<1x16xf32>
    %cst_269 = arith.constant 1.000000e+00 : f32
    %760 = vector.broadcast %cst_269 : f32 to vector<1x16xf32>
    %761 = arith.divf %760, %759 : vector<1x16xf32>
    %762 = vector.extract_strided_slice %741 {offsets = [0, 32], sizes = [1, 16], strides = [1, 1]} : vector<1x48xf32> to vector<1x16xf32>
    %763 = vector.extract_strided_slice %740 {offsets = [0, 32], sizes = [1, 16], strides = [1, 1]} : vector<1x48xf32> to vector<1x16xf32>
    %764 = arith.mulf %751, %763 : vector<1x16xf32>
    %765 = arith.addf %762, %764 : vector<1x16xf32>
    %766 = math.tanh %765 : vector<1x16xf32>
    %cst_270 = arith.constant 1.000000e+00 : f32
    %767 = vector.broadcast %cst_270 : f32 to vector<1x16xf32>
    %768 = arith.subf %767, %761 : vector<1x16xf32>
    %769 = arith.mulf %768, %766 : vector<1x16xf32>
    %770 = arith.mulf %761, %738 : vector<1x16xf32>
    %771 = arith.addf %769, %770 : vector<1x16xf32>
    %cst_271 = arith.constant dense<0.000000e+00> : vector<1x48xf32>
    %772 = tpu.matmul %771, %603, %cst_271 {dimension_numbers = #tpu.dot_dimension_numbers<[1], [0], [0], [1], [0, 0, 1, 1], [], []>} : vector<1x16xf32>, vector<16x48xf32>, vector<1x48xf32> -> vector<1x48xf32>
    %773 = arith.addf %772, %605 : vector<1x48xf32>
    %774 = vector.extract_strided_slice %601 {offsets = [2, 0], sizes = [1, 48], strides = [1, 1]} : vector<8x48xf32> to vector<1x48xf32>
    %775 = vector.extract_strided_slice %774 {offsets = [0, 0], sizes = [1, 16], strides = [1, 1]} : vector<1x48xf32> to vector<1x16xf32>
    %776 = vector.extract_strided_slice %773 {offsets = [0, 0], sizes = [1, 16], strides = [1, 1]} : vector<1x48xf32> to vector<1x16xf32>
    %777 = arith.addf %775, %776 : vector<1x16xf32>
    %cst_272 = arith.constant 0.000000e+00 : f32
    %778 = vector.broadcast %cst_272 : f32 to vector<1x16xf32>
    %779 = arith.subf %778, %777 : vector<1x16xf32>
    %780 = math.exp %779 : vector<1x16xf32>
    %cst_273 = arith.constant 1.000000e+00 : f32
    %781 = vector.broadcast %cst_273 : f32 to vector<1x16xf32>
    %782 = arith.addf %781, %780 : vector<1x16xf32>
    %cst_274 = arith.constant 1.000000e+00 : f32
    %783 = vector.broadcast %cst_274 : f32 to vector<1x16xf32>
    %784 = arith.divf %783, %782 : vector<1x16xf32>
    %785 = vector.extract_strided_slice %774 {offsets = [0, 16], sizes = [1, 16], strides = [1, 1]} : vector<1x48xf32> to vector<1x16xf32>
    %786 = vector.extract_strided_slice %773 {offsets = [0, 16], sizes = [1, 16], strides = [1, 1]} : vector<1x48xf32> to vector<1x16xf32>
    %787 = arith.addf %785, %786 : vector<1x16xf32>
    %cst_275 = arith.constant 0.000000e+00 : f32
    %788 = vector.broadcast %cst_275 : f32 to vector<1x16xf32>
    %789 = arith.subf %788, %787 : vector<1x16xf32>
    %790 = math.exp %789 : vector<1x16xf32>
    %cst_276 = arith.constant 1.000000e+00 : f32
    %791 = vector.broadcast %cst_276 : f32 to vector<1x16xf32>
    %792 = arith.addf %791, %790 : vector<1x16xf32>
    %cst_277 = arith.constant 1.000000e+00 : f32
    %793 = vector.broadcast %cst_277 : f32 to vector<1x16xf32>
    %794 = arith.divf %793, %792 : vector<1x16xf32>
    %795 = vector.extract_strided_slice %774 {offsets = [0, 32], sizes = [1, 16], strides = [1, 1]} : vector<1x48xf32> to vector<1x16xf32>
    %796 = vector.extract_strided_slice %773 {offsets = [0, 32], sizes = [1, 16], strides = [1, 1]} : vector<1x48xf32> to vector<1x16xf32>
    %797 = arith.mulf %784, %796 : vector<1x16xf32>
    %798 = arith.addf %795, %797 : vector<1x16xf32>
    %799 = math.tanh %798 : vector<1x16xf32>
    %cst_278 = arith.constant 1.000000e+00 : f32
    %800 = vector.broadcast %cst_278 : f32 to vector<1x16xf32>
    %801 = arith.subf %800, %794 : vector<1x16xf32>
    %802 = arith.mulf %801, %799 : vector<1x16xf32>
    %803 = arith.mulf %794, %771 : vector<1x16xf32>
    %804 = arith.addf %802, %803 : vector<1x16xf32>
    %cst_279 = arith.constant dense<0.000000e+00> : vector<1x48xf32>
    %805 = tpu.matmul %804, %603, %cst_279 {dimension_numbers = #tpu.dot_dimension_numbers<[1], [0], [0], [1], [0, 0, 1, 1], [], []>} : vector<1x16xf32>, vector<16x48xf32>, vector<1x48xf32> -> vector<1x48xf32>
    %806 = arith.addf %805, %605 : vector<1x48xf32>
    %807 = vector.extract_strided_slice %601 {offsets = [1, 0], sizes = [1, 48], strides = [1, 1]} : vector<8x48xf32> to vector<1x48xf32>
    %808 = vector.extract_strided_slice %807 {offsets = [0, 0], sizes = [1, 16], strides = [1, 1]} : vector<1x48xf32> to vector<1x16xf32>
    %809 = vector.extract_strided_slice %806 {offsets = [0, 0], sizes = [1, 16], strides = [1, 1]} : vector<1x48xf32> to vector<1x16xf32>
    %810 = arith.addf %808, %809 : vector<1x16xf32>
    %cst_280 = arith.constant 0.000000e+00 : f32
    %811 = vector.broadcast %cst_280 : f32 to vector<1x16xf32>
    %812 = arith.subf %811, %810 : vector<1x16xf32>
    %813 = math.exp %812 : vector<1x16xf32>
    %cst_281 = arith.constant 1.000000e+00 : f32
    %814 = vector.broadcast %cst_281 : f32 to vector<1x16xf32>
    %815 = arith.addf %814, %813 : vector<1x16xf32>
    %cst_282 = arith.constant 1.000000e+00 : f32
    %816 = vector.broadcast %cst_282 : f32 to vector<1x16xf32>
    %817 = arith.divf %816, %815 : vector<1x16xf32>
    %818 = vector.extract_strided_slice %807 {offsets = [0, 16], sizes = [1, 16], strides = [1, 1]} : vector<1x48xf32> to vector<1x16xf32>
    %819 = vector.extract_strided_slice %806 {offsets = [0, 16], sizes = [1, 16], strides = [1, 1]} : vector<1x48xf32> to vector<1x16xf32>
    %820 = arith.addf %818, %819 : vector<1x16xf32>
    %cst_283 = arith.constant 0.000000e+00 : f32
    %821 = vector.broadcast %cst_283 : f32 to vector<1x16xf32>
    %822 = arith.subf %821, %820 : vector<1x16xf32>
    %823 = math.exp %822 : vector<1x16xf32>
    %cst_284 = arith.constant 1.000000e+00 : f32
    %824 = vector.broadcast %cst_284 : f32 to vector<1x16xf32>
    %825 = arith.addf %824, %823 : vector<1x16xf32>
    %cst_285 = arith.constant 1.000000e+00 : f32
    %826 = vector.broadcast %cst_285 : f32 to vector<1x16xf32>
    %827 = arith.divf %826, %825 : vector<1x16xf32>
    %828 = vector.extract_strided_slice %807 {offsets = [0, 32], sizes = [1, 16], strides = [1, 1]} : vector<1x48xf32> to vector<1x16xf32>
    %829 = vector.extract_strided_slice %806 {offsets = [0, 32], sizes = [1, 16], strides = [1, 1]} : vector<1x48xf32> to vector<1x16xf32>
    %830 = arith.mulf %817, %829 : vector<1x16xf32>
    %831 = arith.addf %828, %830 : vector<1x16xf32>
    %832 = math.tanh %831 : vector<1x16xf32>
    %cst_286 = arith.constant 1.000000e+00 : f32
    %833 = vector.broadcast %cst_286 : f32 to vector<1x16xf32>
    %834 = arith.subf %833, %827 : vector<1x16xf32>
    %835 = arith.mulf %834, %832 : vector<1x16xf32>
    %836 = arith.mulf %827, %804 : vector<1x16xf32>
    %837 = arith.addf %835, %836 : vector<1x16xf32>
    %cst_287 = arith.constant dense<0.000000e+00> : vector<1x48xf32>
    %838 = tpu.matmul %837, %603, %cst_287 {dimension_numbers = #tpu.dot_dimension_numbers<[1], [0], [0], [1], [0, 0, 1, 1], [], []>} : vector<1x16xf32>, vector<16x48xf32>, vector<1x48xf32> -> vector<1x48xf32>
    %839 = arith.addf %838, %605 : vector<1x48xf32>
    %840 = vector.extract_strided_slice %601 {offsets = [0, 0], sizes = [1, 48], strides = [1, 1]} : vector<8x48xf32> to vector<1x48xf32>
    %841 = vector.extract_strided_slice %840 {offsets = [0, 0], sizes = [1, 16], strides = [1, 1]} : vector<1x48xf32> to vector<1x16xf32>
    %842 = vector.extract_strided_slice %839 {offsets = [0, 0], sizes = [1, 16], strides = [1, 1]} : vector<1x48xf32> to vector<1x16xf32>
    %843 = arith.addf %841, %842 : vector<1x16xf32>
    %cst_288 = arith.constant 0.000000e+00 : f32
    %844 = vector.broadcast %cst_288 : f32 to vector<1x16xf32>
    %845 = arith.subf %844, %843 : vector<1x16xf32>
    %846 = math.exp %845 : vector<1x16xf32>
    %cst_289 = arith.constant 1.000000e+00 : f32
    %847 = vector.broadcast %cst_289 : f32 to vector<1x16xf32>
    %848 = arith.addf %847, %846 : vector<1x16xf32>
    %cst_290 = arith.constant 1.000000e+00 : f32
    %849 = vector.broadcast %cst_290 : f32 to vector<1x16xf32>
    %850 = arith.divf %849, %848 : vector<1x16xf32>
    %851 = vector.extract_strided_slice %840 {offsets = [0, 16], sizes = [1, 16], strides = [1, 1]} : vector<1x48xf32> to vector<1x16xf32>
    %852 = vector.extract_strided_slice %839 {offsets = [0, 16], sizes = [1, 16], strides = [1, 1]} : vector<1x48xf32> to vector<1x16xf32>
    %853 = arith.addf %851, %852 : vector<1x16xf32>
    %cst_291 = arith.constant 0.000000e+00 : f32
    %854 = vector.broadcast %cst_291 : f32 to vector<1x16xf32>
    %855 = arith.subf %854, %853 : vector<1x16xf32>
    %856 = math.exp %855 : vector<1x16xf32>
    %cst_292 = arith.constant 1.000000e+00 : f32
    %857 = vector.broadcast %cst_292 : f32 to vector<1x16xf32>
    %858 = arith.addf %857, %856 : vector<1x16xf32>
    %cst_293 = arith.constant 1.000000e+00 : f32
    %859 = vector.broadcast %cst_293 : f32 to vector<1x16xf32>
    %860 = arith.divf %859, %858 : vector<1x16xf32>
    %861 = vector.extract_strided_slice %840 {offsets = [0, 32], sizes = [1, 16], strides = [1, 1]} : vector<1x48xf32> to vector<1x16xf32>
    %862 = vector.extract_strided_slice %839 {offsets = [0, 32], sizes = [1, 16], strides = [1, 1]} : vector<1x48xf32> to vector<1x16xf32>
    %863 = arith.mulf %850, %862 : vector<1x16xf32>
    %864 = arith.addf %861, %863 : vector<1x16xf32>
    %865 = math.tanh %864 : vector<1x16xf32>
    %cst_294 = arith.constant 1.000000e+00 : f32
    %866 = vector.broadcast %cst_294 : f32 to vector<1x16xf32>
    %867 = arith.subf %866, %860 : vector<1x16xf32>
    %868 = arith.mulf %867, %865 : vector<1x16xf32>
    %869 = arith.mulf %860, %837 : vector<1x16xf32>
    %870 = arith.addf %868, %869 : vector<1x16xf32>
    %871 = tpu.concatenate %870, %837, %804, %771, %738, %705, %672, %639 in 0 : vector<1x16xf32>, vector<1x16xf32>, vector<1x16xf32>, vector<1x16xf32>, vector<1x16xf32>, vector<1x16xf32>, vector<1x16xf32>, vector<1x16xf32> -> vector<8x16xf32>
    %872 = tpu.concatenate %594, %871 in 1 : vector<8x16xf32>, vector<8x16xf32> -> vector<8x32xf32>
    %c2 = arith.constant 2 : index
    %c0_295 = arith.constant 0 : index
    %c0_296 = arith.constant 0 : index
    %873 = vector.load %arg20[%c2, %c0_295, %c0_296] : memref<4x32x48xf32, #tpu.memory_space<vmem>>, vector<1x32x48xf32>
    %874 = vector.shape_cast %873 : vector<1x32x48xf32> to vector<32x48xf32>
    %cst_297 = arith.constant dense<0.000000e+00> : vector<8x48xf32>
    %875 = tpu.matmul %872, %874, %cst_297 {dimension_numbers = #tpu.dot_dimension_numbers<[1], [0], [0], [1], [0, 0, 1, 1], [], []>} : vector<8x32xf32>, vector<32x48xf32>, vector<8x48xf32> -> vector<8x48xf32>
    %c2_298 = arith.constant 2 : index
    %c0_299 = arith.constant 0 : index
    %c0_300 = arith.constant 0 : index
    %876 = vector.load %arg22[%c2_298, %c0_299, %c0_300] : memref<4x1x48xf32, #tpu.memory_space<vmem>>, vector<1x1x48xf32>
    %877 = vector.shape_cast %876 : vector<1x1x48xf32> to vector<1x48xf32>
    %878 = vector.broadcast %877 : vector<1x48xf32> to vector<8x48xf32>
    %879 = arith.addf %875, %878 : vector<8x48xf32>
    %c2_301 = arith.constant 2 : index
    %c0_302 = arith.constant 0 : index
    %c0_303 = arith.constant 0 : index
    %880 = vector.load %arg21[%c2_301, %c0_302, %c0_303] : memref<4x16x48xf32, #tpu.memory_space<vmem>>, vector<1x16x48xf32>
    %881 = vector.shape_cast %880 : vector<1x16x48xf32> to vector<16x48xf32>
    %c2_304 = arith.constant 2 : index
    %c0_305 = arith.constant 0 : index
    %c0_306 = arith.constant 0 : index
    %882 = vector.load %arg23[%c2_304, %c0_305, %c0_306] : memref<4x1x48xf32, #tpu.memory_space<vmem>>, vector<1x1x48xf32>
    %883 = vector.shape_cast %882 : vector<1x1x48xf32> to vector<1x48xf32>
    %cst_307 = arith.constant 0.000000e+00 : f32
    %884 = vector.broadcast %cst_307 : f32 to vector<1x16xf32>
    %cst_308 = arith.constant dense<0.000000e+00> : vector<1x48xf32>
    %885 = tpu.matmul %884, %881, %cst_308 {dimension_numbers = #tpu.dot_dimension_numbers<[1], [0], [0], [1], [0, 0, 1, 1], [], []>} : vector<1x16xf32>, vector<16x48xf32>, vector<1x48xf32> -> vector<1x48xf32>
    %886 = arith.addf %885, %883 : vector<1x48xf32>
    %887 = vector.extract_strided_slice %879 {offsets = [0, 0], sizes = [1, 48], strides = [1, 1]} : vector<8x48xf32> to vector<1x48xf32>
    %888 = vector.extract_strided_slice %887 {offsets = [0, 0], sizes = [1, 16], strides = [1, 1]} : vector<1x48xf32> to vector<1x16xf32>
    %889 = vector.extract_strided_slice %886 {offsets = [0, 0], sizes = [1, 16], strides = [1, 1]} : vector<1x48xf32> to vector<1x16xf32>
    %890 = arith.addf %888, %889 : vector<1x16xf32>
    %cst_309 = arith.constant 0.000000e+00 : f32
    %891 = vector.broadcast %cst_309 : f32 to vector<1x16xf32>
    %892 = arith.subf %891, %890 : vector<1x16xf32>
    %893 = math.exp %892 : vector<1x16xf32>
    %cst_310 = arith.constant 1.000000e+00 : f32
    %894 = vector.broadcast %cst_310 : f32 to vector<1x16xf32>
    %895 = arith.addf %894, %893 : vector<1x16xf32>
    %cst_311 = arith.constant 1.000000e+00 : f32
    %896 = vector.broadcast %cst_311 : f32 to vector<1x16xf32>
    %897 = arith.divf %896, %895 : vector<1x16xf32>
    %898 = vector.extract_strided_slice %887 {offsets = [0, 16], sizes = [1, 16], strides = [1, 1]} : vector<1x48xf32> to vector<1x16xf32>
    %899 = vector.extract_strided_slice %886 {offsets = [0, 16], sizes = [1, 16], strides = [1, 1]} : vector<1x48xf32> to vector<1x16xf32>
    %900 = arith.addf %898, %899 : vector<1x16xf32>
    %cst_312 = arith.constant 0.000000e+00 : f32
    %901 = vector.broadcast %cst_312 : f32 to vector<1x16xf32>
    %902 = arith.subf %901, %900 : vector<1x16xf32>
    %903 = math.exp %902 : vector<1x16xf32>
    %cst_313 = arith.constant 1.000000e+00 : f32
    %904 = vector.broadcast %cst_313 : f32 to vector<1x16xf32>
    %905 = arith.addf %904, %903 : vector<1x16xf32>
    %cst_314 = arith.constant 1.000000e+00 : f32
    %906 = vector.broadcast %cst_314 : f32 to vector<1x16xf32>
    %907 = arith.divf %906, %905 : vector<1x16xf32>
    %908 = vector.extract_strided_slice %887 {offsets = [0, 32], sizes = [1, 16], strides = [1, 1]} : vector<1x48xf32> to vector<1x16xf32>
    %909 = vector.extract_strided_slice %886 {offsets = [0, 32], sizes = [1, 16], strides = [1, 1]} : vector<1x48xf32> to vector<1x16xf32>
    %910 = arith.mulf %897, %909 : vector<1x16xf32>
    %911 = arith.addf %908, %910 : vector<1x16xf32>
    %912 = math.tanh %911 : vector<1x16xf32>
    %cst_315 = arith.constant 1.000000e+00 : f32
    %913 = vector.broadcast %cst_315 : f32 to vector<1x16xf32>
    %914 = arith.subf %913, %907 : vector<1x16xf32>
    %915 = arith.mulf %914, %912 : vector<1x16xf32>
    %916 = arith.mulf %907, %884 : vector<1x16xf32>
    %917 = arith.addf %915, %916 : vector<1x16xf32>
    %cst_316 = arith.constant dense<0.000000e+00> : vector<1x48xf32>
    %918 = tpu.matmul %917, %881, %cst_316 {dimension_numbers = #tpu.dot_dimension_numbers<[1], [0], [0], [1], [0, 0, 1, 1], [], []>} : vector<1x16xf32>, vector<16x48xf32>, vector<1x48xf32> -> vector<1x48xf32>
    %919 = arith.addf %918, %883 : vector<1x48xf32>
    %920 = vector.extract_strided_slice %879 {offsets = [1, 0], sizes = [1, 48], strides = [1, 1]} : vector<8x48xf32> to vector<1x48xf32>
    %921 = vector.extract_strided_slice %920 {offsets = [0, 0], sizes = [1, 16], strides = [1, 1]} : vector<1x48xf32> to vector<1x16xf32>
    %922 = vector.extract_strided_slice %919 {offsets = [0, 0], sizes = [1, 16], strides = [1, 1]} : vector<1x48xf32> to vector<1x16xf32>
    %923 = arith.addf %921, %922 : vector<1x16xf32>
    %cst_317 = arith.constant 0.000000e+00 : f32
    %924 = vector.broadcast %cst_317 : f32 to vector<1x16xf32>
    %925 = arith.subf %924, %923 : vector<1x16xf32>
    %926 = math.exp %925 : vector<1x16xf32>
    %cst_318 = arith.constant 1.000000e+00 : f32
    %927 = vector.broadcast %cst_318 : f32 to vector<1x16xf32>
    %928 = arith.addf %927, %926 : vector<1x16xf32>
    %cst_319 = arith.constant 1.000000e+00 : f32
    %929 = vector.broadcast %cst_319 : f32 to vector<1x16xf32>
    %930 = arith.divf %929, %928 : vector<1x16xf32>
    %931 = vector.extract_strided_slice %920 {offsets = [0, 16], sizes = [1, 16], strides = [1, 1]} : vector<1x48xf32> to vector<1x16xf32>
    %932 = vector.extract_strided_slice %919 {offsets = [0, 16], sizes = [1, 16], strides = [1, 1]} : vector<1x48xf32> to vector<1x16xf32>
    %933 = arith.addf %931, %932 : vector<1x16xf32>
    %cst_320 = arith.constant 0.000000e+00 : f32
    %934 = vector.broadcast %cst_320 : f32 to vector<1x16xf32>
    %935 = arith.subf %934, %933 : vector<1x16xf32>
    %936 = math.exp %935 : vector<1x16xf32>
    %cst_321 = arith.constant 1.000000e+00 : f32
    %937 = vector.broadcast %cst_321 : f32 to vector<1x16xf32>
    %938 = arith.addf %937, %936 : vector<1x16xf32>
    %cst_322 = arith.constant 1.000000e+00 : f32
    %939 = vector.broadcast %cst_322 : f32 to vector<1x16xf32>
    %940 = arith.divf %939, %938 : vector<1x16xf32>
    %941 = vector.extract_strided_slice %920 {offsets = [0, 32], sizes = [1, 16], strides = [1, 1]} : vector<1x48xf32> to vector<1x16xf32>
    %942 = vector.extract_strided_slice %919 {offsets = [0, 32], sizes = [1, 16], strides = [1, 1]} : vector<1x48xf32> to vector<1x16xf32>
    %943 = arith.mulf %930, %942 : vector<1x16xf32>
    %944 = arith.addf %941, %943 : vector<1x16xf32>
    %945 = math.tanh %944 : vector<1x16xf32>
    %cst_323 = arith.constant 1.000000e+00 : f32
    %946 = vector.broadcast %cst_323 : f32 to vector<1x16xf32>
    %947 = arith.subf %946, %940 : vector<1x16xf32>
    %948 = arith.mulf %947, %945 : vector<1x16xf32>
    %949 = arith.mulf %940, %917 : vector<1x16xf32>
    %950 = arith.addf %948, %949 : vector<1x16xf32>
    %cst_324 = arith.constant dense<0.000000e+00> : vector<1x48xf32>
    %951 = tpu.matmul %950, %881, %cst_324 {dimension_numbers = #tpu.dot_dimension_numbers<[1], [0], [0], [1], [0, 0, 1, 1], [], []>} : vector<1x16xf32>, vector<16x48xf32>, vector<1x48xf32> -> vector<1x48xf32>
    %952 = arith.addf %951, %883 : vector<1x48xf32>
    %953 = vector.extract_strided_slice %879 {offsets = [2, 0], sizes = [1, 48], strides = [1, 1]} : vector<8x48xf32> to vector<1x48xf32>
    %954 = vector.extract_strided_slice %953 {offsets = [0, 0], sizes = [1, 16], strides = [1, 1]} : vector<1x48xf32> to vector<1x16xf32>
    %955 = vector.extract_strided_slice %952 {offsets = [0, 0], sizes = [1, 16], strides = [1, 1]} : vector<1x48xf32> to vector<1x16xf32>
    %956 = arith.addf %954, %955 : vector<1x16xf32>
    %cst_325 = arith.constant 0.000000e+00 : f32
    %957 = vector.broadcast %cst_325 : f32 to vector<1x16xf32>
    %958 = arith.subf %957, %956 : vector<1x16xf32>
    %959 = math.exp %958 : vector<1x16xf32>
    %cst_326 = arith.constant 1.000000e+00 : f32
    %960 = vector.broadcast %cst_326 : f32 to vector<1x16xf32>
    %961 = arith.addf %960, %959 : vector<1x16xf32>
    %cst_327 = arith.constant 1.000000e+00 : f32
    %962 = vector.broadcast %cst_327 : f32 to vector<1x16xf32>
    %963 = arith.divf %962, %961 : vector<1x16xf32>
    %964 = vector.extract_strided_slice %953 {offsets = [0, 16], sizes = [1, 16], strides = [1, 1]} : vector<1x48xf32> to vector<1x16xf32>
    %965 = vector.extract_strided_slice %952 {offsets = [0, 16], sizes = [1, 16], strides = [1, 1]} : vector<1x48xf32> to vector<1x16xf32>
    %966 = arith.addf %964, %965 : vector<1x16xf32>
    %cst_328 = arith.constant 0.000000e+00 : f32
    %967 = vector.broadcast %cst_328 : f32 to vector<1x16xf32>
    %968 = arith.subf %967, %966 : vector<1x16xf32>
    %969 = math.exp %968 : vector<1x16xf32>
    %cst_329 = arith.constant 1.000000e+00 : f32
    %970 = vector.broadcast %cst_329 : f32 to vector<1x16xf32>
    %971 = arith.addf %970, %969 : vector<1x16xf32>
    %cst_330 = arith.constant 1.000000e+00 : f32
    %972 = vector.broadcast %cst_330 : f32 to vector<1x16xf32>
    %973 = arith.divf %972, %971 : vector<1x16xf32>
    %974 = vector.extract_strided_slice %953 {offsets = [0, 32], sizes = [1, 16], strides = [1, 1]} : vector<1x48xf32> to vector<1x16xf32>
    %975 = vector.extract_strided_slice %952 {offsets = [0, 32], sizes = [1, 16], strides = [1, 1]} : vector<1x48xf32> to vector<1x16xf32>
    %976 = arith.mulf %963, %975 : vector<1x16xf32>
    %977 = arith.addf %974, %976 : vector<1x16xf32>
    %978 = math.tanh %977 : vector<1x16xf32>
    %cst_331 = arith.constant 1.000000e+00 : f32
    %979 = vector.broadcast %cst_331 : f32 to vector<1x16xf32>
    %980 = arith.subf %979, %973 : vector<1x16xf32>
    %981 = arith.mulf %980, %978 : vector<1x16xf32>
    %982 = arith.mulf %973, %950 : vector<1x16xf32>
    %983 = arith.addf %981, %982 : vector<1x16xf32>
    %cst_332 = arith.constant dense<0.000000e+00> : vector<1x48xf32>
    %984 = tpu.matmul %983, %881, %cst_332 {dimension_numbers = #tpu.dot_dimension_numbers<[1], [0], [0], [1], [0, 0, 1, 1], [], []>} : vector<1x16xf32>, vector<16x48xf32>, vector<1x48xf32> -> vector<1x48xf32>
    %985 = arith.addf %984, %883 : vector<1x48xf32>
    %986 = vector.extract_strided_slice %879 {offsets = [3, 0], sizes = [1, 48], strides = [1, 1]} : vector<8x48xf32> to vector<1x48xf32>
    %987 = vector.extract_strided_slice %986 {offsets = [0, 0], sizes = [1, 16], strides = [1, 1]} : vector<1x48xf32> to vector<1x16xf32>
    %988 = vector.extract_strided_slice %985 {offsets = [0, 0], sizes = [1, 16], strides = [1, 1]} : vector<1x48xf32> to vector<1x16xf32>
    %989 = arith.addf %987, %988 : vector<1x16xf32>
    %cst_333 = arith.constant 0.000000e+00 : f32
    %990 = vector.broadcast %cst_333 : f32 to vector<1x16xf32>
    %991 = arith.subf %990, %989 : vector<1x16xf32>
    %992 = math.exp %991 : vector<1x16xf32>
    %cst_334 = arith.constant 1.000000e+00 : f32
    %993 = vector.broadcast %cst_334 : f32 to vector<1x16xf32>
    %994 = arith.addf %993, %992 : vector<1x16xf32>
    %cst_335 = arith.constant 1.000000e+00 : f32
    %995 = vector.broadcast %cst_335 : f32 to vector<1x16xf32>
    %996 = arith.divf %995, %994 : vector<1x16xf32>
    %997 = vector.extract_strided_slice %986 {offsets = [0, 16], sizes = [1, 16], strides = [1, 1]} : vector<1x48xf32> to vector<1x16xf32>
    %998 = vector.extract_strided_slice %985 {offsets = [0, 16], sizes = [1, 16], strides = [1, 1]} : vector<1x48xf32> to vector<1x16xf32>
    %999 = arith.addf %997, %998 : vector<1x16xf32>
    %cst_336 = arith.constant 0.000000e+00 : f32
    %1000 = vector.broadcast %cst_336 : f32 to vector<1x16xf32>
    %1001 = arith.subf %1000, %999 : vector<1x16xf32>
    %1002 = math.exp %1001 : vector<1x16xf32>
    %cst_337 = arith.constant 1.000000e+00 : f32
    %1003 = vector.broadcast %cst_337 : f32 to vector<1x16xf32>
    %1004 = arith.addf %1003, %1002 : vector<1x16xf32>
    %cst_338 = arith.constant 1.000000e+00 : f32
    %1005 = vector.broadcast %cst_338 : f32 to vector<1x16xf32>
    %1006 = arith.divf %1005, %1004 : vector<1x16xf32>
    %1007 = vector.extract_strided_slice %986 {offsets = [0, 32], sizes = [1, 16], strides = [1, 1]} : vector<1x48xf32> to vector<1x16xf32>
    %1008 = vector.extract_strided_slice %985 {offsets = [0, 32], sizes = [1, 16], strides = [1, 1]} : vector<1x48xf32> to vector<1x16xf32>
    %1009 = arith.mulf %996, %1008 : vector<1x16xf32>
    %1010 = arith.addf %1007, %1009 : vector<1x16xf32>
    %1011 = math.tanh %1010 : vector<1x16xf32>
    %cst_339 = arith.constant 1.000000e+00 : f32
    %1012 = vector.broadcast %cst_339 : f32 to vector<1x16xf32>
    %1013 = arith.subf %1012, %1006 : vector<1x16xf32>
    %1014 = arith.mulf %1013, %1011 : vector<1x16xf32>
    %1015 = arith.mulf %1006, %983 : vector<1x16xf32>
    %1016 = arith.addf %1014, %1015 : vector<1x16xf32>
    %cst_340 = arith.constant dense<0.000000e+00> : vector<1x48xf32>
    %1017 = tpu.matmul %1016, %881, %cst_340 {dimension_numbers = #tpu.dot_dimension_numbers<[1], [0], [0], [1], [0, 0, 1, 1], [], []>} : vector<1x16xf32>, vector<16x48xf32>, vector<1x48xf32> -> vector<1x48xf32>
    %1018 = arith.addf %1017, %883 : vector<1x48xf32>
    %1019 = vector.extract_strided_slice %879 {offsets = [4, 0], sizes = [1, 48], strides = [1, 1]} : vector<8x48xf32> to vector<1x48xf32>
    %1020 = vector.extract_strided_slice %1019 {offsets = [0, 0], sizes = [1, 16], strides = [1, 1]} : vector<1x48xf32> to vector<1x16xf32>
    %1021 = vector.extract_strided_slice %1018 {offsets = [0, 0], sizes = [1, 16], strides = [1, 1]} : vector<1x48xf32> to vector<1x16xf32>
    %1022 = arith.addf %1020, %1021 : vector<1x16xf32>
    %cst_341 = arith.constant 0.000000e+00 : f32
    %1023 = vector.broadcast %cst_341 : f32 to vector<1x16xf32>
    %1024 = arith.subf %1023, %1022 : vector<1x16xf32>
    %1025 = math.exp %1024 : vector<1x16xf32>
    %cst_342 = arith.constant 1.000000e+00 : f32
    %1026 = vector.broadcast %cst_342 : f32 to vector<1x16xf32>
    %1027 = arith.addf %1026, %1025 : vector<1x16xf32>
    %cst_343 = arith.constant 1.000000e+00 : f32
    %1028 = vector.broadcast %cst_343 : f32 to vector<1x16xf32>
    %1029 = arith.divf %1028, %1027 : vector<1x16xf32>
    %1030 = vector.extract_strided_slice %1019 {offsets = [0, 16], sizes = [1, 16], strides = [1, 1]} : vector<1x48xf32> to vector<1x16xf32>
    %1031 = vector.extract_strided_slice %1018 {offsets = [0, 16], sizes = [1, 16], strides = [1, 1]} : vector<1x48xf32> to vector<1x16xf32>
    %1032 = arith.addf %1030, %1031 : vector<1x16xf32>
    %cst_344 = arith.constant 0.000000e+00 : f32
    %1033 = vector.broadcast %cst_344 : f32 to vector<1x16xf32>
    %1034 = arith.subf %1033, %1032 : vector<1x16xf32>
    %1035 = math.exp %1034 : vector<1x16xf32>
    %cst_345 = arith.constant 1.000000e+00 : f32
    %1036 = vector.broadcast %cst_345 : f32 to vector<1x16xf32>
    %1037 = arith.addf %1036, %1035 : vector<1x16xf32>
    %cst_346 = arith.constant 1.000000e+00 : f32
    %1038 = vector.broadcast %cst_346 : f32 to vector<1x16xf32>
    %1039 = arith.divf %1038, %1037 : vector<1x16xf32>
    %1040 = vector.extract_strided_slice %1019 {offsets = [0, 32], sizes = [1, 16], strides = [1, 1]} : vector<1x48xf32> to vector<1x16xf32>
    %1041 = vector.extract_strided_slice %1018 {offsets = [0, 32], sizes = [1, 16], strides = [1, 1]} : vector<1x48xf32> to vector<1x16xf32>
    %1042 = arith.mulf %1029, %1041 : vector<1x16xf32>
    %1043 = arith.addf %1040, %1042 : vector<1x16xf32>
    %1044 = math.tanh %1043 : vector<1x16xf32>
    %cst_347 = arith.constant 1.000000e+00 : f32
    %1045 = vector.broadcast %cst_347 : f32 to vector<1x16xf32>
    %1046 = arith.subf %1045, %1039 : vector<1x16xf32>
    %1047 = arith.mulf %1046, %1044 : vector<1x16xf32>
    %1048 = arith.mulf %1039, %1016 : vector<1x16xf32>
    %1049 = arith.addf %1047, %1048 : vector<1x16xf32>
    %cst_348 = arith.constant dense<0.000000e+00> : vector<1x48xf32>
    %1050 = tpu.matmul %1049, %881, %cst_348 {dimension_numbers = #tpu.dot_dimension_numbers<[1], [0], [0], [1], [0, 0, 1, 1], [], []>} : vector<1x16xf32>, vector<16x48xf32>, vector<1x48xf32> -> vector<1x48xf32>
    %1051 = arith.addf %1050, %883 : vector<1x48xf32>
    %1052 = vector.extract_strided_slice %879 {offsets = [5, 0], sizes = [1, 48], strides = [1, 1]} : vector<8x48xf32> to vector<1x48xf32>
    %1053 = vector.extract_strided_slice %1052 {offsets = [0, 0], sizes = [1, 16], strides = [1, 1]} : vector<1x48xf32> to vector<1x16xf32>
    %1054 = vector.extract_strided_slice %1051 {offsets = [0, 0], sizes = [1, 16], strides = [1, 1]} : vector<1x48xf32> to vector<1x16xf32>
    %1055 = arith.addf %1053, %1054 : vector<1x16xf32>
    %cst_349 = arith.constant 0.000000e+00 : f32
    %1056 = vector.broadcast %cst_349 : f32 to vector<1x16xf32>
    %1057 = arith.subf %1056, %1055 : vector<1x16xf32>
    %1058 = math.exp %1057 : vector<1x16xf32>
    %cst_350 = arith.constant 1.000000e+00 : f32
    %1059 = vector.broadcast %cst_350 : f32 to vector<1x16xf32>
    %1060 = arith.addf %1059, %1058 : vector<1x16xf32>
    %cst_351 = arith.constant 1.000000e+00 : f32
    %1061 = vector.broadcast %cst_351 : f32 to vector<1x16xf32>
    %1062 = arith.divf %1061, %1060 : vector<1x16xf32>
    %1063 = vector.extract_strided_slice %1052 {offsets = [0, 16], sizes = [1, 16], strides = [1, 1]} : vector<1x48xf32> to vector<1x16xf32>
    %1064 = vector.extract_strided_slice %1051 {offsets = [0, 16], sizes = [1, 16], strides = [1, 1]} : vector<1x48xf32> to vector<1x16xf32>
    %1065 = arith.addf %1063, %1064 : vector<1x16xf32>
    %cst_352 = arith.constant 0.000000e+00 : f32
    %1066 = vector.broadcast %cst_352 : f32 to vector<1x16xf32>
    %1067 = arith.subf %1066, %1065 : vector<1x16xf32>
    %1068 = math.exp %1067 : vector<1x16xf32>
    %cst_353 = arith.constant 1.000000e+00 : f32
    %1069 = vector.broadcast %cst_353 : f32 to vector<1x16xf32>
    %1070 = arith.addf %1069, %1068 : vector<1x16xf32>
    %cst_354 = arith.constant 1.000000e+00 : f32
    %1071 = vector.broadcast %cst_354 : f32 to vector<1x16xf32>
    %1072 = arith.divf %1071, %1070 : vector<1x16xf32>
    %1073 = vector.extract_strided_slice %1052 {offsets = [0, 32], sizes = [1, 16], strides = [1, 1]} : vector<1x48xf32> to vector<1x16xf32>
    %1074 = vector.extract_strided_slice %1051 {offsets = [0, 32], sizes = [1, 16], strides = [1, 1]} : vector<1x48xf32> to vector<1x16xf32>
    %1075 = arith.mulf %1062, %1074 : vector<1x16xf32>
    %1076 = arith.addf %1073, %1075 : vector<1x16xf32>
    %1077 = math.tanh %1076 : vector<1x16xf32>
    %cst_355 = arith.constant 1.000000e+00 : f32
    %1078 = vector.broadcast %cst_355 : f32 to vector<1x16xf32>
    %1079 = arith.subf %1078, %1072 : vector<1x16xf32>
    %1080 = arith.mulf %1079, %1077 : vector<1x16xf32>
    %1081 = arith.mulf %1072, %1049 : vector<1x16xf32>
    %1082 = arith.addf %1080, %1081 : vector<1x16xf32>
    %cst_356 = arith.constant dense<0.000000e+00> : vector<1x48xf32>
    %1083 = tpu.matmul %1082, %881, %cst_356 {dimension_numbers = #tpu.dot_dimension_numbers<[1], [0], [0], [1], [0, 0, 1, 1], [], []>} : vector<1x16xf32>, vector<16x48xf32>, vector<1x48xf32> -> vector<1x48xf32>
    %1084 = arith.addf %1083, %883 : vector<1x48xf32>
    %1085 = vector.extract_strided_slice %879 {offsets = [6, 0], sizes = [1, 48], strides = [1, 1]} : vector<8x48xf32> to vector<1x48xf32>
    %1086 = vector.extract_strided_slice %1085 {offsets = [0, 0], sizes = [1, 16], strides = [1, 1]} : vector<1x48xf32> to vector<1x16xf32>
    %1087 = vector.extract_strided_slice %1084 {offsets = [0, 0], sizes = [1, 16], strides = [1, 1]} : vector<1x48xf32> to vector<1x16xf32>
    %1088 = arith.addf %1086, %1087 : vector<1x16xf32>
    %cst_357 = arith.constant 0.000000e+00 : f32
    %1089 = vector.broadcast %cst_357 : f32 to vector<1x16xf32>
    %1090 = arith.subf %1089, %1088 : vector<1x16xf32>
    %1091 = math.exp %1090 : vector<1x16xf32>
    %cst_358 = arith.constant 1.000000e+00 : f32
    %1092 = vector.broadcast %cst_358 : f32 to vector<1x16xf32>
    %1093 = arith.addf %1092, %1091 : vector<1x16xf32>
    %cst_359 = arith.constant 1.000000e+00 : f32
    %1094 = vector.broadcast %cst_359 : f32 to vector<1x16xf32>
    %1095 = arith.divf %1094, %1093 : vector<1x16xf32>
    %1096 = vector.extract_strided_slice %1085 {offsets = [0, 16], sizes = [1, 16], strides = [1, 1]} : vector<1x48xf32> to vector<1x16xf32>
    %1097 = vector.extract_strided_slice %1084 {offsets = [0, 16], sizes = [1, 16], strides = [1, 1]} : vector<1x48xf32> to vector<1x16xf32>
    %1098 = arith.addf %1096, %1097 : vector<1x16xf32>
    %cst_360 = arith.constant 0.000000e+00 : f32
    %1099 = vector.broadcast %cst_360 : f32 to vector<1x16xf32>
    %1100 = arith.subf %1099, %1098 : vector<1x16xf32>
    %1101 = math.exp %1100 : vector<1x16xf32>
    %cst_361 = arith.constant 1.000000e+00 : f32
    %1102 = vector.broadcast %cst_361 : f32 to vector<1x16xf32>
    %1103 = arith.addf %1102, %1101 : vector<1x16xf32>
    %cst_362 = arith.constant 1.000000e+00 : f32
    %1104 = vector.broadcast %cst_362 : f32 to vector<1x16xf32>
    %1105 = arith.divf %1104, %1103 : vector<1x16xf32>
    %1106 = vector.extract_strided_slice %1085 {offsets = [0, 32], sizes = [1, 16], strides = [1, 1]} : vector<1x48xf32> to vector<1x16xf32>
    %1107 = vector.extract_strided_slice %1084 {offsets = [0, 32], sizes = [1, 16], strides = [1, 1]} : vector<1x48xf32> to vector<1x16xf32>
    %1108 = arith.mulf %1095, %1107 : vector<1x16xf32>
    %1109 = arith.addf %1106, %1108 : vector<1x16xf32>
    %1110 = math.tanh %1109 : vector<1x16xf32>
    %cst_363 = arith.constant 1.000000e+00 : f32
    %1111 = vector.broadcast %cst_363 : f32 to vector<1x16xf32>
    %1112 = arith.subf %1111, %1105 : vector<1x16xf32>
    %1113 = arith.mulf %1112, %1110 : vector<1x16xf32>
    %1114 = arith.mulf %1105, %1082 : vector<1x16xf32>
    %1115 = arith.addf %1113, %1114 : vector<1x16xf32>
    %cst_364 = arith.constant dense<0.000000e+00> : vector<1x48xf32>
    %1116 = tpu.matmul %1115, %881, %cst_364 {dimension_numbers = #tpu.dot_dimension_numbers<[1], [0], [0], [1], [0, 0, 1, 1], [], []>} : vector<1x16xf32>, vector<16x48xf32>, vector<1x48xf32> -> vector<1x48xf32>
    %1117 = arith.addf %1116, %883 : vector<1x48xf32>
    %1118 = vector.extract_strided_slice %879 {offsets = [7, 0], sizes = [1, 48], strides = [1, 1]} : vector<8x48xf32> to vector<1x48xf32>
    %1119 = vector.extract_strided_slice %1118 {offsets = [0, 0], sizes = [1, 16], strides = [1, 1]} : vector<1x48xf32> to vector<1x16xf32>
    %1120 = vector.extract_strided_slice %1117 {offsets = [0, 0], sizes = [1, 16], strides = [1, 1]} : vector<1x48xf32> to vector<1x16xf32>
    %1121 = arith.addf %1119, %1120 : vector<1x16xf32>
    %cst_365 = arith.constant 0.000000e+00 : f32
    %1122 = vector.broadcast %cst_365 : f32 to vector<1x16xf32>
    %1123 = arith.subf %1122, %1121 : vector<1x16xf32>
    %1124 = math.exp %1123 : vector<1x16xf32>
    %cst_366 = arith.constant 1.000000e+00 : f32
    %1125 = vector.broadcast %cst_366 : f32 to vector<1x16xf32>
    %1126 = arith.addf %1125, %1124 : vector<1x16xf32>
    %cst_367 = arith.constant 1.000000e+00 : f32
    %1127 = vector.broadcast %cst_367 : f32 to vector<1x16xf32>
    %1128 = arith.divf %1127, %1126 : vector<1x16xf32>
    %1129 = vector.extract_strided_slice %1118 {offsets = [0, 16], sizes = [1, 16], strides = [1, 1]} : vector<1x48xf32> to vector<1x16xf32>
    %1130 = vector.extract_strided_slice %1117 {offsets = [0, 16], sizes = [1, 16], strides = [1, 1]} : vector<1x48xf32> to vector<1x16xf32>
    %1131 = arith.addf %1129, %1130 : vector<1x16xf32>
    %cst_368 = arith.constant 0.000000e+00 : f32
    %1132 = vector.broadcast %cst_368 : f32 to vector<1x16xf32>
    %1133 = arith.subf %1132, %1131 : vector<1x16xf32>
    %1134 = math.exp %1133 : vector<1x16xf32>
    %cst_369 = arith.constant 1.000000e+00 : f32
    %1135 = vector.broadcast %cst_369 : f32 to vector<1x16xf32>
    %1136 = arith.addf %1135, %1134 : vector<1x16xf32>
    %cst_370 = arith.constant 1.000000e+00 : f32
    %1137 = vector.broadcast %cst_370 : f32 to vector<1x16xf32>
    %1138 = arith.divf %1137, %1136 : vector<1x16xf32>
    %1139 = vector.extract_strided_slice %1118 {offsets = [0, 32], sizes = [1, 16], strides = [1, 1]} : vector<1x48xf32> to vector<1x16xf32>
    %1140 = vector.extract_strided_slice %1117 {offsets = [0, 32], sizes = [1, 16], strides = [1, 1]} : vector<1x48xf32> to vector<1x16xf32>
    %1141 = arith.mulf %1128, %1140 : vector<1x16xf32>
    %1142 = arith.addf %1139, %1141 : vector<1x16xf32>
    %1143 = math.tanh %1142 : vector<1x16xf32>
    %cst_371 = arith.constant 1.000000e+00 : f32
    %1144 = vector.broadcast %cst_371 : f32 to vector<1x16xf32>
    %1145 = arith.subf %1144, %1138 : vector<1x16xf32>
    %1146 = arith.mulf %1145, %1143 : vector<1x16xf32>
    %1147 = arith.mulf %1138, %1115 : vector<1x16xf32>
    %1148 = arith.addf %1146, %1147 : vector<1x16xf32>
    %1149 = tpu.concatenate %917, %950, %983, %1016, %1049, %1082, %1115, %1148 in 0 : vector<1x16xf32>, vector<1x16xf32>, vector<1x16xf32>, vector<1x16xf32>, vector<1x16xf32>, vector<1x16xf32>, vector<1x16xf32>, vector<1x16xf32> -> vector<8x16xf32>
    %c3 = arith.constant 3 : index
    %c0_372 = arith.constant 0 : index
    %c0_373 = arith.constant 0 : index
    %1150 = vector.load %arg20[%c3, %c0_372, %c0_373] : memref<4x32x48xf32, #tpu.memory_space<vmem>>, vector<1x32x48xf32>
    %1151 = vector.shape_cast %1150 : vector<1x32x48xf32> to vector<32x48xf32>
    %cst_374 = arith.constant dense<0.000000e+00> : vector<8x48xf32>
    %1152 = tpu.matmul %872, %1151, %cst_374 {dimension_numbers = #tpu.dot_dimension_numbers<[1], [0], [0], [1], [0, 0, 1, 1], [], []>} : vector<8x32xf32>, vector<32x48xf32>, vector<8x48xf32> -> vector<8x48xf32>
    %c3_375 = arith.constant 3 : index
    %c0_376 = arith.constant 0 : index
    %c0_377 = arith.constant 0 : index
    %1153 = vector.load %arg22[%c3_375, %c0_376, %c0_377] : memref<4x1x48xf32, #tpu.memory_space<vmem>>, vector<1x1x48xf32>
    %1154 = vector.shape_cast %1153 : vector<1x1x48xf32> to vector<1x48xf32>
    %1155 = vector.broadcast %1154 : vector<1x48xf32> to vector<8x48xf32>
    %1156 = arith.addf %1152, %1155 : vector<8x48xf32>
    %c3_378 = arith.constant 3 : index
    %c0_379 = arith.constant 0 : index
    %c0_380 = arith.constant 0 : index
    %1157 = vector.load %arg21[%c3_378, %c0_379, %c0_380] : memref<4x16x48xf32, #tpu.memory_space<vmem>>, vector<1x16x48xf32>
    %1158 = vector.shape_cast %1157 : vector<1x16x48xf32> to vector<16x48xf32>
    %c3_381 = arith.constant 3 : index
    %c0_382 = arith.constant 0 : index
    %c0_383 = arith.constant 0 : index
    %1159 = vector.load %arg23[%c3_381, %c0_382, %c0_383] : memref<4x1x48xf32, #tpu.memory_space<vmem>>, vector<1x1x48xf32>
    %1160 = vector.shape_cast %1159 : vector<1x1x48xf32> to vector<1x48xf32>
    %cst_384 = arith.constant 0.000000e+00 : f32
    %1161 = vector.broadcast %cst_384 : f32 to vector<1x16xf32>
    %cst_385 = arith.constant dense<0.000000e+00> : vector<1x48xf32>
    %1162 = tpu.matmul %1161, %1158, %cst_385 {dimension_numbers = #tpu.dot_dimension_numbers<[1], [0], [0], [1], [0, 0, 1, 1], [], []>} : vector<1x16xf32>, vector<16x48xf32>, vector<1x48xf32> -> vector<1x48xf32>
    %1163 = arith.addf %1162, %1160 : vector<1x48xf32>
    %1164 = vector.extract_strided_slice %1156 {offsets = [7, 0], sizes = [1, 48], strides = [1, 1]} : vector<8x48xf32> to vector<1x48xf32>
    %1165 = vector.extract_strided_slice %1164 {offsets = [0, 0], sizes = [1, 16], strides = [1, 1]} : vector<1x48xf32> to vector<1x16xf32>
    %1166 = vector.extract_strided_slice %1163 {offsets = [0, 0], sizes = [1, 16], strides = [1, 1]} : vector<1x48xf32> to vector<1x16xf32>
    %1167 = arith.addf %1165, %1166 : vector<1x16xf32>
    %cst_386 = arith.constant 0.000000e+00 : f32
    %1168 = vector.broadcast %cst_386 : f32 to vector<1x16xf32>
    %1169 = arith.subf %1168, %1167 : vector<1x16xf32>
    %1170 = math.exp %1169 : vector<1x16xf32>
    %cst_387 = arith.constant 1.000000e+00 : f32
    %1171 = vector.broadcast %cst_387 : f32 to vector<1x16xf32>
    %1172 = arith.addf %1171, %1170 : vector<1x16xf32>
    %cst_388 = arith.constant 1.000000e+00 : f32
    %1173 = vector.broadcast %cst_388 : f32 to vector<1x16xf32>
    %1174 = arith.divf %1173, %1172 : vector<1x16xf32>
    %1175 = vector.extract_strided_slice %1164 {offsets = [0, 16], sizes = [1, 16], strides = [1, 1]} : vector<1x48xf32> to vector<1x16xf32>
    %1176 = vector.extract_strided_slice %1163 {offsets = [0, 16], sizes = [1, 16], strides = [1, 1]} : vector<1x48xf32> to vector<1x16xf32>
    %1177 = arith.addf %1175, %1176 : vector<1x16xf32>
    %cst_389 = arith.constant 0.000000e+00 : f32
    %1178 = vector.broadcast %cst_389 : f32 to vector<1x16xf32>
    %1179 = arith.subf %1178, %1177 : vector<1x16xf32>
    %1180 = math.exp %1179 : vector<1x16xf32>
    %cst_390 = arith.constant 1.000000e+00 : f32
    %1181 = vector.broadcast %cst_390 : f32 to vector<1x16xf32>
    %1182 = arith.addf %1181, %1180 : vector<1x16xf32>
    %cst_391 = arith.constant 1.000000e+00 : f32
    %1183 = vector.broadcast %cst_391 : f32 to vector<1x16xf32>
    %1184 = arith.divf %1183, %1182 : vector<1x16xf32>
    %1185 = vector.extract_strided_slice %1164 {offsets = [0, 32], sizes = [1, 16], strides = [1, 1]} : vector<1x48xf32> to vector<1x16xf32>
    %1186 = vector.extract_strided_slice %1163 {offsets = [0, 32], sizes = [1, 16], strides = [1, 1]} : vector<1x48xf32> to vector<1x16xf32>
    %1187 = arith.mulf %1174, %1186 : vector<1x16xf32>
    %1188 = arith.addf %1185, %1187 : vector<1x16xf32>
    %1189 = math.tanh %1188 : vector<1x16xf32>
    %cst_392 = arith.constant 1.000000e+00 : f32
    %1190 = vector.broadcast %cst_392 : f32 to vector<1x16xf32>
    %1191 = arith.subf %1190, %1184 : vector<1x16xf32>
    %1192 = arith.mulf %1191, %1189 : vector<1x16xf32>
    %1193 = arith.mulf %1184, %1161 : vector<1x16xf32>
    %1194 = arith.addf %1192, %1193 : vector<1x16xf32>
    %cst_393 = arith.constant dense<0.000000e+00> : vector<1x48xf32>
    %1195 = tpu.matmul %1194, %1158, %cst_393 {dimension_numbers = #tpu.dot_dimension_numbers<[1], [0], [0], [1], [0, 0, 1, 1], [], []>} : vector<1x16xf32>, vector<16x48xf32>, vector<1x48xf32> -> vector<1x48xf32>
    %1196 = arith.addf %1195, %1160 : vector<1x48xf32>
    %1197 = vector.extract_strided_slice %1156 {offsets = [6, 0], sizes = [1, 48], strides = [1, 1]} : vector<8x48xf32> to vector<1x48xf32>
    %1198 = vector.extract_strided_slice %1197 {offsets = [0, 0], sizes = [1, 16], strides = [1, 1]} : vector<1x48xf32> to vector<1x16xf32>
    %1199 = vector.extract_strided_slice %1196 {offsets = [0, 0], sizes = [1, 16], strides = [1, 1]} : vector<1x48xf32> to vector<1x16xf32>
    %1200 = arith.addf %1198, %1199 : vector<1x16xf32>
    %cst_394 = arith.constant 0.000000e+00 : f32
    %1201 = vector.broadcast %cst_394 : f32 to vector<1x16xf32>
    %1202 = arith.subf %1201, %1200 : vector<1x16xf32>
    %1203 = math.exp %1202 : vector<1x16xf32>
    %cst_395 = arith.constant 1.000000e+00 : f32
    %1204 = vector.broadcast %cst_395 : f32 to vector<1x16xf32>
    %1205 = arith.addf %1204, %1203 : vector<1x16xf32>
    %cst_396 = arith.constant 1.000000e+00 : f32
    %1206 = vector.broadcast %cst_396 : f32 to vector<1x16xf32>
    %1207 = arith.divf %1206, %1205 : vector<1x16xf32>
    %1208 = vector.extract_strided_slice %1197 {offsets = [0, 16], sizes = [1, 16], strides = [1, 1]} : vector<1x48xf32> to vector<1x16xf32>
    %1209 = vector.extract_strided_slice %1196 {offsets = [0, 16], sizes = [1, 16], strides = [1, 1]} : vector<1x48xf32> to vector<1x16xf32>
    %1210 = arith.addf %1208, %1209 : vector<1x16xf32>
    %cst_397 = arith.constant 0.000000e+00 : f32
    %1211 = vector.broadcast %cst_397 : f32 to vector<1x16xf32>
    %1212 = arith.subf %1211, %1210 : vector<1x16xf32>
    %1213 = math.exp %1212 : vector<1x16xf32>
    %cst_398 = arith.constant 1.000000e+00 : f32
    %1214 = vector.broadcast %cst_398 : f32 to vector<1x16xf32>
    %1215 = arith.addf %1214, %1213 : vector<1x16xf32>
    %cst_399 = arith.constant 1.000000e+00 : f32
    %1216 = vector.broadcast %cst_399 : f32 to vector<1x16xf32>
    %1217 = arith.divf %1216, %1215 : vector<1x16xf32>
    %1218 = vector.extract_strided_slice %1197 {offsets = [0, 32], sizes = [1, 16], strides = [1, 1]} : vector<1x48xf32> to vector<1x16xf32>
    %1219 = vector.extract_strided_slice %1196 {offsets = [0, 32], sizes = [1, 16], strides = [1, 1]} : vector<1x48xf32> to vector<1x16xf32>
    %1220 = arith.mulf %1207, %1219 : vector<1x16xf32>
    %1221 = arith.addf %1218, %1220 : vector<1x16xf32>
    %1222 = math.tanh %1221 : vector<1x16xf32>
    %cst_400 = arith.constant 1.000000e+00 : f32
    %1223 = vector.broadcast %cst_400 : f32 to vector<1x16xf32>
    %1224 = arith.subf %1223, %1217 : vector<1x16xf32>
    %1225 = arith.mulf %1224, %1222 : vector<1x16xf32>
    %1226 = arith.mulf %1217, %1194 : vector<1x16xf32>
    %1227 = arith.addf %1225, %1226 : vector<1x16xf32>
    %cst_401 = arith.constant dense<0.000000e+00> : vector<1x48xf32>
    %1228 = tpu.matmul %1227, %1158, %cst_401 {dimension_numbers = #tpu.dot_dimension_numbers<[1], [0], [0], [1], [0, 0, 1, 1], [], []>} : vector<1x16xf32>, vector<16x48xf32>, vector<1x48xf32> -> vector<1x48xf32>
    %1229 = arith.addf %1228, %1160 : vector<1x48xf32>
    %1230 = vector.extract_strided_slice %1156 {offsets = [5, 0], sizes = [1, 48], strides = [1, 1]} : vector<8x48xf32> to vector<1x48xf32>
    %1231 = vector.extract_strided_slice %1230 {offsets = [0, 0], sizes = [1, 16], strides = [1, 1]} : vector<1x48xf32> to vector<1x16xf32>
    %1232 = vector.extract_strided_slice %1229 {offsets = [0, 0], sizes = [1, 16], strides = [1, 1]} : vector<1x48xf32> to vector<1x16xf32>
    %1233 = arith.addf %1231, %1232 : vector<1x16xf32>
    %cst_402 = arith.constant 0.000000e+00 : f32
    %1234 = vector.broadcast %cst_402 : f32 to vector<1x16xf32>
    %1235 = arith.subf %1234, %1233 : vector<1x16xf32>
    %1236 = math.exp %1235 : vector<1x16xf32>
    %cst_403 = arith.constant 1.000000e+00 : f32
    %1237 = vector.broadcast %cst_403 : f32 to vector<1x16xf32>
    %1238 = arith.addf %1237, %1236 : vector<1x16xf32>
    %cst_404 = arith.constant 1.000000e+00 : f32
    %1239 = vector.broadcast %cst_404 : f32 to vector<1x16xf32>
    %1240 = arith.divf %1239, %1238 : vector<1x16xf32>
    %1241 = vector.extract_strided_slice %1230 {offsets = [0, 16], sizes = [1, 16], strides = [1, 1]} : vector<1x48xf32> to vector<1x16xf32>
    %1242 = vector.extract_strided_slice %1229 {offsets = [0, 16], sizes = [1, 16], strides = [1, 1]} : vector<1x48xf32> to vector<1x16xf32>
    %1243 = arith.addf %1241, %1242 : vector<1x16xf32>
    %cst_405 = arith.constant 0.000000e+00 : f32
    %1244 = vector.broadcast %cst_405 : f32 to vector<1x16xf32>
    %1245 = arith.subf %1244, %1243 : vector<1x16xf32>
    %1246 = math.exp %1245 : vector<1x16xf32>
    %cst_406 = arith.constant 1.000000e+00 : f32
    %1247 = vector.broadcast %cst_406 : f32 to vector<1x16xf32>
    %1248 = arith.addf %1247, %1246 : vector<1x16xf32>
    %cst_407 = arith.constant 1.000000e+00 : f32
    %1249 = vector.broadcast %cst_407 : f32 to vector<1x16xf32>
    %1250 = arith.divf %1249, %1248 : vector<1x16xf32>
    %1251 = vector.extract_strided_slice %1230 {offsets = [0, 32], sizes = [1, 16], strides = [1, 1]} : vector<1x48xf32> to vector<1x16xf32>
    %1252 = vector.extract_strided_slice %1229 {offsets = [0, 32], sizes = [1, 16], strides = [1, 1]} : vector<1x48xf32> to vector<1x16xf32>
    %1253 = arith.mulf %1240, %1252 : vector<1x16xf32>
    %1254 = arith.addf %1251, %1253 : vector<1x16xf32>
    %1255 = math.tanh %1254 : vector<1x16xf32>
    %cst_408 = arith.constant 1.000000e+00 : f32
    %1256 = vector.broadcast %cst_408 : f32 to vector<1x16xf32>
    %1257 = arith.subf %1256, %1250 : vector<1x16xf32>
    %1258 = arith.mulf %1257, %1255 : vector<1x16xf32>
    %1259 = arith.mulf %1250, %1227 : vector<1x16xf32>
    %1260 = arith.addf %1258, %1259 : vector<1x16xf32>
    %cst_409 = arith.constant dense<0.000000e+00> : vector<1x48xf32>
    %1261 = tpu.matmul %1260, %1158, %cst_409 {dimension_numbers = #tpu.dot_dimension_numbers<[1], [0], [0], [1], [0, 0, 1, 1], [], []>} : vector<1x16xf32>, vector<16x48xf32>, vector<1x48xf32> -> vector<1x48xf32>
    %1262 = arith.addf %1261, %1160 : vector<1x48xf32>
    %1263 = vector.extract_strided_slice %1156 {offsets = [4, 0], sizes = [1, 48], strides = [1, 1]} : vector<8x48xf32> to vector<1x48xf32>
    %1264 = vector.extract_strided_slice %1263 {offsets = [0, 0], sizes = [1, 16], strides = [1, 1]} : vector<1x48xf32> to vector<1x16xf32>
    %1265 = vector.extract_strided_slice %1262 {offsets = [0, 0], sizes = [1, 16], strides = [1, 1]} : vector<1x48xf32> to vector<1x16xf32>
    %1266 = arith.addf %1264, %1265 : vector<1x16xf32>
    %cst_410 = arith.constant 0.000000e+00 : f32
    %1267 = vector.broadcast %cst_410 : f32 to vector<1x16xf32>
    %1268 = arith.subf %1267, %1266 : vector<1x16xf32>
    %1269 = math.exp %1268 : vector<1x16xf32>
    %cst_411 = arith.constant 1.000000e+00 : f32
    %1270 = vector.broadcast %cst_411 : f32 to vector<1x16xf32>
    %1271 = arith.addf %1270, %1269 : vector<1x16xf32>
    %cst_412 = arith.constant 1.000000e+00 : f32
    %1272 = vector.broadcast %cst_412 : f32 to vector<1x16xf32>
    %1273 = arith.divf %1272, %1271 : vector<1x16xf32>
    %1274 = vector.extract_strided_slice %1263 {offsets = [0, 16], sizes = [1, 16], strides = [1, 1]} : vector<1x48xf32> to vector<1x16xf32>
    %1275 = vector.extract_strided_slice %1262 {offsets = [0, 16], sizes = [1, 16], strides = [1, 1]} : vector<1x48xf32> to vector<1x16xf32>
    %1276 = arith.addf %1274, %1275 : vector<1x16xf32>
    %cst_413 = arith.constant 0.000000e+00 : f32
    %1277 = vector.broadcast %cst_413 : f32 to vector<1x16xf32>
    %1278 = arith.subf %1277, %1276 : vector<1x16xf32>
    %1279 = math.exp %1278 : vector<1x16xf32>
    %cst_414 = arith.constant 1.000000e+00 : f32
    %1280 = vector.broadcast %cst_414 : f32 to vector<1x16xf32>
    %1281 = arith.addf %1280, %1279 : vector<1x16xf32>
    %cst_415 = arith.constant 1.000000e+00 : f32
    %1282 = vector.broadcast %cst_415 : f32 to vector<1x16xf32>
    %1283 = arith.divf %1282, %1281 : vector<1x16xf32>
    %1284 = vector.extract_strided_slice %1263 {offsets = [0, 32], sizes = [1, 16], strides = [1, 1]} : vector<1x48xf32> to vector<1x16xf32>
    %1285 = vector.extract_strided_slice %1262 {offsets = [0, 32], sizes = [1, 16], strides = [1, 1]} : vector<1x48xf32> to vector<1x16xf32>
    %1286 = arith.mulf %1273, %1285 : vector<1x16xf32>
    %1287 = arith.addf %1284, %1286 : vector<1x16xf32>
    %1288 = math.tanh %1287 : vector<1x16xf32>
    %cst_416 = arith.constant 1.000000e+00 : f32
    %1289 = vector.broadcast %cst_416 : f32 to vector<1x16xf32>
    %1290 = arith.subf %1289, %1283 : vector<1x16xf32>
    %1291 = arith.mulf %1290, %1288 : vector<1x16xf32>
    %1292 = arith.mulf %1283, %1260 : vector<1x16xf32>
    %1293 = arith.addf %1291, %1292 : vector<1x16xf32>
    %cst_417 = arith.constant dense<0.000000e+00> : vector<1x48xf32>
    %1294 = tpu.matmul %1293, %1158, %cst_417 {dimension_numbers = #tpu.dot_dimension_numbers<[1], [0], [0], [1], [0, 0, 1, 1], [], []>} : vector<1x16xf32>, vector<16x48xf32>, vector<1x48xf32> -> vector<1x48xf32>
    %1295 = arith.addf %1294, %1160 : vector<1x48xf32>
    %1296 = vector.extract_strided_slice %1156 {offsets = [3, 0], sizes = [1, 48], strides = [1, 1]} : vector<8x48xf32> to vector<1x48xf32>
    %1297 = vector.extract_strided_slice %1296 {offsets = [0, 0], sizes = [1, 16], strides = [1, 1]} : vector<1x48xf32> to vector<1x16xf32>
    %1298 = vector.extract_strided_slice %1295 {offsets = [0, 0], sizes = [1, 16], strides = [1, 1]} : vector<1x48xf32> to vector<1x16xf32>
    %1299 = arith.addf %1297, %1298 : vector<1x16xf32>
    %cst_418 = arith.constant 0.000000e+00 : f32
    %1300 = vector.broadcast %cst_418 : f32 to vector<1x16xf32>
    %1301 = arith.subf %1300, %1299 : vector<1x16xf32>
    %1302 = math.exp %1301 : vector<1x16xf32>
    %cst_419 = arith.constant 1.000000e+00 : f32
    %1303 = vector.broadcast %cst_419 : f32 to vector<1x16xf32>
    %1304 = arith.addf %1303, %1302 : vector<1x16xf32>
    %cst_420 = arith.constant 1.000000e+00 : f32
    %1305 = vector.broadcast %cst_420 : f32 to vector<1x16xf32>
    %1306 = arith.divf %1305, %1304 : vector<1x16xf32>
    %1307 = vector.extract_strided_slice %1296 {offsets = [0, 16], sizes = [1, 16], strides = [1, 1]} : vector<1x48xf32> to vector<1x16xf32>
    %1308 = vector.extract_strided_slice %1295 {offsets = [0, 16], sizes = [1, 16], strides = [1, 1]} : vector<1x48xf32> to vector<1x16xf32>
    %1309 = arith.addf %1307, %1308 : vector<1x16xf32>
    %cst_421 = arith.constant 0.000000e+00 : f32
    %1310 = vector.broadcast %cst_421 : f32 to vector<1x16xf32>
    %1311 = arith.subf %1310, %1309 : vector<1x16xf32>
    %1312 = math.exp %1311 : vector<1x16xf32>
    %cst_422 = arith.constant 1.000000e+00 : f32
    %1313 = vector.broadcast %cst_422 : f32 to vector<1x16xf32>
    %1314 = arith.addf %1313, %1312 : vector<1x16xf32>
    %cst_423 = arith.constant 1.000000e+00 : f32
    %1315 = vector.broadcast %cst_423 : f32 to vector<1x16xf32>
    %1316 = arith.divf %1315, %1314 : vector<1x16xf32>
    %1317 = vector.extract_strided_slice %1296 {offsets = [0, 32], sizes = [1, 16], strides = [1, 1]} : vector<1x48xf32> to vector<1x16xf32>
    %1318 = vector.extract_strided_slice %1295 {offsets = [0, 32], sizes = [1, 16], strides = [1, 1]} : vector<1x48xf32> to vector<1x16xf32>
    %1319 = arith.mulf %1306, %1318 : vector<1x16xf32>
    %1320 = arith.addf %1317, %1319 : vector<1x16xf32>
    %1321 = math.tanh %1320 : vector<1x16xf32>
    %cst_424 = arith.constant 1.000000e+00 : f32
    %1322 = vector.broadcast %cst_424 : f32 to vector<1x16xf32>
    %1323 = arith.subf %1322, %1316 : vector<1x16xf32>
    %1324 = arith.mulf %1323, %1321 : vector<1x16xf32>
    %1325 = arith.mulf %1316, %1293 : vector<1x16xf32>
    %1326 = arith.addf %1324, %1325 : vector<1x16xf32>
    %cst_425 = arith.constant dense<0.000000e+00> : vector<1x48xf32>
    %1327 = tpu.matmul %1326, %1158, %cst_425 {dimension_numbers = #tpu.dot_dimension_numbers<[1], [0], [0], [1], [0, 0, 1, 1], [], []>} : vector<1x16xf32>, vector<16x48xf32>, vector<1x48xf32> -> vector<1x48xf32>
    %1328 = arith.addf %1327, %1160 : vector<1x48xf32>
    %1329 = vector.extract_strided_slice %1156 {offsets = [2, 0], sizes = [1, 48], strides = [1, 1]} : vector<8x48xf32> to vector<1x48xf32>
    %1330 = vector.extract_strided_slice %1329 {offsets = [0, 0], sizes = [1, 16], strides = [1, 1]} : vector<1x48xf32> to vector<1x16xf32>
    %1331 = vector.extract_strided_slice %1328 {offsets = [0, 0], sizes = [1, 16], strides = [1, 1]} : vector<1x48xf32> to vector<1x16xf32>
    %1332 = arith.addf %1330, %1331 : vector<1x16xf32>
    %cst_426 = arith.constant 0.000000e+00 : f32
    %1333 = vector.broadcast %cst_426 : f32 to vector<1x16xf32>
    %1334 = arith.subf %1333, %1332 : vector<1x16xf32>
    %1335 = math.exp %1334 : vector<1x16xf32>
    %cst_427 = arith.constant 1.000000e+00 : f32
    %1336 = vector.broadcast %cst_427 : f32 to vector<1x16xf32>
    %1337 = arith.addf %1336, %1335 : vector<1x16xf32>
    %cst_428 = arith.constant 1.000000e+00 : f32
    %1338 = vector.broadcast %cst_428 : f32 to vector<1x16xf32>
    %1339 = arith.divf %1338, %1337 : vector<1x16xf32>
    %1340 = vector.extract_strided_slice %1329 {offsets = [0, 16], sizes = [1, 16], strides = [1, 1]} : vector<1x48xf32> to vector<1x16xf32>
    %1341 = vector.extract_strided_slice %1328 {offsets = [0, 16], sizes = [1, 16], strides = [1, 1]} : vector<1x48xf32> to vector<1x16xf32>
    %1342 = arith.addf %1340, %1341 : vector<1x16xf32>
    %cst_429 = arith.constant 0.000000e+00 : f32
    %1343 = vector.broadcast %cst_429 : f32 to vector<1x16xf32>
    %1344 = arith.subf %1343, %1342 : vector<1x16xf32>
    %1345 = math.exp %1344 : vector<1x16xf32>
    %cst_430 = arith.constant 1.000000e+00 : f32
    %1346 = vector.broadcast %cst_430 : f32 to vector<1x16xf32>
    %1347 = arith.addf %1346, %1345 : vector<1x16xf32>
    %cst_431 = arith.constant 1.000000e+00 : f32
    %1348 = vector.broadcast %cst_431 : f32 to vector<1x16xf32>
    %1349 = arith.divf %1348, %1347 : vector<1x16xf32>
    %1350 = vector.extract_strided_slice %1329 {offsets = [0, 32], sizes = [1, 16], strides = [1, 1]} : vector<1x48xf32> to vector<1x16xf32>
    %1351 = vector.extract_strided_slice %1328 {offsets = [0, 32], sizes = [1, 16], strides = [1, 1]} : vector<1x48xf32> to vector<1x16xf32>
    %1352 = arith.mulf %1339, %1351 : vector<1x16xf32>
    %1353 = arith.addf %1350, %1352 : vector<1x16xf32>
    %1354 = math.tanh %1353 : vector<1x16xf32>
    %cst_432 = arith.constant 1.000000e+00 : f32
    %1355 = vector.broadcast %cst_432 : f32 to vector<1x16xf32>
    %1356 = arith.subf %1355, %1349 : vector<1x16xf32>
    %1357 = arith.mulf %1356, %1354 : vector<1x16xf32>
    %1358 = arith.mulf %1349, %1326 : vector<1x16xf32>
    %1359 = arith.addf %1357, %1358 : vector<1x16xf32>
    %cst_433 = arith.constant dense<0.000000e+00> : vector<1x48xf32>
    %1360 = tpu.matmul %1359, %1158, %cst_433 {dimension_numbers = #tpu.dot_dimension_numbers<[1], [0], [0], [1], [0, 0, 1, 1], [], []>} : vector<1x16xf32>, vector<16x48xf32>, vector<1x48xf32> -> vector<1x48xf32>
    %1361 = arith.addf %1360, %1160 : vector<1x48xf32>
    %1362 = vector.extract_strided_slice %1156 {offsets = [1, 0], sizes = [1, 48], strides = [1, 1]} : vector<8x48xf32> to vector<1x48xf32>
    %1363 = vector.extract_strided_slice %1362 {offsets = [0, 0], sizes = [1, 16], strides = [1, 1]} : vector<1x48xf32> to vector<1x16xf32>
    %1364 = vector.extract_strided_slice %1361 {offsets = [0, 0], sizes = [1, 16], strides = [1, 1]} : vector<1x48xf32> to vector<1x16xf32>
    %1365 = arith.addf %1363, %1364 : vector<1x16xf32>
    %cst_434 = arith.constant 0.000000e+00 : f32
    %1366 = vector.broadcast %cst_434 : f32 to vector<1x16xf32>
    %1367 = arith.subf %1366, %1365 : vector<1x16xf32>
    %1368 = math.exp %1367 : vector<1x16xf32>
    %cst_435 = arith.constant 1.000000e+00 : f32
    %1369 = vector.broadcast %cst_435 : f32 to vector<1x16xf32>
    %1370 = arith.addf %1369, %1368 : vector<1x16xf32>
    %cst_436 = arith.constant 1.000000e+00 : f32
    %1371 = vector.broadcast %cst_436 : f32 to vector<1x16xf32>
    %1372 = arith.divf %1371, %1370 : vector<1x16xf32>
    %1373 = vector.extract_strided_slice %1362 {offsets = [0, 16], sizes = [1, 16], strides = [1, 1]} : vector<1x48xf32> to vector<1x16xf32>
    %1374 = vector.extract_strided_slice %1361 {offsets = [0, 16], sizes = [1, 16], strides = [1, 1]} : vector<1x48xf32> to vector<1x16xf32>
    %1375 = arith.addf %1373, %1374 : vector<1x16xf32>
    %cst_437 = arith.constant 0.000000e+00 : f32
    %1376 = vector.broadcast %cst_437 : f32 to vector<1x16xf32>
    %1377 = arith.subf %1376, %1375 : vector<1x16xf32>
    %1378 = math.exp %1377 : vector<1x16xf32>
    %cst_438 = arith.constant 1.000000e+00 : f32
    %1379 = vector.broadcast %cst_438 : f32 to vector<1x16xf32>
    %1380 = arith.addf %1379, %1378 : vector<1x16xf32>
    %cst_439 = arith.constant 1.000000e+00 : f32
    %1381 = vector.broadcast %cst_439 : f32 to vector<1x16xf32>
    %1382 = arith.divf %1381, %1380 : vector<1x16xf32>
    %1383 = vector.extract_strided_slice %1362 {offsets = [0, 32], sizes = [1, 16], strides = [1, 1]} : vector<1x48xf32> to vector<1x16xf32>
    %1384 = vector.extract_strided_slice %1361 {offsets = [0, 32], sizes = [1, 16], strides = [1, 1]} : vector<1x48xf32> to vector<1x16xf32>
    %1385 = arith.mulf %1372, %1384 : vector<1x16xf32>
    %1386 = arith.addf %1383, %1385 : vector<1x16xf32>
    %1387 = math.tanh %1386 : vector<1x16xf32>
    %cst_440 = arith.constant 1.000000e+00 : f32
    %1388 = vector.broadcast %cst_440 : f32 to vector<1x16xf32>
    %1389 = arith.subf %1388, %1382 : vector<1x16xf32>
    %1390 = arith.mulf %1389, %1387 : vector<1x16xf32>
    %1391 = arith.mulf %1382, %1359 : vector<1x16xf32>
    %1392 = arith.addf %1390, %1391 : vector<1x16xf32>
    %cst_441 = arith.constant dense<0.000000e+00> : vector<1x48xf32>
    %1393 = tpu.matmul %1392, %1158, %cst_441 {dimension_numbers = #tpu.dot_dimension_numbers<[1], [0], [0], [1], [0, 0, 1, 1], [], []>} : vector<1x16xf32>, vector<16x48xf32>, vector<1x48xf32> -> vector<1x48xf32>
    %1394 = arith.addf %1393, %1160 : vector<1x48xf32>
    %1395 = vector.extract_strided_slice %1156 {offsets = [0, 0], sizes = [1, 48], strides = [1, 1]} : vector<8x48xf32> to vector<1x48xf32>
    %1396 = vector.extract_strided_slice %1395 {offsets = [0, 0], sizes = [1, 16], strides = [1, 1]} : vector<1x48xf32> to vector<1x16xf32>
    %1397 = vector.extract_strided_slice %1394 {offsets = [0, 0], sizes = [1, 16], strides = [1, 1]} : vector<1x48xf32> to vector<1x16xf32>
    %1398 = arith.addf %1396, %1397 : vector<1x16xf32>
    %cst_442 = arith.constant 0.000000e+00 : f32
    %1399 = vector.broadcast %cst_442 : f32 to vector<1x16xf32>
    %1400 = arith.subf %1399, %1398 : vector<1x16xf32>
    %1401 = math.exp %1400 : vector<1x16xf32>
    %cst_443 = arith.constant 1.000000e+00 : f32
    %1402 = vector.broadcast %cst_443 : f32 to vector<1x16xf32>
    %1403 = arith.addf %1402, %1401 : vector<1x16xf32>
    %cst_444 = arith.constant 1.000000e+00 : f32
    %1404 = vector.broadcast %cst_444 : f32 to vector<1x16xf32>
    %1405 = arith.divf %1404, %1403 : vector<1x16xf32>
    %1406 = vector.extract_strided_slice %1395 {offsets = [0, 16], sizes = [1, 16], strides = [1, 1]} : vector<1x48xf32> to vector<1x16xf32>
    %1407 = vector.extract_strided_slice %1394 {offsets = [0, 16], sizes = [1, 16], strides = [1, 1]} : vector<1x48xf32> to vector<1x16xf32>
    %1408 = arith.addf %1406, %1407 : vector<1x16xf32>
    %cst_445 = arith.constant 0.000000e+00 : f32
    %1409 = vector.broadcast %cst_445 : f32 to vector<1x16xf32>
    %1410 = arith.subf %1409, %1408 : vector<1x16xf32>
    %1411 = math.exp %1410 : vector<1x16xf32>
    %cst_446 = arith.constant 1.000000e+00 : f32
    %1412 = vector.broadcast %cst_446 : f32 to vector<1x16xf32>
    %1413 = arith.addf %1412, %1411 : vector<1x16xf32>
    %cst_447 = arith.constant 1.000000e+00 : f32
    %1414 = vector.broadcast %cst_447 : f32 to vector<1x16xf32>
    %1415 = arith.divf %1414, %1413 : vector<1x16xf32>
    %1416 = vector.extract_strided_slice %1395 {offsets = [0, 32], sizes = [1, 16], strides = [1, 1]} : vector<1x48xf32> to vector<1x16xf32>
    %1417 = vector.extract_strided_slice %1394 {offsets = [0, 32], sizes = [1, 16], strides = [1, 1]} : vector<1x48xf32> to vector<1x16xf32>
    %1418 = arith.mulf %1405, %1417 : vector<1x16xf32>
    %1419 = arith.addf %1416, %1418 : vector<1x16xf32>
    %1420 = math.tanh %1419 : vector<1x16xf32>
    %cst_448 = arith.constant 1.000000e+00 : f32
    %1421 = vector.broadcast %cst_448 : f32 to vector<1x16xf32>
    %1422 = arith.subf %1421, %1415 : vector<1x16xf32>
    %1423 = arith.mulf %1422, %1420 : vector<1x16xf32>
    %1424 = arith.mulf %1415, %1392 : vector<1x16xf32>
    %1425 = arith.addf %1423, %1424 : vector<1x16xf32>
    %1426 = tpu.concatenate %1425, %1392, %1359, %1326, %1293, %1260, %1227, %1194 in 0 : vector<1x16xf32>, vector<1x16xf32>, vector<1x16xf32>, vector<1x16xf32>, vector<1x16xf32>, vector<1x16xf32>, vector<1x16xf32>, vector<1x16xf32> -> vector<8x16xf32>
    %1427 = tpu.concatenate %1149, %1426 in 1 : vector<8x16xf32>, vector<8x16xf32> -> vector<8x32xf32>
    %c0_449 = arith.constant 0 : index
    %c0_450 = arith.constant 0 : index
    %1428 = vector.load %arg24[%c0_449, %c0_450] : memref<32x32xf32, #tpu.memory_space<vmem>>, vector<32x32xf32>
    %cst_451 = arith.constant dense<0.000000e+00> : vector<8x32xf32>
    %1429 = tpu.matmul %285, %1428, %cst_451 {dimension_numbers = #tpu.dot_dimension_numbers<[1], [0], [0], [1], [0, 0, 1, 1], [], []>} : vector<8x32xf32>, vector<32x32xf32>, vector<8x32xf32> -> vector<8x32xf32>
    %c0_452 = arith.constant 0 : index
    %c0_453 = arith.constant 0 : index
    %1430 = vector.load %arg25[%c0_452, %c0_453] : memref<32x32xf32, #tpu.memory_space<vmem>>, vector<32x32xf32>
    %cst_454 = arith.constant dense<0.000000e+00> : vector<8x32xf32>
    %1431 = tpu.matmul %1427, %1430, %cst_454 {dimension_numbers = #tpu.dot_dimension_numbers<[1], [0], [0], [1], [0, 0, 1, 1], [], []>} : vector<8x32xf32>, vector<32x32xf32>, vector<8x32xf32> -> vector<8x32xf32>
    %1432 = arith.addf %1429, %1431 : vector<8x32xf32>
    %c0_455 = arith.constant 0 : index
    %c0_456 = arith.constant 0 : index
    %1433 = vector.load %arg26[%c0_455, %c0_456] : memref<1x32xf32, #tpu.memory_space<vmem>>, vector<1x32xf32>
    %1434 = vector.broadcast %317 : vector<8x1xf32> to vector<8x32xf32>
    %1435 = vector.broadcast %1433 : vector<1x32xf32> to vector<8x32xf32>
    %1436 = arith.mulf %1434, %1435 : vector<8x32xf32>
    %1437 = arith.addf %1432, %1436 : vector<8x32xf32>
    %c0_457 = arith.constant 0 : index
    %c0_458 = arith.constant 0 : index
    %1438 = vector.load %arg27[%c0_457, %c0_458] : memref<1x32xf32, #tpu.memory_space<vmem>>, vector<1x32xf32>
    %1439 = vector.broadcast %1438 : vector<1x32xf32> to vector<8x32xf32>
    %1440 = arith.addf %1437, %1439 : vector<8x32xf32>
    %c0_459 = arith.constant 0 : index
    %c0_460 = arith.constant 0 : index
    %1441 = vector.load %arg28[%c0_459, %c0_460] : memref<1x32xf32, #tpu.memory_space<vmem>>, vector<1x32xf32>
    %c0_461 = arith.constant 0 : index
    %c0_462 = arith.constant 0 : index
    %1442 = vector.load %arg29[%c0_461, %c0_462] : memref<1x32xf32, #tpu.memory_space<vmem>>, vector<1x32xf32>
    %cst_463 = arith.constant dense<0.000000e+00> : vector<8xf32>
    %1443 = vector.multi_reduction <add>, %1440, %cst_463 [1] : vector<8x32xf32> to vector<8xf32>
    %1444 = vector.shape_cast %1443 : vector<8xf32> to vector<8x1xf32>
    %cst_464 = arith.constant 3.200000e+01 : f32
    %1445 = vector.broadcast %cst_464 : f32 to vector<8x1xf32>
    %1446 = arith.divf %1444, %1445 : vector<8x1xf32>
    %1447 = vector.broadcast %1446 : vector<8x1xf32> to vector<8x32xf32>
    %1448 = arith.subf %1440, %1447 : vector<8x32xf32>
    %1449 = arith.mulf %1448, %1448 : vector<8x32xf32>
    %cst_465 = arith.constant dense<0.000000e+00> : vector<8xf32>
    %1450 = vector.multi_reduction <add>, %1449, %cst_465 [1] : vector<8x32xf32> to vector<8xf32>
    %1451 = vector.shape_cast %1450 : vector<8xf32> to vector<8x1xf32>
    %cst_466 = arith.constant 3.200000e+01 : f32
    %1452 = vector.broadcast %cst_466 : f32 to vector<8x1xf32>
    %1453 = arith.divf %1451, %1452 : vector<8x1xf32>
    %cst_467 = arith.constant 9.99999974E-6 : f32
    %1454 = vector.broadcast %cst_467 : f32 to vector<8x1xf32>
    %1455 = arith.addf %1453, %1454 : vector<8x1xf32>
    %1456 = math.rsqrt %1455 : vector<8x1xf32>
    %1457 = vector.broadcast %1456 : vector<8x1xf32> to vector<8x32xf32>
    %1458 = arith.mulf %1448, %1457 : vector<8x32xf32>
    %1459 = vector.broadcast %1441 : vector<1x32xf32> to vector<8x32xf32>
    %1460 = arith.mulf %1458, %1459 : vector<8x32xf32>
    %1461 = vector.broadcast %1442 : vector<1x32xf32> to vector<8x32xf32>
    %1462 = arith.addf %1460, %1461 : vector<8x32xf32>
    %cst_468 = arith.constant 5.000000e-01 : f32
    %1463 = vector.broadcast %cst_468 : f32 to vector<8x32xf32>
    %1464 = arith.mulf %1463, %1462 : vector<8x32xf32>
    %cst_469 = arith.constant 4.471500e-02 : f32
    %1465 = vector.broadcast %cst_469 : f32 to vector<8x32xf32>
    %1466 = arith.mulf %1465, %1462 : vector<8x32xf32>
    %1467 = arith.mulf %1466, %1462 : vector<8x32xf32>
    %1468 = arith.mulf %1467, %1462 : vector<8x32xf32>
    %1469 = arith.addf %1462, %1468 : vector<8x32xf32>
    %cst_470 = arith.constant 0.797884583 : f32
    %1470 = vector.broadcast %cst_470 : f32 to vector<8x32xf32>
    %1471 = arith.mulf %1470, %1469 : vector<8x32xf32>
    %1472 = math.tanh %1471 : vector<8x32xf32>
    %cst_471 = arith.constant 1.000000e+00 : f32
    %1473 = vector.broadcast %cst_471 : f32 to vector<8x32xf32>
    %1474 = arith.addf %1473, %1472 : vector<8x32xf32>
    %1475 = arith.mulf %1464, %1474 : vector<8x32xf32>
    %c0_472 = arith.constant 0 : index
    %c0_473 = arith.constant 0 : index
    %c0_474 = arith.constant 0 : index
    %1476 = vector.load %arg30[%c0_472, %c0_473, %c0_474] : memref<1x8x32xf32, #tpu.memory_space<vmem>>, vector<1x8x32xf32>
    %1477 = vector.shape_cast %1476 : vector<1x8x32xf32> to vector<8x32xf32>
    %1478 = vector.shape_cast %1475 : vector<8x32xf32> to vector<1x8x32xf32>
    tpu.vector_store %arg30[%c0_472, %c0_473, %c0_474], %1478 {strides = array<i32>} : memref<1x8x32xf32, #tpu.memory_space<vmem>>, vector<1x8x32xf32>,
    "tpu.trace_start"() <{level = 10 : i32, message = "td,sd->ts"}> : () -> ()
    %cst_475 = arith.constant dense<0.000000e+00> : vector<8x8xf32>
    %1479 = tpu.matmul %285, %285, %cst_475 {dimension_numbers = #tpu.dot_dimension_numbers<[1], [1], [0], [0], [0, 0, 1, 0], [], []>} : vector<8x32xf32>, vector<8x32xf32>, vector<8x8xf32> -> vector<8x8xf32>
    "tpu.trace_stop"() : () -> ()
    %cst_476 = arith.constant 0.176776692 : f32
    %1480 = vector.broadcast %cst_476 : f32 to vector<8x8xf32>
    %1481 = arith.mulf %1479, %1480 : vector<8x8xf32>
    %cst_477 = arith.constant dense<0xFF800000> : vector<8xf32>
    %1482 = vector.multi_reduction <maximumf>, %1481, %cst_477 [1] : vector<8x8xf32> to vector<8xf32>
    %1483 = vector.shape_cast %1482 : vector<8xf32> to vector<8x1xf32>
    %1484 = vector.broadcast %1483 : vector<8x1xf32> to vector<8x8xf32>
    %1485 = arith.subf %1481, %1484 : vector<8x8xf32>
    %1486 = math.exp %1485 : vector<8x8xf32>
    %cst_478 = arith.constant dense<0.000000e+00> : vector<8xf32>
    %1487 = vector.multi_reduction <add>, %1486, %cst_478 [1] : vector<8x8xf32> to vector<8xf32>
    %1488 = vector.shape_cast %1487 : vector<8xf32> to vector<8x1xf32>
    %1489 = vector.broadcast %1488 : vector<8x1xf32> to vector<8x8xf32>
    %1490 = arith.divf %1486, %1489 : vector<8x8xf32>
    %c0_479 = arith.constant 0 : index
    %c0_480 = arith.constant 0 : index
    %c0_481 = arith.constant 0 : index
    %1491 = vector.load %arg31[%c0_479, %c0_480, %c0_481] : memref<1x8x8xf32, #tpu.memory_space<vmem>>, vector<1x8x8xf32>
    %1492 = vector.shape_cast %1491 : vector<1x8x8xf32> to vector<8x8xf32>
    %1493 = vector.shape_cast %1490 : vector<8x8xf32> to vector<1x8x8xf32>
    tpu.vector_store %arg31[%c0_479, %c0_480, %c0_481], %1493 {strides = array<i32>} : memref<1x8x8xf32, #tpu.memory_space<vmem>>, vector<1x8x8xf32>,
    return
  }
  func.func @transform_0(%arg0: i32) -> (i32, i32, i32) {
    %c0_i32 = arith.constant 0 : i32
    %c0_i32_0 = arith.constant 0 : i32
    %c0_i32_1 = arith.constant 0 : i32
    return %arg0, %c0_i32, %c0_i32_0 : i32, i32, i32
  }
  func.func @transform_1(%arg0: i32) -> (i32, i32) {
    %c0_i32 = arith.constant 0 : i32
    %c0_i32_0 = arith.constant 0 : i32
    %c0_i32_1 = arith.constant 0 : i32
    return %c0_i32, %c0_i32_0 : i32, i32
  }
  func.func @transform_2(%arg0: i32) -> (i32, i32) {
    %c0_i32 = arith.constant 0 : i32
    %c0_i32_0 = arith.constant 0 : i32
    %c0_i32_1 = arith.constant 0 : i32
    return %c0_i32, %c0_i32_0 : i32, i32
  }
  func.func @transform_3(%arg0: i32) -> (i32, i32, i32) {
    %c0_i32 = arith.constant 0 : i32
    %c0_i32_0 = arith.constant 0 : i32
    %c0_i32_1 = arith.constant 0 : i32
    %c0_i32_2 = arith.constant 0 : i32
    return %c0_i32, %c0_i32_0, %c0_i32_1 : i32, i32, i32
  }
  func.func @transform_4(%arg0: i32) -> (i32, i32, i32) {
    %c0_i32 = arith.constant 0 : i32
    %c0_i32_0 = arith.constant 0 : i32
    %c0_i32_1 = arith.constant 0 : i32
    %c0_i32_2 = arith.constant 0 : i32
    return %c0_i32, %c0_i32_0, %c0_i32_1 : i32, i32, i32
  }
  func.func @transform_5(%arg0: i32) -> (i32, i32, i32) {
    %c0_i32 = arith.constant 0 : i32
    %c0_i32_0 = arith.constant 0 : i32
    %c0_i32_1 = arith.constant 0 : i32
    %c0_i32_2 = arith.constant 0 : i32
    return %c0_i32, %c0_i32_0, %c0_i32_1 : i32, i32, i32
  }
  func.func @transform_6(%arg0: i32) -> (i32, i32, i32) {
    %c0_i32 = arith.constant 0 : i32
    %c0_i32_0 = arith.constant 0 : i32
    %c0_i32_1 = arith.constant 0 : i32
    %c0_i32_2 = arith.constant 0 : i32
    return %c0_i32, %c0_i32_0, %c0_i32_1 : i32, i32, i32
  }
  func.func @transform_7(%arg0: i32) -> (i32, i32, i32) {
    %c0_i32 = arith.constant 0 : i32
    %c0_i32_0 = arith.constant 0 : i32
    %c0_i32_1 = arith.constant 0 : i32
    %c0_i32_2 = arith.constant 0 : i32
    return %c0_i32, %c0_i32_0, %c0_i32_1 : i32, i32, i32
  }
  func.func @transform_8(%arg0: i32) -> (i32, i32, i32) {
    %c0_i32 = arith.constant 0 : i32
    %c0_i32_0 = arith.constant 0 : i32
    %c0_i32_1 = arith.constant 0 : i32
    %c0_i32_2 = arith.constant 0 : i32
    return %c0_i32, %c0_i32_0, %c0_i32_1 : i32, i32, i32
  }
  func.func @transform_9(%arg0: i32) -> (i32, i32, i32) {
    %c0_i32 = arith.constant 0 : i32
    %c0_i32_0 = arith.constant 0 : i32
    %c0_i32_1 = arith.constant 0 : i32
    %c0_i32_2 = arith.constant 0 : i32
    return %c0_i32, %c0_i32_0, %c0_i32_1 : i32, i32, i32
  }
  func.func @transform_10(%arg0: i32) -> (i32, i32, i32) {
    %c0_i32 = arith.constant 0 : i32
    %c0_i32_0 = arith.constant 0 : i32
    %c0_i32_1 = arith.constant 0 : i32
    %c0_i32_2 = arith.constant 0 : i32
    return %c0_i32, %c0_i32_0, %c0_i32_1 : i32, i32, i32
  }
  func.func @transform_11(%arg0: i32) -> (i32, i32, i32) {
    %c0_i32 = arith.constant 0 : i32
    %c0_i32_0 = arith.constant 0 : i32
    %c0_i32_1 = arith.constant 0 : i32
    %c0_i32_2 = arith.constant 0 : i32
    return %c0_i32, %c0_i32_0, %c0_i32_1 : i32, i32, i32
  }
  func.func @transform_12(%arg0: i32) -> (i32, i32, i32) {
    %c0_i32 = arith.constant 0 : i32
    %c0_i32_0 = arith.constant 0 : i32
    %c0_i32_1 = arith.constant 0 : i32
    %c0_i32_2 = arith.constant 0 : i32
    return %c0_i32, %c0_i32_0, %c0_i32_1 : i32, i32, i32
  }
  func.func @transform_13(%arg0: i32) -> (i32, i32, i32) {
    %c0_i32 = arith.constant 0 : i32
    %c0_i32_0 = arith.constant 0 : i32
    %c0_i32_1 = arith.constant 0 : i32
    %c0_i32_2 = arith.constant 0 : i32
    return %c0_i32, %c0_i32_0, %c0_i32_1 : i32, i32, i32
  }
  func.func @transform_14(%arg0: i32) -> (i32, i32, i32) {
    %c0_i32 = arith.constant 0 : i32
    %c0_i32_0 = arith.constant 0 : i32
    %c0_i32_1 = arith.constant 0 : i32
    %c0_i32_2 = arith.constant 0 : i32
    return %c0_i32, %c0_i32_0, %c0_i32_1 : i32, i32, i32
  }
  func.func @transform_15(%arg0: i32) -> (i32, i32) {
    %c0_i32 = arith.constant 0 : i32
    %c0_i32_0 = arith.constant 0 : i32
    %c0_i32_1 = arith.constant 0 : i32
    return %c0_i32, %c0_i32_0 : i32, i32
  }
  func.func @transform_16(%arg0: i32) -> (i32, i32) {
    %c0_i32 = arith.constant 0 : i32
    %c0_i32_0 = arith.constant 0 : i32
    %c0_i32_1 = arith.constant 0 : i32
    return %c0_i32, %c0_i32_0 : i32, i32
  }
  func.func @transform_17(%arg0: i32) -> (i32, i32) {
    %c0_i32 = arith.constant 0 : i32
    %c0_i32_0 = arith.constant 0 : i32
    %c0_i32_1 = arith.constant 0 : i32
    return %c0_i32, %c0_i32_0 : i32, i32
  }
  func.func @transform_18(%arg0: i32) -> (i32, i32) {
    %c0_i32 = arith.constant 0 : i32
    %c0_i32_0 = arith.constant 0 : i32
    %c0_i32_1 = arith.constant 0 : i32
    return %c0_i32, %c0_i32_0 : i32, i32
  }
  func.func @transform_19(%arg0: i32) -> (i32, i32, i32) {
    %c0_i32 = arith.constant 0 : i32
    %c0_i32_0 = arith.constant 0 : i32
    %c0_i32_1 = arith.constant 0 : i32
    %c0_i32_2 = arith.constant 0 : i32
    return %c0_i32, %c0_i32_0, %c0_i32_1 : i32, i32, i32
  }
  func.func @transform_20(%arg0: i32) -> (i32, i32, i32) {
    %c0_i32 = arith.constant 0 : i32
    %c0_i32_0 = arith.constant 0 : i32
    %c0_i32_1 = arith.constant 0 : i32
    %c0_i32_2 = arith.constant 0 : i32
    return %c0_i32, %c0_i32_0, %c0_i32_1 : i32, i32, i32
  }
  func.func @transform_21(%arg0: i32) -> (i32, i32, i32) {
    %c0_i32 = arith.constant 0 : i32
    %c0_i32_0 = arith.constant 0 : i32
    %c0_i32_1 = arith.constant 0 : i32
    %c0_i32_2 = arith.constant 0 : i32
    return %c0_i32, %c0_i32_0, %c0_i32_1 : i32, i32, i32
  }
  func.func @transform_22(%arg0: i32) -> (i32, i32, i32) {
    %c0_i32 = arith.constant 0 : i32
    %c0_i32_0 = arith.constant 0 : i32
    %c0_i32_1 = arith.constant 0 : i32
    %c0_i32_2 = arith.constant 0 : i32
    return %c0_i32, %c0_i32_0, %c0_i32_1 : i32, i32, i32
  }
  func.func @transform_23(%arg0: i32) -> (i32, i32) {
    %c0_i32 = arith.constant 0 : i32
    %c0_i32_0 = arith.constant 0 : i32
    %c0_i32_1 = arith.constant 0 : i32
    return %c0_i32, %c0_i32_0 : i32, i32
  }
  func.func @transform_24(%arg0: i32) -> (i32, i32) {
    %c0_i32 = arith.constant 0 : i32
    %c0_i32_0 = arith.constant 0 : i32
    %c0_i32_1 = arith.constant 0 : i32
    return %c0_i32, %c0_i32_0 : i32, i32
  }
  func.func @transform_25(%arg0: i32) -> (i32, i32) {
    %c0_i32 = arith.constant 0 : i32
    %c0_i32_0 = arith.constant 0 : i32
    %c0_i32_1 = arith.constant 0 : i32
    return %c0_i32, %c0_i32_0 : i32, i32
  }
  func.func @transform_26(%arg0: i32) -> (i32, i32) {
    %c0_i32 = arith.constant 0 : i32
    %c0_i32_0 = arith.constant 0 : i32
    %c0_i32_1 = arith.constant 0 : i32
    return %c0_i32, %c0_i32_0 : i32, i32
  }
  func.func @transform_27(%arg0: i32) -> (i32, i32) {
    %c0_i32 = arith.constant 0 : i32
    %c0_i32_0 = arith.constant 0 : i32
    %c0_i32_1 = arith.constant 0 : i32
    return %c0_i32, %c0_i32_0 : i32, i32
  }
  func.func @transform_28(%arg0: i32) -> (i32, i32) {
    %c0_i32 = arith.constant 0 : i32
    %c0_i32_0 = arith.constant 0 : i32
    %c0_i32_1 = arith.constant 0 : i32
    return %c0_i32, %c0_i32_0 : i32, i32
  }
  func.func @transform_29(%arg0: i32) -> (i32, i32, i32) {
    %c0_i32 = arith.constant 0 : i32
    %c0_i32_0 = arith.constant 0 : i32
    %c0_i32_1 = arith.constant 0 : i32
    return %arg0, %c0_i32, %c0_i32_0 : i32, i32, i32
  }
  func.func @transform_30(%arg0: i32) -> (i32, i32, i32) {
    %c0_i32 = arith.constant 0 : i32
    %c0_i32_0 = arith.constant 0 : i32
    %c0_i32_1 = arith.constant 0 : i32
    return %arg0, %c0_i32, %c0_i32_0 : i32, i32, i32
  }
}

</mosaic_0001>

<llo_original>
// kernel: market_dynamics_encoder_forward.1
$region0: #{market_dynamics_encoder_forward.1}
  #allocation0 [shape = 'u32[]', space=smem, size = 0x4, offset = 0x4, fixed_abs, tag = 'smem constant byte address 0x4 - core index']
  #allocation1 [shape = 'u32[144,128]{1,0:T(1,128)}', space=vmem, size = 0x12000, scoped, tag = 'internal scratch']
  %s0 = inlined_call_operand.smem [shape: u32[31], index: -1, kind: input, shape index: {}]
  %s1 = sld [smem:[%s0]]
  %s2 = scalar_lea.smem %s0, 1
  %s3 = sld [smem:[%s2]]
  %s4 = scalar_lea.smem %s0, 2
  %s5 = sld [smem:[%s4]]
  %s6 = scalar_lea.smem %s0, 3
  %s7 = sld [smem:[%s6]]
  %s8 = scalar_lea.smem %s0, 4
  %s9 = sld [smem:[%s8]]
  %s10 = scalar_lea.smem %s0, 5
  %s11 = sld [smem:[%s10]]
  %s12 = scalar_lea.smem %s0, 6
  %s13 = sld [smem:[%s12]]
  %s14 = scalar_lea.smem %s0, 7
  %s15 = sld [smem:[%s14]]
  %s16 = scalar_lea.smem %s0, 8
  %s17 = sld [smem:[%s16]]
  %s18 = scalar_lea.smem %s0, 9
  %s19 = sld [smem:[%s18]]
  %s20 = scalar_lea.smem %s0, 10
  %s21 = sld [smem:[%s20]]
  %s22 = scalar_lea.smem %s0, 11
  %s23 = sld [smem:[%s22]]
  %s24 = scalar_lea.smem %s0, 12
  %s25 = sld [smem:[%s24]]
  %s26 = scalar_lea.smem %s0, 13
  %s27 = sld [smem:[%s26]]
  %s28 = scalar_lea.smem %s0, 14
  %s29 = sld [smem:[%s28]]
  %s30 = scalar_lea.smem %s0, 15
  %s31 = sld [smem:[%s30]]
  %s32 = scalar_lea.smem %s0, 16
  %s33 = sld [smem:[%s32]]
  %s34 = scalar_lea.smem %s0, 17
  %s35 = sld [smem:[%s34]]
  %s36 = scalar_lea.smem %s0, 18
  %s37 = sld [smem:[%s36]]
  %s38 = scalar_lea.smem %s0, 19
  %s39 = sld [smem:[%s38]]
  %s40 = scalar_lea.smem %s0, 20
  %s41 = sld [smem:[%s40]]
  %s42 = scalar_lea.smem %s0, 21
  %s43 = sld [smem:[%s42]]
  %s44 = scalar_lea.smem %s0, 22
  %s45 = sld [smem:[%s44]]
  %s46 = scalar_lea.smem %s0, 23
  %s47 = sld [smem:[%s46]]
  %s48 = scalar_lea.smem %s0, 24
  %s49 = sld [smem:[%s48]]
  %s50 = scalar_lea.smem %s0, 25
  %s51 = sld [smem:[%s50]]
  %s52 = scalar_lea.smem %s0, 26
  %s53 = sld [smem:[%s52]]
  %s54 = scalar_lea.smem %s0, 27
  %s55 = sld [smem:[%s54]]
  %s56 = scalar_lea.smem %s0, 28
  %s57 = sld [smem:[%s56]]
  %s58 = scalar_lea.smem %s0, 29
  %s59 = sld [smem:[%s58]]
  %s60 = scalar_lea.smem %s0, 30
  %s61 = sld [smem:[%s60]]
  %62 = xla_tuple %s59, %s61
  %s63 = sld [smem:[#allocation0]]
  $region157: #{market_dynamics_encoder_forward.1} parent=0
    _
  %s65 = ssub.s32 1, %s63
  %s66 = scalar_select 0, %s65, %s63
  $region1: #{market_dynamics_encoder_forward.1} parent=0
    #allocation2 [shape = 'u8[8192]{0}', space=vmem, size = 0x2000, scoped, tag = 'output window, operand 0']
    #allocation3 [shape = 's32[2]{0}', space=sflag, size = 0x8, scoped, tag = 'scoped memory for market_dynamics_encoder_forward.1']
    #allocation4 [shape = 'u8[8192]{0}', space=vmem, size = 0x2000, scoped, tag = 'output window, operand 1']
    #allocation5 [shape = 's32[2]{0}', space=sflag, size = 0x8, scoped, tag = 'scoped memory for market_dynamics_encoder_forward.1']
    %67 = vsyncpa [#allocation3], 0
    %s68 = scalar_lea.sflag [#allocation3], 1
    %69 = vsyncpa %s68, 0
    %70 = vsyncpa [#allocation5], 0
    %s71 = scalar_lea.sflag [#allocation5], 1
    %72 = vsyncpa %s71, 0
    loop: start=0, step=1, limit=4
    $region2: #{market_dynamics_encoder_forward.1} parent=1 // loop_pre_header
      _
    $region3: #{market_dynamics_encoder_forward.1} parent=1 // loop_header
      %s74 = sphi 0, %s78
      %p75 = scmp.ge.s32.totalorder %s74, 4
      %s84 = sphi 0, %s86
      %s87 = sphi 0, %s84
      %s88 = sphi 0, %s87
      %s104 = sphi 0, %s88
      %s108 = sphi 0, %s108
      %s110 = sphi 0, %s108
      %s111 = sphi 0, %s110
      %s125 = sphi 0, %s111
      %s129 = sphi 0, %s129
      %s131 = sphi 0, %s129
      %s132 = sphi 0, %s131
      %s146 = sphi 0, %s132
      %s150 = sphi 0, %s150
      %s152 = sphi 0, %s150
      %s153 = sphi 0, %s152
      %s167 = sphi 0, %s153
      %s171 = sphi 0, %s171
      %s173 = sphi 0, %s171
      %s174 = sphi 0, %s173
      %s188 = sphi 0, %s174
      %s192 = sphi 0, %s192
      %s194 = sphi 0, %s192
      %s195 = sphi 0, %s194
      %s209 = sphi 0, %s195
      %s213 = sphi 0, %s213
      %s215 = sphi 0, %s213
      %s216 = sphi 0, %s215
      %s230 = sphi 0, %s216
      %s234 = sphi 0, %s234
      %s236 = sphi 0, %s234
      %s237 = sphi 0, %s236
      %s251 = sphi 0, %s237
      %s255 = sphi 0, %s255
      %s257 = sphi 0, %s255
      %s258 = sphi 0, %s257
      %s272 = sphi 0, %s258
      %s276 = sphi 0, %s276
      %s278 = sphi 0, %s276
      %s279 = sphi 0, %s278
      %s293 = sphi 0, %s279
      %s297 = sphi 0, %s297
      %s299 = sphi 0, %s297
      %s300 = sphi 0, %s299
      %s314 = sphi 0, %s300
      %s318 = sphi 0, %s318
      %s320 = sphi 0, %s318
      %s321 = sphi 0, %s320
      %s335 = sphi 0, %s321
      %s339 = sphi 0, %s339
      %s341 = sphi 0, %s339
      %s342 = sphi 0, %s341
      %s356 = sphi 0, %s342
      %s360 = sphi 0, %s360
      %s362 = sphi 0, %s360
      %s363 = sphi 0, %s362
      %s377 = sphi 0, %s363
      %s381 = sphi 0, %s381
      %s383 = sphi 0, %s381
      %s384 = sphi 0, %s383
      %s398 = sphi 0, %s384
      %s402 = sphi 0, %s402
      %s404 = sphi 0, %s402
      %s405 = sphi 0, %s404
      %s419 = sphi 0, %s405
      %s423 = sphi 0, %s423
      %s425 = sphi 0, %s423
      %s426 = sphi 0, %s425
      %s440 = sphi 0, %s426
      %s444 = sphi 0, %s444
      %s446 = sphi 0, %s444
      %s447 = sphi 0, %s446
      %s461 = sphi 0, %s447
      %s465 = sphi 0, %s465
      %s467 = sphi 0, %s465
      %s468 = sphi 0, %s467
      %s482 = sphi 0, %s468
      %s486 = sphi 0, %s486
      %s488 = sphi 0, %s486
      %s489 = sphi 0, %s488
      %s503 = sphi 0, %s489
      %s507 = sphi 0, %s507
      %s509 = sphi 0, %s507
      %s510 = sphi 0, %s509
      %s524 = sphi 0, %s510
      %s528 = sphi 0, %s528
      %s530 = sphi 0, %s528
      %s531 = sphi 0, %s530
      %s545 = sphi 0, %s531
      %s549 = sphi 0, %s549
      %s551 = sphi 0, %s549
      %s552 = sphi 0, %s551
      %s566 = sphi 0, %s552
      %s570 = sphi 0, %s570
      %s572 = sphi 0, %s570
      %s573 = sphi 0, %s572
      %s587 = sphi 0, %s573
      %s591 = sphi 0, %s591
      %s593 = sphi 0, %s591
      %s594 = sphi 0, %s593
      %s608 = sphi 0, %s594
      %s612 = sphi 0, %s612
      %s614 = sphi 0, %s612
      %s615 = sphi 0, %s614
      %s629 = sphi 0, %s615
      %s633 = sphi 0, %s633
      %s635 = sphi 0, %s633
      %s636 = sphi 0, %s635
      %s650 = sphi 0, %s636
      %s654 = sphi 0, %s654
      %s656 = sphi 0, %s654
      %s657 = sphi 0, %s656
      %s671 = sphi 0, %s657
      %s675 = sphi 0, %s675
      %s677 = sphi 0, %s675
      %s678 = sphi 0, %s677
      %s692 = sphi 0, %s678
      %s698 = sphi 0, %s700
      %s701 = sphi 0, %s698
      %s702 = sphi 0, %s701
      %s718 = sphi 0, %s702
      %s724 = sphi 0, %s726
      %s727 = sphi 0, %s724
      %s728 = sphi 0, %s727
      %s744 = sphi 0, %s728
    $region4: #{market_dynamics_encoder_forward.1} parent=1 // loop_header_branch
      %77 = sbr.rel (%p75) target = $region8
    $region5: #{market_dynamics_encoder_forward.1} parent=1 // loop_body
      %s79 = ssub.s32 %s74, 1
      %s80 = ssub.s32 %s74, 2
      %s81 = sadd.s32 %s74, 1
      %s82 = ssub.s32 %s74, %s81
      %p83 = scmp.eq.s32.totalorder %s82, 0
      %s85 = sadd.s32 %s84, 1
      %s86 = scalar_select %p83, %s84, %s85
      %p89 = pneg %p83
      %p90 = scmp.eq.s32.totalorder %s74, 1
      %p91 = por %p89, %p90
      %p92 = scmp.ne.s32.totalorder %s84, %s87
      %p93 = scmp.eq.s32.totalorder %s74, 0
      %p94 = por %p92, %p93
      %p95 = scmp.ne.s32.totalorder %s84, %s87
      %p96 = scmp.eq.s32.totalorder %s79, 1
      %p97 = por %p95, %p96
      %p98 = scmp.ne.s32.totalorder %s87, %s88
      %p99 = scmp.eq.s32.totalorder %s79, 0
      %p100 = por %p98, %p99
      %p101 = scmp.ne.s32.totalorder %s87, %s88
      %p102 = scmp.eq.s32.totalorder %s80, 1
      %p103 = por %p101, %p102
      %p105 = scmp.ne.s32.totalorder %s88, %s104
      %p106 = scmp.eq.s32.totalorder %s80, 0
      %p107 = por %p105, %p106
      %s109 = sadd.s32 %s108, 1
      %p112 = scmp.eq.s32.totalorder %s74, 1
      %p113 = scmp.ne.s32.totalorder %s108, %s110
      %p114 = scmp.eq.s32.totalorder %s74, 0
      %p115 = por %p113, %p114
      %p116 = scmp.ne.s32.totalorder %s108, %s110
      %p117 = scmp.eq.s32.totalorder %s79, 1
      %p118 = por %p116, %p117
      %p119 = scmp.ne.s32.totalorder %s110, %s111
      %p120 = scmp.eq.s32.totalorder %s79, 0
      %p121 = por %p119, %p120
      %p122 = scmp.ne.s32.totalorder %s110, %s111
      %p123 = scmp.eq.s32.totalorder %s80, 1
      %p124 = por %p122, %p123
      %p126 = scmp.ne.s32.totalorder %s111, %s125
      %p127 = scmp.eq.s32.totalorder %s80, 0
      %p128 = por %p126, %p127
      %s130 = sadd.s32 %s129, 1
      %p133 = scmp.eq.s32.totalorder %s74, 1
      %p134 = scmp.ne.s32.totalorder %s129, %s131
      %p135 = scmp.eq.s32.totalorder %s74, 0
      %p136 = por %p134, %p135
      %p137 = scmp.ne.s32.totalorder %s129, %s131
      %p138 = scmp.eq.s32.totalorder %s79, 1
      %p139 = por %p137, %p138
      %p140 = scmp.ne.s32.totalorder %s131, %s132
      %p141 = scmp.eq.s32.totalorder %s79, 0
      %p142 = por %p140, %p141
      %p143 = scmp.ne.s32.totalorder %s131, %s132
      %p144 = scmp.eq.s32.totalorder %s80, 1
      %p145 = por %p143, %p144
      %p147 = scmp.ne.s32.totalorder %s132, %s146
      %p148 = scmp.eq.s32.totalorder %s80, 0
      %p149 = por %p147, %p148
      %s151 = sadd.s32 %s150, 1
      %p154 = scmp.eq.s32.totalorder %s74, 1
      %p155 = scmp.ne.s32.totalorder %s150, %s152
      %p156 = scmp.eq.s32.totalorder %s74, 0
      %p157 = por %p155, %p156
      %p158 = scmp.ne.s32.totalorder %s150, %s152
      %p159 = scmp.eq.s32.totalorder %s79, 1
      %p160 = por %p158, %p159
      %p161 = scmp.ne.s32.totalorder %s152, %s153
      %p162 = scmp.eq.s32.totalorder %s79, 0
      %p163 = por %p161, %p162
      %p164 = scmp.ne.s32.totalorder %s152, %s153
      %p165 = scmp.eq.s32.totalorder %s80, 1
      %p166 = por %p164, %p165
      %p168 = scmp.ne.s32.totalorder %s153, %s167
      %p169 = scmp.eq.s32.totalorder %s80, 0
      %p170 = por %p168, %p169
      %s172 = sadd.s32 %s171, 1
      %p175 = scmp.eq.s32.totalorder %s74, 1
      %p176 = scmp.ne.s32.totalorder %s171, %s173
      %p177 = scmp.eq.s32.totalorder %s74, 0
      %p178 = por %p176, %p177
      %p179 = scmp.ne.s32.totalorder %s171, %s173
      %p180 = scmp.eq.s32.totalorder %s79, 1
      %p181 = por %p179, %p180
      %p182 = scmp.ne.s32.totalorder %s173, %s174
      %p183 = scmp.eq.s32.totalorder %s79, 0
      %p184 = por %p182, %p183
      %p185 = scmp.ne.s32.totalorder %s173, %s174
      %p186 = scmp.eq.s32.totalorder %s80, 1
      %p187 = por %p185, %p186
      %p189 = scmp.ne.s32.totalorder %s174, %s188
      %p190 = scmp.eq.s32.totalorder %s80, 0
      %p191 = por %p189, %p190
      %s193 = sadd.s32 %s192, 1
      %p196 = scmp.eq.s32.totalorder %s74, 1
      %p197 = scmp.ne.s32.totalorder %s192, %s194
      %p198 = scmp.eq.s32.totalorder %s74, 0
      %p199 = por %p197, %p198
      %p200 = scmp.ne.s32.totalorder %s192, %s194
      %p201 = scmp.eq.s32.totalorder %s79, 1
      %p202 = por %p200, %p201
      %p203 = scmp.ne.s32.totalorder %s194, %s195
      %p204 = scmp.eq.s32.totalorder %s79, 0
      %p205 = por %p203, %p204
      %p206 = scmp.ne.s32.totalorder %s194, %s195
      %p207 = scmp.eq.s32.totalorder %s80, 1
      %p208 = por %p206, %p207
      %p210 = scmp.ne.s32.totalorder %s195, %s209
      %p211 = scmp.eq.s32.totalorder %s80, 0
      %p212 = por %p210, %p211
      %s214 = sadd.s32 %s213, 1
      %p217 = scmp.eq.s32.totalorder %s74, 1
      %p218 = scmp.ne.s32.totalorder %s213, %s215
      %p219 = scmp.eq.s32.totalorder %s74, 0
      %p220 = por %p218, %p219
      %p221 = scmp.ne.s32.totalorder %s213, %s215
      %p222 = scmp.eq.s32.totalorder %s79, 1
      %p223 = por %p221, %p222
      %p224 = scmp.ne.s32.totalorder %s215, %s216
      %p225 = scmp.eq.s32.totalorder %s79, 0
      %p226 = por %p224, %p225
      %p227 = scmp.ne.s32.totalorder %s215, %s216
      %p228 = scmp.eq.s32.totalorder %s80, 1
      %p229 = por %p227, %p228
      %p231 = scmp.ne.s32.totalorder %s216, %s230
      %p232 = scmp.eq.s32.totalorder %s80, 0
      %p233 = por %p231, %p232
      %s235 = sadd.s32 %s234, 1
      %p238 = scmp.eq.s32.totalorder %s74, 1
      %p239 = scmp.ne.s32.totalorder %s234, %s236
      %p240 = scmp.eq.s32.totalorder %s74, 0
      %p241 = por %p239, %p240
      %p242 = scmp.ne.s32.totalorder %s234, %s236
      %p243 = scmp.eq.s32.totalorder %s79, 1
      %p244 = por %p242, %p243
      %p245 = scmp.ne.s32.totalorder %s236, %s237
      %p246 = scmp.eq.s32.totalorder %s79, 0
      %p247 = por %p245, %p246
      %p248 = scmp.ne.s32.totalorder %s236, %s237
      %p249 = scmp.eq.s32.totalorder %s80, 1
      %p250 = por %p248, %p249
      %p252 = scmp.ne.s32.totalorder %s237, %s251
      %p253 = scmp.eq.s32.totalorder %s80, 0
      %p254 = por %p252, %p253
      %s256 = sadd.s32 %s255, 1
      %p259 = scmp.eq.s32.totalorder %s74, 1
      %p260 = scmp.ne.s32.totalorder %s255, %s257
      %p261 = scmp.eq.s32.totalorder %s74, 0
      %p262 = por %p260, %p261
      %p263 = scmp.ne.s32.totalorder %s255, %s257
      %p264 = scmp.eq.s32.totalorder %s79, 1
      %p265 = por %p263, %p264
      %p266 = scmp.ne.s32.totalorder %s257, %s258
      %p267 = scmp.eq.s32.totalorder %s79, 0
      %p268 = por %p266, %p267
      %p269 = scmp.ne.s32.totalorder %s257, %s258
      %p270 = scmp.eq.s32.totalorder %s80, 1
      %p271 = por %p269, %p270
      %p273 = scmp.ne.s32.totalorder %s258, %s272
      %p274 = scmp.eq.s32.totalorder %s80, 0
      %p275 = por %p273, %p274
      %s277 = sadd.s32 %s276, 1
      %p280 = scmp.eq.s32.totalorder %s74, 1
      %p281 = scmp.ne.s32.totalorder %s276, %s278
      %p282 = scmp.eq.s32.totalorder %s74, 0
      %p283 = por %p281, %p282
      %p284 = scmp.ne.s32.totalorder %s276, %s278
      %p285 = scmp.eq.s32.totalorder %s79, 1
      %p286 = por %p284, %p285
      %p287 = scmp.ne.s32.totalorder %s278, %s279
      %p288 = scmp.eq.s32.totalorder %s79, 0
      %p289 = por %p287, %p288
      %p290 = scmp.ne.s32.totalorder %s278, %s279
      %p291 = scmp.eq.s32.totalorder %s80, 1
      %p292 = por %p290, %p291
      %p294 = scmp.ne.s32.totalorder %s279, %s293
      %p295 = scmp.eq.s32.totalorder %s80, 0
      %p296 = por %p294, %p295
      %s298 = sadd.s32 %s297, 1
      %p301 = scmp.eq.s32.totalorder %s74, 1
      %p302 = scmp.ne.s32.totalorder %s297, %s299
      %p303 = scmp.eq.s32.totalorder %s74, 0
      %p304 = por %p302, %p303
      %p305 = scmp.ne.s32.totalorder %s297, %s299
      %p306 = scmp.eq.s32.totalorder %s79, 1
      %p307 = por %p305, %p306
      %p308 = scmp.ne.s32.totalorder %s299, %s300
      %p309 = scmp.eq.s32.totalorder %s79, 0
      %p310 = por %p308, %p309
      %p311 = scmp.ne.s32.totalorder %s299, %s300
      %p312 = scmp.eq.s32.totalorder %s80, 1
      %p313 = por %p311, %p312
      %p315 = scmp.ne.s32.totalorder %s300, %s314
      %p316 = scmp.eq.s32.totalorder %s80, 0
      %p317 = por %p315, %p316
      %s319 = sadd.s32 %s318, 1
      %p322 = scmp.eq.s32.totalorder %s74, 1
      %p323 = scmp.ne.s32.totalorder %s318, %s320
      %p324 = scmp.eq.s32.totalorder %s74, 0
      %p325 = por %p323, %p324
      %p326 = scmp.ne.s32.totalorder %s318, %s320
      %p327 = scmp.eq.s32.totalorder %s79, 1
      %p328 = por %p326, %p327
      %p329 = scmp.ne.s32.totalorder %s320, %s321
      %p330 = scmp.eq.s32.totalorder %s79, 0
      %p331 = por %p329, %p330
      %p332 = scmp.ne.s32.totalorder %s320, %s321
      %p333 = scmp.eq.s32.totalorder %s80, 1
      %p334 = por %p332, %p333
      %p336 = scmp.ne.s32.totalorder %s321, %s335
      %p337 = scmp.eq.s32.totalorder %s80, 0
      %p338 = por %p336, %p337
      %s340 = sadd.s32 %s339, 1
      %p343 = scmp.eq.s32.totalorder %s74, 1
      %p344 = scmp.ne.s32.totalorder %s339, %s341
      %p345 = scmp.eq.s32.totalorder %s74, 0
      %p346 = por %p344, %p345
      %p347 = scmp.ne.s32.totalorder %s339, %s341
      %p348 = scmp.eq.s32.totalorder %s79, 1
      %p349 = por %p347, %p348
      %p350 = scmp.ne.s32.totalorder %s341, %s342
      %p351 = scmp.eq.s32.totalorder %s79, 0
      %p352 = por %p350, %p351
      %p353 = scmp.ne.s32.totalorder %s341, %s342
      %p354 = scmp.eq.s32.totalorder %s80, 1
      %p355 = por %p353, %p354
      %p357 = scmp.ne.s32.totalorder %s342, %s356
      %p358 = scmp.eq.s32.totalorder %s80, 0
      %p359 = por %p357, %p358
      %s361 = sadd.s32 %s360, 1
      %p364 = scmp.eq.s32.totalorder %s74, 1
      %p365 = scmp.ne.s32.totalorder %s360, %s362
      %p366 = scmp.eq.s32.totalorder %s74, 0
      %p367 = por %p365, %p366
      %p368 = scmp.ne.s32.totalorder %s360, %s362
      %p369 = scmp.eq.s32.totalorder %s79, 1
      %p370 = por %p368, %p369
      %p371 = scmp.ne.s32.totalorder %s362, %s363
      %p372 = scmp.eq.s32.totalorder %s79, 0
      %p373 = por %p371, %p372
      %p374 = scmp.ne.s32.totalorder %s362, %s363
      %p375 = scmp.eq.s32.totalorder %s80, 1
      %p376 = por %p374, %p375
      %p378 = scmp.ne.s32.totalorder %s363, %s377
      %p379 = scmp.eq.s32.totalorder %s80, 0
      %p380 = por %p378, %p379
      %s382 = sadd.s32 %s381, 1
      %p385 = scmp.eq.s32.totalorder %s74, 1
      %p386 = scmp.ne.s32.totalorder %s381, %s383
      %p387 = scmp.eq.s32.totalorder %s74, 0
      %p388 = por %p386, %p387
      %p389 = scmp.ne.s32.totalorder %s381, %s383
      %p390 = scmp.eq.s32.totalorder %s79, 1
      %p391 = por %p389, %p390
      %p392 = scmp.ne.s32.totalorder %s383, %s384
      %p393 = scmp.eq.s32.totalorder %s79, 0
      %p394 = por %p392, %p393
      %p395 = scmp.ne.s32.totalorder %s383, %s384
      %p396 = scmp.eq.s32.totalorder %s80, 1
      %p397 = por %p395, %p396
      %p399 = scmp.ne.s32.totalorder %s384, %s398
      %p400 = scmp.eq.s32.totalorder %s80, 0
      %p401 = por %p399, %p400
      %s403 = sadd.s32 %s402, 1
      %p406 = scmp.eq.s32.totalorder %s74, 1
      %p407 = scmp.ne.s32.totalorder %s402, %s404
      %p408 = scmp.eq.s32.totalorder %s74, 0
      %p409 = por %p407, %p408
      %p410 = scmp.ne.s32.totalorder %s402, %s404
      %p411 = scmp.eq.s32.totalorder %s79, 1
      %p412 = por %p410, %p411
      %p413 = scmp.ne.s32.totalorder %s404, %s405
      %p414 = scmp.eq.s32.totalorder %s79, 0
      %p415 = por %p413, %p414
      %p416 = scmp.ne.s32.totalorder %s404, %s405
      %p417 = scmp.eq.s32.totalorder %s80, 1
      %p418 = por %p416, %p417
      %p420 = scmp.ne.s32.totalorder %s405, %s419
      %p421 = scmp.eq.s32.totalorder %s80, 0
      %p422 = por %p420, %p421
      %s424 = sadd.s32 %s423, 1
      %p427 = scmp.eq.s32.totalorder %s74, 1
      %p428 = scmp.ne.s32.totalorder %s423, %s425
      %p429 = scmp.eq.s32.totalorder %s74, 0
      %p430 = por %p428, %p429
      %p431 = scmp.ne.s32.totalorder %s423, %s425
      %p432 = scmp.eq.s32.totalorder %s79, 1
      %p433 = por %p431, %p432
      %p434 = scmp.ne.s32.totalorder %s425, %s426
      %p435 = scmp.eq.s32.totalorder %s79, 0
      %p436 = por %p434, %p435
      %p437 = scmp.ne.s32.totalorder %s425, %s426
      %p438 = scmp.eq.s32.totalorder %s80, 1
      %p439 = por %p437, %p438
      %p441 = scmp.ne.s32.totalorder %s426, %s440
      %p442 = scmp.eq.s32.totalorder %s80, 0
      %p443 = por %p441, %p442
      %s445 = sadd.s32 %s444, 1
      %p448 = scmp.eq.s32.totalorder %s74, 1
      %p449 = scmp.ne.s32.totalorder %s444, %s446
      %p450 = scmp.eq.s32.totalorder %s74, 0
      %p451 = por %p449, %p450
      %p452 = scmp.ne.s32.totalorder %s444, %s446
      %p453 = scmp.eq.s32.totalorder %s79, 1
      %p454 = por %p452, %p453
      %p455 = scmp.ne.s32.totalorder %s446, %s447
      %p456 = scmp.eq.s32.totalorder %s79, 0
      %p457 = por %p455, %p456
      %p458 = scmp.ne.s32.totalorder %s446, %s447
      %p459 = scmp.eq.s32.totalorder %s80, 1
      %p460 = por %p458, %p459
      %p462 = scmp.ne.s32.totalorder %s447, %s461
      %p463 = scmp.eq.s32.totalorder %s80, 0
      %p464 = por %p462, %p463
      %s466 = sadd.s32 %s465, 1
      %p469 = scmp.eq.s32.totalorder %s74, 1
      %p470 = scmp.ne.s32.totalorder %s465, %s467
      %p471 = scmp.eq.s32.totalorder %s74, 0
      %p472 = por %p470, %p471
      %p473 = scmp.ne.s32.totalorder %s465, %s467
      %p474 = scmp.eq.s32.totalorder %s79, 1
      %p475 = por %p473, %p474
      %p476 = scmp.ne.s32.totalorder %s467, %s468
      %p477 = scmp.eq.s32.totalorder %s79, 0
      %p478 = por %p476, %p477
      %p479 = scmp.ne.s32.totalorder %s467, %s468
      %p480 = scmp.eq.s32.totalorder %s80, 1
      %p481 = por %p479, %p480
      %p483 = scmp.ne.s32.totalorder %s468, %s482
      %p484 = scmp.eq.s32.totalorder %s80, 0
      %p485 = por %p483, %p484
      %s487 = sadd.s32 %s486, 1
      %p490 = scmp.eq.s32.totalorder %s74, 1
      %p491 = scmp.ne.s32.totalorder %s486, %s488
      %p492 = scmp.eq.s32.totalorder %s74, 0
      %p493 = por %p491, %p492
      %p494 = scmp.ne.s32.totalorder %s486, %s488
      %p495 = scmp.eq.s32.totalorder %s79, 1
      %p496 = por %p494, %p495
      %p497 = scmp.ne.s32.totalorder %s488, %s489
      %p498 = scmp.eq.s32.totalorder %s79, 0
      %p499 = por %p497, %p498
      %p500 = scmp.ne.s32.totalorder %s488, %s489
      %p501 = scmp.eq.s32.totalorder %s80, 1
      %p502 = por %p500, %p501
      %p504 = scmp.ne.s32.totalorder %s489, %s503
      %p505 = scmp.eq.s32.totalorder %s80, 0
      %p506 = por %p504, %p505
      %s508 = sadd.s32 %s507, 1
      %p511 = scmp.eq.s32.totalorder %s74, 1
      %p512 = scmp.ne.s32.totalorder %s507, %s509
      %p513 = scmp.eq.s32.totalorder %s74, 0
      %p514 = por %p512, %p513
      %p515 = scmp.ne.s32.totalorder %s507, %s509
      %p516 = scmp.eq.s32.totalorder %s79, 1
      %p517 = por %p515, %p516
      %p518 = scmp.ne.s32.totalorder %s509, %s510
      %p519 = scmp.eq.s32.totalorder %s79, 0
      %p520 = por %p518, %p519
      %p521 = scmp.ne.s32.totalorder %s509, %s510
      %p522 = scmp.eq.s32.totalorder %s80, 1
      %p523 = por %p521, %p522
      %p525 = scmp.ne.s32.totalorder %s510, %s524
      %p526 = scmp.eq.s32.totalorder %s80, 0
      %p527 = por %p525, %p526
      %s529 = sadd.s32 %s528, 1
      %p532 = scmp.eq.s32.totalorder %s74, 1
      %p533 = scmp.ne.s32.totalorder %s528, %s530
      %p534 = scmp.eq.s32.totalorder %s74, 0
      %p535 = por %p533, %p534
      %p536 = scmp.ne.s32.totalorder %s528, %s530
      %p537 = scmp.eq.s32.totalorder %s79, 1
      %p538 = por %p536, %p537
      %p539 = scmp.ne.s32.totalorder %s530, %s531
      %p540 = scmp.eq.s32.totalorder %s79, 0
      %p541 = por %p539, %p540
      %p542 = scmp.ne.s32.totalorder %s530, %s531
      %p543 = scmp.eq.s32.totalorder %s80, 1
      %p544 = por %p542, %p543
      %p546 = scmp.ne.s32.totalorder %s531, %s545
      %p547 = scmp.eq.s32.totalorder %s80, 0
      %p548 = por %p546, %p547
      %s550 = sadd.s32 %s549, 1
      %p553 = scmp.eq.s32.totalorder %s74, 1
      %p554 = scmp.ne.s32.totalorder %s549, %s551
      %p555 = scmp.eq.s32.totalorder %s74, 0
      %p556 = por %p554, %p555
      %p557 = scmp.ne.s32.totalorder %s549, %s551
      %p558 = scmp.eq.s32.totalorder %s79, 1
      %p559 = por %p557, %p558
      %p560 = scmp.ne.s32.totalorder %s551, %s552
      %p561 = scmp.eq.s32.totalorder %s79, 0
      %p562 = por %p560, %p561
      %p563 = scmp.ne.s32.totalorder %s551, %s552
      %p564 = scmp.eq.s32.totalorder %s80, 1
      %p565 = por %p563, %p564
      %p567 = scmp.ne.s32.totalorder %s552, %s566
      %p568 = scmp.eq.s32.totalorder %s80, 0
      %p569 = por %p567, %p568
      %s571 = sadd.s32 %s570, 1
      %p574 = scmp.eq.s32.totalorder %s74, 1
      %p575 = scmp.ne.s32.totalorder %s570, %s572
      %p576 = scmp.eq.s32.totalorder %s74, 0
      %p577 = por %p575, %p576
      %p578 = scmp.ne.s32.totalorder %s570, %s572
      %p579 = scmp.eq.s32.totalorder %s79, 1
      %p580 = por %p578, %p579
      %p581 = scmp.ne.s32.totalorder %s572, %s573
      %p582 = scmp.eq.s32.totalorder %s79, 0
      %p583 = por %p581, %p582
      %p584 = scmp.ne.s32.totalorder %s572, %s573
      %p585 = scmp.eq.s32.totalorder %s80, 1
      %p586 = por %p584, %p585
      %p588 = scmp.ne.s32.totalorder %s573, %s587
      %p589 = scmp.eq.s32.totalorder %s80, 0
      %p590 = por %p588, %p589
      %s592 = sadd.s32 %s591, 1
      %p595 = scmp.eq.s32.totalorder %s74, 1
      %p596 = scmp.ne.s32.totalorder %s591, %s593
      %p597 = scmp.eq.s32.totalorder %s74, 0
      %p598 = por %p596, %p597
      %p599 = scmp.ne.s32.totalorder %s591, %s593
      %p600 = scmp.eq.s32.totalorder %s79, 1
      %p601 = por %p599, %p600
      %p602 = scmp.ne.s32.totalorder %s593, %s594
      %p603 = scmp.eq.s32.totalorder %s79, 0
      %p604 = por %p602, %p603
      %p605 = scmp.ne.s32.totalorder %s593, %s594
      %p606 = scmp.eq.s32.totalorder %s80, 1
      %p607 = por %p605, %p606
      %p609 = scmp.ne.s32.totalorder %s594, %s608
      %p610 = scmp.eq.s32.totalorder %s80, 0
      %p611 = por %p609, %p610
      %s613 = sadd.s32 %s612, 1
      %p616 = scmp.eq.s32.totalorder %s74, 1
      %p617 = scmp.ne.s32.totalorder %s612, %s614
      %p618 = scmp.eq.s32.totalorder %s74, 0
      %p619 = por %p617, %p618
      %p620 = scmp.ne.s32.totalorder %s612, %s614
      %p621 = scmp.eq.s32.totalorder %s79, 1
      %p622 = por %p620, %p621
      %p623 = scmp.ne.s32.totalorder %s614, %s615
      %p624 = scmp.eq.s32.totalorder %s79, 0
      %p625 = por %p623, %p624
      %p626 = scmp.ne.s32.totalorder %s614, %s615
      %p627 = scmp.eq.s32.totalorder %s80, 1
      %p628 = por %p626, %p627
      %p630 = scmp.ne.s32.totalorder %s615, %s629
      %p631 = scmp.eq.s32.totalorder %s80, 0
      %p632 = por %p630, %p631
      %s634 = sadd.s32 %s633, 1
      %p637 = scmp.eq.s32.totalorder %s74, 1
      %p638 = scmp.ne.s32.totalorder %s633, %s635
      %p639 = scmp.eq.s32.totalorder %s74, 0
      %p640 = por %p638, %p639
      %p641 = scmp.ne.s32.totalorder %s633, %s635
      %p642 = scmp.eq.s32.totalorder %s79, 1
      %p643 = por %p641, %p642
      %p644 = scmp.ne.s32.totalorder %s635, %s636
      %p645 = scmp.eq.s32.totalorder %s79, 0
      %p646 = por %p644, %p645
      %p647 = scmp.ne.s32.totalorder %s635, %s636
      %p648 = scmp.eq.s32.totalorder %s80, 1
      %p649 = por %p647, %p648
      %p651 = scmp.ne.s32.totalorder %s636, %s650
      %p652 = scmp.eq.s32.totalorder %s80, 0
      %p653 = por %p651, %p652
      %s655 = sadd.s32 %s654, 1
      %p658 = scmp.eq.s32.totalorder %s74, 1
      %p659 = scmp.ne.s32.totalorder %s654, %s656
      %p660 = scmp.eq.s32.totalorder %s74, 0
      %p661 = por %p659, %p660
      %p662 = scmp.ne.s32.totalorder %s654, %s656
      %p663 = scmp.eq.s32.totalorder %s79, 1
      %p664 = por %p662, %p663
      %p665 = scmp.ne.s32.totalorder %s656, %s657
      %p666 = scmp.eq.s32.totalorder %s79, 0
      %p667 = por %p665, %p666
      %p668 = scmp.ne.s32.totalorder %s656, %s657
      %p669 = scmp.eq.s32.totalorder %s80, 1
      %p670 = por %p668, %p669
      %p672 = scmp.ne.s32.totalorder %s657, %s671
      %p673 = scmp.eq.s32.totalorder %s80, 0
      %p674 = por %p672, %p673
      %s676 = sadd.s32 %s675, 1
      %p679 = scmp.eq.s32.totalorder %s74, 1
      %p680 = scmp.ne.s32.totalorder %s675, %s677
      %p681 = scmp.eq.s32.totalorder %s74, 0
      %p682 = por %p680, %p681
      %p683 = scmp.ne.s32.totalorder %s675, %s677
      %p684 = scmp.eq.s32.totalorder %s79, 1
      %p685 = por %p683, %p684
      %p686 = scmp.ne.s32.totalorder %s677, %s678
      %p687 = scmp.eq.s32.totalorder %s79, 0
      %p688 = por %p686, %p687
      %p689 = scmp.ne.s32.totalorder %s677, %s678
      %p690 = scmp.eq.s32.totalorder %s80, 1
      %p691 = por %p689, %p690
      %p693 = scmp.ne.s32.totalorder %s678, %s692
      %p694 = scmp.eq.s32.totalorder %s80, 0
      %p695 = por %p693, %p694
      %s696 = ssub.s32 %s74, %s81
      %p697 = scmp.eq.s32.totalorder %s696, 0
      %s699 = sadd.s32 %s698, 1
      %s700 = scalar_select %p697, %s698, %s699
      %p703 = pneg %p697
      %p704 = scmp.eq.s32.totalorder %s74, 1
      %p705 = por %p703, %p704
      %p706 = scmp.ne.s32.totalorder %s698, %s701
      %p707 = scmp.eq.s32.totalorder %s74, 0
      %p708 = por %p706, %p707
      %p709 = scmp.ne.s32.totalorder %s698, %s701
      %p710 = scmp.eq.s32.totalorder %s79, 1
      %p711 = por %p709, %p710
      %p712 = scmp.ne.s32.totalorder %s701, %s702
      %p713 = scmp.eq.s32.totalorder %s79, 0
      %p714 = por %p712, %p713
      %p715 = scmp.ne.s32.totalorder %s701, %s702
      %p716 = scmp.eq.s32.totalorder %s80, 1
      %p717 = por %p715, %p716
      %p719 = scmp.ne.s32.totalorder %s702, %s718
      %p720 = scmp.eq.s32.totalorder %s80, 0
      %p721 = por %p719, %p720
      %s722 = ssub.s32 %s74, %s81
      %p723 = scmp.eq.s32.totalorder %s722, 0
      %s725 = sadd.s32 %s724, 1
      %s726 = scalar_select %p723, %s724, %s725
      %p729 = pneg %p723
      %p730 = scmp.eq.s32.totalorder %s74, 1
      %p731 = por %p729, %p730
      %p732 = scmp.ne.s32.totalorder %s724, %s727
      %p733 = scmp.eq.s32.totalorder %s74, 0
      %p734 = por %p732, %p733
      %p735 = scmp.ne.s32.totalorder %s724, %s727
      %p736 = scmp.eq.s32.totalorder %s79, 1
      %p737 = por %p735, %p736
      %p738 = scmp.ne.s32.totalorder %s727, %s728
      %p739 = scmp.eq.s32.totalorder %s79, 0
      %p740 = por %p738, %p739
      %p741 = scmp.ne.s32.totalorder %s727, %s728
      %p742 = scmp.eq.s32.totalorder %s80, 1
      %p743 = por %p741, %p742
      %p745 = scmp.ne.s32.totalorder %s728, %s744
      %p746 = scmp.eq.s32.totalorder %s80, 0
      %p747 = por %p745, %p746
      %p748 = scmp.le.s32.totalorder 1, %s74
      %p749 = scmp.lt.s32.totalorder %s74, 3
      %p750 = pnand %p748, %p749
      %p751 = pneg %p750
      // Predicated region
      $region9: #{market_dynamics_encoder_forward.1} parent=5 // pred_check
        _
      $region10: #{market_dynamics_encoder_forward.1} parent=5 // pred_check_branch
        %753 = sbr.rel (%p750) target = $region12
      $region11: #{market_dynamics_encoder_forward.1} parent=5 // pred_region
        %s754 = ssub.s32 %s74, 1
        // Predicated region
        $region13: #{market_dynamics_encoder_forward.1} parent=11 // pred_check
          %p755 = pneg %p121
        $region14: #{market_dynamics_encoder_forward.1} parent=11 // pred_check_branch
          %757 = sbr.rel (%p755) target = $region16
        $region15: #{market_dynamics_encoder_forward.1} parent=11 // pred_region
          _
        $region16: #{market_dynamics_encoder_forward.1} parent=11 // pred_fallthru
          _
        // Predicated region
        $region17: #{market_dynamics_encoder_forward.1} parent=11 // pred_check
          %p758 = pneg %p142
        $region18: #{market_dynamics_encoder_forward.1} parent=11 // pred_check_branch
          %760 = sbr.rel (%p758) target = $region20
        $region19: #{market_dynamics_encoder_forward.1} parent=11 // pred_region
          _
        $region20: #{market_dynamics_encoder_forward.1} parent=11 // pred_fallthru
          _
        // Predicated region
        $region21: #{market_dynamics_encoder_forward.1} parent=11 // pred_check
          %p761 = pneg %p163
        $region22: #{market_dynamics_encoder_forward.1} parent=11 // pred_check_branch
          %763 = sbr.rel (%p761) target = $region24
        $region23: #{market_dynamics_encoder_forward.1} parent=11 // pred_region
          _
        $region24: #{market_dynamics_encoder_forward.1} parent=11 // pred_fallthru
          _
        // Predicated region
        $region25: #{market_dynamics_encoder_forward.1} parent=11 // pred_check
          %p764 = pneg %p184
        $region26: #{market_dynamics_encoder_forward.1} parent=11 // pred_check_branch
          %766 = sbr.rel (%p764) target = $region28
        $region27: #{market_dynamics_encoder_forward.1} parent=11 // pred_region
          _
        $region28: #{market_dynamics_encoder_forward.1} parent=11 // pred_fallthru
          _
        // Predicated region
        $region29: #{market_dynamics_encoder_forward.1} parent=11 // pred_check
          %p767 = pneg %p205
        $region30: #{market_dynamics_encoder_forward.1} parent=11 // pred_check_branch
          %769 = sbr.rel (%p767) target = $region32
        $region31: #{market_dynamics_encoder_forward.1} parent=11 // pred_region
          _
        $region32: #{market_dynamics_encoder_forward.1} parent=11 // pred_fallthru
          _
        // Predicated region
        $region33: #{market_dynamics_encoder_forward.1} parent=11 // pred_check
          %p770 = pneg %p226
        $region34: #{market_dynamics_encoder_forward.1} parent=11 // pred_check_branch
          %772 = sbr.rel (%p770) target = $region36
        $region35: #{market_dynamics_encoder_forward.1} parent=11 // pred_region
          _
        $region36: #{market_dynamics_encoder_forward.1} parent=11 // pred_fallthru
          _
        // Predicated region
        $region37: #{market_dynamics_encoder_forward.1} parent=11 // pred_check
          %p773 = pneg %p247
        $region38: #{market_dynamics_encoder_forward.1} parent=11 // pred_check_branch
          %775 = sbr.rel (%p773) target = $region40
        $region39: #{market_dynamics_encoder_forward.1} parent=11 // pred_region
          _
        $region40: #{market_dynamics_encoder_forward.1} parent=11 // pred_fallthru
          _
        // Predicated region
        $region41: #{market_dynamics_encoder_forward.1} parent=11 // pred_check
          %p776 = pneg %p268
        $region42: #{market_dynamics_encoder_forward.1} parent=11 // pred_check_branch
          %778 = sbr.rel (%p776) target = $region44
        $region43: #{market_dynamics_encoder_forward.1} parent=11 // pred_region
          _
        $region44: #{market_dynamics_encoder_forward.1} parent=11 // pred_fallthru
          _
        // Predicated region
        $region45: #{market_dynamics_encoder_forward.1} parent=11 // pred_check
          %p779 = pneg %p289
        $region46: #{market_dynamics_encoder_forward.1} parent=11 // pred_check_branch
          %781 = sbr.rel (%p779) target = $region48
        $region47: #{market_dynamics_encoder_forward.1} parent=11 // pred_region
          _
        $region48: #{market_dynamics_encoder_forward.1} parent=11 // pred_fallthru
          _
        // Predicated region
        $region49: #{market_dynamics_encoder_forward.1} parent=11 // pred_check
          %p782 = pneg %p310
        $region50: #{market_dynamics_encoder_forward.1} parent=11 // pred_check_branch
          %784 = sbr.rel (%p782) target = $region52
        $region51: #{market_dynamics_encoder_forward.1} parent=11 // pred_region
          _
        $region52: #{market_dynamics_encoder_forward.1} parent=11 // pred_fallthru
          _
        // Predicated region
        $region53: #{market_dynamics_encoder_forward.1} parent=11 // pred_check
          %p785 = pneg %p331
        $region54: #{market_dynamics_encoder_forward.1} parent=11 // pred_check_branch
          %787 = sbr.rel (%p785) target = $region56
        $region55: #{market_dynamics_encoder_forward.1} parent=11 // pred_region
          _
        $region56: #{market_dynamics_encoder_forward.1} parent=11 // pred_fallthru
          _
        // Predicated region
        $region57: #{market_dynamics_encoder_forward.1} parent=11 // pred_check
          %p788 = pneg %p352
        $region58: #{market_dynamics_encoder_forward.1} parent=11 // pred_check_branch
          %790 = sbr.rel (%p788) target = $region60
        $region59: #{market_dynamics_encoder_forward.1} parent=11 // pred_region
          _
        $region60: #{market_dynamics_encoder_forward.1} parent=11 // pred_fallthru
          _
        // Predicated region
        $region61: #{market_dynamics_encoder_forward.1} parent=11 // pred_check
          %p791 = pneg %p373
        $region62: #{market_dynamics_encoder_forward.1} parent=11 // pred_check_branch
          %793 = sbr.rel (%p791) target = $region64
        $region63: #{market_dynamics_encoder_forward.1} parent=11 // pred_region
          _
        $region64: #{market_dynamics_encoder_forward.1} parent=11 // pred_fallthru
          _
        // Predicated region
        $region65: #{market_dynamics_encoder_forward.1} parent=11 // pred_check
          %p794 = pneg %p394
        $region66: #{market_dynamics_encoder_forward.1} parent=11 // pred_check_branch
          %796 = sbr.rel (%p794) target = $region68
        $region67: #{market_dynamics_encoder_forward.1} parent=11 // pred_region
          _
        $region68: #{market_dynamics_encoder_forward.1} parent=11 // pred_fallthru
          _
        // Predicated region
        $region69: #{market_dynamics_encoder_forward.1} parent=11 // pred_check
          %p797 = pneg %p415
        $region70: #{market_dynamics_encoder_forward.1} parent=11 // pred_check_branch
          %799 = sbr.rel (%p797) target = $region72
        $region71: #{market_dynamics_encoder_forward.1} parent=11 // pred_region
          _
        $region72: #{market_dynamics_encoder_forward.1} parent=11 // pred_fallthru
          _
        // Predicated region
        $region73: #{market_dynamics_encoder_forward.1} parent=11 // pred_check
          %p800 = pneg %p436
        $region74: #{market_dynamics_encoder_forward.1} parent=11 // pred_check_branch
          %802 = sbr.rel (%p800) target = $region76
        $region75: #{market_dynamics_encoder_forward.1} parent=11 // pred_region
          _
        $region76: #{market_dynamics_encoder_forward.1} parent=11 // pred_fallthru
          _
        // Predicated region
        $region77: #{market_dynamics_encoder_forward.1} parent=11 // pred_check
          %p803 = pneg %p457
        $region78: #{market_dynamics_encoder_forward.1} parent=11 // pred_check_branch
          %805 = sbr.rel (%p803) target = $region80
        $region79: #{market_dynamics_encoder_forward.1} parent=11 // pred_region
          _
        $region80: #{market_dynamics_encoder_forward.1} parent=11 // pred_fallthru
          _
        // Predicated region
        $region81: #{market_dynamics_encoder_forward.1} parent=11 // pred_check
          %p806 = pneg %p478
        $region82: #{market_dynamics_encoder_forward.1} parent=11 // pred_check_branch
          %808 = sbr.rel (%p806) target = $region84
        $region83: #{market_dynamics_encoder_forward.1} parent=11 // pred_region
          _
        $region84: #{market_dynamics_encoder_forward.1} parent=11 // pred_fallthru
          _
        // Predicated region
        $region85: #{market_dynamics_encoder_forward.1} parent=11 // pred_check
          %p809 = pneg %p499
        $region86: #{market_dynamics_encoder_forward.1} parent=11 // pred_check_branch
          %811 = sbr.rel (%p809) target = $region88
        $region87: #{market_dynamics_encoder_forward.1} parent=11 // pred_region
          _
        $region88: #{market_dynamics_encoder_forward.1} parent=11 // pred_fallthru
          _
        // Predicated region
        $region89: #{market_dynamics_encoder_forward.1} parent=11 // pred_check
          %p812 = pneg %p520
        $region90: #{market_dynamics_encoder_forward.1} parent=11 // pred_check_branch
          %814 = sbr.rel (%p812) target = $region92
        $region91: #{market_dynamics_encoder_forward.1} parent=11 // pred_region
          _
        $region92: #{market_dynamics_encoder_forward.1} parent=11 // pred_fallthru
          _
        // Predicated region
        $region93: #{market_dynamics_encoder_forward.1} parent=11 // pred_check
          %p815 = pneg %p541
        $region94: #{market_dynamics_encoder_forward.1} parent=11 // pred_check_branch
          %817 = sbr.rel (%p815) target = $region96
        $region95: #{market_dynamics_encoder_forward.1} parent=11 // pred_region
          _
        $region96: #{market_dynamics_encoder_forward.1} parent=11 // pred_fallthru
          _
        // Predicated region
        $region97: #{market_dynamics_encoder_forward.1} parent=11 // pred_check
          %p818 = pneg %p562
        $region98: #{market_dynamics_encoder_forward.1} parent=11 // pred_check_branch
          %820 = sbr.rel (%p818) target = $region100
        $region99: #{market_dynamics_encoder_forward.1} parent=11 // pred_region
          _
        $region100: #{market_dynamics_encoder_forward.1} parent=11 // pred_fallthru
          _
        // Predicated region
        $region101: #{market_dynamics_encoder_forward.1} parent=11 // pred_check
          %p821 = pneg %p583
        $region102: #{market_dynamics_encoder_forward.1} parent=11 // pred_check_branch
          %823 = sbr.rel (%p821) target = $region104
        $region103: #{market_dynamics_encoder_forward.1} parent=11 // pred_region
          _
        $region104: #{market_dynamics_encoder_forward.1} parent=11 // pred_fallthru
          _
        // Predicated region
        $region105: #{market_dynamics_encoder_forward.1} parent=11 // pred_check
          %p824 = pneg %p604
        $region106: #{market_dynamics_encoder_forward.1} parent=11 // pred_check_branch
          %826 = sbr.rel (%p824) target = $region108
        $region107: #{market_dynamics_encoder_forward.1} parent=11 // pred_region
          _
        $region108: #{market_dynamics_encoder_forward.1} parent=11 // pred_fallthru
          _
        // Predicated region
        $region109: #{market_dynamics_encoder_forward.1} parent=11 // pred_check
          %p827 = pneg %p625
        $region110: #{market_dynamics_encoder_forward.1} parent=11 // pred_check_branch
          %829 = sbr.rel (%p827) target = $region112
        $region111: #{market_dynamics_encoder_forward.1} parent=11 // pred_region
          _
        $region112: #{market_dynamics_encoder_forward.1} parent=11 // pred_fallthru
          _
        // Predicated region
        $region113: #{market_dynamics_encoder_forward.1} parent=11 // pred_check
          %p830 = pneg %p646
        $region114: #{market_dynamics_encoder_forward.1} parent=11 // pred_check_branch
          %832 = sbr.rel (%p830) target = $region116
        $region115: #{market_dynamics_encoder_forward.1} parent=11 // pred_region
          _
        $region116: #{market_dynamics_encoder_forward.1} parent=11 // pred_fallthru
          _
        // Predicated region
        $region117: #{market_dynamics_encoder_forward.1} parent=11 // pred_check
          %p833 = pneg %p667
        $region118: #{market_dynamics_encoder_forward.1} parent=11 // pred_check_branch
          %835 = sbr.rel (%p833) target = $region120
        $region119: #{market_dynamics_encoder_forward.1} parent=11 // pred_region
          _
        $region120: #{market_dynamics_encoder_forward.1} parent=11 // pred_fallthru
          _
        // Predicated region
        $region121: #{market_dynamics_encoder_forward.1} parent=11 // pred_check
          %p836 = pneg %p688
        $region122: #{market_dynamics_encoder_forward.1} parent=11 // pred_check_branch
          %838 = sbr.rel (%p836) target = $region124
        $region123: #{market_dynamics_encoder_forward.1} parent=11 // pred_region
          _
        $region124: #{market_dynamics_encoder_forward.1} parent=11 // pred_fallthru
          _
      $region12: #{market_dynamics_encoder_forward.1} parent=5 // pred_fallthru
        _
      %p839 = scmp.lt.s32.totalorder %s74, 2
      // Predicated region
      $region125: #{market_dynamics_encoder_forward.1} parent=5 // pred_check
        %p840 = pneg %p839
      $region126: #{market_dynamics_encoder_forward.1} parent=5 // pred_check_branch
        %842 = sbr.rel (%p840) target = $region128
      $region127: #{market_dynamics_encoder_forward.1} parent=5 // pred_region
        // Predicated region
        $region129: #{market_dynamics_encoder_forward.1} parent=127 // pred_check
          %p843 = pneg %p94
        $region130: #{market_dynamics_encoder_forward.1} parent=127 // pred_check_branch
          %845 = sbr.rel (%p843) target = $region132
        $region131: #{market_dynamics_encoder_forward.1} parent=127 // pred_region
          %p846 = scmp.lt.s32.totalorder %s74, 1
          %s847 = scalar_select %p846, %s74, 1
          %s848 = smul.addr %s847, 8
          %s849 = scalar_lea.vmem %s1, %s848
        $region132: #{market_dynamics_encoder_forward.1} parent=127 // pred_fallthru
          _
      $region128: #{market_dynamics_encoder_forward.1} parent=5 // pred_fallthru
        _
      %p850 = scmp.le.s32.totalorder 1, %s74
      %p851 = scmp.lt.s32.totalorder %s74, 3
      %p852 = pnand %p850, %p851
      %p853 = pneg %p852
      // Predicated region
      $region133: #{market_dynamics_encoder_forward.1} parent=5 // pred_check
        _
      $region134: #{market_dynamics_encoder_forward.1} parent=5 // pred_check_branch
        %855 = sbr.rel (%p852) target = $region136
      $region135: #{market_dynamics_encoder_forward.1} parent=5 // pred_region
        %s856 = ssub.s32 %s74, 1
        %p857 = scmp.lt.s32.totalorder %s79, 1
        %s858 = scalar_select %p857, %s79, 1
        %s859 = smul.addr %s858, 8
        %s860 = scalar_lea.vmem %s1, %s859
        %p861 = pneg %p100
        %p862 = pneg %p97
        %p863 = pneg %p121
        %p864 = pneg %p118
        %p865 = pneg %p142
        %p866 = pneg %p139
        %p867 = pneg %p163
        %p868 = pneg %p160
        %p869 = pneg %p184
        %p870 = pneg %p181
        %p871 = pneg %p205
        %p872 = pneg %p202
        %p873 = pneg %p226
        %p874 = pneg %p223
        %p875 = pneg %p247
        %p876 = pneg %p244
        %p877 = pneg %p268
        %p878 = pneg %p265
        %p879 = pneg %p289
        %p880 = pneg %p286
        %p881 = pneg %p310
        %p882 = pneg %p307
        %p883 = pneg %p331
        %p884 = pneg %p328
        %p885 = pneg %p352
        %p886 = pneg %p349
        %p887 = pneg %p373
        %p888 = pneg %p370
        %p889 = pneg %p394
        %p890 = pneg %p391
        %p891 = pneg %p415
        %p892 = pneg %p412
        %p893 = pneg %p436
        %p894 = pneg %p433
        %p895 = pneg %p457
        %p896 = pneg %p454
        %p897 = pneg %p478
        %p898 = pneg %p475
        %p899 = pneg %p499
        %p900 = pneg %p496
        %p901 = pneg %p520
        %p902 = pneg %p517
        %p903 = pneg %p541
        %p904 = pneg %p538
        %p905 = pneg %p562
        %p906 = pneg %p559
        %p907 = pneg %p583
        %p908 = pneg %p580
        %p909 = pneg %p604
        %p910 = pneg %p601
        %p911 = pneg %p625
        %p912 = pneg %p622
        %p913 = pneg %p646
        %p914 = pneg %p643
        %p915 = pneg %p667
        %p916 = pneg %p664
        %p917 = pneg %p688
        %p918 = pneg %p685
        %p919 = pneg %p714
        %p920 = pneg %p711
        %s921 = sand.u32 %s701, 1
        %s922 = scalar_lea.sflag [#allocation3], %s921
        %s923 = sand.u32 %s701, 1
        %s924 = smul.addr %s923, 8
        %s925 = scalar_lea.vmem [#allocation2], %s924
        %p926 = pneg %p740
        %p927 = pneg %p737
        %s928 = sand.u32 %s727, 1
        %s929 = scalar_lea.sflag [#allocation5], %s928
        %s930 = sand.u32 %s727, 1
        %s931 = smul.addr %s930, 8
        %s932 = scalar_lea.vmem [#allocation4], %s931
        %p933 = scmp.lt.s32.totalorder %s79, 1
        %s934 = scalar_select %p933, %s79, 1
        %s935 = smul.addr %s934, 8
        %s936 = scalar_lea.vmem %s1, %s935
        %v937 = vld [vmem:[%s936] sm:$0xff]
        %v938 = vld [vmem:[%s3] sm:$0xff]
        %v939 = vld [vmem:[%s3 + $0x8] sm:$0xff]
        %v940 = vld [vmem:[%s5] sm:$0xff]
        %vm941 = vcmask 130048
        %v943 = vsel %vm941, %v937, 0
        %945 = vmatprep.subr.mxu0 0.0
        %946 = vmatpush1.msra.mxu0 %v938
        %947 = vmatprep.subr.mxu0 0.0
        %948 = vmatpush1.msra.mxu0 %v939
        %949 = vmatprep.subr.mxu0 0.0
        %950 = vmatpush1.msra.mxu0 0.0
        %951 = vmatprep.subr.mxu0 0.0
        %952 = vmatpush1.msra.mxu0 0.0
        %953 = vmatprep.subr.mxu0 0.0
        %954 = vmatpush1.msra.mxu0 0.0
        %955 = vmatprep.subr.mxu0 0.0
        %956 = vmatpush1.msra.mxu0 0.0
        %957 = vmatprep.subr.mxu0 0.0
        %958 = vmatpush1.msra.mxu0 0.0
        %959 = vmatprep.subr.mxu0 0.0
        %960 = vmatpush1.msra.mxu0 0.0
        %961 = vmatprep.subr.mxu0 0.0
        %962 = vmatpush1.msra.mxu0 0.0
        %963 = vmatprep.subr.mxu0 0.0
        %964 = vmatpush1.msra.mxu0 0.0
        %965 = vmatprep.subr.mxu0 0.0
        %966 = vmatpush1.msra.mxu0 0.0
        %967 = vmatprep.subr.mxu0 0.0
        %968 = vmatpush1.msra.mxu0 0.0
        %969 = vmatprep.subr.mxu0 0.0
        %970 = vmatpush1.msra.mxu0 0.0
        %971 = vmatprep.subr.mxu0 0.0
        %972 = vmatpush1.msra.mxu0 0.0
        %973 = vmatprep.subr.mxu0 0.0
        %974 = vmatpush1.msra.mxu0 0.0
        %975 = vmatprep.subr.mxu0 0.0
        %976 = vmatpush1.msra.mxu0 0.0
        %977 = vmatprep.subr.mxu0 0.0
        %978 = vmatpush1.msra.mxu0 0.0
        %979 = vmatprep.subr.mxu0 0.0
        %980 = vmatpush1.msra.mxu0 0.0
        %981 = vmatprep.subr.mxu0 0.0
        %982 = vmatpush1.msra.mxu0 0.0
        %983 = vmatprep.subr.mxu0 0.0
        %984 = vmatpush1.msra.mxu0 0.0
        %985 = vmatprep.subr.mxu0 0.0
        %986 = vmatpush1.msra.mxu0 0.0
        %987 = vmatprep.subr.mxu0 0.0
        %988 = vmatpush1.msra.mxu0 0.0
        %989 = vmatprep.subr.mxu0 0.0
        %990 = vmatpush1.msra.mxu0 0.0
        %991 = vmatprep.subr.mxu0 0.0
        %992 = vmatpush1.msra.mxu0 0.0
        %993 = vmatprep.subr.mxu0 0.0
        %994 = vmatpush1.msra.mxu0 0.0
        %995 = vmatprep.subr.mxu0 0.0
        %996 = vmatpush1.msra.mxu0 0.0
        %997 = vmatprep.subr.mxu0 0.0
        %998 = vmatpush1.msra.mxu0 0.0
        %999 = vmatprep.subr.mxu0 0.0
        %1000 = vmatpush1.msra.mxu0 0.0
        %1001 = vmatprep.subr.mxu0 0.0
        %1002 = vmatpush1.msra.mxu0 0.0
        %1003 = vmatprep.subr.mxu0 0.0
        %1004 = vmatpush1.msra.mxu0 0.0
        %1005 = vmatprep.subr.mxu0 0.0
        %1006 = vmatpush1.msra.mxu0 0.0
        %1007 = vmatprep.subr.mxu0 0.0
        %1008 = vmatpush1.msra.mxu0 0.0
        %1009 = vmatprep.mubr.f32.mxu0 0.0
        %1010 = vmatmul.mubr.f32.gmra.mrb[0].mxu0 %v943
        %v1011 = vpop.f32.mrb[0].mxu0
        %v1012 = vadd.f32 %v940, %v1011
        %v1013 = vpop.f32.mrb[0].mxu0
        %1014 = vdwg.mxu0
        %v1015 = vld [vmem:[%s7] sm:$0xff]
        %v1016 = vld [vmem:[%s7 + $0x8] sm:$0xff]
        %v1017 = vld [vmem:[%s7 + $0x10] sm:$0xff]
        %v1018 = vld [vmem:[%s7 + $0x18] sm:$0xff]
        %v1019 = vld [vmem:[%s9] sm:$0x1]
        %v1021 = vlaneseq
        %v1022 = vshrl.u32 %v1021, 7
        %v1023 = vsub.s32 0, %v1022
        %v1024 = vrot.slane %v1019, %v1023
        %vm1026 = vcmask 261120
        %v1028 = vsel %vm1026, %v1012, 0
        %1030 = vmatprep.subr.mxu0 0.0
        %1031 = vmatpush1.msra.mxu0 %v1015
        %1032 = vmatprep.subr.mxu0 0.0
        %1033 = vmatpush1.msra.mxu0 %v1016
        %1034 = vmatprep.subr.mxu0 0.0
        %1035 = vmatpush1.msra.mxu0 %v1017
        %1036 = vmatprep.subr.mxu0 0.0
        %1037 = vmatpush1.msra.mxu0 %v1018
        %1038 = vmatprep.subr.mxu0 0.0
        %1039 = vmatpush1.msra.mxu0 0.0
        %1040 = vmatprep.subr.mxu0 0.0
        %1041 = vmatpush1.msra.mxu0 0.0
        %1042 = vmatprep.subr.mxu0 0.0
        %1043 = vmatpush1.msra.mxu0 0.0
        %1044 = vmatprep.subr.mxu0 0.0
        %1045 = vmatpush1.msra.mxu0 0.0
        %1046 = vmatprep.subr.mxu0 0.0
        %1047 = vmatpush1.msra.mxu0 0.0
        %1048 = vmatprep.subr.mxu0 0.0
        %1049 = vmatpush1.msra.mxu0 0.0
        %1050 = vmatprep.subr.mxu0 0.0
        %1051 = vmatpush1.msra.mxu0 0.0
        %1052 = vmatprep.subr.mxu0 0.0
        %1053 = vmatpush1.msra.mxu0 0.0
        %1054 = vmatprep.subr.mxu0 0.0
        %1055 = vmatpush1.msra.mxu0 0.0
        %1056 = vmatprep.subr.mxu0 0.0
        %1057 = vmatpush1.msra.mxu0 0.0
        %1058 = vmatprep.subr.mxu0 0.0
        %1059 = vmatpush1.msra.mxu0 0.0
        %1060 = vmatprep.subr.mxu0 0.0
        %1061 = vmatpush1.msra.mxu0 0.0
        %1062 = vmatprep.subr.mxu0 0.0
        %1063 = vmatpush1.msra.mxu0 0.0
        %1064 = vmatprep.subr.mxu0 0.0
        %1065 = vmatpush1.msra.mxu0 0.0
        %1066 = vmatprep.subr.mxu0 0.0
        %1067 = vmatpush1.msra.mxu0 0.0
        %1068 = vmatprep.subr.mxu0 0.0
        %1069 = vmatpush1.msra.mxu0 0.0
        %1070 = vmatprep.subr.mxu0 0.0
        %1071 = vmatpush1.msra.mxu0 0.0
        %1072 = vmatprep.subr.mxu0 0.0
        %1073 = vmatpush1.msra.mxu0 0.0
        %1074 = vmatprep.subr.mxu0 0.0
        %1075 = vmatpush1.msra.mxu0 0.0
        %1076 = vmatprep.subr.mxu0 0.0
        %1077 = vmatpush1.msra.mxu0 0.0
        %1078 = vmatprep.subr.mxu0 0.0
        %1079 = vmatpush1.msra.mxu0 0.0
        %1080 = vmatprep.subr.mxu0 0.0
        %1081 = vmatpush1.msra.mxu0 0.0
        %1082 = vmatprep.subr.mxu0 0.0
        %1083 = vmatpush1.msra.mxu0 0.0
        %1084 = vmatprep.subr.mxu0 0.0
        %1085 = vmatpush1.msra.mxu0 0.0
        %1086 = vmatprep.subr.mxu0 0.0
        %1087 = vmatpush1.msra.mxu0 0.0
        %1088 = vmatprep.subr.mxu0 0.0
        %1089 = vmatpush1.msra.mxu0 0.0
        %1090 = vmatprep.subr.mxu0 0.0
        %1091 = vmatpush1.msra.mxu0 0.0
        %1092 = vmatprep.subr.mxu0 0.0
        %1093 = vmatpush1.msra.mxu0 0.0
        %1094 = vmatprep.mubr.f32.mxu0 0.0
        %1095 = vmatmul.mubr.f32.gmra.mrb[0].mxu0 %v1028
        %v1096 = vpop.f32.mrb[0].mxu0
        %v1097 = vadd.f32 %v1024, %v1096
        %v1098 = vpop.f32.mrb[0].mxu0
        %1099 = vdwg.mxu0
        %1101 = vrot.lane.b32.xlu0 %v1097, 120
        %v1102 = vpop.permute.xlu0 %1101
        %1103 = vrot.lane.b32.xlu0 %v1097, 112
        %v1104 = vpop.permute.xlu0 %1103
        %1105 = vrot.lane.b32.xlu0 %v1097, 104
        %v1106 = vpop.permute.xlu0 %1105
        %1107 = vrot.lane.b32.xlu0 %v1097, 96
        %v1108 = vpop.permute.xlu0 %1107
        %vm1109 = vcmask 64512
        %v1110 = vsel %vm1109, %v1097, 0
        %v1112 = vsel %vm1109, %v1108, 0
        %1114 = vmatprep.subr.mxu0 0.0
        %1115 = vmatpush1.xpose.msra.mxu0 %v1112
        %1116 = vmatprep.subr.mxu0 0.0
        %1117 = vmatpush1.xpose.msra.mxu0 0.0
        %1118 = vmatprep.subr.mxu0 0.0
        %1119 = vmatpush1.xpose.msra.mxu0 0.0
        %1120 = vmatprep.subr.mxu0 0.0
        %1121 = vmatpush1.xpose.msra.mxu0 0.0
        %1122 = vmatprep.subr.mxu0 0.0
        %1123 = vmatpush1.xpose.msra.mxu0 0.0
        %1124 = vmatprep.subr.mxu0 0.0
        %1125 = vmatpush1.xpose.msra.mxu0 0.0
        %1126 = vmatprep.subr.mxu0 0.0
        %1127 = vmatpush1.xpose.msra.mxu0 0.0
        %1128 = vmatprep.subr.mxu0 0.0
        %1129 = vmatpush1.xpose.msra.mxu0 0.0
        %1130 = vmatprep.subr.mxu0 0.0
        %1131 = vmatpush1.xpose.msra.mxu0 0.0
        %1132 = vmatprep.subr.mxu0 0.0
        %1133 = vmatpush1.xpose.msra.mxu0 0.0
        %1134 = vmatprep.subr.mxu0 0.0
        %1135 = vmatpush1.xpose.msra.mxu0 0.0
        %1136 = vmatprep.subr.mxu0 0.0
        %1137 = vmatpush1.xpose.msra.mxu0 0.0
        %1138 = vmatprep.subr.mxu0 0.0
        %1139 = vmatpush1.xpose.msra.mxu0 0.0
        %1140 = vmatprep.subr.mxu0 0.0
        %1141 = vmatpush1.xpose.msra.mxu0 0.0
        %1142 = vmatprep.subr.mxu0 0.0
        %1143 = vmatpush1.xpose.msra.mxu0 0.0
        %1144 = vmatprep.subr.mxu0 0.0
        %1145 = vmatpush1.xpose.msra.mxu0 0.0
        %1146 = vmatprep.subr.mxu0 0.0
        %1147 = vmatpush1.xpose.msra.mxu0 0.0
        %1148 = vmatprep.subr.mxu0 0.0
        %1149 = vmatpush1.xpose.msra.mxu0 0.0
        %1150 = vmatprep.subr.mxu0 0.0
        %1151 = vmatpush1.xpose.msra.mxu0 0.0
        %1152 = vmatprep.subr.mxu0 0.0
        %1153 = vmatpush1.xpose.msra.mxu0 0.0
        %1154 = vmatprep.subr.mxu0 0.0
        %1155 = vmatpush1.xpose.msra.mxu0 0.0
        %1156 = vmatprep.subr.mxu0 0.0
        %1157 = vmatpush1.xpose.msra.mxu0 0.0
        %1158 = vmatprep.subr.mxu0 0.0
        %1159 = vmatpush1.xpose.msra.mxu0 0.0
        %1160 = vmatprep.subr.mxu0 0.0
        %1161 = vmatpush1.xpose.msra.mxu0 0.0
        %1162 = vmatprep.subr.mxu0 0.0
        %1163 = vmatpush1.xpose.msra.mxu0 0.0
        %1164 = vmatprep.subr.mxu0 0.0
        %1165 = vmatpush1.xpose.msra.mxu0 0.0
        %1166 = vmatprep.subr.mxu0 0.0
        %1167 = vmatpush1.xpose.msra.mxu0 0.0
        %1168 = vmatprep.subr.mxu0 0.0
        %1169 = vmatpush1.xpose.msra.mxu0 0.0
        %1170 = vmatprep.subr.mxu0 0.0
        %1171 = vmatpush1.xpose.msra.mxu0 0.0
        %1172 = vmatprep.subr.mxu0 0.0
        %1173 = vmatpush1.xpose.msra.mxu0 0.0
        %1174 = vmatprep.subr.mxu0 0.0
        %1175 = vmatpush1.xpose.msra.mxu0 0.0
        %1176 = vmatprep.subr.mxu0 0.0
        %1177 = vmatpush1.xpose.msra.mxu0 0.0
        %1178 = vmatprep.mubr.f32.mxu0 0.0
        %1179 = vmatmul.mubr.f32.gmra.mrb[0].mxu0 %v1110
        %v1180 = vpop.f32.mrb[0].mxu0
        %v1181 = vadd.f32 0.0, %v1180
        %v1182 = vpop.f32.mrb[0].mxu0
        %1183 = vdwg.mxu0
        %1184 = vrot.lane.b32.xlu0 %v1102, 96
        %v1185 = vpop.permute.xlu0 %1184
        %v1186 = vsel %vm1109, %v1102, 0
        %v1188 = vsel %vm1109, %v1185, 0
        %1190 = vmatprep.subr.mxu0 0.0
        %1191 = vmatpush1.xpose.msra.mxu0 %v1188
        %1192 = vmatprep.subr.mxu0 0.0
        %1193 = vmatpush1.xpose.msra.mxu0 0.0
        %1194 = vmatprep.subr.mxu0 0.0
        %1195 = vmatpush1.xpose.msra.mxu0 0.0
        %1196 = vmatprep.subr.mxu0 0.0
        %1197 = vmatpush1.xpose.msra.mxu0 0.0
        %1198 = vmatprep.subr.mxu0 0.0
        %1199 = vmatpush1.xpose.msra.mxu0 0.0
        %1200 = vmatprep.subr.mxu0 0.0
        %1201 = vmatpush1.xpose.msra.mxu0 0.0
        %1202 = vmatprep.subr.mxu0 0.0
        %1203 = vmatpush1.xpose.msra.mxu0 0.0
        %1204 = vmatprep.subr.mxu0 0.0
        %1205 = vmatpush1.xpose.msra.mxu0 0.0
        %1206 = vmatprep.subr.mxu0 0.0
        %1207 = vmatpush1.xpose.msra.mxu0 0.0
        %1208 = vmatprep.subr.mxu0 0.0
        %1209 = vmatpush1.xpose.msra.mxu0 0.0
        %1210 = vmatprep.subr.mxu0 0.0
        %1211 = vmatpush1.xpose.msra.mxu0 0.0
        %1212 = vmatprep.subr.mxu0 0.0
        %1213 = vmatpush1.xpose.msra.mxu0 0.0
        %1214 = vmatprep.subr.mxu0 0.0
        %1215 = vmatpush1.xpose.msra.mxu0 0.0
        %1216 = vmatprep.subr.mxu0 0.0
        %1217 = vmatpush1.xpose.msra.mxu0 0.0
        %1218 = vmatprep.subr.mxu0 0.0
        %1219 = vmatpush1.xpose.msra.mxu0 0.0
        %1220 = vmatprep.subr.mxu0 0.0
        %1221 = vmatpush1.xpose.msra.mxu0 0.0
        %1222 = vmatprep.subr.mxu0 0.0
        %1223 = vmatpush1.xpose.msra.mxu0 0.0
        %1224 = vmatprep.subr.mxu0 0.0
        %1225 = vmatpush1.xpose.msra.mxu0 0.0
        %1226 = vmatprep.subr.mxu0 0.0
        %1227 = vmatpush1.xpose.msra.mxu0 0.0
        %1228 = vmatprep.subr.mxu0 0.0
        %1229 = vmatpush1.xpose.msra.mxu0 0.0
        %1230 = vmatprep.subr.mxu0 0.0
        %1231 = vmatpush1.xpose.msra.mxu0 0.0
        %1232 = vmatprep.subr.mxu0 0.0
        %1233 = vmatpush1.xpose.msra.mxu0 0.0
        %1234 = vmatprep.subr.mxu0 0.0
        %1235 = vmatpush1.xpose.msra.mxu0 0.0
        %1236 = vmatprep.subr.mxu0 0.0
        %1237 = vmatpush1.xpose.msra.mxu0 0.0
        %1238 = vmatprep.subr.mxu0 0.0
        %1239 = vmatpush1.xpose.msra.mxu0 0.0
        %1240 = vmatprep.subr.mxu0 0.0
        %1241 = vmatpush1.xpose.msra.mxu0 0.0
        %1242 = vmatprep.subr.mxu0 0.0
        %1243 = vmatpush1.xpose.msra.mxu0 0.0
        %1244 = vmatprep.subr.mxu0 0.0
        %1245 = vmatpush1.xpose.msra.mxu0 0.0
        %1246 = vmatprep.subr.mxu0 0.0
        %1247 = vmatpush1.xpose.msra.mxu0 0.0
        %1248 = vmatprep.subr.mxu0 0.0
        %1249 = vmatpush1.xpose.msra.mxu0 0.0
        %1250 = vmatprep.subr.mxu0 0.0
        %1251 = vmatpush1.xpose.msra.mxu0 0.0
        %1252 = vmatprep.subr.mxu0 0.0
        %1253 = vmatpush1.xpose.msra.mxu0 0.0
        %1254 = vmatprep.mubr.f32.mxu0 0.0
        %1255 = vmatmul.mubr.f32.gmra.mrb[0].mxu0 %v1186
        %v1256 = vpop.f32.mrb[0].mxu0
        %v1257 = vadd.f32 0.0, %v1256
        %v1258 = vpop.f32.mrb[0].mxu0
        %1259 = vdwg.mxu0
        %1260 = vrot.lane.b32.xlu0 %v1104, 96
        %v1261 = vpop.permute.xlu0 %1260
        %v1262 = vsel %vm1109, %v1104, 0
        %v1264 = vsel %vm1109, %v1261, 0
        %1266 = vmatprep.subr.mxu0 0.0
        %1267 = vmatpush1.xpose.msra.mxu0 %v1264
        %1268 = vmatprep.subr.mxu0 0.0
        %1269 = vmatpush1.xpose.msra.mxu0 0.0
        %1270 = vmatprep.subr.mxu0 0.0
        %1271 = vmatpush1.xpose.msra.mxu0 0.0
        %1272 = vmatprep.subr.mxu0 0.0
        %1273 = vmatpush1.xpose.msra.mxu0 0.0
        %1274 = vmatprep.subr.mxu0 0.0
        %1275 = vmatpush1.xpose.msra.mxu0 0.0
        %1276 = vmatprep.subr.mxu0 0.0
        %1277 = vmatpush1.xpose.msra.mxu0 0.0
        %1278 = vmatprep.subr.mxu0 0.0
        %1279 = vmatpush1.xpose.msra.mxu0 0.0
        %1280 = vmatprep.subr.mxu0 0.0
        %1281 = vmatpush1.xpose.msra.mxu0 0.0
        %1282 = vmatprep.subr.mxu0 0.0
        %1283 = vmatpush1.xpose.msra.mxu0 0.0
        %1284 = vmatprep.subr.mxu0 0.0
        %1285 = vmatpush1.xpose.msra.mxu0 0.0
        %1286 = vmatprep.subr.mxu0 0.0
        %1287 = vmatpush1.xpose.msra.mxu0 0.0
        %1288 = vmatprep.subr.mxu0 0.0
        %1289 = vmatpush1.xpose.msra.mxu0 0.0
        %1290 = vmatprep.subr.mxu0 0.0
        %1291 = vmatpush1.xpose.msra.mxu0 0.0
        %1292 = vmatprep.subr.mxu0 0.0
        %1293 = vmatpush1.xpose.msra.mxu0 0.0
        %1294 = vmatprep.subr.mxu0 0.0
        %1295 = vmatpush1.xpose.msra.mxu0 0.0
        %1296 = vmatprep.subr.mxu0 0.0
        %1297 = vmatpush1.xpose.msra.mxu0 0.0
        %1298 = vmatprep.subr.mxu0 0.0
        %1299 = vmatpush1.xpose.msra.mxu0 0.0
        %1300 = vmatprep.subr.mxu0 0.0
        %1301 = vmatpush1.xpose.msra.mxu0 0.0
        %1302 = vmatprep.subr.mxu0 0.0
        %1303 = vmatpush1.xpose.msra.mxu0 0.0
        %1304 = vmatprep.subr.mxu0 0.0
        %1305 = vmatpush1.xpose.msra.mxu0 0.0
        %1306 = vmatprep.subr.mxu0 0.0
        %1307 = vmatpush1.xpose.msra.mxu0 0.0
        %1308 = vmatprep.subr.mxu0 0.0
        %1309 = vmatpush1.xpose.msra.mxu0 0.0
        %1310 = vmatprep.subr.mxu0 0.0
        %1311 = vmatpush1.xpose.msra.mxu0 0.0
        %1312 = vmatprep.subr.mxu0 0.0
        %1313 = vmatpush1.xpose.msra.mxu0 0.0
        %1314 = vmatprep.subr.mxu0 0.0
        %1315 = vmatpush1.xpose.msra.mxu0 0.0
        %1316 = vmatprep.subr.mxu0 0.0
        %1317 = vmatpush1.xpose.msra.mxu0 0.0
        %1318 = vmatprep.subr.mxu0 0.0
        %1319 = vmatpush1.xpose.msra.mxu0 0.0
        %1320 = vmatprep.subr.mxu0 0.0
        %1321 = vmatpush1.xpose.msra.mxu0 0.0
        %1322 = vmatprep.subr.mxu0 0.0
        %1323 = vmatpush1.xpose.msra.mxu0 0.0
        %1324 = vmatprep.subr.mxu0 0.0
        %1325 = vmatpush1.xpose.msra.mxu0 0.0
        %1326 = vmatprep.subr.mxu0 0.0
        %1327 = vmatpush1.xpose.msra.mxu0 0.0
        %1328 = vmatprep.subr.mxu0 0.0
        %1329 = vmatpush1.xpose.msra.mxu0 0.0
        %1330 = vmatprep.mubr.f32.mxu0 0.0
        %1331 = vmatmul.mubr.f32.gmra.mrb[0].mxu0 %v1262
        %v1332 = vpop.f32.mrb[0].mxu0
        %v1333 = vadd.f32 0.0, %v1332
        %v1334 = vpop.f32.mrb[0].mxu0
        %1335 = vdwg.mxu0
        %1336 = vrot.lane.b32.xlu0 %v1106, 96
        %v1337 = vpop.permute.xlu0 %1336
        %v1338 = vsel %vm1109, %v1106, 0
        %v1340 = vsel %vm1109, %v1337, 0
        %1342 = vmatprep.subr.mxu0 0.0
        %1343 = vmatpush1.xpose.msra.mxu0 %v1340
        %1344 = vmatprep.subr.mxu0 0.0
        %1345 = vmatpush1.xpose.msra.mxu0 0.0
        %1346 = vmatprep.subr.mxu0 0.0
        %1347 = vmatpush1.xpose.msra.mxu0 0.0
        %1348 = vmatprep.subr.mxu0 0.0
        %1349 = vmatpush1.xpose.msra.mxu0 0.0
        %1350 = vmatprep.subr.mxu0 0.0
        %1351 = vmatpush1.xpose.msra.mxu0 0.0
        %1352 = vmatprep.subr.mxu0 0.0
        %1353 = vmatpush1.xpose.msra.mxu0 0.0
        %1354 = vmatprep.subr.mxu0 0.0
        %1355 = vmatpush1.xpose.msra.mxu0 0.0
        %1356 = vmatprep.subr.mxu0 0.0
        %1357 = vmatpush1.xpose.msra.mxu0 0.0
        %1358 = vmatprep.subr.mxu0 0.0
        %1359 = vmatpush1.xpose.msra.mxu0 0.0
        %1360 = vmatprep.subr.mxu0 0.0
        %1361 = vmatpush1.xpose.msra.mxu0 0.0
        %1362 = vmatprep.subr.mxu0 0.0
        %1363 = vmatpush1.xpose.msra.mxu0 0.0
        %1364 = vmatprep.subr.mxu0 0.0
        %1365 = vmatpush1.xpose.msra.mxu0 0.0
        %1366 = vmatprep.subr.mxu0 0.0
        %1367 = vmatpush1.xpose.msra.mxu0 0.0
        %1368 = vmatprep.subr.mxu0 0.0
        %1369 = vmatpush1.xpose.msra.mxu0 0.0
        %1370 = vmatprep.subr.mxu0 0.0
        %1371 = vmatpush1.xpose.msra.mxu0 0.0
        %1372 = vmatprep.subr.mxu0 0.0
        %1373 = vmatpush1.xpose.msra.mxu0 0.0
        %1374 = vmatprep.subr.mxu0 0.0
        %1375 = vmatpush1.xpose.msra.mxu0 0.0
        %1376 = vmatprep.subr.mxu0 0.0
        %1377 = vmatpush1.xpose.msra.mxu0 0.0
        %1378 = vmatprep.subr.mxu0 0.0
        %1379 = vmatpush1.xpose.msra.mxu0 0.0
        %1380 = vmatprep.subr.mxu0 0.0
        %1381 = vmatpush1.xpose.msra.mxu0 0.0
        %1382 = vmatprep.subr.mxu0 0.0
        %1383 = vmatpush1.xpose.msra.mxu0 0.0
        %1384 = vmatprep.subr.mxu0 0.0
        %1385 = vmatpush1.xpose.msra.mxu0 0.0
        %1386 = vmatprep.subr.mxu0 0.0
        %1387 = vmatpush1.xpose.msra.mxu0 0.0
        %1388 = vmatprep.subr.mxu0 0.0
        %1389 = vmatpush1.xpose.msra.mxu0 0.0
        %1390 = vmatprep.subr.mxu0 0.0
        %1391 = vmatpush1.xpose.msra.mxu0 0.0
        %1392 = vmatprep.subr.mxu0 0.0
        %1393 = vmatpush1.xpose.msra.mxu0 0.0
        %1394 = vmatprep.subr.mxu0 0.0
        %1395 = vmatpush1.xpose.msra.mxu0 0.0
        %1396 = vmatprep.subr.mxu0 0.0
        %1397 = vmatpush1.xpose.msra.mxu0 0.0
        %1398 = vmatprep.subr.mxu0 0.0
        %1399 = vmatpush1.xpose.msra.mxu0 0.0
        %1400 = vmatprep.subr.mxu0 0.0
        %1401 = vmatpush1.xpose.msra.mxu0 0.0
        %1402 = vmatprep.subr.mxu0 0.0
        %1403 = vmatpush1.xpose.msra.mxu0 0.0
        %1404 = vmatprep.subr.mxu0 0.0
        %1405 = vmatpush1.xpose.msra.mxu0 0.0
        %1406 = vmatprep.mubr.f32.mxu0 0.0
        %1407 = vmatmul.mubr.f32.gmra.mrb[0].mxu0 %v1338
        %v1408 = vpop.f32.mrb[0].mxu0
        %v1409 = vadd.f32 0.0, %v1408
        %v1410 = vpop.f32.mrb[0].mxu0
        %1411 = vdwg.mxu0
        %v1412 = vmul.f32 %v1181, 0.35355338
        %v1413 = vmul.f32 %v1257, 0.35355338
        %v1414 = vmul.f32 %v1333, 0.35355338
        %v1415 = vmul.f32 %v1409, 0.35355338
        %v1416 = vsel %vm1109, %v1412, -inf
        %1417 = vmax.xlane.f32.xlu0 %v1416
        %v1418 = vpop.xlane.xlu0 %1417
        %v1419 = vsel %vm1109, %v1413, -inf
        %1420 = vmax.xlane.f32.xlu0 %v1419
        %v1421 = vpop.xlane.xlu0 %1420
        %v1422 = vsel %vm1109, %v1414, -inf
        %1423 = vmax.xlane.f32.xlu0 %v1422
        %v1424 = vpop.xlane.xlu0 %1423
        %v1425 = vsel %vm1109, %v1415, -inf
        %1426 = vmax.xlane.f32.xlu0 %v1425
        %v1427 = vpop.xlane.xlu0 %1426
        %v1428 = vsub.f32 %v1412, %v1418
        %v1429 = vsub.f32 %v1413, %v1421
        %v1430 = vsub.f32 %v1414, %v1424
        %v1431 = vsub.f32 %v1415, %v1427
        %v1432 = vmul.f32 %v1428, 1.442695
        %v1433 = vpow.pop %v1432
        %v1434 = vmul.f32 %v1429, 1.442695
        %v1435 = vpow.pop %v1434
        %v1436 = vmul.f32 %v1430, 1.442695
        %v1437 = vpow.pop %v1436
        %v1438 = vmul.f32 %v1431, 1.442695
        %v1439 = vpow.pop %v1438
        %v1440 = vsel %vm1109, %v1433, 0.0
        %1441 = vadd.xlane.f32.xlu0 %v1440
        %v1442 = vpop.xlane.xlu0 %1441
        %v1443 = vsel %vm1109, %v1435, 0.0
        %1444 = vadd.xlane.f32.xlu0 %v1443
        %v1445 = vpop.xlane.xlu0 %1444
        %v1446 = vsel %vm1109, %v1437, 0.0
        %1447 = vadd.xlane.f32.xlu0 %v1446
        %v1448 = vpop.xlane.xlu0 %1447
        %v1449 = vsel %vm1109, %v1439, 0.0
        %1450 = vadd.xlane.f32.xlu0 %v1449
        %v1451 = vpop.xlane.xlu0 %1450
        %v1452 = vrcp.pop %v1442
        %v1453 = vmul.f32 %v1433, %v1452
        %v1454 = vrcp.pop %v1445
        %v1455 = vmul.f32 %v1435, %v1454
        %v1456 = vrcp.pop %v1448
        %v1457 = vmul.f32 %v1437, %v1456
        %v1458 = vrcp.pop %v1451
        %v1459 = vmul.f32 %v1439, %v1458
        %1460 = vrot.lane.b32.xlu0 %v1097, 64
        %v1461 = vpop.permute.xlu0 %1460
        %v1464 = vsel %vm1109, %v1453, 0
        %1466 = vmatprep.subr.mxu0 0.0
        %1467 = vmatpush1.msra.mxu0 %v1461
        %1468 = vmatprep.subr.mxu0 0.0
        %1469 = vmatpush1.msra.mxu0 0.0
        %1470 = vmatprep.subr.mxu0 0.0
        %1471 = vmatpush1.msra.mxu0 0.0
        %1472 = vmatprep.subr.mxu0 0.0
        %1473 = vmatpush1.msra.mxu0 0.0
        %1474 = vmatprep.subr.mxu0 0.0
        %1475 = vmatpush1.msra.mxu0 0.0
        %1476 = vmatprep.subr.mxu0 0.0
        %1477 = vmatpush1.msra.mxu0 0.0
        %1478 = vmatprep.subr.mxu0 0.0
        %1479 = vmatpush1.msra.mxu0 0.0
        %1480 = vmatprep.subr.mxu0 0.0
        %1481 = vmatpush1.msra.mxu0 0.0
        %1482 = vmatprep.subr.mxu0 0.0
        %1483 = vmatpush1.msra.mxu0 0.0
        %1484 = vmatprep.subr.mxu0 0.0
        %1485 = vmatpush1.msra.mxu0 0.0
        %1486 = vmatprep.subr.mxu0 0.0
        %1487 = vmatpush1.msra.mxu0 0.0
        %1488 = vmatprep.subr.mxu0 0.0
        %1489 = vmatpush1.msra.mxu0 0.0
        %1490 = vmatprep.subr.mxu0 0.0
        %1491 = vmatpush1.msra.mxu0 0.0
        %1492 = vmatprep.subr.mxu0 0.0
        %1493 = vmatpush1.msra.mxu0 0.0
        %1494 = vmatprep.subr.mxu0 0.0
        %1495 = vmatpush1.msra.mxu0 0.0
        %1496 = vmatprep.subr.mxu0 0.0
        %1497 = vmatpush1.msra.mxu0 0.0
        %1498 = vmatprep.subr.mxu0 0.0
        %1499 = vmatpush1.msra.mxu0 0.0
        %1500 = vmatprep.subr.mxu0 0.0
        %1501 = vmatpush1.msra.mxu0 0.0
        %1502 = vmatprep.subr.mxu0 0.0
        %1503 = vmatpush1.msra.mxu0 0.0
        %1504 = vmatprep.subr.mxu0 0.0
        %1505 = vmatpush1.msra.mxu0 0.0
        %1506 = vmatprep.subr.mxu0 0.0
        %1507 = vmatpush1.msra.mxu0 0.0
        %1508 = vmatprep.subr.mxu0 0.0
        %1509 = vmatpush1.msra.mxu0 0.0
        %1510 = vmatprep.subr.mxu0 0.0
        %1511 = vmatpush1.msra.mxu0 0.0
        %1512 = vmatprep.subr.mxu0 0.0
        %1513 = vmatpush1.msra.mxu0 0.0
        %1514 = vmatprep.subr.mxu0 0.0
        %1515 = vmatpush1.msra.mxu0 0.0
        %1516 = vmatprep.subr.mxu0 0.0
        %1517 = vmatpush1.msra.mxu0 0.0
        %1518 = vmatprep.subr.mxu0 0.0
        %1519 = vmatpush1.msra.mxu0 0.0
        %1520 = vmatprep.subr.mxu0 0.0
        %1521 = vmatpush1.msra.mxu0 0.0
        %1522 = vmatprep.subr.mxu0 0.0
        %1523 = vmatpush1.msra.mxu0 0.0
        %1524 = vmatprep.subr.mxu0 0.0
        %1525 = vmatpush1.msra.mxu0 0.0
        %1526 = vmatprep.subr.mxu0 0.0
        %1527 = vmatpush1.msra.mxu0 0.0
        %1528 = vmatprep.subr.mxu0 0.0
        %1529 = vmatpush1.msra.mxu0 0.0
        %1530 = vmatprep.mubr.f32.mxu0 0.0
        %1531 = vmatmul.mubr.f32.gmra.mrb[0].mxu0 %v1464
        %v1532 = vpop.f32.mrb[0].mxu0
        %v1533 = vadd.f32 0.0, %v1532
        %v1534 = vpop.f32.mrb[0].mxu0
        %1535 = vdwg.mxu0
        %1536 = vrot.lane.b32.xlu0 %v1102, 64
        %v1537 = vpop.permute.xlu0 %1536
        %v1540 = vsel %vm1109, %v1455, 0
        %1542 = vmatprep.subr.mxu0 0.0
        %1543 = vmatpush1.msra.mxu0 %v1537
        %1544 = vmatprep.subr.mxu0 0.0
        %1545 = vmatpush1.msra.mxu0 0.0
        %1546 = vmatprep.subr.mxu0 0.0
        %1547 = vmatpush1.msra.mxu0 0.0
        %1548 = vmatprep.subr.mxu0 0.0
        %1549 = vmatpush1.msra.mxu0 0.0
        %1550 = vmatprep.subr.mxu0 0.0
        %1551 = vmatpush1.msra.mxu0 0.0
        %1552 = vmatprep.subr.mxu0 0.0
        %1553 = vmatpush1.msra.mxu0 0.0
        %1554 = vmatprep.subr.mxu0 0.0
        %1555 = vmatpush1.msra.mxu0 0.0
        %1556 = vmatprep.subr.mxu0 0.0
        %1557 = vmatpush1.msra.mxu0 0.0
        %1558 = vmatprep.subr.mxu0 0.0
        %1559 = vmatpush1.msra.mxu0 0.0
        %1560 = vmatprep.subr.mxu0 0.0
        %1561 = vmatpush1.msra.mxu0 0.0
        %1562 = vmatprep.subr.mxu0 0.0
        %1563 = vmatpush1.msra.mxu0 0.0
        %1564 = vmatprep.subr.mxu0 0.0
        %1565 = vmatpush1.msra.mxu0 0.0
        %1566 = vmatprep.subr.mxu0 0.0
        %1567 = vmatpush1.msra.mxu0 0.0
        %1568 = vmatprep.subr.mxu0 0.0
        %1569 = vmatpush1.msra.mxu0 0.0
        %1570 = vmatprep.subr.mxu0 0.0
        %1571 = vmatpush1.msra.mxu0 0.0
        %1572 = vmatprep.subr.mxu0 0.0
        %1573 = vmatpush1.msra.mxu0 0.0
        %1574 = vmatprep.subr.mxu0 0.0
        %1575 = vmatpush1.msra.mxu0 0.0
        %1576 = vmatprep.subr.mxu0 0.0
        %1577 = vmatpush1.msra.mxu0 0.0
        %1578 = vmatprep.subr.mxu0 0.0
        %1579 = vmatpush1.msra.mxu0 0.0
        %1580 = vmatprep.subr.mxu0 0.0
        %1581 = vmatpush1.msra.mxu0 0.0
        %1582 = vmatprep.subr.mxu0 0.0
        %1583 = vmatpush1.msra.mxu0 0.0
        %1584 = vmatprep.subr.mxu0 0.0
        %1585 = vmatpush1.msra.mxu0 0.0
        %1586 = vmatprep.subr.mxu0 0.0
        %1587 = vmatpush1.msra.mxu0 0.0
        %1588 = vmatprep.subr.mxu0 0.0
        %1589 = vmatpush1.msra.mxu0 0.0
        %1590 = vmatprep.subr.mxu0 0.0
        %1591 = vmatpush1.msra.mxu0 0.0
        %1592 = vmatprep.subr.mxu0 0.0
        %1593 = vmatpush1.msra.mxu0 0.0
        %1594 = vmatprep.subr.mxu0 0.0
        %1595 = vmatpush1.msra.mxu0 0.0
        %1596 = vmatprep.subr.mxu0 0.0
        %1597 = vmatpush1.msra.mxu0 0.0
        %1598 = vmatprep.subr.mxu0 0.0
        %1599 = vmatpush1.msra.mxu0 0.0
        %1600 = vmatprep.subr.mxu0 0.0
        %1601 = vmatpush1.msra.mxu0 0.0
        %1602 = vmatprep.subr.mxu0 0.0
        %1603 = vmatpush1.msra.mxu0 0.0
        %1604 = vmatprep.subr.mxu0 0.0
        %1605 = vmatpush1.msra.mxu0 0.0
        %1606 = vmatprep.mubr.f32.mxu0 0.0
        %1607 = vmatmul.mubr.f32.gmra.mrb[0].mxu0 %v1540
        %v1608 = vpop.f32.mrb[0].mxu0
        %v1609 = vadd.f32 0.0, %v1608
        %v1610 = vpop.f32.mrb[0].mxu0
        %1611 = vdwg.mxu0
        %1612 = vrot.lane.b32.xlu0 %v1104, 64
        %v1613 = vpop.permute.xlu0 %1612
        %v1616 = vsel %vm1109, %v1457, 0
        %1618 = vmatprep.subr.mxu0 0.0
        %1619 = vmatpush1.msra.mxu0 %v1613
        %1620 = vmatprep.subr.mxu0 0.0
        %1621 = vmatpush1.msra.mxu0 0.0
        %1622 = vmatprep.subr.mxu0 0.0
        %1623 = vmatpush1.msra.mxu0 0.0
        %1624 = vmatprep.subr.mxu0 0.0
        %1625 = vmatpush1.msra.mxu0 0.0
        %1626 = vmatprep.subr.mxu0 0.0
        %1627 = vmatpush1.msra.mxu0 0.0
        %1628 = vmatprep.subr.mxu0 0.0
        %1629 = vmatpush1.msra.mxu0 0.0
        %1630 = vmatprep.subr.mxu0 0.0
        %1631 = vmatpush1.msra.mxu0 0.0
        %1632 = vmatprep.subr.mxu0 0.0
        %1633 = vmatpush1.msra.mxu0 0.0
        %1634 = vmatprep.subr.mxu0 0.0
        %1635 = vmatpush1.msra.mxu0 0.0
        %1636 = vmatprep.subr.mxu0 0.0
        %1637 = vmatpush1.msra.mxu0 0.0
        %1638 = vmatprep.subr.mxu0 0.0
        %1639 = vmatpush1.msra.mxu0 0.0
        %1640 = vmatprep.subr.mxu0 0.0
        %1641 = vmatpush1.msra.mxu0 0.0
        %1642 = vmatprep.subr.mxu0 0.0
        %1643 = vmatpush1.msra.mxu0 0.0
        %1644 = vmatprep.subr.mxu0 0.0
        %1645 = vmatpush1.msra.mxu0 0.0
        %1646 = vmatprep.subr.mxu0 0.0
        %1647 = vmatpush1.msra.mxu0 0.0
        %1648 = vmatprep.subr.mxu0 0.0
        %1649 = vmatpush1.msra.mxu0 0.0
        %1650 = vmatprep.subr.mxu0 0.0
        %1651 = vmatpush1.msra.mxu0 0.0
        %1652 = vmatprep.subr.mxu0 0.0
        %1653 = vmatpush1.msra.mxu0 0.0
        %1654 = vmatprep.subr.mxu0 0.0
        %1655 = vmatpush1.msra.mxu0 0.0
        %1656 = vmatprep.subr.mxu0 0.0
        %1657 = vmatpush1.msra.mxu0 0.0
        %1658 = vmatprep.subr.mxu0 0.0
        %1659 = vmatpush1.msra.mxu0 0.0
        %1660 = vmatprep.subr.mxu0 0.0
        %1661 = vmatpush1.msra.mxu0 0.0
        %1662 = vmatprep.subr.mxu0 0.0
        %1663 = vmatpush1.msra.mxu0 0.0
        %1664 = vmatprep.subr.mxu0 0.0
        %1665 = vmatpush1.msra.mxu0 0.0
        %1666 = vmatprep.subr.mxu0 0.0
        %1667 = vmatpush1.msra.mxu0 0.0
        %1668 = vmatprep.subr.mxu0 0.0
        %1669 = vmatpush1.msra.mxu0 0.0
        %1670 = vmatprep.subr.mxu0 0.0
        %1671 = vmatpush1.msra.mxu0 0.0
        %1672 = vmatprep.subr.mxu0 0.0
        %1673 = vmatpush1.msra.mxu0 0.0
        %1674 = vmatprep.subr.mxu0 0.0
        %1675 = vmatpush1.msra.mxu0 0.0
        %1676 = vmatprep.subr.mxu0 0.0
        %1677 = vmatpush1.msra.mxu0 0.0
        %1678 = vmatprep.subr.mxu0 0.0
        %1679 = vmatpush1.msra.mxu0 0.0
        %1680 = vmatprep.subr.mxu0 0.0
        %1681 = vmatpush1.msra.mxu0 0.0
        %1682 = vmatprep.mubr.f32.mxu0 0.0
        %1683 = vmatmul.mubr.f32.gmra.mrb[0].mxu0 %v1616
        %v1684 = vpop.f32.mrb[0].mxu0
        %v1685 = vadd.f32 0.0, %v1684
        %v1686 = vpop.f32.mrb[0].mxu0
        %1687 = vdwg.mxu0
        %1688 = vrot.lane.b32.xlu0 %v1106, 64
        %v1689 = vpop.permute.xlu0 %1688
        %v1692 = vsel %vm1109, %v1459, 0
        %1694 = vmatprep.subr.mxu0 0.0
        %1695 = vmatpush1.msra.mxu0 %v1689
        %1696 = vmatprep.subr.mxu0 0.0
        %1697 = vmatpush1.msra.mxu0 0.0
        %1698 = vmatprep.subr.mxu0 0.0
        %1699 = vmatpush1.msra.mxu0 0.0
        %1700 = vmatprep.subr.mxu0 0.0
        %1701 = vmatpush1.msra.mxu0 0.0
        %1702 = vmatprep.subr.mxu0 0.0
        %1703 = vmatpush1.msra.mxu0 0.0
        %1704 = vmatprep.subr.mxu0 0.0
        %1705 = vmatpush1.msra.mxu0 0.0
        %1706 = vmatprep.subr.mxu0 0.0
        %1707 = vmatpush1.msra.mxu0 0.0
        %1708 = vmatprep.subr.mxu0 0.0
        %1709 = vmatpush1.msra.mxu0 0.0
        %1710 = vmatprep.subr.mxu0 0.0
        %1711 = vmatpush1.msra.mxu0 0.0
        %1712 = vmatprep.subr.mxu0 0.0
        %1713 = vmatpush1.msra.mxu0 0.0
        %1714 = vmatprep.subr.mxu0 0.0
        %1715 = vmatpush1.msra.mxu0 0.0
        %1716 = vmatprep.subr.mxu0 0.0
        %1717 = vmatpush1.msra.mxu0 0.0
        %1718 = vmatprep.subr.mxu0 0.0
        %1719 = vmatpush1.msra.mxu0 0.0
        %1720 = vmatprep.subr.mxu0 0.0
        %1721 = vmatpush1.msra.mxu0 0.0
        %1722 = vmatprep.subr.mxu0 0.0
        %1723 = vmatpush1.msra.mxu0 0.0
        %1724 = vmatprep.subr.mxu0 0.0
        %1725 = vmatpush1.msra.mxu0 0.0
        %1726 = vmatprep.subr.mxu0 0.0
        %1727 = vmatpush1.msra.mxu0 0.0
        %1728 = vmatprep.subr.mxu0 0.0
        %1729 = vmatpush1.msra.mxu0 0.0
        %1730 = vmatprep.subr.mxu0 0.0
        %1731 = vmatpush1.msra.mxu0 0.0
        %1732 = vmatprep.subr.mxu0 0.0
        %1733 = vmatpush1.msra.mxu0 0.0
        %1734 = vmatprep.subr.mxu0 0.0
        %1735 = vmatpush1.msra.mxu0 0.0
        %1736 = vmatprep.subr.mxu0 0.0
        %1737 = vmatpush1.msra.mxu0 0.0
        %1738 = vmatprep.subr.mxu0 0.0
        %1739 = vmatpush1.msra.mxu0 0.0
        %1740 = vmatprep.subr.mxu0 0.0
        %1741 = vmatpush1.msra.mxu0 0.0
        %1742 = vmatprep.subr.mxu0 0.0
        %1743 = vmatpush1.msra.mxu0 0.0
        %1744 = vmatprep.subr.mxu0 0.0
        %1745 = vmatpush1.msra.mxu0 0.0
        %1746 = vmatprep.subr.mxu0 0.0
        %1747 = vmatpush1.msra.mxu0 0.0
        %1748 = vmatprep.subr.mxu0 0.0
        %1749 = vmatpush1.msra.mxu0 0.0
        %1750 = vmatprep.subr.mxu0 0.0
        %1751 = vmatpush1.msra.mxu0 0.0
        %1752 = vmatprep.subr.mxu0 0.0
        %1753 = vmatpush1.msra.mxu0 0.0
        %1754 = vmatprep.subr.mxu0 0.0
        %1755 = vmatpush1.msra.mxu0 0.0
        %1756 = vmatprep.subr.mxu0 0.0
        %1757 = vmatpush1.msra.mxu0 0.0
        %1758 = vmatprep.mubr.f32.mxu0 0.0
        %1759 = vmatmul.mubr.f32.gmra.mrb[0].mxu0 %v1692
        %v1760 = vpop.f32.mrb[0].mxu0
        %v1761 = vadd.f32 0.0, %v1760
        %v1762 = vpop.f32.mrb[0].mxu0
        %1763 = vdwg.mxu0
        %1765 = vrot.lane.b32.xlu0 %v1609, 8
        %v1766 = vpop.permute.xlu0 %1765
        %1769 = vrot.lane.b32.xlu0 %v1685, 16
        %v1770 = vpop.permute.xlu0 %1769
        %1773 = vrot.lane.b32.xlu0 %v1761, 24
        %v1774 = vpop.permute.xlu0 %1773
        %v1776 = vsel %vm1109, %v1533, %v1766
        %v1777 = vsel %vm941, %v1776, %v1770
        %vm1778 = vcmask 195584
        %v1779 = vsel %vm1778, %v1777, %v1774
        %v1780 = vld [vmem:[%s11] sm:$0xff]
        %v1781 = vld [vmem:[%s11 + $0x8] sm:$0xff]
        %v1782 = vld [vmem:[%s11 + $0x10] sm:$0xff]
        %v1783 = vld [vmem:[%s11 + $0x18] sm:$0xff]
        %v1784 = vld [vmem:[%s13] sm:$0x1]
        %v1786 = vlaneseq
        %v1787 = vshrl.u32 %v1786, 7
        %v1788 = vsub.s32 0, %v1787
        %v1789 = vrot.slane %v1784, %v1788
        %v1792 = vsel %vm1026, %v1779, 0
        %1794 = vmatprep.subr.mxu0 0.0
        %1795 = vmatpush1.msra.mxu0 %v1780
        %1796 = vmatprep.subr.mxu0 0.0
        %1797 = vmatpush1.msra.mxu0 %v1781
        %1798 = vmatprep.subr.mxu0 0.0
        %1799 = vmatpush1.msra.mxu0 %v1782
        %1800 = vmatprep.subr.mxu0 0.0
        %1801 = vmatpush1.msra.mxu0 %v1783
        %1802 = vmatprep.subr.mxu0 0.0
        %1803 = vmatpush1.msra.mxu0 0.0
        %1804 = vmatprep.subr.mxu0 0.0
        %1805 = vmatpush1.msra.mxu0 0.0
        %1806 = vmatprep.subr.mxu0 0.0
        %1807 = vmatpush1.msra.mxu0 0.0
        %1808 = vmatprep.subr.mxu0 0.0
        %1809 = vmatpush1.msra.mxu0 0.0
        %1810 = vmatprep.subr.mxu0 0.0
        %1811 = vmatpush1.msra.mxu0 0.0
        %1812 = vmatprep.subr.mxu0 0.0
        %1813 = vmatpush1.msra.mxu0 0.0
        %1814 = vmatprep.subr.mxu0 0.0
        %1815 = vmatpush1.msra.mxu0 0.0
        %1816 = vmatprep.subr.mxu0 0.0
        %1817 = vmatpush1.msra.mxu0 0.0
        %1818 = vmatprep.subr.mxu0 0.0
        %1819 = vmatpush1.msra.mxu0 0.0
        %1820 = vmatprep.subr.mxu0 0.0
        %1821 = vmatpush1.msra.mxu0 0.0
        %1822 = vmatprep.subr.mxu0 0.0
        %1823 = vmatpush1.msra.mxu0 0.0
        %1824 = vmatprep.subr.mxu0 0.0
        %1825 = vmatpush1.msra.mxu0 0.0
        %1826 = vmatprep.subr.mxu0 0.0
        %1827 = vmatpush1.msra.mxu0 0.0
        %1828 = vmatprep.subr.mxu0 0.0
        %1829 = vmatpush1.msra.mxu0 0.0
        %1830 = vmatprep.subr.mxu0 0.0
        %1831 = vmatpush1.msra.mxu0 0.0
        %1832 = vmatprep.subr.mxu0 0.0
        %1833 = vmatpush1.msra.mxu0 0.0
        %1834 = vmatprep.subr.mxu0 0.0
        %1835 = vmatpush1.msra.mxu0 0.0
        %1836 = vmatprep.subr.mxu0 0.0
        %1837 = vmatpush1.msra.mxu0 0.0
        %1838 = vmatprep.subr.mxu0 0.0
        %1839 = vmatpush1.msra.mxu0 0.0
        %1840 = vmatprep.subr.mxu0 0.0
        %1841 = vmatpush1.msra.mxu0 0.0
        %1842 = vmatprep.subr.mxu0 0.0
        %1843 = vmatpush1.msra.mxu0 0.0
        %1844 = vmatprep.subr.mxu0 0.0
        %1845 = vmatpush1.msra.mxu0 0.0
        %1846 = vmatprep.subr.mxu0 0.0
        %1847 = vmatpush1.msra.mxu0 0.0
        %1848 = vmatprep.subr.mxu0 0.0
        %1849 = vmatpush1.msra.mxu0 0.0
        %1850 = vmatprep.subr.mxu0 0.0
        %1851 = vmatpush1.msra.mxu0 0.0
        %1852 = vmatprep.subr.mxu0 0.0
        %1853 = vmatpush1.msra.mxu0 0.0
        %1854 = vmatprep.subr.mxu0 0.0
        %1855 = vmatpush1.msra.mxu0 0.0
        %1856 = vmatprep.subr.mxu0 0.0
        %1857 = vmatpush1.msra.mxu0 0.0
        %1858 = vmatprep.mubr.f32.mxu0 0.0
        %1859 = vmatmul.mubr.f32.gmra.mrb[0].mxu0 %v1792
        %v1860 = vpop.f32.mrb[0].mxu0
        %v1861 = vadd.f32 %v1789, %v1860
        %v1862 = vpop.f32.mrb[0].mxu0
        %1863 = vdwg.mxu0
        %v1864 = vadd.f32 %v1012, %v1861
        %v1865 = vld [vmem:[%s15] sm:$0x1]
        %v1866 = vld [vmem:[%s17] sm:$0x1]
        %v1867 = vsel %vm1026, %v1864, 0.0
        %1868 = vadd.xlane.f32.xlu0 %v1867
        %v1869 = vpop.xlane.xlu0 %1868
        %v1870 = vrcp.pop 32.0
        %v1871 = vmul.f32 %v1869, %v1870
        %v1872 = vsub.f32 %v1864, %v1871
        %v1873 = vmul.f32 %v1872, %v1872
        %v1874 = vsel %vm1026, %v1873, 0.0
        %1875 = vadd.xlane.f32.xlu0 %v1874
        %v1876 = vpop.xlane.xlu0 %1875
        %v1877 = vmul.f32 %v1876, %v1870
        %v1878 = vadd.f32 %v1877, 1e-05
        %v1879 = vrsqrt.pop %v1878
        %v1880 = vmul.f32 %v1872, %v1879
        %v1882 = vlaneseq
        %v1883 = vshrl.u32 %v1882, 7
        %v1884 = vsub.s32 0, %v1883
        %v1885 = vrot.slane %v1865, %v1884
        %v1887 = vmul.f32 %v1880, %v1885
        %v1889 = vlaneseq
        %v1890 = vshrl.u32 %v1889, 7
        %v1891 = vsub.s32 0, %v1890
        %v1892 = vrot.slane %v1866, %v1891
        %v1894 = vadd.f32 %v1887, %v1892
        %v1895 = vld [vmem:[%s19] sm:$0xff]
        %v1896 = vld [vmem:[%s19 + $0x8] sm:$0xff]
        %v1897 = vld [vmem:[%s19 + $0x10] sm:$0xff]
        %v1898 = vld [vmem:[%s19 + $0x18] sm:$0xff]
        %v1899 = vld [vmem:[%s21] sm:$0x1]
        %v1901 = vlaneseq
        %v1902 = vshrl.u32 %v1901, 7
        %v1903 = vsub.s32 0, %v1902
        %v1904 = vrot.slane %v1899, %v1903
        %v1907 = vsel %vm1026, %v1894, 0
        %1909 = vmatprep.subr.mxu0 0.0
        %1910 = vmatpush1.msra.mxu0 %v1895
        %1911 = vmatprep.subr.mxu0 0.0
        %1912 = vmatpush1.msra.mxu0 %v1896
        %1913 = vmatprep.subr.mxu0 0.0
        %1914 = vmatpush1.msra.mxu0 %v1897
        %1915 = vmatprep.subr.mxu0 0.0
        %1916 = vmatpush1.msra.mxu0 %v1898
        %1917 = vmatprep.subr.mxu0 0.0
        %1918 = vmatpush1.msra.mxu0 0.0
        %1919 = vmatprep.subr.mxu0 0.0
        %1920 = vmatpush1.msra.mxu0 0.0
        %1921 = vmatprep.subr.mxu0 0.0
        %1922 = vmatpush1.msra.mxu0 0.0
        %1923 = vmatprep.subr.mxu0 0.0
        %1924 = vmatpush1.msra.mxu0 0.0
        %1925 = vmatprep.subr.mxu0 0.0
        %1926 = vmatpush1.msra.mxu0 0.0
        %1927 = vmatprep.subr.mxu0 0.0
        %1928 = vmatpush1.msra.mxu0 0.0
        %1929 = vmatprep.subr.mxu0 0.0
        %1930 = vmatpush1.msra.mxu0 0.0
        %1931 = vmatprep.subr.mxu0 0.0
        %1932 = vmatpush1.msra.mxu0 0.0
        %1933 = vmatprep.subr.mxu0 0.0
        %1934 = vmatpush1.msra.mxu0 0.0
        %1935 = vmatprep.subr.mxu0 0.0
        %1936 = vmatpush1.msra.mxu0 0.0
        %1937 = vmatprep.subr.mxu0 0.0
        %1938 = vmatpush1.msra.mxu0 0.0
        %1939 = vmatprep.subr.mxu0 0.0
        %1940 = vmatpush1.msra.mxu0 0.0
        %1941 = vmatprep.subr.mxu0 0.0
        %1942 = vmatpush1.msra.mxu0 0.0
        %1943 = vmatprep.subr.mxu0 0.0
        %1944 = vmatpush1.msra.mxu0 0.0
        %1945 = vmatprep.subr.mxu0 0.0
        %1946 = vmatpush1.msra.mxu0 0.0
        %1947 = vmatprep.subr.mxu0 0.0
        %1948 = vmatpush1.msra.mxu0 0.0
        %1949 = vmatprep.subr.mxu0 0.0
        %1950 = vmatpush1.msra.mxu0 0.0
        %1951 = vmatprep.subr.mxu0 0.0
        %1952 = vmatpush1.msra.mxu0 0.0
        %1953 = vmatprep.subr.mxu0 0.0
        %1954 = vmatpush1.msra.mxu0 0.0
        %1955 = vmatprep.subr.mxu0 0.0
        %1956 = vmatpush1.msra.mxu0 0.0
        %1957 = vmatprep.subr.mxu0 0.0
        %1958 = vmatpush1.msra.mxu0 0.0
        %1959 = vmatprep.subr.mxu0 0.0
        %1960 = vmatpush1.msra.mxu0 0.0
        %1961 = vmatprep.subr.mxu0 0.0
        %1962 = vmatpush1.msra.mxu0 0.0
        %1963 = vmatprep.subr.mxu0 0.0
        %1964 = vmatpush1.msra.mxu0 0.0
        %1965 = vmatprep.subr.mxu0 0.0
        %1966 = vmatpush1.msra.mxu0 0.0
        %1967 = vmatprep.subr.mxu0 0.0
        %1968 = vmatpush1.msra.mxu0 0.0
        %1969 = vmatprep.subr.mxu0 0.0
        %1970 = vmatpush1.msra.mxu0 0.0
        %1971 = vmatprep.subr.mxu0 0.0
        %1972 = vmatpush1.msra.mxu0 0.0
        %1973 = vmatprep.mubr.f32.mxu0 0.0
        %1974 = vmatmul.mubr.f32.gmra.mrb[0].mxu0 %v1907
        %v1975 = vpop.f32.mrb[0].mxu0
        %v1976 = vadd.f32 %v1904, %v1975
        %v1977 = vpop.f32.mrb[0].mxu0
        %1978 = vdwg.mxu0
        %v1979 = vmul.f32 %v1976, 0.5
        %v1980 = vmul.f32 %v1976, 0.044715
        %v1981 = vmul.f32 %v1980, %v1976
        %v1982 = vmul.f32 %v1981, %v1976
        %v1983 = vadd.f32 %v1976, %v1982
        %v1984 = vmul.f32 %v1983, 0.7978846
        %v1985 = vtanh.pop %v1984
        %v1986 = vadd.f32 %v1985, 1.0
        %v1987 = vmul.f32 %v1979, %v1986
        %v1988 = vld [vmem:[%s23] sm:$0xff]
        %v1989 = vld [vmem:[%s23 + $0x8] sm:$0xff]
        %v1990 = vld [vmem:[%s23 + $0x10] sm:$0xff]
        %v1991 = vld [vmem:[%s23 + $0x18] sm:$0xff]
        %v1992 = vld [vmem:[%s23 + $0x20] sm:$0xff]
        %v1993 = vld [vmem:[%s23 + $0x28] sm:$0xff]
        %v1994 = vld [vmem:[%s23 + $0x30] sm:$0xff]
        %v1995 = vld [vmem:[%s23 + $0x38] sm:$0xff]
        %v1996 = vld [vmem:[%s23 + $0x40] sm:$0xff]
        %v1997 = vld [vmem:[%s23 + $0x48] sm:$0xff]
        %v1998 = vld [vmem:[%s23 + $0x50] sm:$0xff]
        %v1999 = vld [vmem:[%s23 + $0x58] sm:$0xff]
        %v2000 = vld [vmem:[%s23 + $0x60] sm:$0xff]
        %v2001 = vld [vmem:[%s23 + $0x68] sm:$0xff]
        %v2002 = vld [vmem:[%s23 + $0x70] sm:$0xff]
        %v2003 = vld [vmem:[%s23 + $0x78] sm:$0xff]
        %v2004 = vld [vmem:[%s25] sm:$0x1]
        %v2006 = vlaneseq
        %v2007 = vshrl.u32 %v2006, 7
        %v2008 = vsub.s32 0, %v2007
        %v2009 = vrot.slane %v2004, %v2008
        %2011 = vmatprep.subr.mxu0 0.0
        %2012 = vmatpush1.msra.mxu0 %v1988
        %2013 = vmatprep.subr.mxu0 0.0
        %2014 = vmatpush1.msra.mxu0 %v1989
        %2015 = vmatprep.subr.mxu0 0.0
        %2016 = vmatpush1.msra.mxu0 %v1990
        %2017 = vmatprep.subr.mxu0 0.0
        %2018 = vmatpush1.msra.mxu0 %v1991
        %2019 = vmatprep.subr.mxu0 0.0
        %2020 = vmatpush1.msra.mxu0 %v1992
        %2021 = vmatprep.subr.mxu0 0.0
        %2022 = vmatpush1.msra.mxu0 %v1993
        %2023 = vmatprep.subr.mxu0 0.0
        %2024 = vmatpush1.msra.mxu0 %v1994
        %2025 = vmatprep.subr.mxu0 0.0
        %2026 = vmatpush1.msra.mxu0 %v1995
        %2027 = vmatprep.subr.mxu0 0.0
        %2028 = vmatpush1.msra.mxu0 %v1996
        %2029 = vmatprep.subr.mxu0 0.0
        %2030 = vmatpush1.msra.mxu0 %v1997
        %2031 = vmatprep.subr.mxu0 0.0
        %2032 = vmatpush1.msra.mxu0 %v1998
        %2033 = vmatprep.subr.mxu0 0.0
        %2034 = vmatpush1.msra.mxu0 %v1999
        %2035 = vmatprep.subr.mxu0 0.0
        %2036 = vmatpush1.msra.mxu0 %v2000
        %2037 = vmatprep.subr.mxu0 0.0
        %2038 = vmatpush1.msra.mxu0 %v2001
        %2039 = vmatprep.subr.mxu0 0.0
        %2040 = vmatpush1.msra.mxu0 %v2002
        %2041 = vmatprep.subr.mxu0 0.0
        %2042 = vmatpush1.msra.mxu0 %v2003
        %2043 = vmatprep.subr.mxu0 0.0
        %2044 = vmatpush1.msra.mxu0 0.0
        %2045 = vmatprep.subr.mxu0 0.0
        %2046 = vmatpush1.msra.mxu0 0.0
        %2047 = vmatprep.subr.mxu0 0.0
        %2048 = vmatpush1.msra.mxu0 0.0
        %2049 = vmatprep.subr.mxu0 0.0
        %2050 = vmatpush1.msra.mxu0 0.0
        %2051 = vmatprep.subr.mxu0 0.0
        %2052 = vmatpush1.msra.mxu0 0.0
        %2053 = vmatprep.subr.mxu0 0.0
        %2054 = vmatpush1.msra.mxu0 0.0
        %2055 = vmatprep.subr.mxu0 0.0
        %2056 = vmatpush1.msra.mxu0 0.0
        %2057 = vmatprep.subr.mxu0 0.0
        %2058 = vmatpush1.msra.mxu0 0.0
        %2059 = vmatprep.subr.mxu0 0.0
        %2060 = vmatpush1.msra.mxu0 0.0
        %2061 = vmatprep.subr.mxu0 0.0
        %2062 = vmatpush1.msra.mxu0 0.0
        %2063 = vmatprep.subr.mxu0 0.0
        %2064 = vmatpush1.msra.mxu0 0.0
        %2065 = vmatprep.subr.mxu0 0.0
        %2066 = vmatpush1.msra.mxu0 0.0
        %2067 = vmatprep.subr.mxu0 0.0
        %2068 = vmatpush1.msra.mxu0 0.0
        %2069 = vmatprep.subr.mxu0 0.0
        %2070 = vmatpush1.msra.mxu0 0.0
        %2071 = vmatprep.subr.mxu0 0.0
        %2072 = vmatpush1.msra.mxu0 0.0
        %2073 = vmatprep.subr.mxu0 0.0
        %2074 = vmatpush1.msra.mxu0 0.0
        %2075 = vmatprep.mubr.f32.mxu0 0.0
        %2076 = vmatmul.mubr.f32.gmra.mrb[0].mxu0 %v1987
        %v2077 = vpop.f32.mrb[0].mxu0
        %v2078 = vadd.f32 %v2009, %v2077
        %v2079 = vpop.f32.mrb[0].mxu0
        %2080 = vdwg.mxu0
        %v2081 = vadd.f32 %v1894, %v2078
        %v2082 = vld [vmem:[%s27] sm:$0x1]
        %v2083 = vld [vmem:[%s29] sm:$0x1]
        %v2084 = vsel %vm1026, %v2081, 0.0
        %2085 = vadd.xlane.f32.xlu0 %v2084
        %v2086 = vpop.xlane.xlu0 %2085
        %v2087 = vmul.f32 %v2086, %v1870
        %v2088 = vsub.f32 %v2081, %v2087
        %v2089 = vmul.f32 %v2088, %v2088
        %v2090 = vsel %vm1026, %v2089, 0.0
        %2091 = vadd.xlane.f32.xlu0 %v2090
        %v2092 = vpop.xlane.xlu0 %2091
        %v2093 = vmul.f32 %v2092, %v1870
        %v2094 = vadd.f32 %v2093, 1e-05
        %v2095 = vrsqrt.pop %v2094
        %v2096 = vmul.f32 %v2088, %v2095
        %v2098 = vlaneseq
        %v2099 = vshrl.u32 %v2098, 7
        %v2100 = vsub.s32 0, %v2099
        %v2101 = vrot.slane %v2082, %v2100
        %v2103 = vmul.f32 %v2096, %v2101
        %v2105 = vlaneseq
        %v2106 = vshrl.u32 %v2105, 7
        %v2107 = vsub.s32 0, %v2106
        %v2108 = vrot.slane %v2083, %v2107
        %v2110 = vadd.f32 %v2103, %v2108
        %s2111 = scalar_lea.vmem %s7, 32
        %v2112 = vld [vmem:[%s2111] sm:$0xff]
        %v2113 = vld [vmem:[%s2111 + $0x8] sm:$0xff]
        %v2114 = vld [vmem:[%s2111 + $0x10] sm:$0xff]
        %v2115 = vld [vmem:[%s2111 + $0x18] sm:$0xff]
        %s2116 = scalar_lea.vmem %s9, 1
        %v2117 = vld [vmem:[%s2116] sm:$0x1]
        %v2119 = vlaneseq
        %v2120 = vshrl.u32 %v2119, 7
        %v2121 = vsub.s32 0, %v2120
        %v2122 = vrot.slane %v2117, %v2121
        %v2125 = vsel %vm1026, %v2110, 0
        %2127 = vmatprep.subr.mxu0 0.0
        %2128 = vmatpush1.msra.mxu0 %v2112
        %2129 = vmatprep.subr.mxu0 0.0
        %2130 = vmatpush1.msra.mxu0 %v2113
        %2131 = vmatprep.subr.mxu0 0.0
        %2132 = vmatpush1.msra.mxu0 %v2114
        %2133 = vmatprep.subr.mxu0 0.0
        %2134 = vmatpush1.msra.mxu0 %v2115
        %2135 = vmatprep.subr.mxu0 0.0
        %2136 = vmatpush1.msra.mxu0 0.0
        %2137 = vmatprep.subr.mxu0 0.0
        %2138 = vmatpush1.msra.mxu0 0.0
        %2139 = vmatprep.subr.mxu0 0.0
        %2140 = vmatpush1.msra.mxu0 0.0
        %2141 = vmatprep.subr.mxu0 0.0
        %2142 = vmatpush1.msra.mxu0 0.0
        %2143 = vmatprep.subr.mxu0 0.0
        %2144 = vmatpush1.msra.mxu0 0.0
        %2145 = vmatprep.subr.mxu0 0.0
        %2146 = vmatpush1.msra.mxu0 0.0
        %2147 = vmatprep.subr.mxu0 0.0
        %2148 = vmatpush1.msra.mxu0 0.0
        %2149 = vmatprep.subr.mxu0 0.0
        %2150 = vmatpush1.msra.mxu0 0.0
        %2151 = vmatprep.subr.mxu0 0.0
        %2152 = vmatpush1.msra.mxu0 0.0
        %2153 = vmatprep.subr.mxu0 0.0
        %2154 = vmatpush1.msra.mxu0 0.0
        %2155 = vmatprep.subr.mxu0 0.0
        %2156 = vmatpush1.msra.mxu0 0.0
        %2157 = vmatprep.subr.mxu0 0.0
        %2158 = vmatpush1.msra.mxu0 0.0
        %2159 = vmatprep.subr.mxu0 0.0
        %2160 = vmatpush1.msra.mxu0 0.0
        %2161 = vmatprep.subr.mxu0 0.0
        %2162 = vmatpush1.msra.mxu0 0.0
        %2163 = vmatprep.subr.mxu0 0.0
        %2164 = vmatpush1.msra.mxu0 0.0
        %2165 = vmatprep.subr.mxu0 0.0
        %2166 = vmatpush1.msra.mxu0 0.0
        %2167 = vmatprep.subr.mxu0 0.0
        %2168 = vmatpush1.msra.mxu0 0.0
        %2169 = vmatprep.subr.mxu0 0.0
        %2170 = vmatpush1.msra.mxu0 0.0
        %2171 = vmatprep.subr.mxu0 0.0
        %2172 = vmatpush1.msra.mxu0 0.0
        %2173 = vmatprep.subr.mxu0 0.0
        %2174 = vmatpush1.msra.mxu0 0.0
        %2175 = vmatprep.subr.mxu0 0.0
        %2176 = vmatpush1.msra.mxu0 0.0
        %2177 = vmatprep.subr.mxu0 0.0
        %2178 = vmatpush1.msra.mxu0 0.0
        %2179 = vmatprep.subr.mxu0 0.0
        %2180 = vmatpush1.msra.mxu0 0.0
        %2181 = vmatprep.subr.mxu0 0.0
        %2182 = vmatpush1.msra.mxu0 0.0
        %2183 = vmatprep.subr.mxu0 0.0
        %2184 = vmatpush1.msra.mxu0 0.0
        %2185 = vmatprep.subr.mxu0 0.0
        %2186 = vmatpush1.msra.mxu0 0.0
        %2187 = vmatprep.subr.mxu0 0.0
        %2188 = vmatpush1.msra.mxu0 0.0
        %2189 = vmatprep.subr.mxu0 0.0
        %2190 = vmatpush1.msra.mxu0 0.0
        %2191 = vmatprep.mubr.f32.mxu0 0.0
        %2192 = vmatmul.mubr.f32.gmra.mrb[0].mxu0 %v2125
        %v2193 = vpop.f32.mrb[0].mxu0
        %v2194 = vadd.f32 %v2122, %v2193
        %v2195 = vpop.f32.mrb[0].mxu0
        %2196 = vdwg.mxu0
        %2198 = vrot.lane.b32.xlu0 %v2194, 120
        %v2199 = vpop.permute.xlu0 %2198
        %2200 = vrot.lane.b32.xlu0 %v2194, 112
        %v2201 = vpop.permute.xlu0 %2200
        %2202 = vrot.lane.b32.xlu0 %v2194, 104
        %v2203 = vpop.permute.xlu0 %2202
        %2204 = vrot.lane.b32.xlu0 %v2194, 96
        %v2205 = vpop.permute.xlu0 %2204
        %v2206 = vsel %vm1109, %v2194, 0
        %v2208 = vsel %vm1109, %v2205, 0
        %2210 = vmatprep.subr.mxu0 0.0
        %2211 = vmatpush1.xpose.msra.mxu0 %v2208
        %2212 = vmatprep.subr.mxu0 0.0
        %2213 = vmatpush1.xpose.msra.mxu0 0.0
        %2214 = vmatprep.subr.mxu0 0.0
        %2215 = vmatpush1.xpose.msra.mxu0 0.0
        %2216 = vmatprep.subr.mxu0 0.0
        %2217 = vmatpush1.xpose.msra.mxu0 0.0
        %2218 = vmatprep.subr.mxu0 0.0
        %2219 = vmatpush1.xpose.msra.mxu0 0.0
        %2220 = vmatprep.subr.mxu0 0.0
        %2221 = vmatpush1.xpose.msra.mxu0 0.0
        %2222 = vmatprep.subr.mxu0 0.0
        %2223 = vmatpush1.xpose.msra.mxu0 0.0
        %2224 = vmatprep.subr.mxu0 0.0
        %2225 = vmatpush1.xpose.msra.mxu0 0.0
        %2226 = vmatprep.subr.mxu0 0.0
        %2227 = vmatpush1.xpose.msra.mxu0 0.0
        %2228 = vmatprep.subr.mxu0 0.0
        %2229 = vmatpush1.xpose.msra.mxu0 0.0
        %2230 = vmatprep.subr.mxu0 0.0
        %2231 = vmatpush1.xpose.msra.mxu0 0.0
        %2232 = vmatprep.subr.mxu0 0.0
        %2233 = vmatpush1.xpose.msra.mxu0 0.0
        %2234 = vmatprep.subr.mxu0 0.0
        %2235 = vmatpush1.xpose.msra.mxu0 0.0
        %2236 = vmatprep.subr.mxu0 0.0
        %2237 = vmatpush1.xpose.msra.mxu0 0.0
        %2238 = vmatprep.subr.mxu0 0.0
        %2239 = vmatpush1.xpose.msra.mxu0 0.0
        %2240 = vmatprep.subr.mxu0 0.0
        %2241 = vmatpush1.xpose.msra.mxu0 0.0
        %2242 = vmatprep.subr.mxu0 0.0
        %2243 = vmatpush1.xpose.msra.mxu0 0.0
        %2244 = vmatprep.subr.mxu0 0.0
        %2245 = vmatpush1.xpose.msra.mxu0 0.0
        %2246 = vmatprep.subr.mxu0 0.0
        %2247 = vmatpush1.xpose.msra.mxu0 0.0
        %2248 = vmatprep.subr.mxu0 0.0
        %2249 = vmatpush1.xpose.msra.mxu0 0.0
        %2250 = vmatprep.subr.mxu0 0.0
        %2251 = vmatpush1.xpose.msra.mxu0 0.0
        %2252 = vmatprep.subr.mxu0 0.0
        %2253 = vmatpush1.xpose.msra.mxu0 0.0
        %2254 = vmatprep.subr.mxu0 0.0
        %2255 = vmatpush1.xpose.msra.mxu0 0.0
        %2256 = vmatprep.subr.mxu0 0.0
        %2257 = vmatpush1.xpose.msra.mxu0 0.0
        %2258 = vmatprep.subr.mxu0 0.0
        %2259 = vmatpush1.xpose.msra.mxu0 0.0
        %2260 = vmatprep.subr.mxu0 0.0
        %2261 = vmatpush1.xpose.msra.mxu0 0.0
        %2262 = vmatprep.subr.mxu0 0.0
        %2263 = vmatpush1.xpose.msra.mxu0 0.0
        %2264 = vmatprep.subr.mxu0 0.0
        %2265 = vmatpush1.xpose.msra.mxu0 0.0
        %2266 = vmatprep.subr.mxu0 0.0
        %2267 = vmatpush1.xpose.msra.mxu0 0.0
        %2268 = vmatprep.subr.mxu0 0.0
        %2269 = vmatpush1.xpose.msra.mxu0 0.0
        %2270 = vmatprep.subr.mxu0 0.0
        %2271 = vmatpush1.xpose.msra.mxu0 0.0
        %2272 = vmatprep.subr.mxu0 0.0
        %2273 = vmatpush1.xpose.msra.mxu0 0.0
        %2274 = vmatprep.mubr.f32.mxu0 0.0
        %2275 = vmatmul.mubr.f32.gmra.mrb[0].mxu0 %v2206
        %v2276 = vpop.f32.mrb[0].mxu0
        %v2277 = vadd.f32 0.0, %v2276
        %v2278 = vpop.f32.mrb[0].mxu0
        %2279 = vdwg.mxu0
        %2280 = vrot.lane.b32.xlu0 %v2199, 96
        %v2281 = vpop.permute.xlu0 %2280
        %v2282 = vsel %vm1109, %v2199, 0
        %v2284 = vsel %vm1109, %v2281, 0
        %2286 = vmatprep.subr.mxu0 0.0
        %2287 = vmatpush1.xpose.msra.mxu0 %v2284
        %2288 = vmatprep.subr.mxu0 0.0
        %2289 = vmatpush1.xpose.msra.mxu0 0.0
        %2290 = vmatprep.subr.mxu0 0.0
        %2291 = vmatpush1.xpose.msra.mxu0 0.0
        %2292 = vmatprep.subr.mxu0 0.0
        %2293 = vmatpush1.xpose.msra.mxu0 0.0
        %2294 = vmatprep.subr.mxu0 0.0
        %2295 = vmatpush1.xpose.msra.mxu0 0.0
        %2296 = vmatprep.subr.mxu0 0.0
        %2297 = vmatpush1.xpose.msra.mxu0 0.0
        %2298 = vmatprep.subr.mxu0 0.0
        %2299 = vmatpush1.xpose.msra.mxu0 0.0
        %2300 = vmatprep.subr.mxu0 0.0
        %2301 = vmatpush1.xpose.msra.mxu0 0.0
        %2302 = vmatprep.subr.mxu0 0.0
        %2303 = vmatpush1.xpose.msra.mxu0 0.0
        %2304 = vmatprep.subr.mxu0 0.0
        %2305 = vmatpush1.xpose.msra.mxu0 0.0
        %2306 = vmatprep.subr.mxu0 0.0
        %2307 = vmatpush1.xpose.msra.mxu0 0.0
        %2308 = vmatprep.subr.mxu0 0.0
        %2309 = vmatpush1.xpose.msra.mxu0 0.0
        %2310 = vmatprep.subr.mxu0 0.0
        %2311 = vmatpush1.xpose.msra.mxu0 0.0
        %2312 = vmatprep.subr.mxu0 0.0
        %2313 = vmatpush1.xpose.msra.mxu0 0.0
        %2314 = vmatprep.subr.mxu0 0.0
        %2315 = vmatpush1.xpose.msra.mxu0 0.0
        %2316 = vmatprep.subr.mxu0 0.0
        %2317 = vmatpush1.xpose.msra.mxu0 0.0
        %2318 = vmatprep.subr.mxu0 0.0
        %2319 = vmatpush1.xpose.msra.mxu0 0.0
        %2320 = vmatprep.subr.mxu0 0.0
        %2321 = vmatpush1.xpose.msra.mxu0 0.0
        %2322 = vmatprep.subr.mxu0 0.0
        %2323 = vmatpush1.xpose.msra.mxu0 0.0
        %2324 = vmatprep.subr.mxu0 0.0
        %2325 = vmatpush1.xpose.msra.mxu0 0.0
        %2326 = vmatprep.subr.mxu0 0.0
        %2327 = vmatpush1.xpose.msra.mxu0 0.0
        %2328 = vmatprep.subr.mxu0 0.0
        %2329 = vmatpush1.xpose.msra.mxu0 0.0
        %2330 = vmatprep.subr.mxu0 0.0
        %2331 = vmatpush1.xpose.msra.mxu0 0.0
        %2332 = vmatprep.subr.mxu0 0.0
        %2333 = vmatpush1.xpose.msra.mxu0 0.0
        %2334 = vmatprep.subr.mxu0 0.0
        %2335 = vmatpush1.xpose.msra.mxu0 0.0
        %2336 = vmatprep.subr.mxu0 0.0
        %2337 = vmatpush1.xpose.msra.mxu0 0.0
        %2338 = vmatprep.subr.mxu0 0.0
        %2339 = vmatpush1.xpose.msra.mxu0 0.0
        %2340 = vmatprep.subr.mxu0 0.0
        %2341 = vmatpush1.xpose.msra.mxu0 0.0
        %2342 = vmatprep.subr.mxu0 0.0
        %2343 = vmatpush1.xpose.msra.mxu0 0.0
        %2344 = vmatprep.subr.mxu0 0.0
        %2345 = vmatpush1.xpose.msra.mxu0 0.0
        %2346 = vmatprep.subr.mxu0 0.0
        %2347 = vmatpush1.xpose.msra.mxu0 0.0
        %2348 = vmatprep.subr.mxu0 0.0
        %2349 = vmatpush1.xpose.msra.mxu0 0.0
        %2350 = vmatprep.mubr.f32.mxu0 0.0
        %2351 = vmatmul.mubr.f32.gmra.mrb[0].mxu0 %v2282
        %v2352 = vpop.f32.mrb[0].mxu0
        %v2353 = vadd.f32 0.0, %v2352
        %v2354 = vpop.f32.mrb[0].mxu0
        %2355 = vdwg.mxu0
        %2356 = vrot.lane.b32.xlu0 %v2201, 96
        %v2357 = vpop.permute.xlu0 %2356
        %v2358 = vsel %vm1109, %v2201, 0
        %v2360 = vsel %vm1109, %v2357, 0
        %2362 = vmatprep.subr.mxu0 0.0
        %2363 = vmatpush1.xpose.msra.mxu0 %v2360
        %2364 = vmatprep.subr.mxu0 0.0
        %2365 = vmatpush1.xpose.msra.mxu0 0.0
        %2366 = vmatprep.subr.mxu0 0.0
        %2367 = vmatpush1.xpose.msra.mxu0 0.0
        %2368 = vmatprep.subr.mxu0 0.0
        %2369 = vmatpush1.xpose.msra.mxu0 0.0
        %2370 = vmatprep.subr.mxu0 0.0
        %2371 = vmatpush1.xpose.msra.mxu0 0.0
        %2372 = vmatprep.subr.mxu0 0.0
        %2373 = vmatpush1.xpose.msra.mxu0 0.0
        %2374 = vmatprep.subr.mxu0 0.0
        %2375 = vmatpush1.xpose.msra.mxu0 0.0
        %2376 = vmatprep.subr.mxu0 0.0
        %2377 = vmatpush1.xpose.msra.mxu0 0.0
        %2378 = vmatprep.subr.mxu0 0.0
        %2379 = vmatpush1.xpose.msra.mxu0 0.0
        %2380 = vmatprep.subr.mxu0 0.0
        %2381 = vmatpush1.xpose.msra.mxu0 0.0
        %2382 = vmatprep.subr.mxu0 0.0
        %2383 = vmatpush1.xpose.msra.mxu0 0.0
        %2384 = vmatprep.subr.mxu0 0.0
        %2385 = vmatpush1.xpose.msra.mxu0 0.0
        %2386 = vmatprep.subr.mxu0 0.0
        %2387 = vmatpush1.xpose.msra.mxu0 0.0
        %2388 = vmatprep.subr.mxu0 0.0
        %2389 = vmatpush1.xpose.msra.mxu0 0.0
        %2390 = vmatprep.subr.mxu0 0.0
        %2391 = vmatpush1.xpose.msra.mxu0 0.0
        %2392 = vmatprep.subr.mxu0 0.0
        %2393 = vmatpush1.xpose.msra.mxu0 0.0
        %2394 = vmatprep.subr.mxu0 0.0
        %2395 = vmatpush1.xpose.msra.mxu0 0.0
        %2396 = vmatprep.subr.mxu0 0.0
        %2397 = vmatpush1.xpose.msra.mxu0 0.0
        %2398 = vmatprep.subr.mxu0 0.0
        %2399 = vmatpush1.xpose.msra.mxu0 0.0
        %2400 = vmatprep.subr.mxu0 0.0
        %2401 = vmatpush1.xpose.msra.mxu0 0.0
        %2402 = vmatprep.subr.mxu0 0.0
        %2403 = vmatpush1.xpose.msra.mxu0 0.0
        %2404 = vmatprep.subr.mxu0 0.0
        %2405 = vmatpush1.xpose.msra.mxu0 0.0
        %2406 = vmatprep.subr.mxu0 0.0
        %2407 = vmatpush1.xpose.msra.mxu0 0.0
        %2408 = vmatprep.subr.mxu0 0.0
        %2409 = vmatpush1.xpose.msra.mxu0 0.0
        %2410 = vmatprep.subr.mxu0 0.0
        %2411 = vmatpush1.xpose.msra.mxu0 0.0
        %2412 = vmatprep.subr.mxu0 0.0
        %2413 = vmatpush1.xpose.msra.mxu0 0.0
        %2414 = vmatprep.subr.mxu0 0.0
        %2415 = vmatpush1.xpose.msra.mxu0 0.0
        %2416 = vmatprep.subr.mxu0 0.0
        %2417 = vmatpush1.xpose.msra.mxu0 0.0
        %2418 = vmatprep.subr.mxu0 0.0
        %2419 = vmatpush1.xpose.msra.mxu0 0.0
        %2420 = vmatprep.subr.mxu0 0.0
        %2421 = vmatpush1.xpose.msra.mxu0 0.0
        %2422 = vmatprep.subr.mxu0 0.0
        %2423 = vmatpush1.xpose.msra.mxu0 0.0
        %2424 = vmatprep.subr.mxu0 0.0
        %2425 = vmatpush1.xpose.msra.mxu0 0.0
        %2426 = vmatprep.mubr.f32.mxu0 0.0
        %2427 = vmatmul.mubr.f32.gmra.mrb[0].mxu0 %v2358
        %v2428 = vpop.f32.mrb[0].mxu0
        %v2429 = vadd.f32 0.0, %v2428
        %v2430 = vpop.f32.mrb[0].mxu0
        %2431 = vdwg.mxu0
        %2432 = vrot.lane.b32.xlu0 %v2203, 96
        %v2433 = vpop.permute.xlu0 %2432
        %v2434 = vsel %vm1109, %v2203, 0
        %v2436 = vsel %vm1109, %v2433, 0
        %2438 = vmatprep.subr.mxu0 0.0
        %2439 = vmatpush1.xpose.msra.mxu0 %v2436
        %2440 = vmatprep.subr.mxu0 0.0
        %2441 = vmatpush1.xpose.msra.mxu0 0.0
        %2442 = vmatprep.subr.mxu0 0.0
        %2443 = vmatpush1.xpose.msra.mxu0 0.0
        %2444 = vmatprep.subr.mxu0 0.0
        %2445 = vmatpush1.xpose.msra.mxu0 0.0
        %2446 = vmatprep.subr.mxu0 0.0
        %2447 = vmatpush1.xpose.msra.mxu0 0.0
        %2448 = vmatprep.subr.mxu0 0.0
        %2449 = vmatpush1.xpose.msra.mxu0 0.0
        %2450 = vmatprep.subr.mxu0 0.0
        %2451 = vmatpush1.xpose.msra.mxu0 0.0
        %2452 = vmatprep.subr.mxu0 0.0
        %2453 = vmatpush1.xpose.msra.mxu0 0.0
        %2454 = vmatprep.subr.mxu0 0.0
        %2455 = vmatpush1.xpose.msra.mxu0 0.0
        %2456 = vmatprep.subr.mxu0 0.0
        %2457 = vmatpush1.xpose.msra.mxu0 0.0
        %2458 = vmatprep.subr.mxu0 0.0
        %2459 = vmatpush1.xpose.msra.mxu0 0.0
        %2460 = vmatprep.subr.mxu0 0.0
        %2461 = vmatpush1.xpose.msra.mxu0 0.0
        %2462 = vmatprep.subr.mxu0 0.0
        %2463 = vmatpush1.xpose.msra.mxu0 0.0
        %2464 = vmatprep.subr.mxu0 0.0
        %2465 = vmatpush1.xpose.msra.mxu0 0.0
        %2466 = vmatprep.subr.mxu0 0.0
        %2467 = vmatpush1.xpose.msra.mxu0 0.0
        %2468 = vmatprep.subr.mxu0 0.0
        %2469 = vmatpush1.xpose.msra.mxu0 0.0
        %2470 = vmatprep.subr.mxu0 0.0
        %2471 = vmatpush1.xpose.msra.mxu0 0.0
        %2472 = vmatprep.subr.mxu0 0.0
        %2473 = vmatpush1.xpose.msra.mxu0 0.0
        %2474 = vmatprep.subr.mxu0 0.0
        %2475 = vmatpush1.xpose.msra.mxu0 0.0
        %2476 = vmatprep.subr.mxu0 0.0
        %2477 = vmatpush1.xpose.msra.mxu0 0.0
        %2478 = vmatprep.subr.mxu0 0.0
        %2479 = vmatpush1.xpose.msra.mxu0 0.0
        %2480 = vmatprep.subr.mxu0 0.0
        %2481 = vmatpush1.xpose.msra.mxu0 0.0
        %2482 = vmatprep.subr.mxu0 0.0
        %2483 = vmatpush1.xpose.msra.mxu0 0.0
        %2484 = vmatprep.subr.mxu0 0.0
        %2485 = vmatpush1.xpose.msra.mxu0 0.0
        %2486 = vmatprep.subr.mxu0 0.0
        %2487 = vmatpush1.xpose.msra.mxu0 0.0
        %2488 = vmatprep.subr.mxu0 0.0
        %2489 = vmatpush1.xpose.msra.mxu0 0.0
        %2490 = vmatprep.subr.mxu0 0.0
        %2491 = vmatpush1.xpose.msra.mxu0 0.0
        %2492 = vmatprep.subr.mxu0 0.0
        %2493 = vmatpush1.xpose.msra.mxu0 0.0
        %2494 = vmatprep.subr.mxu0 0.0
        %2495 = vmatpush1.xpose.msra.mxu0 0.0
        %2496 = vmatprep.subr.mxu0 0.0
        %2497 = vmatpush1.xpose.msra.mxu0 0.0
        %2498 = vmatprep.subr.mxu0 0.0
        %2499 = vmatpush1.xpose.msra.mxu0 0.0
        %2500 = vmatprep.subr.mxu0 0.0
        %2501 = vmatpush1.xpose.msra.mxu0 0.0
        %2502 = vmatprep.mubr.f32.mxu0 0.0
        %2503 = vmatmul.mubr.f32.gmra.mrb[0].mxu0 %v2434
        %v2504 = vpop.f32.mrb[0].mxu0
        %v2505 = vadd.f32 0.0, %v2504
        %v2506 = vpop.f32.mrb[0].mxu0
        %2507 = vdwg.mxu0
        %v2508 = vmul.f32 %v2277, 0.35355338
        %v2509 = vmul.f32 %v2353, 0.35355338
        %v2510 = vmul.f32 %v2429, 0.35355338
        %v2511 = vmul.f32 %v2505, 0.35355338
        %v2512 = vsel %vm1109, %v2508, -inf
        %2513 = vmax.xlane.f32.xlu0 %v2512
        %v2514 = vpop.xlane.xlu0 %2513
        %v2515 = vsel %vm1109, %v2509, -inf
        %2516 = vmax.xlane.f32.xlu0 %v2515
        %v2517 = vpop.xlane.xlu0 %2516
        %v2518 = vsel %vm1109, %v2510, -inf
        %2519 = vmax.xlane.f32.xlu0 %v2518
        %v2520 = vpop.xlane.xlu0 %2519
        %v2521 = vsel %vm1109, %v2511, -inf
        %2522 = vmax.xlane.f32.xlu0 %v2521
        %v2523 = vpop.xlane.xlu0 %2522
        %v2524 = vsub.f32 %v2508, %v2514
        %v2525 = vsub.f32 %v2509, %v2517
        %v2526 = vsub.f32 %v2510, %v2520
        %v2527 = vsub.f32 %v2511, %v2523
        %v2528 = vmul.f32 %v2524, 1.442695
        %v2529 = vpow.pop %v2528
        %v2530 = vmul.f32 %v2525, 1.442695
        %v2531 = vpow.pop %v2530
        %v2532 = vmul.f32 %v2526, 1.442695
        %v2533 = vpow.pop %v2532
        %v2534 = vmul.f32 %v2527, 1.442695
        %v2535 = vpow.pop %v2534
        %v2536 = vsel %vm1109, %v2529, 0.0
        %2537 = vadd.xlane.f32.xlu0 %v2536
        %v2538 = vpop.xlane.xlu0 %2537
        %v2539 = vsel %vm1109, %v2531, 0.0
        %2540 = vadd.xlane.f32.xlu0 %v2539
        %v2541 = vpop.xlane.xlu0 %2540
        %v2542 = vsel %vm1109, %v2533, 0.0
        %2543 = vadd.xlane.f32.xlu0 %v2542
        %v2544 = vpop.xlane.xlu0 %2543
        %v2545 = vsel %vm1109, %v2535, 0.0
        %2546 = vadd.xlane.f32.xlu0 %v2545
        %v2547 = vpop.xlane.xlu0 %2546
        %v2548 = vrcp.pop %v2538
        %v2549 = vmul.f32 %v2529, %v2548
        %v2550 = vrcp.pop %v2541
        %v2551 = vmul.f32 %v2531, %v2550
        %v2552 = vrcp.pop %v2544
        %v2553 = vmul.f32 %v2533, %v2552
        %v2554 = vrcp.pop %v2547
        %v2555 = vmul.f32 %v2535, %v2554
        %2556 = vrot.lane.b32.xlu0 %v2194, 64
        %v2557 = vpop.permute.xlu0 %2556
        %v2560 = vsel %vm1109, %v2549, 0
        %2562 = vmatprep.subr.mxu0 0.0
        %2563 = vmatpush1.msra.mxu0 %v2557
        %2564 = vmatprep.subr.mxu0 0.0
        %2565 = vmatpush1.msra.mxu0 0.0
        %2566 = vmatprep.subr.mxu0 0.0
        %2567 = vmatpush1.msra.mxu0 0.0
        %2568 = vmatprep.subr.mxu0 0.0
        %2569 = vmatpush1.msra.mxu0 0.0
        %2570 = vmatprep.subr.mxu0 0.0
        %2571 = vmatpush1.msra.mxu0 0.0
        %2572 = vmatprep.subr.mxu0 0.0
        %2573 = vmatpush1.msra.mxu0 0.0
        %2574 = vmatprep.subr.mxu0 0.0
        %2575 = vmatpush1.msra.mxu0 0.0
        %2576 = vmatprep.subr.mxu0 0.0
        %2577 = vmatpush1.msra.mxu0 0.0
        %2578 = vmatprep.subr.mxu0 0.0
        %2579 = vmatpush1.msra.mxu0 0.0
        %2580 = vmatprep.subr.mxu0 0.0
        %2581 = vmatpush1.msra.mxu0 0.0
        %2582 = vmatprep.subr.mxu0 0.0
        %2583 = vmatpush1.msra.mxu0 0.0
        %2584 = vmatprep.subr.mxu0 0.0
        %2585 = vmatpush1.msra.mxu0 0.0
        %2586 = vmatprep.subr.mxu0 0.0
        %2587 = vmatpush1.msra.mxu0 0.0
        %2588 = vmatprep.subr.mxu0 0.0
        %2589 = vmatpush1.msra.mxu0 0.0
        %2590 = vmatprep.subr.mxu0 0.0
        %2591 = vmatpush1.msra.mxu0 0.0
        %2592 = vmatprep.subr.mxu0 0.0
        %2593 = vmatpush1.msra.mxu0 0.0
        %2594 = vmatprep.subr.mxu0 0.0
        %2595 = vmatpush1.msra.mxu0 0.0
        %2596 = vmatprep.subr.mxu0 0.0
        %2597 = vmatpush1.msra.mxu0 0.0
        %2598 = vmatprep.subr.mxu0 0.0
        %2599 = vmatpush1.msra.mxu0 0.0
        %2600 = vmatprep.subr.mxu0 0.0
        %2601 = vmatpush1.msra.mxu0 0.0
        %2602 = vmatprep.subr.mxu0 0.0
        %2603 = vmatpush1.msra.mxu0 0.0
        %2604 = vmatprep.subr.mxu0 0.0
        %2605 = vmatpush1.msra.mxu0 0.0
        %2606 = vmatprep.subr.mxu0 0.0
        %2607 = vmatpush1.msra.mxu0 0.0
        %2608 = vmatprep.subr.mxu0 0.0
        %2609 = vmatpush1.msra.mxu0 0.0
        %2610 = vmatprep.subr.mxu0 0.0
        %2611 = vmatpush1.msra.mxu0 0.0
        %2612 = vmatprep.subr.mxu0 0.0
        %2613 = vmatpush1.msra.mxu0 0.0
        %2614 = vmatprep.subr.mxu0 0.0
        %2615 = vmatpush1.msra.mxu0 0.0
        %2616 = vmatprep.subr.mxu0 0.0
        %2617 = vmatpush1.msra.mxu0 0.0
        %2618 = vmatprep.subr.mxu0 0.0
        %2619 = vmatpush1.msra.mxu0 0.0
        %2620 = vmatprep.subr.mxu0 0.0
        %2621 = vmatpush1.msra.mxu0 0.0
        %2622 = vmatprep.subr.mxu0 0.0
        %2623 = vmatpush1.msra.mxu0 0.0
        %2624 = vmatprep.subr.mxu0 0.0
        %2625 = vmatpush1.msra.mxu0 0.0
        %2626 = vmatprep.mubr.f32.mxu0 0.0
        %2627 = vmatmul.mubr.f32.gmra.mrb[0].mxu0 %v2560
        %v2628 = vpop.f32.mrb[0].mxu0
        %v2629 = vadd.f32 0.0, %v2628
        %v2630 = vpop.f32.mrb[0].mxu0
        %2631 = vdwg.mxu0
        %2632 = vrot.lane.b32.xlu0 %v2199, 64
        %v2633 = vpop.permute.xlu0 %2632
        %v2636 = vsel %vm1109, %v2551, 0
        %2638 = vmatprep.subr.mxu0 0.0
        %2639 = vmatpush1.msra.mxu0 %v2633
        %2640 = vmatprep.subr.mxu0 0.0
        %2641 = vmatpush1.msra.mxu0 0.0
        %2642 = vmatprep.subr.mxu0 0.0
        %2643 = vmatpush1.msra.mxu0 0.0
        %2644 = vmatprep.subr.mxu0 0.0
        %2645 = vmatpush1.msra.mxu0 0.0
        %2646 = vmatprep.subr.mxu0 0.0
        %2647 = vmatpush1.msra.mxu0 0.0
        %2648 = vmatprep.subr.mxu0 0.0
        %2649 = vmatpush1.msra.mxu0 0.0
        %2650 = vmatprep.subr.mxu0 0.0
        %2651 = vmatpush1.msra.mxu0 0.0
        %2652 = vmatprep.subr.mxu0 0.0
        %2653 = vmatpush1.msra.mxu0 0.0
        %2654 = vmatprep.subr.mxu0 0.0
        %2655 = vmatpush1.msra.mxu0 0.0
        %2656 = vmatprep.subr.mxu0 0.0
        %2657 = vmatpush1.msra.mxu0 0.0
        %2658 = vmatprep.subr.mxu0 0.0
        %2659 = vmatpush1.msra.mxu0 0.0
        %2660 = vmatprep.subr.mxu0 0.0
        %2661 = vmatpush1.msra.mxu0 0.0
        %2662 = vmatprep.subr.mxu0 0.0
        %2663 = vmatpush1.msra.mxu0 0.0
        %2664 = vmatprep.subr.mxu0 0.0
        %2665 = vmatpush1.msra.mxu0 0.0
        %2666 = vmatprep.subr.mxu0 0.0
        %2667 = vmatpush1.msra.mxu0 0.0
        %2668 = vmatprep.subr.mxu0 0.0
        %2669 = vmatpush1.msra.mxu0 0.0
        %2670 = vmatprep.subr.mxu0 0.0
        %2671 = vmatpush1.msra.mxu0 0.0
        %2672 = vmatprep.subr.mxu0 0.0
        %2673 = vmatpush1.msra.mxu0 0.0
        %2674 = vmatprep.subr.mxu0 0.0
        %2675 = vmatpush1.msra.mxu0 0.0
        %2676 = vmatprep.subr.mxu0 0.0
        %2677 = vmatpush1.msra.mxu0 0.0
        %2678 = vmatprep.subr.mxu0 0.0
        %2679 = vmatpush1.msra.mxu0 0.0
        %2680 = vmatprep.subr.mxu0 0.0
        %2681 = vmatpush1.msra.mxu0 0.0
        %2682 = vmatprep.subr.mxu0 0.0
        %2683 = vmatpush1.msra.mxu0 0.0
        %2684 = vmatprep.subr.mxu0 0.0
        %2685 = vmatpush1.msra.mxu0 0.0
        %2686 = vmatprep.subr.mxu0 0.0
        %2687 = vmatpush1.msra.mxu0 0.0
        %2688 = vmatprep.subr.mxu0 0.0
        %2689 = vmatpush1.msra.mxu0 0.0
        %2690 = vmatprep.subr.mxu0 0.0
        %2691 = vmatpush1.msra.mxu0 0.0
        %2692 = vmatprep.subr.mxu0 0.0
        %2693 = vmatpush1.msra.mxu0 0.0
        %2694 = vmatprep.subr.mxu0 0.0
        %2695 = vmatpush1.msra.mxu0 0.0
        %2696 = vmatprep.subr.mxu0 0.0
        %2697 = vmatpush1.msra.mxu0 0.0
        %2698 = vmatprep.subr.mxu0 0.0
        %2699 = vmatpush1.msra.mxu0 0.0
        %2700 = vmatprep.subr.mxu0 0.0
        %2701 = vmatpush1.msra.mxu0 0.0
        %2702 = vmatprep.mubr.f32.mxu0 0.0
        %2703 = vmatmul.mubr.f32.gmra.mrb[0].mxu0 %v2636
        %v2704 = vpop.f32.mrb[0].mxu0
        %v2705 = vadd.f32 0.0, %v2704
        %v2706 = vpop.f32.mrb[0].mxu0
        %2707 = vdwg.mxu0
        %2708 = vrot.lane.b32.xlu0 %v2201, 64
        %v2709 = vpop.permute.xlu0 %2708
        %v2712 = vsel %vm1109, %v2553, 0
        %2714 = vmatprep.subr.mxu0 0.0
        %2715 = vmatpush1.msra.mxu0 %v2709
        %2716 = vmatprep.subr.mxu0 0.0
        %2717 = vmatpush1.msra.mxu0 0.0
        %2718 = vmatprep.subr.mxu0 0.0
        %2719 = vmatpush1.msra.mxu0 0.0
        %2720 = vmatprep.subr.mxu0 0.0
        %2721 = vmatpush1.msra.mxu0 0.0
        %2722 = vmatprep.subr.mxu0 0.0
        %2723 = vmatpush1.msra.mxu0 0.0
        %2724 = vmatprep.subr.mxu0 0.0
        %2725 = vmatpush1.msra.mxu0 0.0
        %2726 = vmatprep.subr.mxu0 0.0
        %2727 = vmatpush1.msra.mxu0 0.0
        %2728 = vmatprep.subr.mxu0 0.0
        %2729 = vmatpush1.msra.mxu0 0.0
        %2730 = vmatprep.subr.mxu0 0.0
        %2731 = vmatpush1.msra.mxu0 0.0
        %2732 = vmatprep.subr.mxu0 0.0
        %2733 = vmatpush1.msra.mxu0 0.0
        %2734 = vmatprep.subr.mxu0 0.0
        %2735 = vmatpush1.msra.mxu0 0.0
        %2736 = vmatprep.subr.mxu0 0.0
        %2737 = vmatpush1.msra.mxu0 0.0
        %2738 = vmatprep.subr.mxu0 0.0
        %2739 = vmatpush1.msra.mxu0 0.0
        %2740 = vmatprep.subr.mxu0 0.0
        %2741 = vmatpush1.msra.mxu0 0.0
        %2742 = vmatprep.subr.mxu0 0.0
        %2743 = vmatpush1.msra.mxu0 0.0
        %2744 = vmatprep.subr.mxu0 0.0
        %2745 = vmatpush1.msra.mxu0 0.0
        %2746 = vmatprep.subr.mxu0 0.0
        %2747 = vmatpush1.msra.mxu0 0.0
        %2748 = vmatprep.subr.mxu0 0.0
        %2749 = vmatpush1.msra.mxu0 0.0
        %2750 = vmatprep.subr.mxu0 0.0
        %2751 = vmatpush1.msra.mxu0 0.0
        %2752 = vmatprep.subr.mxu0 0.0
        %2753 = vmatpush1.msra.mxu0 0.0
        %2754 = vmatprep.subr.mxu0 0.0
        %2755 = vmatpush1.msra.mxu0 0.0
        %2756 = vmatprep.subr.mxu0 0.0
        %2757 = vmatpush1.msra.mxu0 0.0
        %2758 = vmatprep.subr.mxu0 0.0
        %2759 = vmatpush1.msra.mxu0 0.0
        %2760 = vmatprep.subr.mxu0 0.0
        %2761 = vmatpush1.msra.mxu0 0.0
        %2762 = vmatprep.subr.mxu0 0.0
        %2763 = vmatpush1.msra.mxu0 0.0
        %2764 = vmatprep.subr.mxu0 0.0
        %2765 = vmatpush1.msra.mxu0 0.0
        %2766 = vmatprep.subr.mxu0 0.0
        %2767 = vmatpush1.msra.mxu0 0.0
        %2768 = vmatprep.subr.mxu0 0.0
        %2769 = vmatpush1.msra.mxu0 0.0
        %2770 = vmatprep.subr.mxu0 0.0
        %2771 = vmatpush1.msra.mxu0 0.0
        %2772 = vmatprep.subr.mxu0 0.0
        %2773 = vmatpush1.msra.mxu0 0.0
        %2774 = vmatprep.subr.mxu0 0.0
        %2775 = vmatpush1.msra.mxu0 0.0
        %2776 = vmatprep.subr.mxu0 0.0
        %2777 = vmatpush1.msra.mxu0 0.0
        %2778 = vmatprep.mubr.f32.mxu0 0.0
        %2779 = vmatmul.mubr.f32.gmra.mrb[0].mxu0 %v2712
        %v2780 = vpop.f32.mrb[0].mxu0
        %v2781 = vadd.f32 0.0, %v2780
        %v2782 = vpop.f32.mrb[0].mxu0
        %2783 = vdwg.mxu0
        %2784 = vrot.lane.b32.xlu0 %v2203, 64
        %v2785 = vpop.permute.xlu0 %2784
        %v2788 = vsel %vm1109, %v2555, 0
        %2790 = vmatprep.subr.mxu0 0.0
        %2791 = vmatpush1.msra.mxu0 %v2785
        %2792 = vmatprep.subr.mxu0 0.0
        %2793 = vmatpush1.msra.mxu0 0.0
        %2794 = vmatprep.subr.mxu0 0.0
        %2795 = vmatpush1.msra.mxu0 0.0
        %2796 = vmatprep.subr.mxu0 0.0
        %2797 = vmatpush1.msra.mxu0 0.0
        %2798 = vmatprep.subr.mxu0 0.0
        %2799 = vmatpush1.msra.mxu0 0.0
        %2800 = vmatprep.subr.mxu0 0.0
        %2801 = vmatpush1.msra.mxu0 0.0
        %2802 = vmatprep.subr.mxu0 0.0
        %2803 = vmatpush1.msra.mxu0 0.0
        %2804 = vmatprep.subr.mxu0 0.0
        %2805 = vmatpush1.msra.mxu0 0.0
        %2806 = vmatprep.subr.mxu0 0.0
        %2807 = vmatpush1.msra.mxu0 0.0
        %2808 = vmatprep.subr.mxu0 0.0
        %2809 = vmatpush1.msra.mxu0 0.0
        %2810 = vmatprep.subr.mxu0 0.0
        %2811 = vmatpush1.msra.mxu0 0.0
        %2812 = vmatprep.subr.mxu0 0.0
        %2813 = vmatpush1.msra.mxu0 0.0
        %2814 = vmatprep.subr.mxu0 0.0
        %2815 = vmatpush1.msra.mxu0 0.0
        %2816 = vmatprep.subr.mxu0 0.0
        %2817 = vmatpush1.msra.mxu0 0.0
        %2818 = vmatprep.subr.mxu0 0.0
        %2819 = vmatpush1.msra.mxu0 0.0
        %2820 = vmatprep.subr.mxu0 0.0
        %2821 = vmatpush1.msra.mxu0 0.0
        %2822 = vmatprep.subr.mxu0 0.0
        %2823 = vmatpush1.msra.mxu0 0.0
        %2824 = vmatprep.subr.mxu0 0.0
        %2825 = vmatpush1.msra.mxu0 0.0
        %2826 = vmatprep.subr.mxu0 0.0
        %2827 = vmatpush1.msra.mxu0 0.0
        %2828 = vmatprep.subr.mxu0 0.0
        %2829 = vmatpush1.msra.mxu0 0.0
        %2830 = vmatprep.subr.mxu0 0.0
        %2831 = vmatpush1.msra.mxu0 0.0
        %2832 = vmatprep.subr.mxu0 0.0
        %2833 = vmatpush1.msra.mxu0 0.0
        %2834 = vmatprep.subr.mxu0 0.0
        %2835 = vmatpush1.msra.mxu0 0.0
        %2836 = vmatprep.subr.mxu0 0.0
        %2837 = vmatpush1.msra.mxu0 0.0
        %2838 = vmatprep.subr.mxu0 0.0
        %2839 = vmatpush1.msra.mxu0 0.0
        %2840 = vmatprep.subr.mxu0 0.0
        %2841 = vmatpush1.msra.mxu0 0.0
        %2842 = vmatprep.subr.mxu0 0.0
        %2843 = vmatpush1.msra.mxu0 0.0
        %2844 = vmatprep.subr.mxu0 0.0
        %2845 = vmatpush1.msra.mxu0 0.0
        %2846 = vmatprep.subr.mxu0 0.0
        %2847 = vmatpush1.msra.mxu0 0.0
        %2848 = vmatprep.subr.mxu0 0.0
        %2849 = vmatpush1.msra.mxu0 0.0
        %2850 = vmatprep.subr.mxu0 0.0
        %2851 = vmatpush1.msra.mxu0 0.0
        %2852 = vmatprep.subr.mxu0 0.0
        %2853 = vmatpush1.msra.mxu0 0.0
        %2854 = vmatprep.mubr.f32.mxu0 0.0
        %2855 = vmatmul.mubr.f32.gmra.mrb[0].mxu0 %v2788
        %v2856 = vpop.f32.mrb[0].mxu0
        %v2857 = vadd.f32 0.0, %v2856
        %v2858 = vpop.f32.mrb[0].mxu0
        %2859 = vdwg.mxu0
        %2861 = vrot.lane.b32.xlu0 %v2705, 8
        %v2862 = vpop.permute.xlu0 %2861
        %2865 = vrot.lane.b32.xlu0 %v2781, 16
        %v2866 = vpop.permute.xlu0 %2865
        %2869 = vrot.lane.b32.xlu0 %v2857, 24
        %v2870 = vpop.permute.xlu0 %2869
        %v2872 = vsel %vm1109, %v2629, %v2862
        %v2873 = vsel %vm941, %v2872, %v2866
        %v2874 = vsel %vm1778, %v2873, %v2870
        %s2875 = scalar_lea.vmem %s11, 32
        %v2876 = vld [vmem:[%s2875] sm:$0xff]
        %v2877 = vld [vmem:[%s2875 + $0x8] sm:$0xff]
        %v2878 = vld [vmem:[%s2875 + $0x10] sm:$0xff]
        %v2879 = vld [vmem:[%s2875 + $0x18] sm:$0xff]
        %s2880 = scalar_lea.vmem %s13, 1
        %v2881 = vld [vmem:[%s2880] sm:$0x1]
        %v2883 = vlaneseq
        %v2884 = vshrl.u32 %v2883, 7
        %v2885 = vsub.s32 0, %v2884
        %v2886 = vrot.slane %v2881, %v2885
        %v2889 = vsel %vm1026, %v2874, 0
        %2891 = vmatprep.subr.mxu0 0.0
        %2892 = vmatpush1.msra.mxu0 %v2876
        %2893 = vmatprep.subr.mxu0 0.0
        %2894 = vmatpush1.msra.mxu0 %v2877
        %2895 = vmatprep.subr.mxu0 0.0
        %2896 = vmatpush1.msra.mxu0 %v2878
        %2897 = vmatprep.subr.mxu0 0.0
        %2898 = vmatpush1.msra.mxu0 %v2879
        %2899 = vmatprep.subr.mxu0 0.0
        %2900 = vmatpush1.msra.mxu0 0.0
        %2901 = vmatprep.subr.mxu0 0.0
        %2902 = vmatpush1.msra.mxu0 0.0
        %2903 = vmatprep.subr.mxu0 0.0
        %2904 = vmatpush1.msra.mxu0 0.0
        %2905 = vmatprep.subr.mxu0 0.0
        %2906 = vmatpush1.msra.mxu0 0.0
        %2907 = vmatprep.subr.mxu0 0.0
        %2908 = vmatpush1.msra.mxu0 0.0
        %2909 = vmatprep.subr.mxu0 0.0
        %2910 = vmatpush1.msra.mxu0 0.0
        %2911 = vmatprep.subr.mxu0 0.0
        %2912 = vmatpush1.msra.mxu0 0.0
        %2913 = vmatprep.subr.mxu0 0.0
        %2914 = vmatpush1.msra.mxu0 0.0
        %2915 = vmatprep.subr.mxu0 0.0
        %2916 = vmatpush1.msra.mxu0 0.0
        %2917 = vmatprep.subr.mxu0 0.0
        %2918 = vmatpush1.msra.mxu0 0.0
        %2919 = vmatprep.subr.mxu0 0.0
        %2920 = vmatpush1.msra.mxu0 0.0
        %2921 = vmatprep.subr.mxu0 0.0
        %2922 = vmatpush1.msra.mxu0 0.0
        %2923 = vmatprep.subr.mxu0 0.0
        %2924 = vmatpush1.msra.mxu0 0.0
        %2925 = vmatprep.subr.mxu0 0.0
        %2926 = vmatpush1.msra.mxu0 0.0
        %2927 = vmatprep.subr.mxu0 0.0
        %2928 = vmatpush1.msra.mxu0 0.0
        %2929 = vmatprep.subr.mxu0 0.0
        %2930 = vmatpush1.msra.mxu0 0.0
        %2931 = vmatprep.subr.mxu0 0.0
        %2932 = vmatpush1.msra.mxu0 0.0
        %2933 = vmatprep.subr.mxu0 0.0
        %2934 = vmatpush1.msra.mxu0 0.0
        %2935 = vmatprep.subr.mxu0 0.0
        %2936 = vmatpush1.msra.mxu0 0.0
        %2937 = vmatprep.subr.mxu0 0.0
        %2938 = vmatpush1.msra.mxu0 0.0
        %2939 = vmatprep.subr.mxu0 0.0
        %2940 = vmatpush1.msra.mxu0 0.0
        %2941 = vmatprep.subr.mxu0 0.0
        %2942 = vmatpush1.msra.mxu0 0.0
        %2943 = vmatprep.subr.mxu0 0.0
        %2944 = vmatpush1.msra.mxu0 0.0
        %2945 = vmatprep.subr.mxu0 0.0
        %2946 = vmatpush1.msra.mxu0 0.0
        %2947 = vmatprep.subr.mxu0 0.0
        %2948 = vmatpush1.msra.mxu0 0.0
        %2949 = vmatprep.subr.mxu0 0.0
        %2950 = vmatpush1.msra.mxu0 0.0
        %2951 = vmatprep.subr.mxu0 0.0
        %2952 = vmatpush1.msra.mxu0 0.0
        %2953 = vmatprep.subr.mxu0 0.0
        %2954 = vmatpush1.msra.mxu0 0.0
        %2955 = vmatprep.mubr.f32.mxu0 0.0
        %2956 = vmatmul.mubr.f32.gmra.mrb[0].mxu0 %v2889
        %v2957 = vpop.f32.mrb[0].mxu0
        %v2958 = vadd.f32 %v2886, %v2957
        %v2959 = vpop.f32.mrb[0].mxu0
        %2960 = vdwg.mxu0
        %v2961 = vadd.f32 %v2110, %v2958
        %s2962 = scalar_lea.vmem %s15, 1
        %v2963 = vld [vmem:[%s2962] sm:$0x1]
        %s2964 = scalar_lea.vmem %s17, 1
        %v2965 = vld [vmem:[%s2964] sm:$0x1]
        %v2966 = vsel %vm1026, %v2961, 0.0
        %2967 = vadd.xlane.f32.xlu0 %v2966
        %v2968 = vpop.xlane.xlu0 %2967
        %v2969 = vmul.f32 %v2968, %v1870
        %v2970 = vsub.f32 %v2961, %v2969
        %v2971 = vmul.f32 %v2970, %v2970
        %v2972 = vsel %vm1026, %v2971, 0.0
        %2973 = vadd.xlane.f32.xlu0 %v2972
        %v2974 = vpop.xlane.xlu0 %2973
        %v2975 = vmul.f32 %v2974, %v1870
        %v2976 = vadd.f32 %v2975, 1e-05
        %v2977 = vrsqrt.pop %v2976
        %v2978 = vmul.f32 %v2970, %v2977
        %v2980 = vlaneseq
        %v2981 = vshrl.u32 %v2980, 7
        %v2982 = vsub.s32 0, %v2981
        %v2983 = vrot.slane %v2963, %v2982
        %v2985 = vmul.f32 %v2978, %v2983
        %v2987 = vlaneseq
        %v2988 = vshrl.u32 %v2987, 7
        %v2989 = vsub.s32 0, %v2988
        %v2990 = vrot.slane %v2965, %v2989
        %v2992 = vadd.f32 %v2985, %v2990
        %s2993 = scalar_lea.vmem %s19, 32
        %v2994 = vld [vmem:[%s2993] sm:$0xff]
        %v2995 = vld [vmem:[%s2993 + $0x8] sm:$0xff]
        %v2996 = vld [vmem:[%s2993 + $0x10] sm:$0xff]
        %v2997 = vld [vmem:[%s2993 + $0x18] sm:$0xff]
        %s2998 = scalar_lea.vmem %s21, 1
        %v2999 = vld [vmem:[%s2998] sm:$0x1]
        %v3001 = vlaneseq
        %v3002 = vshrl.u32 %v3001, 7
        %v3003 = vsub.s32 0, %v3002
        %v3004 = vrot.slane %v2999, %v3003
        %v3007 = vsel %vm1026, %v2992, 0
        %3009 = vmatprep.subr.mxu0 0.0
        %3010 = vmatpush1.msra.mxu0 %v2994
        %3011 = vmatprep.subr.mxu0 0.0
        %3012 = vmatpush1.msra.mxu0 %v2995
        %3013 = vmatprep.subr.mxu0 0.0
        %3014 = vmatpush1.msra.mxu0 %v2996
        %3015 = vmatprep.subr.mxu0 0.0
        %3016 = vmatpush1.msra.mxu0 %v2997
        %3017 = vmatprep.subr.mxu0 0.0
        %3018 = vmatpush1.msra.mxu0 0.0
        %3019 = vmatprep.subr.mxu0 0.0
        %3020 = vmatpush1.msra.mxu0 0.0
        %3021 = vmatprep.subr.mxu0 0.0
        %3022 = vmatpush1.msra.mxu0 0.0
        %3023 = vmatprep.subr.mxu0 0.0
        %3024 = vmatpush1.msra.mxu0 0.0
        %3025 = vmatprep.subr.mxu0 0.0
        %3026 = vmatpush1.msra.mxu0 0.0
        %3027 = vmatprep.subr.mxu0 0.0
        %3028 = vmatpush1.msra.mxu0 0.0
        %3029 = vmatprep.subr.mxu0 0.0
        %3030 = vmatpush1.msra.mxu0 0.0
        %3031 = vmatprep.subr.mxu0 0.0
        %3032 = vmatpush1.msra.mxu0 0.0
        %3033 = vmatprep.subr.mxu0 0.0
        %3034 = vmatpush1.msra.mxu0 0.0
        %3035 = vmatprep.subr.mxu0 0.0
        %3036 = vmatpush1.msra.mxu0 0.0
        %3037 = vmatprep.subr.mxu0 0.0
        %3038 = vmatpush1.msra.mxu0 0.0
        %3039 = vmatprep.subr.mxu0 0.0
        %3040 = vmatpush1.msra.mxu0 0.0
        %3041 = vmatprep.subr.mxu0 0.0
        %3042 = vmatpush1.msra.mxu0 0.0
        %3043 = vmatprep.subr.mxu0 0.0
        %3044 = vmatpush1.msra.mxu0 0.0
        %3045 = vmatprep.subr.mxu0 0.0
        %3046 = vmatpush1.msra.mxu0 0.0
        %3047 = vmatprep.subr.mxu0 0.0
        %3048 = vmatpush1.msra.mxu0 0.0
        %3049 = vmatprep.subr.mxu0 0.0
        %3050 = vmatpush1.msra.mxu0 0.0
        %3051 = vmatprep.subr.mxu0 0.0
        %3052 = vmatpush1.msra.mxu0 0.0
        %3053 = vmatprep.subr.mxu0 0.0
        %3054 = vmatpush1.msra.mxu0 0.0
        %3055 = vmatprep.subr.mxu0 0.0
        %3056 = vmatpush1.msra.mxu0 0.0
        %3057 = vmatprep.subr.mxu0 0.0
        %3058 = vmatpush1.msra.mxu0 0.0
        %3059 = vmatprep.subr.mxu0 0.0
        %3060 = vmatpush1.msra.mxu0 0.0
        %3061 = vmatprep.subr.mxu0 0.0
        %3062 = vmatpush1.msra.mxu0 0.0
        %3063 = vmatprep.subr.mxu0 0.0
        %3064 = vmatpush1.msra.mxu0 0.0
        %3065 = vmatprep.subr.mxu0 0.0
        %3066 = vmatpush1.msra.mxu0 0.0
        %3067 = vmatprep.subr.mxu0 0.0
        %3068 = vmatpush1.msra.mxu0 0.0
        %3069 = vmatprep.subr.mxu0 0.0
        %3070 = vmatpush1.msra.mxu0 0.0
        %3071 = vmatprep.subr.mxu0 0.0
        %3072 = vmatpush1.msra.mxu0 0.0
        %3073 = vmatprep.mubr.f32.mxu0 0.0
        %3074 = vmatmul.mubr.f32.gmra.mrb[0].mxu0 %v3007
        %v3075 = vpop.f32.mrb[0].mxu0
        %v3076 = vadd.f32 %v3004, %v3075
        %v3077 = vpop.f32.mrb[0].mxu0
        %3078 = vdwg.mxu0
        %v3079 = vmul.f32 %v3076, 0.5
        %v3080 = vmul.f32 %v3076, 0.044715
        %v3081 = vmul.f32 %v3080, %v3076
        %v3082 = vmul.f32 %v3081, %v3076
        %v3083 = vadd.f32 %v3076, %v3082
        %v3084 = vmul.f32 %v3083, 0.7978846
        %v3085 = vtanh.pop %v3084
        %v3086 = vadd.f32 %v3085, 1.0
        %v3087 = vmul.f32 %v3079, %v3086
        %s3088 = scalar_lea.vmem %s23, 128
        %v3089 = vld [vmem:[%s3088] sm:$0xff]
        %v3090 = vld [vmem:[%s3088 + $0x8] sm:$0xff]
        %v3091 = vld [vmem:[%s3088 + $0x10] sm:$0xff]
        %v3092 = vld [vmem:[%s3088 + $0x18] sm:$0xff]
        %v3093 = vld [vmem:[%s3088 + $0x20] sm:$0xff]
        %v3094 = vld [vmem:[%s3088 + $0x28] sm:$0xff]
        %v3095 = vld [vmem:[%s3088 + $0x30] sm:$0xff]
        %v3096 = vld [vmem:[%s3088 + $0x38] sm:$0xff]
        %v3097 = vld [vmem:[%s3088 + $0x40] sm:$0xff]
        %v3098 = vld [vmem:[%s3088 + $0x48] sm:$0xff]
        %v3099 = vld [vmem:[%s3088 + $0x50] sm:$0xff]
        %v3100 = vld [vmem:[%s3088 + $0x58] sm:$0xff]
        %v3101 = vld [vmem:[%s3088 + $0x60] sm:$0xff]
        %v3102 = vld [vmem:[%s3088 + $0x68] sm:$0xff]
        %v3103 = vld [vmem:[%s3088 + $0x70] sm:$0xff]
        %v3104 = vld [vmem:[%s3088 + $0x78] sm:$0xff]
        %s3105 = scalar_lea.vmem %s25, 1
        %v3106 = vld [vmem:[%s3105] sm:$0x1]
        %v3108 = vlaneseq
        %v3109 = vshrl.u32 %v3108, 7
        %v3110 = vsub.s32 0, %v3109
        %v3111 = vrot.slane %v3106, %v3110
        %3113 = vmatprep.subr.mxu0 0.0
        %3114 = vmatpush1.msra.mxu0 %v3089
        %3115 = vmatprep.subr.mxu0 0.0
        %3116 = vmatpush1.msra.mxu0 %v3090
        %3117 = vmatprep.subr.mxu0 0.0
        %3118 = vmatpush1.msra.mxu0 %v3091
        %3119 = vmatprep.subr.mxu0 0.0
        %3120 = vmatpush1.msra.mxu0 %v3092
        %3121 = vmatprep.subr.mxu0 0.0
        %3122 = vmatpush1.msra.mxu0 %v3093
        %3123 = vmatprep.subr.mxu0 0.0
        %3124 = vmatpush1.msra.mxu0 %v3094
        %3125 = vmatprep.subr.mxu0 0.0
        %3126 = vmatpush1.msra.mxu0 %v3095
        %3127 = vmatprep.subr.mxu0 0.0
        %3128 = vmatpush1.msra.mxu0 %v3096
        %3129 = vmatprep.subr.mxu0 0.0
        %3130 = vmatpush1.msra.mxu0 %v3097
        %3131 = vmatprep.subr.mxu0 0.0
        %3132 = vmatpush1.msra.mxu0 %v3098
        %3133 = vmatprep.subr.mxu0 0.0
        %3134 = vmatpush1.msra.mxu0 %v3099
        %3135 = vmatprep.subr.mxu0 0.0
        %3136 = vmatpush1.msra.mxu0 %v3100
        %3137 = vmatprep.subr.mxu0 0.0
        %3138 = vmatpush1.msra.mxu0 %v3101
        %3139 = vmatprep.subr.mxu0 0.0
        %3140 = vmatpush1.msra.mxu0 %v3102
        %3141 = vmatprep.subr.mxu0 0.0
        %3142 = vmatpush1.msra.mxu0 %v3103
        %3143 = vmatprep.subr.mxu0 0.0
        %3144 = vmatpush1.msra.mxu0 %v3104
        %3145 = vmatprep.subr.mxu0 0.0
        %3146 = vmatpush1.msra.mxu0 0.0
        %3147 = vmatprep.subr.mxu0 0.0
        %3148 = vmatpush1.msra.mxu0 0.0
        %3149 = vmatprep.subr.mxu0 0.0
        %3150 = vmatpush1.msra.mxu0 0.0
        %3151 = vmatprep.subr.mxu0 0.0
        %3152 = vmatpush1.msra.mxu0 0.0
        %3153 = vmatprep.subr.mxu0 0.0
        %3154 = vmatpush1.msra.mxu0 0.0
        %3155 = vmatprep.subr.mxu0 0.0
        %3156 = vmatpush1.msra.mxu0 0.0
        %3157 = vmatprep.subr.mxu0 0.0
        %3158 = vmatpush1.msra.mxu0 0.0
        %3159 = vmatprep.subr.mxu0 0.0
        %3160 = vmatpush1.msra.mxu0 0.0
        %3161 = vmatprep.subr.mxu0 0.0
        %3162 = vmatpush1.msra.mxu0 0.0
        %3163 = vmatprep.subr.mxu0 0.0
        %3164 = vmatpush1.msra.mxu0 0.0
        %3165 = vmatprep.subr.mxu0 0.0
        %3166 = vmatpush1.msra.mxu0 0.0
        %3167 = vmatprep.subr.mxu0 0.0
        %3168 = vmatpush1.msra.mxu0 0.0
        %3169 = vmatprep.subr.mxu0 0.0
        %3170 = vmatpush1.msra.mxu0 0.0
        %3171 = vmatprep.subr.mxu0 0.0
        %3172 = vmatpush1.msra.mxu0 0.0
        %3173 = vmatprep.subr.mxu0 0.0
        %3174 = vmatpush1.msra.mxu0 0.0
        %3175 = vmatprep.subr.mxu0 0.0
        %3176 = vmatpush1.msra.mxu0 0.0
        %3177 = vmatprep.mubr.f32.mxu0 0.0
        %3178 = vmatmul.mubr.f32.gmra.mrb[0].mxu0 %v3087
        %v3179 = vpop.f32.mrb[0].mxu0
        %v3180 = vadd.f32 %v3111, %v3179
        %v3181 = vpop.f32.mrb[0].mxu0
        %3182 = vdwg.mxu0
        %v3183 = vadd.f32 %v2992, %v3180
        %s3184 = scalar_lea.vmem %s27, 1
        %v3185 = vld [vmem:[%s3184] sm:$0x1]
        %s3186 = scalar_lea.vmem %s29, 1
        %v3187 = vld [vmem:[%s3186] sm:$0x1]
        %v3188 = vsel %vm1026, %v3183, 0.0
        %3189 = vadd.xlane.f32.xlu0 %v3188
        %v3190 = vpop.xlane.xlu0 %3189
        %v3191 = vmul.f32 %v3190, %v1870
        %v3192 = vsub.f32 %v3183, %v3191
        %v3193 = vmul.f32 %v3192, %v3192
        %v3194 = vsel %vm1026, %v3193, 0.0
        %3195 = vadd.xlane.f32.xlu0 %v3194
        %v3196 = vpop.xlane.xlu0 %3195
        %v3197 = vmul.f32 %v3196, %v1870
        %v3198 = vadd.f32 %v3197, 1e-05
        %v3199 = vrsqrt.pop %v3198
        %v3200 = vmul.f32 %v3192, %v3199
        %v3202 = vlaneseq
        %v3203 = vshrl.u32 %v3202, 7
        %v3204 = vsub.s32 0, %v3203
        %v3205 = vrot.slane %v3185, %v3204
        %v3207 = vmul.f32 %v3200, %v3205
        %v3209 = vlaneseq
        %v3210 = vshrl.u32 %v3209, 7
        %v3211 = vsub.s32 0, %v3210
        %v3212 = vrot.slane %v3187, %v3211
        %v3214 = vadd.f32 %v3207, %v3212
        %v3216 = vrot.slane %v3214, 6
        %vm3218 = vcmask 1041408
        %v3219 = vsel %vm3218, 0.0, %v3216
        %v3220 = vsel %vm3218, %v3216, 0.0
        %vm3223 = vcmask 1046528
        %v3224 = vrot.slane %v3219, 1
        %v3225 = vrot.slane %v3220, 1
        %v3226 = vsel %vm3223, %v3224, %v3225
        %3227 = vrot.lane.b32.xlu0 %v3226, 32
        %v3228 = vpop.permute.xlu0 %3227
        %vm3230 = vcmask 1045504
        %v3231 = vrot.slane %v3219, 2
        %v3232 = vrot.slane %v3220, 2
        %v3233 = vsel %vm3230, %v3231, %v3232
        %3234 = vrot.lane.b32.xlu0 %v3233, 64
        %v3235 = vpop.permute.xlu0 %3234
        %vm3237 = vcmask 1044480
        %v3238 = vrot.slane %v3219, 3
        %v3239 = vrot.slane %v3220, 3
        %v3240 = vsel %vm3237, %v3238, %v3239
        %3241 = vrot.lane.b32.xlu0 %v3240, 96
        %v3242 = vpop.permute.xlu0 %3241
        %vm3244 = vcmask 1043456
        %v3245 = vrot.slane %v3219, 4
        %v3246 = vrot.slane %v3220, 4
        %v3247 = vsel %vm3244, %v3245, %v3246
        %v3248 = vsel %vm1026, %v3219, %v3228
        %vm3249 = vcmask 523264
        %v3250 = vsel %vm3249, %v3248, %v3235
        %vm3251 = vcmask 785408
        %v3252 = vsel %vm3251, %v3250, %v3242
        %v3253 = vld [vmem:[%s31] sm:$0xff]
        %v3254 = vld [vmem:[%s31 + $0x8] sm:$0xff]
        %v3255 = vld [vmem:[%s31 + $0x10] sm:$0xff]
        %v3256 = vld [vmem:[%s31 + $0x18] sm:$0xff]
        %v3257 = vld [vmem:[%s31 + $0x20] sm:$0xff]
        %v3258 = vld [vmem:[%s31 + $0x28] sm:$0xff]
        %v3259 = vld [vmem:[%s31 + $0x30] sm:$0xff]
        %v3260 = vld [vmem:[%s31 + $0x38] sm:$0xff]
        %v3261 = vld [vmem:[%s31 + $0x40] sm:$0xff]
        %v3262 = vld [vmem:[%s31 + $0x48] sm:$0xff]
        %v3263 = vld [vmem:[%s31 + $0x50] sm:$0xff]
        %v3264 = vld [vmem:[%s31 + $0x58] sm:$0xff]
        %v3265 = vld [vmem:[%s31 + $0x60] sm:$0xff]
        %v3266 = vld [vmem:[%s31 + $0x68] sm:$0xff]
        %v3267 = vld [vmem:[%s31 + $0x70] sm:$0xff]
        %v3268 = vld [vmem:[%s31 + $0x78] sm:$0xff]
        %v3269 = vld [vmem:[%s31 + $0x80] sm:$0xff]
        %v3270 = vld [vmem:[%s31 + $0x88] sm:$0xff]
        %v3271 = vld [vmem:[%s31 + $0x90] sm:$0xff]
        %v3272 = vld [vmem:[%s31 + $0x98] sm:$0xff]
        %v3273 = vld [vmem:[%s33] sm:$0x1]
        %v3275 = vlaneseq
        %v3276 = vshrl.u32 %v3275, 7
        %v3277 = vsub.s32 0, %v3276
        %v3278 = vrot.slane %v3273, %v3277
        %v3280 = vsel %vm1026, %v3247, 0
        %3282 = vmatprep.subr.mxu0 0.0
        %3283 = vmatpush1.msra.mxu0 %v3253
        %3284 = vmatprep.subr.mxu0 0.0
        %3285 = vmatpush1.msra.mxu0 %v3254
        %3286 = vmatprep.subr.mxu0 0.0
        %3287 = vmatpush1.msra.mxu0 %v3255
        %3288 = vmatprep.subr.mxu0 0.0
        %3289 = vmatpush1.msra.mxu0 %v3256
        %3290 = vmatprep.subr.mxu0 0.0
        %3291 = vmatpush1.msra.mxu0 %v3257
        %3292 = vmatprep.subr.mxu0 0.0
        %3293 = vmatpush1.msra.mxu0 %v3258
        %3294 = vmatprep.subr.mxu0 0.0
        %3295 = vmatpush1.msra.mxu0 %v3259
        %3296 = vmatprep.subr.mxu0 0.0
        %3297 = vmatpush1.msra.mxu0 %v3260
        %3298 = vmatprep.subr.mxu0 0.0
        %3299 = vmatpush1.msra.mxu0 %v3261
        %3300 = vmatprep.subr.mxu0 0.0
        %3301 = vmatpush1.msra.mxu0 %v3262
        %3302 = vmatprep.subr.mxu0 0.0
        %3303 = vmatpush1.msra.mxu0 %v3263
        %3304 = vmatprep.subr.mxu0 0.0
        %3305 = vmatpush1.msra.mxu0 %v3264
        %3306 = vmatprep.subr.mxu0 0.0
        %3307 = vmatpush1.msra.mxu0 %v3265
        %3308 = vmatprep.subr.mxu0 0.0
        %3309 = vmatpush1.msra.mxu0 %v3266
        %3310 = vmatprep.subr.mxu0 0.0
        %3311 = vmatpush1.msra.mxu0 %v3267
        %3312 = vmatprep.subr.mxu0 0.0
        %3313 = vmatpush1.msra.mxu0 %v3268
        %3314 = vmatprep.subr.mxu0 0.0
        %3315 = vmatpush1.msra.mxu0 %v3269
        %3316 = vmatprep.subr.mxu0 0.0
        %3317 = vmatpush1.msra.mxu0 %v3270
        %3318 = vmatprep.subr.mxu0 0.0
        %3319 = vmatpush1.msra.mxu0 %v3271
        %3320 = vmatprep.subr.mxu0 0.0
        %3321 = vmatpush1.msra.mxu0 %v3272
        %3322 = vmatprep.subr.mxu0 0.0
        %3323 = vmatpush1.msra.mxu0 0.0
        %3324 = vmatprep.subr.mxu0 0.0
        %3325 = vmatpush1.msra.mxu0 0.0
        %3326 = vmatprep.subr.mxu0 0.0
        %3327 = vmatpush1.msra.mxu0 0.0
        %3328 = vmatprep.subr.mxu0 0.0
        %3329 = vmatpush1.msra.mxu0 0.0
        %3330 = vmatprep.subr.mxu0 0.0
        %3331 = vmatpush1.msra.mxu0 0.0
        %3332 = vmatprep.subr.mxu0 0.0
        %3333 = vmatpush1.msra.mxu0 0.0
        %3334 = vmatprep.subr.mxu0 0.0
        %3335 = vmatpush1.msra.mxu0 0.0
        %3336 = vmatprep.subr.mxu0 0.0
        %3337 = vmatpush1.msra.mxu0 0.0
        %3338 = vmatprep.subr.mxu0 0.0
        %3339 = vmatpush1.msra.mxu0 0.0
        %3340 = vmatprep.subr.mxu0 0.0
        %3341 = vmatpush1.msra.mxu0 0.0
        %3342 = vmatprep.subr.mxu0 0.0
        %3343 = vmatpush1.msra.mxu0 0.0
        %3344 = vmatprep.subr.mxu0 0.0
        %3345 = vmatpush1.msra.mxu0 0.0
        %3346 = vmatprep.mubr.f32.mxu0 %v3280
        %3347 = vmatmul.mubr.f32.gmra.mrb[0].mxu0 %v3252
        %v3348 = vpop.f32.mrb[0].mxu0
        %v3349 = vadd.f32 %v3278, %v3348
        %v3350 = vpop.f32.mrb[0].mxu0
        %3351 = vdwg.mxu0
        %v3352 = vmax.f32 %v3349, 0.0
        %v3354 = vrot.slane %v3352, 7
        %vm3356 = vcmask 1040384
        %v3357 = vsel %vm3356, 0.0, %v3354
        %v3358 = vsel %vm3356, %v3354, 0.0
        %v3361 = vrot.slane %v3357, 1
        %v3362 = vrot.slane %v3358, 1
        %v3363 = vsel %vm3223, %v3361, %v3362
        %3364 = vrot.lane.b32.xlu0 %v3363, 16
        %v3365 = vpop.permute.xlu0 %3364
        %v3367 = vrot.slane %v3357, 2
        %v3368 = vrot.slane %v3358, 2
        %v3369 = vsel %vm3230, %v3367, %v3368
        %3370 = vrot.lane.b32.xlu0 %v3369, 32
        %v3371 = vpop.permute.xlu0 %3370
        %v3373 = vsel %vm941, %v3357, %v3365
        %v3374 = vsel %vm1026, %v3373, %v3371
        %v3375 = vld [vmem:[%s35] sm:$0xff]
        %v3376 = vld [vmem:[%s35 + $0x8] sm:$0xff]
        %v3377 = vld [vmem:[%s35 + $0x10] sm:$0xff]
        %v3378 = vld [vmem:[%s35 + $0x18] sm:$0xff]
        %v3379 = vld [vmem:[%s35 + $0x20] sm:$0xff]
        %v3380 = vld [vmem:[%s35 + $0x28] sm:$0xff]
        %v3381 = vld [vmem:[%s37] sm:$0x1]
        %v3383 = vlaneseq
        %v3384 = vshrl.u32 %v3383, 7
        %v3385 = vsub.s32 0, %v3384
        %v3386 = vrot.slane %v3381, %v3385
        %vm3388 = vcmask 392192
        %v3390 = vsel %vm3388, %v3374, 0
        %3392 = vmatprep.subr.mxu0 0.0
        %3393 = vmatpush1.msra.mxu0 %v3375
        %3394 = vmatprep.subr.mxu0 0.0
        %3395 = vmatpush1.msra.mxu0 %v3376
        %3396 = vmatprep.subr.mxu0 0.0
        %3397 = vmatpush1.msra.mxu0 %v3377
        %3398 = vmatprep.subr.mxu0 0.0
        %3399 = vmatpush1.msra.mxu0 %v3378
        %3400 = vmatprep.subr.mxu0 0.0
        %3401 = vmatpush1.msra.mxu0 %v3379
        %3402 = vmatprep.subr.mxu0 0.0
        %3403 = vmatpush1.msra.mxu0 %v3380
        %3404 = vmatprep.subr.mxu0 0.0
        %3405 = vmatpush1.msra.mxu0 0.0
        %3406 = vmatprep.subr.mxu0 0.0
        %3407 = vmatpush1.msra.mxu0 0.0
        %3408 = vmatprep.subr.mxu0 0.0
        %3409 = vmatpush1.msra.mxu0 0.0
        %3410 = vmatprep.subr.mxu0 0.0
        %3411 = vmatpush1.msra.mxu0 0.0
        %3412 = vmatprep.subr.mxu0 0.0
        %3413 = vmatpush1.msra.mxu0 0.0
        %3414 = vmatprep.subr.mxu0 0.0
        %3415 = vmatpush1.msra.mxu0 0.0
        %3416 = vmatprep.subr.mxu0 0.0
        %3417 = vmatpush1.msra.mxu0 0.0
        %3418 = vmatprep.subr.mxu0 0.0
        %3419 = vmatpush1.msra.mxu0 0.0
        %3420 = vmatprep.subr.mxu0 0.0
        %3421 = vmatpush1.msra.mxu0 0.0
        %3422 = vmatprep.subr.mxu0 0.0
        %3423 = vmatpush1.msra.mxu0 0.0
        %3424 = vmatprep.subr.mxu0 0.0
        %3425 = vmatpush1.msra.mxu0 0.0
        %3426 = vmatprep.subr.mxu0 0.0
        %3427 = vmatpush1.msra.mxu0 0.0
        %3428 = vmatprep.subr.mxu0 0.0
        %3429 = vmatpush1.msra.mxu0 0.0
        %3430 = vmatprep.subr.mxu0 0.0
        %3431 = vmatpush1.msra.mxu0 0.0
        %3432 = vmatprep.subr.mxu0 0.0
        %3433 = vmatpush1.msra.mxu0 0.0
        %3434 = vmatprep.subr.mxu0 0.0
        %3435 = vmatpush1.msra.mxu0 0.0
        %3436 = vmatprep.subr.mxu0 0.0
        %3437 = vmatpush1.msra.mxu0 0.0
        %3438 = vmatprep.subr.mxu0 0.0
        %3439 = vmatpush1.msra.mxu0 0.0
        %3440 = vmatprep.subr.mxu0 0.0
        %3441 = vmatpush1.msra.mxu0 0.0
        %3442 = vmatprep.subr.mxu0 0.0
        %3443 = vmatpush1.msra.mxu0 0.0
        %3444 = vmatprep.subr.mxu0 0.0
        %3445 = vmatpush1.msra.mxu0 0.0
        %3446 = vmatprep.subr.mxu0 0.0
        %3447 = vmatpush1.msra.mxu0 0.0
        %3448 = vmatprep.subr.mxu0 0.0
        %3449 = vmatpush1.msra.mxu0 0.0
        %3450 = vmatprep.subr.mxu0 0.0
        %3451 = vmatpush1.msra.mxu0 0.0
        %3452 = vmatprep.subr.mxu0 0.0
        %3453 = vmatpush1.msra.mxu0 0.0
        %3454 = vmatprep.subr.mxu0 0.0
        %3455 = vmatpush1.msra.mxu0 0.0
        %3456 = vmatprep.mubr.f32.mxu0 0.0
        %3457 = vmatmul.mubr.f32.gmra.mrb[0].mxu0 %v3390
        %v3458 = vpop.f32.mrb[0].mxu0
        %v3459 = vadd.f32 %v3386, %v3458
        %v3460 = vpop.f32.mrb[0].mxu0
        %3461 = vdwg.mxu0
        %v3462 = vmax.f32 %v3459, 0.0
        %v3463 = vsel %vm1109, %v3462, 0.0
        %3464 = vadd.xlane.f32.xlu0 %v3463
        %v3465 = vpop.xlane.xlu0 %3464
        %v3466 = vrcp.pop 8.0
        %v3467 = vmul.f32 %v3465, %v3466
        %v3468 = vld [vmem:[%s39] sm:$0xff]
        %v3469 = vld [vmem:[%s39 + $0x8] sm:$0xff]
        %v3470 = vld [vmem:[%s39 + $0x10] sm:$0xff]
        %v3471 = vld [vmem:[%s39 + $0x18] sm:$0xff]
        %v3472 = vld [vmem:[%s43] sm:$0x1]
        %v3474 = vlaneseq
        %v3475 = vshrl.u32 %v3474, 7
        %v3476 = vsub.s32 0, %v3475
        %v3477 = vrot.slane %v3472, %v3476
        %v3479 = vsel %vm1026, %v3214, 0
        %3481 = vmatprep.subr.mxu0 0.0
        %3482 = vmatpush1.msra.mxu0 %v3468
        %3483 = vmatprep.subr.mxu0 0.0
        %3484 = vmatpush1.msra.mxu0 %v3469
        %3485 = vmatprep.subr.mxu0 0.0
        %3486 = vmatpush1.msra.mxu0 %v3470
        %3487 = vmatprep.subr.mxu0 0.0
        %3488 = vmatpush1.msra.mxu0 %v3471
        %3489 = vmatprep.subr.mxu0 0.0
        %3490 = vmatpush1.msra.mxu0 0.0
        %3491 = vmatprep.subr.mxu0 0.0
        %3492 = vmatpush1.msra.mxu0 0.0
        %3493 = vmatprep.subr.mxu0 0.0
        %3494 = vmatpush1.msra.mxu0 0.0
        %3495 = vmatprep.subr.mxu0 0.0
        %3496 = vmatpush1.msra.mxu0 0.0
        %3497 = vmatprep.subr.mxu0 0.0
        %3498 = vmatpush1.msra.mxu0 0.0
        %3499 = vmatprep.subr.mxu0 0.0
        %3500 = vmatpush1.msra.mxu0 0.0
        %3501 = vmatprep.subr.mxu0 0.0
        %3502 = vmatpush1.msra.mxu0 0.0
        %3503 = vmatprep.subr.mxu0 0.0
        %3504 = vmatpush1.msra.mxu0 0.0
        %3505 = vmatprep.subr.mxu0 0.0
        %3506 = vmatpush1.msra.mxu0 0.0
        %3507 = vmatprep.subr.mxu0 0.0
        %3508 = vmatpush1.msra.mxu0 0.0
        %3509 = vmatprep.subr.mxu0 0.0
        %3510 = vmatpush1.msra.mxu0 0.0
        %3511 = vmatprep.subr.mxu0 0.0
        %3512 = vmatpush1.msra.mxu0 0.0
        %3513 = vmatprep.subr.mxu0 0.0
        %3514 = vmatpush1.msra.mxu0 0.0
        %3515 = vmatprep.subr.mxu0 0.0
        %3516 = vmatpush1.msra.mxu0 0.0
        %3517 = vmatprep.subr.mxu0 0.0
        %3518 = vmatpush1.msra.mxu0 0.0
        %3519 = vmatprep.subr.mxu0 0.0
        %3520 = vmatpush1.msra.mxu0 0.0
        %3521 = vmatprep.subr.mxu0 0.0
        %3522 = vmatpush1.msra.mxu0 0.0
        %3523 = vmatprep.subr.mxu0 0.0
        %3524 = vmatpush1.msra.mxu0 0.0
        %3525 = vmatprep.subr.mxu0 0.0
        %3526 = vmatpush1.msra.mxu0 0.0
        %3527 = vmatprep.subr.mxu0 0.0
        %3528 = vmatpush1.msra.mxu0 0.0
        %3529 = vmatprep.subr.mxu0 0.0
        %3530 = vmatpush1.msra.mxu0 0.0
        %3531 = vmatprep.subr.mxu0 0.0
        %3532 = vmatpush1.msra.mxu0 0.0
        %3533 = vmatprep.subr.mxu0 0.0
        %3534 = vmatpush1.msra.mxu0 0.0
        %3535 = vmatprep.subr.mxu0 0.0
        %3536 = vmatpush1.msra.mxu0 0.0
        %3537 = vmatprep.subr.mxu0 0.0
        %3538 = vmatpush1.msra.mxu0 0.0
        %3539 = vmatprep.subr.mxu0 0.0
        %3540 = vmatpush1.msra.mxu0 0.0
        %3541 = vmatprep.subr.mxu0 0.0
        %3542 = vmatpush1.msra.mxu0 0.0
        %3543 = vmatprep.subr.mxu0 0.0
        %3544 = vmatpush1.msra.mxu0 0.0
        %3545 = vmatprep.mubr.f32.mxu0 0.0
        %3546 = vmatmul.mubr.f32.gmra.mrb[0].mxu0 %v3479
        %v3547 = vpop.f32.mrb[0].mxu0
        %v3548 = vadd.f32 %v3477, %v3547
        %v3549 = vpop.f32.mrb[0].mxu0
        %3550 = vdwg.mxu0
        %v3551 = vld [vmem:[%s41] sm:$0xff]
        %v3552 = vld [vmem:[%s41 + $0x8] sm:$0xff]
        %v3553 = vld [vmem:[%s45] sm:$0x1]
        %v3555 = vsel %vm941, 0.0, 0
        %3557 = vmatprep.subr.mxu0 0.0
        %3558 = vmatpush1.msra.mxu0 %v3551
        %3559 = vmatprep.subr.mxu0 0.0
        %3560 = vmatpush1.msra.mxu0 %v3552
        %3561 = vmatprep.subr.mxu0 0.0
        %3562 = vmatpush1.msra.mxu0 0.0
        %3563 = vmatprep.subr.mxu0 0.0
        %3564 = vmatpush1.msra.mxu0 0.0
        %3565 = vmatprep.subr.mxu0 0.0
        %3566 = vmatpush1.msra.mxu0 0.0
        %3567 = vmatprep.subr.mxu0 0.0
        %3568 = vmatpush1.msra.mxu0 0.0
        %3569 = vmatprep.subr.mxu0 0.0
        %3570 = vmatpush1.msra.mxu0 0.0
        %3571 = vmatprep.subr.mxu0 0.0
        %3572 = vmatpush1.msra.mxu0 0.0
        %3573 = vmatprep.subr.mxu0 0.0
        %3574 = vmatpush1.msra.mxu0 0.0
        %3575 = vmatprep.subr.mxu0 0.0
        %3576 = vmatpush1.msra.mxu0 0.0
        %3577 = vmatprep.subr.mxu0 0.0
        %3578 = vmatpush1.msra.mxu0 0.0
        %3579 = vmatprep.subr.mxu0 0.0
        %3580 = vmatpush1.msra.mxu0 0.0
        %3581 = vmatprep.subr.mxu0 0.0
        %3582 = vmatpush1.msra.mxu0 0.0
        %3583 = vmatprep.subr.mxu0 0.0
        %3584 = vmatpush1.msra.mxu0 0.0
        %3585 = vmatprep.subr.mxu0 0.0
        %3586 = vmatpush1.msra.mxu0 0.0
        %3587 = vmatprep.subr.mxu0 0.0
        %3588 = vmatpush1.msra.mxu0 0.0
        %3589 = vmatprep.subr.mxu0 0.0
        %3590 = vmatpush1.msra.mxu0 0.0
        %3591 = vmatprep.subr.mxu0 0.0
        %3592 = vmatpush1.msra.mxu0 0.0
        %3593 = vmatprep.subr.mxu0 0.0
        %3594 = vmatpush1.msra.mxu0 0.0
        %3595 = vmatprep.subr.mxu0 0.0
        %3596 = vmatpush1.msra.mxu0 0.0
        %3597 = vmatprep.subr.mxu0 0.0
        %3598 = vmatpush1.msra.mxu0 0.0
        %3599 = vmatprep.subr.mxu0 0.0
        %3600 = vmatpush1.msra.mxu0 0.0
        %3601 = vmatprep.subr.mxu0 0.0
        %3602 = vmatpush1.msra.mxu0 0.0
        %3603 = vmatprep.subr.mxu0 0.0
        %3604 = vmatpush1.msra.mxu0 0.0
        %3605 = vmatprep.subr.mxu0 0.0
        %3606 = vmatpush1.msra.mxu0 0.0
        %3607 = vmatprep.subr.mxu0 0.0
        %3608 = vmatpush1.msra.mxu0 0.0
        %3609 = vmatprep.subr.mxu0 0.0
        %3610 = vmatpush1.msra.mxu0 0.0
        %3611 = vmatprep.subr.mxu0 0.0
        %3612 = vmatpush1.msra.mxu0 0.0
        %3613 = vmatprep.subr.mxu0 0.0
        %3614 = vmatpush1.msra.mxu0 0.0
        %3615 = vmatprep.subr.mxu0 0.0
        %3616 = vmatpush1.msra.mxu0 0.0
        %3617 = vmatprep.subr.mxu0 0.0
        %3618 = vmatpush1.msra.mxu0 0.0
        %3619 = vmatprep.subr.mxu0 0.0
        %3620 = vmatpush1.msra.mxu0 0.0
        %3621 = vmatprep.mubr.f32.mxu0 0.0
        %3622 = vmatmul.mubr.f32.gmra.mrb[0].mxu0 %v3555
        %v3623 = vpop.f32.mrb[0].mxu0
        %v3624 = vadd.f32 %v3553, %v3623
        %v3625 = vpop.f32.mrb[0].mxu0
        %3626 = vdwg.mxu0
        %v3627 = vadd.f32 %v3548, %v3624
        %v3628 = vsub.f32 0.0, %v3627
        %v3629 = vmul.f32 %v3628, 1.442695
        %v3630 = vpow.pop %v3629
        %v3631 = vadd.f32 %v3630, 1.0
        %v3632 = vrcp.pop %v3631
        %v3633 = vmul.f32 1.0, %v3632
        %3635 = vrot.lane.b32.xlu0 %v3624, 96
        %v3636 = vpop.permute.xlu0 %3635
        %v3638 = vmul.f32 %v3633, %v3636
        %3640 = vrot.lane.b32.xlu0 %v3638, 32
        %v3641 = vpop.permute.xlu0 %3640
        %v3643 = vadd.f32 %v3548, %v3641
        %v3644 = vtanh.pop %v3643
        %v3645 = vsub.f32 1.0, %v3633
        %3647 = vrot.lane.b32.xlu0 %v3644, 112
        %v3648 = vpop.permute.xlu0 %3647
        %v3650 = vmul.f32 %v3645, %v3648
        %v3651 = vmul.f32 %v3633, 0.0
        %v3652 = vadd.f32 %v3650, %v3651
        %3654 = vrot.lane.b32.xlu0 %v3652, 112
        %v3655 = vpop.permute.xlu0 %3654
        %v3656 = vsel %vm941, %v3655, 0
        %3658 = vmatprep.subr.mxu0 0.0
        %3659 = vmatpush1.msra.mxu0 %v3551
        %3660 = vmatprep.subr.mxu0 0.0
        %3661 = vmatpush1.msra.mxu0 %v3552
        %3662 = vmatprep.subr.mxu0 0.0
        %3663 = vmatpush1.msra.mxu0 0.0
        %3664 = vmatprep.subr.mxu0 0.0
        %3665 = vmatpush1.msra.mxu0 0.0
        %3666 = vmatprep.subr.mxu0 0.0
        %3667 = vmatpush1.msra.mxu0 0.0
        %3668 = vmatprep.subr.mxu0 0.0
        %3669 = vmatpush1.msra.mxu0 0.0
        %3670 = vmatprep.subr.mxu0 0.0
        %3671 = vmatpush1.msra.mxu0 0.0
        %3672 = vmatprep.subr.mxu0 0.0
        %3673 = vmatpush1.msra.mxu0 0.0
        %3674 = vmatprep.subr.mxu0 0.0
        %3675 = vmatpush1.msra.mxu0 0.0
        %3676 = vmatprep.subr.mxu0 0.0
        %3677 = vmatpush1.msra.mxu0 0.0
        %3678 = vmatprep.subr.mxu0 0.0
        %3679 = vmatpush1.msra.mxu0 0.0
        %3680 = vmatprep.subr.mxu0 0.0
        %3681 = vmatpush1.msra.mxu0 0.0
        %3682 = vmatprep.subr.mxu0 0.0
        %3683 = vmatpush1.msra.mxu0 0.0
        %3684 = vmatprep.subr.mxu0 0.0
        %3685 = vmatpush1.msra.mxu0 0.0
        %3686 = vmatprep.subr.mxu0 0.0
        %3687 = vmatpush1.msra.mxu0 0.0
        %3688 = vmatprep.subr.mxu0 0.0
        %3689 = vmatpush1.msra.mxu0 0.0
        %3690 = vmatprep.subr.mxu0 0.0
        %3691 = vmatpush1.msra.mxu0 0.0
        %3692 = vmatprep.subr.mxu0 0.0
        %3693 = vmatpush1.msra.mxu0 0.0
        %3694 = vmatprep.subr.mxu0 0.0
        %3695 = vmatpush1.msra.mxu0 0.0
        %3696 = vmatprep.subr.mxu0 0.0
        %3697 = vmatpush1.msra.mxu0 0.0
        %3698 = vmatprep.subr.mxu0 0.0
        %3699 = vmatpush1.msra.mxu0 0.0
        %3700 = vmatprep.subr.mxu0 0.0
        %3701 = vmatpush1.msra.mxu0 0.0
        %3702 = vmatprep.subr.mxu0 0.0
        %3703 = vmatpush1.msra.mxu0 0.0
        %3704 = vmatprep.subr.mxu0 0.0
        %3705 = vmatpush1.msra.mxu0 0.0
        %3706 = vmatprep.subr.mxu0 0.0
        %3707 = vmatpush1.msra.mxu0 0.0
        %3708 = vmatprep.subr.mxu0 0.0
        %3709 = vmatpush1.msra.mxu0 0.0
        %3710 = vmatprep.subr.mxu0 0.0
        %3711 = vmatpush1.msra.mxu0 0.0
        %3712 = vmatprep.subr.mxu0 0.0
        %3713 = vmatpush1.msra.mxu0 0.0
        %3714 = vmatprep.subr.mxu0 0.0
        %3715 = vmatpush1.msra.mxu0 0.0
        %3716 = vmatprep.subr.mxu0 0.0
        %3717 = vmatpush1.msra.mxu0 0.0
        %3718 = vmatprep.subr.mxu0 0.0
        %3719 = vmatpush1.msra.mxu0 0.0
        %3720 = vmatprep.subr.mxu0 0.0
        %3721 = vmatpush1.msra.mxu0 0.0
        %3722 = vmatprep.mubr.f32.mxu0 0.0
        %3723 = vmatmul.mubr.f32.gmra.mrb[0].mxu0 %v3656
        %v3724 = vpop.f32.mrb[0].mxu0
        %v3725 = vadd.f32 %v3553, %v3724
        %v3726 = vpop.f32.mrb[0].mxu0
        %3727 = vdwg.mxu0
        %v3729 = vrot.slane %v3725, 7
        %v3731 = vadd.f32 %v3548, %v3729
        %v3732 = vsub.f32 0.0, %v3731
        %v3733 = vmul.f32 %v3732, 1.442695
        %v3734 = vpow.pop %v3733
        %v3735 = vadd.f32 %v3734, 1.0
        %v3736 = vrcp.pop %v3735
        %v3737 = vmul.f32 1.0, %v3736
        %3738 = vrot.lane.b32.xlu0 %v3729, 96
        %v3739 = vpop.permute.xlu0 %3738
        %v3741 = vmul.f32 %v3737, %v3739
        %3743 = vrot.lane.b32.xlu0 %v3741, 32
        %v3744 = vpop.permute.xlu0 %3743
        %v3746 = vadd.f32 %v3548, %v3744
        %v3747 = vtanh.pop %v3746
        %v3748 = vsub.f32 1.0, %v3737
        %3750 = vrot.lane.b32.xlu0 %v3747, 112
        %v3751 = vpop.permute.xlu0 %3750
        %v3753 = vmul.f32 %v3748, %v3751
        %v3754 = vrot.slane %v3652, 7
        %v3756 = vmul.f32 %v3737, %v3754
        %v3757 = vadd.f32 %v3753, %v3756
        %v3759 = vrot.slane %v3757, 1
        %3760 = vrot.lane.b32.xlu0 %v3759, 112
        %v3761 = vpop.permute.xlu0 %3760
        %v3762 = vsel %vm941, %v3761, 0
        %3764 = vmatprep.subr.mxu0 0.0
        %3765 = vmatpush1.msra.mxu0 %v3551
        %3766 = vmatprep.subr.mxu0 0.0
        %3767 = vmatpush1.msra.mxu0 %v3552
        %3768 = vmatprep.subr.mxu0 0.0
        %3769 = vmatpush1.msra.mxu0 0.0
        %3770 = vmatprep.subr.mxu0 0.0
        %3771 = vmatpush1.msra.mxu0 0.0
        %3772 = vmatprep.subr.mxu0 0.0
        %3773 = vmatpush1.msra.mxu0 0.0
        %3774 = vmatprep.subr.mxu0 0.0
        %3775 = vmatpush1.msra.mxu0 0.0
        %3776 = vmatprep.subr.mxu0 0.0
        %3777 = vmatpush1.msra.mxu0 0.0
        %3778 = vmatprep.subr.mxu0 0.0
        %3779 = vmatpush1.msra.mxu0 0.0
        %3780 = vmatprep.subr.mxu0 0.0
        %3781 = vmatpush1.msra.mxu0 0.0
        %3782 = vmatprep.subr.mxu0 0.0
        %3783 = vmatpush1.msra.mxu0 0.0
        %3784 = vmatprep.subr.mxu0 0.0
        %3785 = vmatpush1.msra.mxu0 0.0
        %3786 = vmatprep.subr.mxu0 0.0
        %3787 = vmatpush1.msra.mxu0 0.0
        %3788 = vmatprep.subr.mxu0 0.0
        %3789 = vmatpush1.msra.mxu0 0.0
        %3790 = vmatprep.subr.mxu0 0.0
        %3791 = vmatpush1.msra.mxu0 0.0
        %3792 = vmatprep.subr.mxu0 0.0
        %3793 = vmatpush1.msra.mxu0 0.0
        %3794 = vmatprep.subr.mxu0 0.0
        %3795 = vmatpush1.msra.mxu0 0.0
        %3796 = vmatprep.subr.mxu0 0.0
        %3797 = vmatpush1.msra.mxu0 0.0
        %3798 = vmatprep.subr.mxu0 0.0
        %3799 = vmatpush1.msra.mxu0 0.0
        %3800 = vmatprep.subr.mxu0 0.0
        %3801 = vmatpush1.msra.mxu0 0.0
        %3802 = vmatprep.subr.mxu0 0.0
        %3803 = vmatpush1.msra.mxu0 0.0
        %3804 = vmatprep.subr.mxu0 0.0
        %3805 = vmatpush1.msra.mxu0 0.0
        %3806 = vmatprep.subr.mxu0 0.0
        %3807 = vmatpush1.msra.mxu0 0.0
        %3808 = vmatprep.subr.mxu0 0.0
        %3809 = vmatpush1.msra.mxu0 0.0
        %3810 = vmatprep.subr.mxu0 0.0
        %3811 = vmatpush1.msra.mxu0 0.0
        %3812 = vmatprep.subr.mxu0 0.0
        %3813 = vmatpush1.msra.mxu0 0.0
        %3814 = vmatprep.subr.mxu0 0.0
        %3815 = vmatpush1.msra.mxu0 0.0
        %3816 = vmatprep.subr.mxu0 0.0
        %3817 = vmatpush1.msra.mxu0 0.0
        %3818 = vmatprep.subr.mxu0 0.0
        %3819 = vmatpush1.msra.mxu0 0.0
        %3820 = vmatprep.subr.mxu0 0.0
        %3821 = vmatpush1.msra.mxu0 0.0
        %3822 = vmatprep.subr.mxu0 0.0
        %3823 = vmatpush1.msra.mxu0 0.0
        %3824 = vmatprep.subr.mxu0 0.0
        %3825 = vmatpush1.msra.mxu0 0.0
        %3826 = vmatprep.subr.mxu0 0.0
        %3827 = vmatpush1.msra.mxu0 0.0
        %3828 = vmatprep.mubr.f32.mxu0 0.0
        %3829 = vmatmul.mubr.f32.gmra.mrb[0].mxu0 %v3762
        %v3830 = vpop.f32.mrb[0].mxu0
        %v3831 = vadd.f32 %v3553, %v3830
        %v3832 = vpop.f32.mrb[0].mxu0
        %3833 = vdwg.mxu0
        %v3835 = vrot.slane %v3831, 6
        %v3837 = vadd.f32 %v3548, %v3835
        %v3838 = vsub.f32 0.0, %v3837
        %v3839 = vmul.f32 %v3838, 1.442695
        %v3840 = vpow.pop %v3839
        %v3841 = vadd.f32 %v3840, 1.0
        %v3842 = vrcp.pop %v3841
        %v3843 = vmul.f32 1.0, %v3842
        %3844 = vrot.lane.b32.xlu0 %v3835, 96
        %v3845 = vpop.permute.xlu0 %3844
        %v3847 = vmul.f32 %v3843, %v3845
        %3849 = vrot.lane.b32.xlu0 %v3847, 32
        %v3850 = vpop.permute.xlu0 %3849
        %v3852 = vadd.f32 %v3548, %v3850
        %v3853 = vtanh.pop %v3852
        %v3854 = vsub.f32 1.0, %v3843
        %3856 = vrot.lane.b32.xlu0 %v3853, 112
        %v3857 = vpop.permute.xlu0 %3856
        %v3859 = vmul.f32 %v3854, %v3857
        %v3860 = vrot.slane %v3757, 7
        %v3862 = vmul.f32 %v3843, %v3860
        %v3863 = vadd.f32 %v3859, %v3862
        %v3865 = vrot.slane %v3863, 2
        %3866 = vrot.lane.b32.xlu0 %v3865, 112
        %v3867 = vpop.permute.xlu0 %3866
        %v3868 = vsel %vm941, %v3867, 0
        %3870 = vmatprep.subr.mxu0 0.0
        %3871 = vmatpush1.msra.mxu0 %v3551
        %3872 = vmatprep.subr.mxu0 0.0
        %3873 = vmatpush1.msra.mxu0 %v3552
        %3874 = vmatprep.subr.mxu0 0.0
        %3875 = vmatpush1.msra.mxu0 0.0
        %3876 = vmatprep.subr.mxu0 0.0
        %3877 = vmatpush1.msra.mxu0 0.0
        %3878 = vmatprep.subr.mxu0 0.0
        %3879 = vmatpush1.msra.mxu0 0.0
        %3880 = vmatprep.subr.mxu0 0.0
        %3881 = vmatpush1.msra.mxu0 0.0
        %3882 = vmatprep.subr.mxu0 0.0
        %3883 = vmatpush1.msra.mxu0 0.0
        %3884 = vmatprep.subr.mxu0 0.0
        %3885 = vmatpush1.msra.mxu0 0.0
        %3886 = vmatprep.subr.mxu0 0.0
        %3887 = vmatpush1.msra.mxu0 0.0
        %3888 = vmatprep.subr.mxu0 0.0
        %3889 = vmatpush1.msra.mxu0 0.0
        %3890 = vmatprep.subr.mxu0 0.0
        %3891 = vmatpush1.msra.mxu0 0.0
        %3892 = vmatprep.subr.mxu0 0.0
        %3893 = vmatpush1.msra.mxu0 0.0
        %3894 = vmatprep.subr.mxu0 0.0
        %3895 = vmatpush1.msra.mxu0 0.0
        %3896 = vmatprep.subr.mxu0 0.0
        %3897 = vmatpush1.msra.mxu0 0.0
        %3898 = vmatprep.subr.mxu0 0.0
        %3899 = vmatpush1.msra.mxu0 0.0
        %3900 = vmatprep.subr.mxu0 0.0
        %3901 = vmatpush1.msra.mxu0 0.0
        %3902 = vmatprep.subr.mxu0 0.0
        %3903 = vmatpush1.msra.mxu0 0.0
        %3904 = vmatprep.subr.mxu0 0.0
        %3905 = vmatpush1.msra.mxu0 0.0
        %3906 = vmatprep.subr.mxu0 0.0
        %3907 = vmatpush1.msra.mxu0 0.0
        %3908 = vmatprep.subr.mxu0 0.0
        %3909 = vmatpush1.msra.mxu0 0.0
        %3910 = vmatprep.subr.mxu0 0.0
        %3911 = vmatpush1.msra.mxu0 0.0
        %3912 = vmatprep.subr.mxu0 0.0
        %3913 = vmatpush1.msra.mxu0 0.0
        %3914 = vmatprep.subr.mxu0 0.0
        %3915 = vmatpush1.msra.mxu0 0.0
        %3916 = vmatprep.subr.mxu0 0.0
        %3917 = vmatpush1.msra.mxu0 0.0
        %3918 = vmatprep.subr.mxu0 0.0
        %3919 = vmatpush1.msra.mxu0 0.0
        %3920 = vmatprep.subr.mxu0 0.0
        %3921 = vmatpush1.msra.mxu0 0.0
        %3922 = vmatprep.subr.mxu0 0.0
        %3923 = vmatpush1.msra.mxu0 0.0
        %3924 = vmatprep.subr.mxu0 0.0
        %3925 = vmatpush1.msra.mxu0 0.0
        %3926 = vmatprep.subr.mxu0 0.0
        %3927 = vmatpush1.msra.mxu0 0.0
        %3928 = vmatprep.subr.mxu0 0.0
        %3929 = vmatpush1.msra.mxu0 0.0
        %3930 = vmatprep.subr.mxu0 0.0
        %3931 = vmatpush1.msra.mxu0 0.0
        %3932 = vmatprep.subr.mxu0 0.0
        %3933 = vmatpush1.msra.mxu0 0.0
        %3934 = vmatprep.mubr.f32.mxu0 0.0
        %3935 = vmatmul.mubr.f32.gmra.mrb[0].mxu0 %v3868
        %v3936 = vpop.f32.mrb[0].mxu0
        %v3937 = vadd.f32 %v3553, %v3936
        %v3938 = vpop.f32.mrb[0].mxu0
        %3939 = vdwg.mxu0
        %v3941 = vrot.slane %v3937, 5
        %v3943 = vadd.f32 %v3548, %v3941
        %v3944 = vsub.f32 0.0, %v3943
        %v3945 = vmul.f32 %v3944, 1.442695
        %v3946 = vpow.pop %v3945
        %v3947 = vadd.f32 %v3946, 1.0
        %v3948 = vrcp.pop %v3947
        %v3949 = vmul.f32 1.0, %v3948
        %3950 = vrot.lane.b32.xlu0 %v3941, 96
        %v3951 = vpop.permute.xlu0 %3950
        %v3953 = vmul.f32 %v3949, %v3951
        %3955 = vrot.lane.b32.xlu0 %v3953, 32
        %v3956 = vpop.permute.xlu0 %3955
        %v3958 = vadd.f32 %v3548, %v3956
        %v3959 = vtanh.pop %v3958
        %v3960 = vsub.f32 1.0, %v3949
        %3962 = vrot.lane.b32.xlu0 %v3959, 112
        %v3963 = vpop.permute.xlu0 %3962
        %v3965 = vmul.f32 %v3960, %v3963
        %v3966 = vrot.slane %v3863, 7
        %v3968 = vmul.f32 %v3949, %v3966
        %v3969 = vadd.f32 %v3965, %v3968
        %v3971 = vrot.slane %v3969, 3
        %3972 = vrot.lane.b32.xlu0 %v3971, 112
        %v3973 = vpop.permute.xlu0 %3972
        %v3974 = vsel %vm941, %v3973, 0
        %3976 = vmatprep.subr.mxu0 0.0
        %3977 = vmatpush1.msra.mxu0 %v3551
        %3978 = vmatprep.subr.mxu0 0.0
        %3979 = vmatpush1.msra.mxu0 %v3552
        %3980 = vmatprep.subr.mxu0 0.0
        %3981 = vmatpush1.msra.mxu0 0.0
        %3982 = vmatprep.subr.mxu0 0.0
        %3983 = vmatpush1.msra.mxu0 0.0
        %3984 = vmatprep.subr.mxu0 0.0
        %3985 = vmatpush1.msra.mxu0 0.0
        %3986 = vmatprep.subr.mxu0 0.0
        %3987 = vmatpush1.msra.mxu0 0.0
        %3988 = vmatprep.subr.mxu0 0.0
        %3989 = vmatpush1.msra.mxu0 0.0
        %3990 = vmatprep.subr.mxu0 0.0
        %3991 = vmatpush1.msra.mxu0 0.0
        %3992 = vmatprep.subr.mxu0 0.0
        %3993 = vmatpush1.msra.mxu0 0.0
        %3994 = vmatprep.subr.mxu0 0.0
        %3995 = vmatpush1.msra.mxu0 0.0
        %3996 = vmatprep.subr.mxu0 0.0
        %3997 = vmatpush1.msra.mxu0 0.0
        %3998 = vmatprep.subr.mxu0 0.0
        %3999 = vmatpush1.msra.mxu0 0.0
        %4000 = vmatprep.subr.mxu0 0.0
        %4001 = vmatpush1.msra.mxu0 0.0
        %4002 = vmatprep.subr.mxu0 0.0
        %4003 = vmatpush1.msra.mxu0 0.0
        %4004 = vmatprep.subr.mxu0 0.0
        %4005 = vmatpush1.msra.mxu0 0.0
        %4006 = vmatprep.subr.mxu0 0.0
        %4007 = vmatpush1.msra.mxu0 0.0
        %4008 = vmatprep.subr.mxu0 0.0
        %4009 = vmatpush1.msra.mxu0 0.0
        %4010 = vmatprep.subr.mxu0 0.0
        %4011 = vmatpush1.msra.mxu0 0.0
        %4012 = vmatprep.subr.mxu0 0.0
        %4013 = vmatpush1.msra.mxu0 0.0
        %4014 = vmatprep.subr.mxu0 0.0
        %4015 = vmatpush1.msra.mxu0 0.0
        %4016 = vmatprep.subr.mxu0 0.0
        %4017 = vmatpush1.msra.mxu0 0.0
        %4018 = vmatprep.subr.mxu0 0.0
        %4019 = vmatpush1.msra.mxu0 0.0
        %4020 = vmatprep.subr.mxu0 0.0
        %4021 = vmatpush1.msra.mxu0 0.0
        %4022 = vmatprep.subr.mxu0 0.0
        %4023 = vmatpush1.msra.mxu0 0.0
        %4024 = vmatprep.subr.mxu0 0.0
        %4025 = vmatpush1.msra.mxu0 0.0
        %4026 = vmatprep.subr.mxu0 0.0
        %4027 = vmatpush1.msra.mxu0 0.0
        %4028 = vmatprep.subr.mxu0 0.0
        %4029 = vmatpush1.msra.mxu0 0.0
        %4030 = vmatprep.subr.mxu0 0.0
        %4031 = vmatpush1.msra.mxu0 0.0
        %4032 = vmatprep.subr.mxu0 0.0
        %4033 = vmatpush1.msra.mxu0 0.0
        %4034 = vmatprep.subr.mxu0 0.0
        %4035 = vmatpush1.msra.mxu0 0.0
        %4036 = vmatprep.subr.mxu0 0.0
        %4037 = vmatpush1.msra.mxu0 0.0
        %4038 = vmatprep.subr.mxu0 0.0
        %4039 = vmatpush1.msra.mxu0 0.0
        %4040 = vmatprep.mubr.f32.mxu0 0.0
        %4041 = vmatmul.mubr.f32.gmra.mrb[0].mxu0 %v3974
        %v4042 = vpop.f32.mrb[0].mxu0
        %v4043 = vadd.f32 %v3553, %v4042
        %v4044 = vpop.f32.mrb[0].mxu0
        %4045 = vdwg.mxu0
        %v4047 = vrot.slane %v4043, 4
        %v4049 = vadd.f32 %v3548, %v4047
        %v4050 = vsub.f32 0.0, %v4049
        %v4051 = vmul.f32 %v4050, 1.442695
        %v4052 = vpow.pop %v4051
        %v4053 = vadd.f32 %v4052, 1.0
        %v4054 = vrcp.pop %v4053
        %v4055 = vmul.f32 1.0, %v4054
        %4056 = vrot.lane.b32.xlu0 %v4047, 96
        %v4057 = vpop.permute.xlu0 %4056
        %v4059 = vmul.f32 %v4055, %v4057
        %4061 = vrot.lane.b32.xlu0 %v4059, 32
        %v4062 = vpop.permute.xlu0 %4061
        %v4064 = vadd.f32 %v3548, %v4062
        %v4065 = vtanh.pop %v4064
        %v4066 = vsub.f32 1.0, %v4055
        %4068 = vrot.lane.b32.xlu0 %v4065, 112
        %v4069 = vpop.permute.xlu0 %4068
        %v4071 = vmul.f32 %v4066, %v4069
        %v4072 = vrot.slane %v3969, 7
        %v4074 = vmul.f32 %v4055, %v4072
        %v4075 = vadd.f32 %v4071, %v4074
        %v4077 = vrot.slane %v4075, 4
        %4078 = vrot.lane.b32.xlu0 %v4077, 112
        %v4079 = vpop.permute.xlu0 %4078
        %v4080 = vsel %vm941, %v4079, 0
        %4082 = vmatprep.subr.mxu0 0.0
        %4083 = vmatpush1.msra.mxu0 %v3551
        %4084 = vmatprep.subr.mxu0 0.0
        %4085 = vmatpush1.msra.mxu0 %v3552
        %4086 = vmatprep.subr.mxu0 0.0
        %4087 = vmatpush1.msra.mxu0 0.0
        %4088 = vmatprep.subr.mxu0 0.0
        %4089 = vmatpush1.msra.mxu0 0.0
        %4090 = vmatprep.subr.mxu0 0.0
        %4091 = vmatpush1.msra.mxu0 0.0
        %4092 = vmatprep.subr.mxu0 0.0
        %4093 = vmatpush1.msra.mxu0 0.0
        %4094 = vmatprep.subr.mxu0 0.0
        %4095 = vmatpush1.msra.mxu0 0.0
        %4096 = vmatprep.subr.mxu0 0.0
        %4097 = vmatpush1.msra.mxu0 0.0
        %4098 = vmatprep.subr.mxu0 0.0
        %4099 = vmatpush1.msra.mxu0 0.0
        %4100 = vmatprep.subr.mxu0 0.0
        %4101 = vmatpush1.msra.mxu0 0.0
        %4102 = vmatprep.subr.mxu0 0.0
        %4103 = vmatpush1.msra.mxu0 0.0
        %4104 = vmatprep.subr.mxu0 0.0
        %4105 = vmatpush1.msra.mxu0 0.0
        %4106 = vmatprep.subr.mxu0 0.0
        %4107 = vmatpush1.msra.mxu0 0.0
        %4108 = vmatprep.subr.mxu0 0.0
        %4109 = vmatpush1.msra.mxu0 0.0
        %4110 = vmatprep.subr.mxu0 0.0
        %4111 = vmatpush1.msra.mxu0 0.0
        %4112 = vmatprep.subr.mxu0 0.0
        %4113 = vmatpush1.msra.mxu0 0.0
        %4114 = vmatprep.subr.mxu0 0.0
        %4115 = vmatpush1.msra.mxu0 0.0
        %4116 = vmatprep.subr.mxu0 0.0
        %4117 = vmatpush1.msra.mxu0 0.0
        %4118 = vmatprep.subr.mxu0 0.0
        %4119 = vmatpush1.msra.mxu0 0.0
        %4120 = vmatprep.subr.mxu0 0.0
        %4121 = vmatpush1.msra.mxu0 0.0
        %4122 = vmatprep.subr.mxu0 0.0
        %4123 = vmatpush1.msra.mxu0 0.0
        %4124 = vmatprep.subr.mxu0 0.0
        %4125 = vmatpush1.msra.mxu0 0.0
        %4126 = vmatprep.subr.mxu0 0.0
        %4127 = vmatpush1.msra.mxu0 0.0
        %4128 = vmatprep.subr.mxu0 0.0
        %4129 = vmatpush1.msra.mxu0 0.0
        %4130 = vmatprep.subr.mxu0 0.0
        %4131 = vmatpush1.msra.mxu0 0.0
        %4132 = vmatprep.subr.mxu0 0.0
        %4133 = vmatpush1.msra.mxu0 0.0
        %4134 = vmatprep.subr.mxu0 0.0
        %4135 = vmatpush1.msra.mxu0 0.0
        %4136 = vmatprep.subr.mxu0 0.0
        %4137 = vmatpush1.msra.mxu0 0.0
        %4138 = vmatprep.subr.mxu0 0.0
        %4139 = vmatpush1.msra.mxu0 0.0
        %4140 = vmatprep.subr.mxu0 0.0
        %4141 = vmatpush1.msra.mxu0 0.0
        %4142 = vmatprep.subr.mxu0 0.0
        %4143 = vmatpush1.msra.mxu0 0.0
        %4144 = vmatprep.subr.mxu0 0.0
        %4145 = vmatpush1.msra.mxu0 0.0
        %4146 = vmatprep.mubr.f32.mxu0 0.0
        %4147 = vmatmul.mubr.f32.gmra.mrb[0].mxu0 %v4080
        %v4148 = vpop.f32.mrb[0].mxu0
        %v4149 = vadd.f32 %v3553, %v4148
        %v4150 = vpop.f32.mrb[0].mxu0
        %4151 = vdwg.mxu0
        %v4153 = vrot.slane %v4149, 3
        %v4155 = vadd.f32 %v3548, %v4153
        %v4156 = vsub.f32 0.0, %v4155
        %v4157 = vmul.f32 %v4156, 1.442695
        %v4158 = vpow.pop %v4157
        %v4159 = vadd.f32 %v4158, 1.0
        %v4160 = vrcp.pop %v4159
        %v4161 = vmul.f32 1.0, %v4160
        %4162 = vrot.lane.b32.xlu0 %v4153, 96
        %v4163 = vpop.permute.xlu0 %4162
        %v4165 = vmul.f32 %v4161, %v4163
        %4167 = vrot.lane.b32.xlu0 %v4165, 32
        %v4168 = vpop.permute.xlu0 %4167
        %v4170 = vadd.f32 %v3548, %v4168
        %v4171 = vtanh.pop %v4170
        %v4172 = vsub.f32 1.0, %v4161
        %4174 = vrot.lane.b32.xlu0 %v4171, 112
        %v4175 = vpop.permute.xlu0 %4174
        %v4177 = vmul.f32 %v4172, %v4175
        %v4178 = vrot.slane %v4075, 7
        %v4180 = vmul.f32 %v4161, %v4178
        %v4181 = vadd.f32 %v4177, %v4180
        %v4183 = vrot.slane %v4181, 5
        %4184 = vrot.lane.b32.xlu0 %v4183, 112
        %v4185 = vpop.permute.xlu0 %4184
        %v4186 = vsel %vm941, %v4185, 0
        %4188 = vmatprep.subr.mxu0 0.0
        %4189 = vmatpush1.msra.mxu0 %v3551
        %4190 = vmatprep.subr.mxu0 0.0
        %4191 = vmatpush1.msra.mxu0 %v3552
        %4192 = vmatprep.subr.mxu0 0.0
        %4193 = vmatpush1.msra.mxu0 0.0
        %4194 = vmatprep.subr.mxu0 0.0
        %4195 = vmatpush1.msra.mxu0 0.0
        %4196 = vmatprep.subr.mxu0 0.0
        %4197 = vmatpush1.msra.mxu0 0.0
        %4198 = vmatprep.subr.mxu0 0.0
        %4199 = vmatpush1.msra.mxu0 0.0
        %4200 = vmatprep.subr.mxu0 0.0
        %4201 = vmatpush1.msra.mxu0 0.0
        %4202 = vmatprep.subr.mxu0 0.0
        %4203 = vmatpush1.msra.mxu0 0.0
        %4204 = vmatprep.subr.mxu0 0.0
        %4205 = vmatpush1.msra.mxu0 0.0
        %4206 = vmatprep.subr.mxu0 0.0
        %4207 = vmatpush1.msra.mxu0 0.0
        %4208 = vmatprep.subr.mxu0 0.0
        %4209 = vmatpush1.msra.mxu0 0.0
        %4210 = vmatprep.subr.mxu0 0.0
        %4211 = vmatpush1.msra.mxu0 0.0
        %4212 = vmatprep.subr.mxu0 0.0
        %4213 = vmatpush1.msra.mxu0 0.0
        %4214 = vmatprep.subr.mxu0 0.0
        %4215 = vmatpush1.msra.mxu0 0.0
        %4216 = vmatprep.subr.mxu0 0.0
        %4217 = vmatpush1.msra.mxu0 0.0
        %4218 = vmatprep.subr.mxu0 0.0
        %4219 = vmatpush1.msra.mxu0 0.0
        %4220 = vmatprep.subr.mxu0 0.0
        %4221 = vmatpush1.msra.mxu0 0.0
        %4222 = vmatprep.subr.mxu0 0.0
        %4223 = vmatpush1.msra.mxu0 0.0
        %4224 = vmatprep.subr.mxu0 0.0
        %4225 = vmatpush1.msra.mxu0 0.0
        %4226 = vmatprep.subr.mxu0 0.0
        %4227 = vmatpush1.msra.mxu0 0.0
        %4228 = vmatprep.subr.mxu0 0.0
        %4229 = vmatpush1.msra.mxu0 0.0
        %4230 = vmatprep.subr.mxu0 0.0
        %4231 = vmatpush1.msra.mxu0 0.0
        %4232 = vmatprep.subr.mxu0 0.0
        %4233 = vmatpush1.msra.mxu0 0.0
        %4234 = vmatprep.subr.mxu0 0.0
        %4235 = vmatpush1.msra.mxu0 0.0
        %4236 = vmatprep.subr.mxu0 0.0
        %4237 = vmatpush1.msra.mxu0 0.0
        %4238 = vmatprep.subr.mxu0 0.0
        %4239 = vmatpush1.msra.mxu0 0.0
        %4240 = vmatprep.subr.mxu0 0.0
        %4241 = vmatpush1.msra.mxu0 0.0
        %4242 = vmatprep.subr.mxu0 0.0
        %4243 = vmatpush1.msra.mxu0 0.0
        %4244 = vmatprep.subr.mxu0 0.0
        %4245 = vmatpush1.msra.mxu0 0.0
        %4246 = vmatprep.subr.mxu0 0.0
        %4247 = vmatpush1.msra.mxu0 0.0
        %4248 = vmatprep.subr.mxu0 0.0
        %4249 = vmatpush1.msra.mxu0 0.0
        %4250 = vmatprep.subr.mxu0 0.0
        %4251 = vmatpush1.msra.mxu0 0.0
        %4252 = vmatprep.mubr.f32.mxu0 0.0
        %4253 = vmatmul.mubr.f32.gmra.mrb[0].mxu0 %v4186
        %v4254 = vpop.f32.mrb[0].mxu0
        %v4255 = vadd.f32 %v3553, %v4254
        %v4256 = vpop.f32.mrb[0].mxu0
        %4257 = vdwg.mxu0
        %v4259 = vrot.slane %v4255, 2
        %v4261 = vadd.f32 %v3548, %v4259
        %v4262 = vsub.f32 0.0, %v4261
        %v4263 = vmul.f32 %v4262, 1.442695
        %v4264 = vpow.pop %v4263
        %v4265 = vadd.f32 %v4264, 1.0
        %v4266 = vrcp.pop %v4265
        %v4267 = vmul.f32 1.0, %v4266
        %4268 = vrot.lane.b32.xlu0 %v4259, 96
        %v4269 = vpop.permute.xlu0 %4268
        %v4271 = vmul.f32 %v4267, %v4269
        %4273 = vrot.lane.b32.xlu0 %v4271, 32
        %v4274 = vpop.permute.xlu0 %4273
        %v4276 = vadd.f32 %v3548, %v4274
        %v4277 = vtanh.pop %v4276
        %v4278 = vsub.f32 1.0, %v4267
        %4280 = vrot.lane.b32.xlu0 %v4277, 112
        %v4281 = vpop.permute.xlu0 %4280
        %v4283 = vmul.f32 %v4278, %v4281
        %v4284 = vrot.slane %v4181, 7
        %v4286 = vmul.f32 %v4267, %v4284
        %v4287 = vadd.f32 %v4283, %v4286
        %v4289 = vrot.slane %v4287, 6
        %4290 = vrot.lane.b32.xlu0 %v4289, 112
        %v4291 = vpop.permute.xlu0 %4290
        %v4292 = vsel %vm941, %v4291, 0
        %4294 = vmatprep.subr.mxu0 0.0
        %4295 = vmatpush1.msra.mxu0 %v3551
        %4296 = vmatprep.subr.mxu0 0.0
        %4297 = vmatpush1.msra.mxu0 %v3552
        %4298 = vmatprep.subr.mxu0 0.0
        %4299 = vmatpush1.msra.mxu0 0.0
        %4300 = vmatprep.subr.mxu0 0.0
        %4301 = vmatpush1.msra.mxu0 0.0
        %4302 = vmatprep.subr.mxu0 0.0
        %4303 = vmatpush1.msra.mxu0 0.0
        %4304 = vmatprep.subr.mxu0 0.0
        %4305 = vmatpush1.msra.mxu0 0.0
        %4306 = vmatprep.subr.mxu0 0.0
        %4307 = vmatpush1.msra.mxu0 0.0
        %4308 = vmatprep.subr.mxu0 0.0
        %4309 = vmatpush1.msra.mxu0 0.0
        %4310 = vmatprep.subr.mxu0 0.0
        %4311 = vmatpush1.msra.mxu0 0.0
        %4312 = vmatprep.subr.mxu0 0.0
        %4313 = vmatpush1.msra.mxu0 0.0
        %4314 = vmatprep.subr.mxu0 0.0
        %4315 = vmatpush1.msra.mxu0 0.0
        %4316 = vmatprep.subr.mxu0 0.0
        %4317 = vmatpush1.msra.mxu0 0.0
        %4318 = vmatprep.subr.mxu0 0.0
        %4319 = vmatpush1.msra.mxu0 0.0
        %4320 = vmatprep.subr.mxu0 0.0
        %4321 = vmatpush1.msra.mxu0 0.0
        %4322 = vmatprep.subr.mxu0 0.0
        %4323 = vmatpush1.msra.mxu0 0.0
        %4324 = vmatprep.subr.mxu0 0.0
        %4325 = vmatpush1.msra.mxu0 0.0
        %4326 = vmatprep.subr.mxu0 0.0
        %4327 = vmatpush1.msra.mxu0 0.0
        %4328 = vmatprep.subr.mxu0 0.0
        %4329 = vmatpush1.msra.mxu0 0.0
        %4330 = vmatprep.subr.mxu0 0.0
        %4331 = vmatpush1.msra.mxu0 0.0
        %4332 = vmatprep.subr.mxu0 0.0
        %4333 = vmatpush1.msra.mxu0 0.0
        %4334 = vmatprep.subr.mxu0 0.0
        %4335 = vmatpush1.msra.mxu0 0.0
        %4336 = vmatprep.subr.mxu0 0.0
        %4337 = vmatpush1.msra.mxu0 0.0
        %4338 = vmatprep.subr.mxu0 0.0
        %4339 = vmatpush1.msra.mxu0 0.0
        %4340 = vmatprep.subr.mxu0 0.0
        %4341 = vmatpush1.msra.mxu0 0.0
        %4342 = vmatprep.subr.mxu0 0.0
        %4343 = vmatpush1.msra.mxu0 0.0
        %4344 = vmatprep.subr.mxu0 0.0
        %4345 = vmatpush1.msra.mxu0 0.0
        %4346 = vmatprep.subr.mxu0 0.0
        %4347 = vmatpush1.msra.mxu0 0.0
        %4348 = vmatprep.subr.mxu0 0.0
        %4349 = vmatpush1.msra.mxu0 0.0
        %4350 = vmatprep.subr.mxu0 0.0
        %4351 = vmatpush1.msra.mxu0 0.0
        %4352 = vmatprep.subr.mxu0 0.0
        %4353 = vmatpush1.msra.mxu0 0.0
        %4354 = vmatprep.subr.mxu0 0.0
        %4355 = vmatpush1.msra.mxu0 0.0
        %4356 = vmatprep.subr.mxu0 0.0
        %4357 = vmatpush1.msra.mxu0 0.0
        %4358 = vmatprep.mubr.f32.mxu0 0.0
        %4359 = vmatmul.mubr.f32.gmra.mrb[0].mxu0 %v4292
        %v4360 = vpop.f32.mrb[0].mxu0
        %v4361 = vadd.f32 %v3553, %v4360
        %v4362 = vpop.f32.mrb[0].mxu0
        %4363 = vdwg.mxu0
        %v4365 = vrot.slane %v4361, 1
        %v4367 = vadd.f32 %v3548, %v4365
        %v4368 = vsub.f32 0.0, %v4367
        %v4369 = vmul.f32 %v4368, 1.442695
        %v4370 = vpow.pop %v4369
        %v4371 = vadd.f32 %v4370, 1.0
        %v4372 = vrcp.pop %v4371
        %v4373 = vmul.f32 1.0, %v4372
        %4374 = vrot.lane.b32.xlu0 %v4365, 96
        %v4375 = vpop.permute.xlu0 %4374
        %v4377 = vmul.f32 %v4373, %v4375
        %4379 = vrot.lane.b32.xlu0 %v4377, 32
        %v4380 = vpop.permute.xlu0 %4379
        %v4382 = vadd.f32 %v3548, %v4380
        %v4383 = vtanh.pop %v4382
        %v4384 = vsub.f32 1.0, %v4373
        %4386 = vrot.lane.b32.xlu0 %v4383, 112
        %v4387 = vpop.permute.xlu0 %4386
        %v4389 = vmul.f32 %v4384, %v4387
        %v4390 = vrot.slane %v4287, 7
        %v4392 = vmul.f32 %v4373, %v4390
        %v4393 = vadd.f32 %v4389, %v4392
        %v4394 = vsel %vm3356, %v3652, %v3757
        %v4395 = vsel %vm3218, %v4394, %v3863
        %vm4396 = vcmask 1042432
        %v4397 = vsel %vm4396, %v4395, %v3969
        %v4398 = vsel %vm3244, %v4397, %v4075
        %v4399 = vsel %vm3237, %v4398, %v4181
        %v4400 = vsel %vm3230, %v4399, %v4287
        %v4401 = vsel %vm3223, %v4400, %v4393
        %s4402 = scalar_lea.vmem %s39, 32
        %v4403 = vld [vmem:[%s4402] sm:$0xff]
        %v4404 = vld [vmem:[%s4402 + $0x8] sm:$0xff]
        %v4405 = vld [vmem:[%s4402 + $0x10] sm:$0xff]
        %v4406 = vld [vmem:[%s4402 + $0x18] sm:$0xff]
        %s4407 = scalar_lea.vmem %s43, 1
        %v4408 = vld [vmem:[%s4407] sm:$0x1]
        %v4410 = vlaneseq
        %v4411 = vshrl.u32 %v4410, 7
        %v4412 = vsub.s32 0, %v4411
        %v4413 = vrot.slane %v4408, %v4412
        %4415 = vmatprep.subr.mxu0 0.0
        %4416 = vmatpush1.msra.mxu0 %v4403
        %4417 = vmatprep.subr.mxu0 0.0
        %4418 = vmatpush1.msra.mxu0 %v4404
        %4419 = vmatprep.subr.mxu0 0.0
        %4420 = vmatpush1.msra.mxu0 %v4405
        %4421 = vmatprep.subr.mxu0 0.0
        %4422 = vmatpush1.msra.mxu0 %v4406
        %4423 = vmatprep.subr.mxu0 0.0
        %4424 = vmatpush1.msra.mxu0 0.0
        %4425 = vmatprep.subr.mxu0 0.0
        %4426 = vmatpush1.msra.mxu0 0.0
        %4427 = vmatprep.subr.mxu0 0.0
        %4428 = vmatpush1.msra.mxu0 0.0
        %4429 = vmatprep.subr.mxu0 0.0
        %4430 = vmatpush1.msra.mxu0 0.0
        %4431 = vmatprep.subr.mxu0 0.0
        %4432 = vmatpush1.msra.mxu0 0.0
        %4433 = vmatprep.subr.mxu0 0.0
        %4434 = vmatpush1.msra.mxu0 0.0
        %4435 = vmatprep.subr.mxu0 0.0
        %4436 = vmatpush1.msra.mxu0 0.0
        %4437 = vmatprep.subr.mxu0 0.0
        %4438 = vmatpush1.msra.mxu0 0.0
        %4439 = vmatprep.subr.mxu0 0.0
        %4440 = vmatpush1.msra.mxu0 0.0
        %4441 = vmatprep.subr.mxu0 0.0
        %4442 = vmatpush1.msra.mxu0 0.0
        %4443 = vmatprep.subr.mxu0 0.0
        %4444 = vmatpush1.msra.mxu0 0.0
        %4445 = vmatprep.subr.mxu0 0.0
        %4446 = vmatpush1.msra.mxu0 0.0
        %4447 = vmatprep.subr.mxu0 0.0
        %4448 = vmatpush1.msra.mxu0 0.0
        %4449 = vmatprep.subr.mxu0 0.0
        %4450 = vmatpush1.msra.mxu0 0.0
        %4451 = vmatprep.subr.mxu0 0.0
        %4452 = vmatpush1.msra.mxu0 0.0
        %4453 = vmatprep.subr.mxu0 0.0
        %4454 = vmatpush1.msra.mxu0 0.0
        %4455 = vmatprep.subr.mxu0 0.0
        %4456 = vmatpush1.msra.mxu0 0.0
        %4457 = vmatprep.subr.mxu0 0.0
        %4458 = vmatpush1.msra.mxu0 0.0
        %4459 = vmatprep.subr.mxu0 0.0
        %4460 = vmatpush1.msra.mxu0 0.0
        %4461 = vmatprep.subr.mxu0 0.0
        %4462 = vmatpush1.msra.mxu0 0.0
        %4463 = vmatprep.subr.mxu0 0.0
        %4464 = vmatpush1.msra.mxu0 0.0
        %4465 = vmatprep.subr.mxu0 0.0
        %4466 = vmatpush1.msra.mxu0 0.0
        %4467 = vmatprep.subr.mxu0 0.0
        %4468 = vmatpush1.msra.mxu0 0.0
        %4469 = vmatprep.subr.mxu0 0.0
        %4470 = vmatpush1.msra.mxu0 0.0
        %4471 = vmatprep.subr.mxu0 0.0
        %4472 = vmatpush1.msra.mxu0 0.0
        %4473 = vmatprep.subr.mxu0 0.0
        %4474 = vmatpush1.msra.mxu0 0.0
        %4475 = vmatprep.subr.mxu0 0.0
        %4476 = vmatpush1.msra.mxu0 0.0
        %4477 = vmatprep.subr.mxu0 0.0
        %4478 = vmatpush1.msra.mxu0 0.0
        %4479 = vmatprep.mubr.f32.mxu0 0.0
        %4480 = vmatmul.mubr.f32.gmra.mrb[0].mxu0 %v3479
        %v4481 = vpop.f32.mrb[0].mxu0
        %v4482 = vadd.f32 %v4413, %v4481
        %v4483 = vpop.f32.mrb[0].mxu0
        %4484 = vdwg.mxu0
        %s4485 = scalar_lea.vmem %s41, 16
        %v4486 = vld [vmem:[%s4485] sm:$0xff]
        %v4487 = vld [vmem:[%s4485 + $0x8] sm:$0xff]
        %s4488 = scalar_lea.vmem %s45, 1
        %v4489 = vld [vmem:[%s4488] sm:$0x1]
        %4490 = vmatprep.subr.mxu0 0.0
        %4491 = vmatpush1.msra.mxu0 %v4486
        %4492 = vmatprep.subr.mxu0 0.0
        %4493 = vmatpush1.msra.mxu0 %v4487
        %4494 = vmatprep.subr.mxu0 0.0
        %4495 = vmatpush1.msra.mxu0 0.0
        %4496 = vmatprep.subr.mxu0 0.0
        %4497 = vmatpush1.msra.mxu0 0.0
        %4498 = vmatprep.subr.mxu0 0.0
        %4499 = vmatpush1.msra.mxu0 0.0
        %4500 = vmatprep.subr.mxu0 0.0
        %4501 = vmatpush1.msra.mxu0 0.0
        %4502 = vmatprep.subr.mxu0 0.0
        %4503 = vmatpush1.msra.mxu0 0.0
        %4504 = vmatprep.subr.mxu0 0.0
        %4505 = vmatpush1.msra.mxu0 0.0
        %4506 = vmatprep.subr.mxu0 0.0
        %4507 = vmatpush1.msra.mxu0 0.0
        %4508 = vmatprep.subr.mxu0 0.0
        %4509 = vmatpush1.msra.mxu0 0.0
        %4510 = vmatprep.subr.mxu0 0.0
        %4511 = vmatpush1.msra.mxu0 0.0
        %4512 = vmatprep.subr.mxu0 0.0
        %4513 = vmatpush1.msra.mxu0 0.0
        %4514 = vmatprep.subr.mxu0 0.0
        %4515 = vmatpush1.msra.mxu0 0.0
        %4516 = vmatprep.subr.mxu0 0.0
        %4517 = vmatpush1.msra.mxu0 0.0
        %4518 = vmatprep.subr.mxu0 0.0
        %4519 = vmatpush1.msra.mxu0 0.0
        %4520 = vmatprep.subr.mxu0 0.0
        %4521 = vmatpush1.msra.mxu0 0.0
        %4522 = vmatprep.subr.mxu0 0.0
        %4523 = vmatpush1.msra.mxu0 0.0
        %4524 = vmatprep.subr.mxu0 0.0
        %4525 = vmatpush1.msra.mxu0 0.0
        %4526 = vmatprep.subr.mxu0 0.0
        %4527 = vmatpush1.msra.mxu0 0.0
        %4528 = vmatprep.subr.mxu0 0.0
        %4529 = vmatpush1.msra.mxu0 0.0
        %4530 = vmatprep.subr.mxu0 0.0
        %4531 = vmatpush1.msra.mxu0 0.0
        %4532 = vmatprep.subr.mxu0 0.0
        %4533 = vmatpush1.msra.mxu0 0.0
        %4534 = vmatprep.subr.mxu0 0.0
        %4535 = vmatpush1.msra.mxu0 0.0
        %4536 = vmatprep.subr.mxu0 0.0
        %4537 = vmatpush1.msra.mxu0 0.0
        %4538 = vmatprep.subr.mxu0 0.0
        %4539 = vmatpush1.msra.mxu0 0.0
        %4540 = vmatprep.subr.mxu0 0.0
        %4541 = vmatpush1.msra.mxu0 0.0
        %4542 = vmatprep.subr.mxu0 0.0
        %4543 = vmatpush1.msra.mxu0 0.0
        %4544 = vmatprep.subr.mxu0 0.0
        %4545 = vmatpush1.msra.mxu0 0.0
        %4546 = vmatprep.subr.mxu0 0.0
        %4547 = vmatpush1.msra.mxu0 0.0
        %4548 = vmatprep.subr.mxu0 0.0
        %4549 = vmatpush1.msra.mxu0 0.0
        %4550 = vmatprep.subr.mxu0 0.0
        %4551 = vmatpush1.msra.mxu0 0.0
        %4552 = vmatprep.subr.mxu0 0.0
        %4553 = vmatpush1.msra.mxu0 0.0
        %4554 = vmatprep.mubr.f32.mxu0 0.0
        %4555 = vmatmul.mubr.f32.gmra.mrb[0].mxu0 %v3555
        %v4556 = vpop.f32.mrb[0].mxu0
        %v4557 = vadd.f32 %v4489, %v4556
        %v4558 = vpop.f32.mrb[0].mxu0
        %4559 = vdwg.mxu0
        %v4561 = vrot.slane %v4557, 1
        %v4563 = vadd.f32 %v4482, %v4561
        %v4564 = vsub.f32 0.0, %v4563
        %v4565 = vmul.f32 %v4564, 1.442695
        %v4566 = vpow.pop %v4565
        %v4567 = vadd.f32 %v4566, 1.0
        %v4568 = vrcp.pop %v4567
        %v4569 = vmul.f32 1.0, %v4568
        %4570 = vrot.lane.b32.xlu0 %v4561, 96
        %v4571 = vpop.permute.xlu0 %4570
        %v4573 = vmul.f32 %v4569, %v4571
        %4575 = vrot.lane.b32.xlu0 %v4573, 32
        %v4576 = vpop.permute.xlu0 %4575
        %v4578 = vadd.f32 %v4482, %v4576
        %v4579 = vtanh.pop %v4578
        %v4580 = vsub.f32 1.0, %v4569
        %4582 = vrot.lane.b32.xlu0 %v4579, 112
        %v4583 = vpop.permute.xlu0 %4582
        %v4585 = vmul.f32 %v4580, %v4583
        %v4586 = vmul.f32 %v4569, 0.0
        %v4587 = vadd.f32 %v4585, %v4586
        %v4589 = vrot.slane %v4587, 7
        %4590 = vrot.lane.b32.xlu0 %v4589, 112
        %v4591 = vpop.permute.xlu0 %4590
        %v4592 = vsel %vm941, %v4591, 0
        %4594 = vmatprep.subr.mxu0 0.0
        %4595 = vmatpush1.msra.mxu0 %v4486
        %4596 = vmatprep.subr.mxu0 0.0
        %4597 = vmatpush1.msra.mxu0 %v4487
        %4598 = vmatprep.subr.mxu0 0.0
        %4599 = vmatpush1.msra.mxu0 0.0
        %4600 = vmatprep.subr.mxu0 0.0
        %4601 = vmatpush1.msra.mxu0 0.0
        %4602 = vmatprep.subr.mxu0 0.0
        %4603 = vmatpush1.msra.mxu0 0.0
        %4604 = vmatprep.subr.mxu0 0.0
        %4605 = vmatpush1.msra.mxu0 0.0
        %4606 = vmatprep.subr.mxu0 0.0
        %4607 = vmatpush1.msra.mxu0 0.0
        %4608 = vmatprep.subr.mxu0 0.0
        %4609 = vmatpush1.msra.mxu0 0.0
        %4610 = vmatprep.subr.mxu0 0.0
        %4611 = vmatpush1.msra.mxu0 0.0
        %4612 = vmatprep.subr.mxu0 0.0
        %4613 = vmatpush1.msra.mxu0 0.0
        %4614 = vmatprep.subr.mxu0 0.0
        %4615 = vmatpush1.msra.mxu0 0.0
        %4616 = vmatprep.subr.mxu0 0.0
        %4617 = vmatpush1.msra.mxu0 0.0
        %4618 = vmatprep.subr.mxu0 0.0
        %4619 = vmatpush1.msra.mxu0 0.0
        %4620 = vmatprep.subr.mxu0 0.0
        %4621 = vmatpush1.msra.mxu0 0.0
        %4622 = vmatprep.subr.mxu0 0.0
        %4623 = vmatpush1.msra.mxu0 0.0
        %4624 = vmatprep.subr.mxu0 0.0
        %4625 = vmatpush1.msra.mxu0 0.0
        %4626 = vmatprep.subr.mxu0 0.0
        %4627 = vmatpush1.msra.mxu0 0.0
        %4628 = vmatprep.subr.mxu0 0.0
        %4629 = vmatpush1.msra.mxu0 0.0
        %4630 = vmatprep.subr.mxu0 0.0
        %4631 = vmatpush1.msra.mxu0 0.0
        %4632 = vmatprep.subr.mxu0 0.0
        %4633 = vmatpush1.msra.mxu0 0.0
        %4634 = vmatprep.subr.mxu0 0.0
        %4635 = vmatpush1.msra.mxu0 0.0
        %4636 = vmatprep.subr.mxu0 0.0
        %4637 = vmatpush1.msra.mxu0 0.0
        %4638 = vmatprep.subr.mxu0 0.0
        %4639 = vmatpush1.msra.mxu0 0.0
        %4640 = vmatprep.subr.mxu0 0.0
        %4641 = vmatpush1.msra.mxu0 0.0
        %4642 = vmatprep.subr.mxu0 0.0
        %4643 = vmatpush1.msra.mxu0 0.0
        %4644 = vmatprep.subr.mxu0 0.0
        %4645 = vmatpush1.msra.mxu0 0.0
        %4646 = vmatprep.subr.mxu0 0.0
        %4647 = vmatpush1.msra.mxu0 0.0
        %4648 = vmatprep.subr.mxu0 0.0
        %4649 = vmatpush1.msra.mxu0 0.0
        %4650 = vmatprep.subr.mxu0 0.0
        %4651 = vmatpush1.msra.mxu0 0.0
        %4652 = vmatprep.subr.mxu0 0.0
        %4653 = vmatpush1.msra.mxu0 0.0
        %4654 = vmatprep.subr.mxu0 0.0
        %4655 = vmatpush1.msra.mxu0 0.0
        %4656 = vmatprep.subr.mxu0 0.0
        %4657 = vmatpush1.msra.mxu0 0.0
        %4658 = vmatprep.mubr.f32.mxu0 0.0
        %4659 = vmatmul.mubr.f32.gmra.mrb[0].mxu0 %v4592
        %v4660 = vpop.f32.mrb[0].mxu0
        %v4661 = vadd.f32 %v4489, %v4660
        %v4662 = vpop.f32.mrb[0].mxu0
        %4663 = vdwg.mxu0
        %v4665 = vrot.slane %v4661, 2
        %v4667 = vadd.f32 %v4482, %v4665
        %v4668 = vsub.f32 0.0, %v4667
        %v4669 = vmul.f32 %v4668, 1.442695
        %v4670 = vpow.pop %v4669
        %v4671 = vadd.f32 %v4670, 1.0
        %v4672 = vrcp.pop %v4671
        %v4673 = vmul.f32 1.0, %v4672
        %4674 = vrot.lane.b32.xlu0 %v4665, 96
        %v4675 = vpop.permute.xlu0 %4674
        %v4677 = vmul.f32 %v4673, %v4675
        %4679 = vrot.lane.b32.xlu0 %v4677, 32
        %v4680 = vpop.permute.xlu0 %4679
        %v4682 = vadd.f32 %v4482, %v4680
        %v4683 = vtanh.pop %v4682
        %v4684 = vsub.f32 1.0, %v4673
        %4686 = vrot.lane.b32.xlu0 %v4683, 112
        %v4687 = vpop.permute.xlu0 %4686
        %v4689 = vmul.f32 %v4684, %v4687
        %v4690 = vrot.slane %v4587, 1
        %v4692 = vmul.f32 %v4673, %v4690
        %v4693 = vadd.f32 %v4689, %v4692
        %v4695 = vrot.slane %v4693, 6
        %4696 = vrot.lane.b32.xlu0 %v4695, 112
        %v4697 = vpop.permute.xlu0 %4696
        %v4698 = vsel %vm941, %v4697, 0
        %4700 = vmatprep.subr.mxu0 0.0
        %4701 = vmatpush1.msra.mxu0 %v4486
        %4702 = vmatprep.subr.mxu0 0.0
        %4703 = vmatpush1.msra.mxu0 %v4487
        %4704 = vmatprep.subr.mxu0 0.0
        %4705 = vmatpush1.msra.mxu0 0.0
        %4706 = vmatprep.subr.mxu0 0.0
        %4707 = vmatpush1.msra.mxu0 0.0
        %4708 = vmatprep.subr.mxu0 0.0
        %4709 = vmatpush1.msra.mxu0 0.0
        %4710 = vmatprep.subr.mxu0 0.0
        %4711 = vmatpush1.msra.mxu0 0.0
        %4712 = vmatprep.subr.mxu0 0.0
        %4713 = vmatpush1.msra.mxu0 0.0
        %4714 = vmatprep.subr.mxu0 0.0
        %4715 = vmatpush1.msra.mxu0 0.0
        %4716 = vmatprep.subr.mxu0 0.0
        %4717 = vmatpush1.msra.mxu0 0.0
        %4718 = vmatprep.subr.mxu0 0.0
        %4719 = vmatpush1.msra.mxu0 0.0
        %4720 = vmatprep.subr.mxu0 0.0
        %4721 = vmatpush1.msra.mxu0 0.0
        %4722 = vmatprep.subr.mxu0 0.0
        %4723 = vmatpush1.msra.mxu0 0.0
        %4724 = vmatprep.subr.mxu0 0.0
        %4725 = vmatpush1.msra.mxu0 0.0
        %4726 = vmatprep.subr.mxu0 0.0
        %4727 = vmatpush1.msra.mxu0 0.0
        %4728 = vmatprep.subr.mxu0 0.0
        %4729 = vmatpush1.msra.mxu0 0.0
        %4730 = vmatprep.subr.mxu0 0.0
        %4731 = vmatpush1.msra.mxu0 0.0
        %4732 = vmatprep.subr.mxu0 0.0
        %4733 = vmatpush1.msra.mxu0 0.0
        %4734 = vmatprep.subr.mxu0 0.0
        %4735 = vmatpush1.msra.mxu0 0.0
        %4736 = vmatprep.subr.mxu0 0.0
        %4737 = vmatpush1.msra.mxu0 0.0
        %4738 = vmatprep.subr.mxu0 0.0
        %4739 = vmatpush1.msra.mxu0 0.0
        %4740 = vmatprep.subr.mxu0 0.0
        %4741 = vmatpush1.msra.mxu0 0.0
        %4742 = vmatprep.subr.mxu0 0.0
        %4743 = vmatpush1.msra.mxu0 0.0
        %4744 = vmatprep.subr.mxu0 0.0
        %4745 = vmatpush1.msra.mxu0 0.0
        %4746 = vmatprep.subr.mxu0 0.0
        %4747 = vmatpush1.msra.mxu0 0.0
        %4748 = vmatprep.subr.mxu0 0.0
        %4749 = vmatpush1.msra.mxu0 0.0
        %4750 = vmatprep.subr.mxu0 0.0
        %4751 = vmatpush1.msra.mxu0 0.0
        %4752 = vmatprep.subr.mxu0 0.0
        %4753 = vmatpush1.msra.mxu0 0.0
        %4754 = vmatprep.subr.mxu0 0.0
        %4755 = vmatpush1.msra.mxu0 0.0
        %4756 = vmatprep.subr.mxu0 0.0
        %4757 = vmatpush1.msra.mxu0 0.0
        %4758 = vmatprep.subr.mxu0 0.0
        %4759 = vmatpush1.msra.mxu0 0.0
        %4760 = vmatprep.subr.mxu0 0.0
        %4761 = vmatpush1.msra.mxu0 0.0
        %4762 = vmatprep.subr.mxu0 0.0
        %4763 = vmatpush1.msra.mxu0 0.0
        %4764 = vmatprep.mubr.f32.mxu0 0.0
        %4765 = vmatmul.mubr.f32.gmra.mrb[0].mxu0 %v4698
        %v4766 = vpop.f32.mrb[0].mxu0
        %v4767 = vadd.f32 %v4489, %v4766
        %v4768 = vpop.f32.mrb[0].mxu0
        %4769 = vdwg.mxu0
        %v4771 = vrot.slane %v4767, 3
        %v4773 = vadd.f32 %v4482, %v4771
        %v4774 = vsub.f32 0.0, %v4773
        %v4775 = vmul.f32 %v4774, 1.442695
        %v4776 = vpow.pop %v4775
        %v4777 = vadd.f32 %v4776, 1.0
        %v4778 = vrcp.pop %v4777
        %v4779 = vmul.f32 1.0, %v4778
        %4780 = vrot.lane.b32.xlu0 %v4771, 96
        %v4781 = vpop.permute.xlu0 %4780
        %v4783 = vmul.f32 %v4779, %v4781
        %4785 = vrot.lane.b32.xlu0 %v4783, 32
        %v4786 = vpop.permute.xlu0 %4785
        %v4788 = vadd.f32 %v4482, %v4786
        %v4789 = vtanh.pop %v4788
        %v4790 = vsub.f32 1.0, %v4779
        %4792 = vrot.lane.b32.xlu0 %v4789, 112
        %v4793 = vpop.permute.xlu0 %4792
        %v4795 = vmul.f32 %v4790, %v4793
        %v4796 = vrot.slane %v4693, 1
        %v4798 = vmul.f32 %v4779, %v4796
        %v4799 = vadd.f32 %v4795, %v4798
        %v4801 = vrot.slane %v4799, 5
        %4802 = vrot.lane.b32.xlu0 %v4801, 112
        %v4803 = vpop.permute.xlu0 %4802
        %v4804 = vsel %vm941, %v4803, 0
        %4806 = vmatprep.subr.mxu0 0.0
        %4807 = vmatpush1.msra.mxu0 %v4486
        %4808 = vmatprep.subr.mxu0 0.0
        %4809 = vmatpush1.msra.mxu0 %v4487
        %4810 = vmatprep.subr.mxu0 0.0
        %4811 = vmatpush1.msra.mxu0 0.0
        %4812 = vmatprep.subr.mxu0 0.0
        %4813 = vmatpush1.msra.mxu0 0.0
        %4814 = vmatprep.subr.mxu0 0.0
        %4815 = vmatpush1.msra.mxu0 0.0
        %4816 = vmatprep.subr.mxu0 0.0
        %4817 = vmatpush1.msra.mxu0 0.0
        %4818 = vmatprep.subr.mxu0 0.0
        %4819 = vmatpush1.msra.mxu0 0.0
        %4820 = vmatprep.subr.mxu0 0.0
        %4821 = vmatpush1.msra.mxu0 0.0
        %4822 = vmatprep.subr.mxu0 0.0
        %4823 = vmatpush1.msra.mxu0 0.0
        %4824 = vmatprep.subr.mxu0 0.0
        %4825 = vmatpush1.msra.mxu0 0.0
        %4826 = vmatprep.subr.mxu0 0.0
        %4827 = vmatpush1.msra.mxu0 0.0
        %4828 = vmatprep.subr.mxu0 0.0
        %4829 = vmatpush1.msra.mxu0 0.0
        %4830 = vmatprep.subr.mxu0 0.0
        %4831 = vmatpush1.msra.mxu0 0.0
        %4832 = vmatprep.subr.mxu0 0.0
        %4833 = vmatpush1.msra.mxu0 0.0
        %4834 = vmatprep.subr.mxu0 0.0
        %4835 = vmatpush1.msra.mxu0 0.0
        %4836 = vmatprep.subr.mxu0 0.0
        %4837 = vmatpush1.msra.mxu0 0.0
        %4838 = vmatprep.subr.mxu0 0.0
        %4839 = vmatpush1.msra.mxu0 0.0
        %4840 = vmatprep.subr.mxu0 0.0
        %4841 = vmatpush1.msra.mxu0 0.0
        %4842 = vmatprep.subr.mxu0 0.0
        %4843 = vmatpush1.msra.mxu0 0.0
        %4844 = vmatprep.subr.mxu0 0.0
        %4845 = vmatpush1.msra.mxu0 0.0
        %4846 = vmatprep.subr.mxu0 0.0
        %4847 = vmatpush1.msra.mxu0 0.0
        %4848 = vmatprep.subr.mxu0 0.0
        %4849 = vmatpush1.msra.mxu0 0.0
        %4850 = vmatprep.subr.mxu0 0.0
        %4851 = vmatpush1.msra.mxu0 0.0
        %4852 = vmatprep.subr.mxu0 0.0
        %4853 = vmatpush1.msra.mxu0 0.0
        %4854 = vmatprep.subr.mxu0 0.0
        %4855 = vmatpush1.msra.mxu0 0.0
        %4856 = vmatprep.subr.mxu0 0.0
        %4857 = vmatpush1.msra.mxu0 0.0
        %4858 = vmatprep.subr.mxu0 0.0
        %4859 = vmatpush1.msra.mxu0 0.0
        %4860 = vmatprep.subr.mxu0 0.0
        %4861 = vmatpush1.msra.mxu0 0.0
        %4862 = vmatprep.subr.mxu0 0.0
        %4863 = vmatpush1.msra.mxu0 0.0
        %4864 = vmatprep.subr.mxu0 0.0
        %4865 = vmatpush1.msra.mxu0 0.0
        %4866 = vmatprep.subr.mxu0 0.0
        %4867 = vmatpush1.msra.mxu0 0.0
        %4868 = vmatprep.subr.mxu0 0.0
        %4869 = vmatpush1.msra.mxu0 0.0
        %4870 = vmatprep.mubr.f32.mxu0 0.0
        %4871 = vmatmul.mubr.f32.gmra.mrb[0].mxu0 %v4804
        %v4872 = vpop.f32.mrb[0].mxu0
        %v4873 = vadd.f32 %v4489, %v4872
        %v4874 = vpop.f32.mrb[0].mxu0
        %4875 = vdwg.mxu0
        %v4877 = vrot.slane %v4873, 4
        %v4879 = vadd.f32 %v4482, %v4877
        %v4880 = vsub.f32 0.0, %v4879
        %v4881 = vmul.f32 %v4880, 1.442695
        %v4882 = vpow.pop %v4881
        %v4883 = vadd.f32 %v4882, 1.0
        %v4884 = vrcp.pop %v4883
        %v4885 = vmul.f32 1.0, %v4884
        %4886 = vrot.lane.b32.xlu0 %v4877, 96
        %v4887 = vpop.permute.xlu0 %4886
        %v4889 = vmul.f32 %v4885, %v4887
        %4891 = vrot.lane.b32.xlu0 %v4889, 32
        %v4892 = vpop.permute.xlu0 %4891
        %v4894 = vadd.f32 %v4482, %v4892
        %v4895 = vtanh.pop %v4894
        %v4896 = vsub.f32 1.0, %v4885
        %4898 = vrot.lane.b32.xlu0 %v4895, 112
        %v4899 = vpop.permute.xlu0 %4898
        %v4901 = vmul.f32 %v4896, %v4899
        %v4902 = vrot.slane %v4799, 1
        %v4904 = vmul.f32 %v4885, %v4902
        %v4905 = vadd.f32 %v4901, %v4904
        %v4907 = vrot.slane %v4905, 4
        %4908 = vrot.lane.b32.xlu0 %v4907, 112
        %v4909 = vpop.permute.xlu0 %4908
        %v4910 = vsel %vm941, %v4909, 0
        %4912 = vmatprep.subr.mxu0 0.0
        %4913 = vmatpush1.msra.mxu0 %v4486
        %4914 = vmatprep.subr.mxu0 0.0
        %4915 = vmatpush1.msra.mxu0 %v4487
        %4916 = vmatprep.subr.mxu0 0.0
        %4917 = vmatpush1.msra.mxu0 0.0
        %4918 = vmatprep.subr.mxu0 0.0
        %4919 = vmatpush1.msra.mxu0 0.0
        %4920 = vmatprep.subr.mxu0 0.0
        %4921 = vmatpush1.msra.mxu0 0.0
        %4922 = vmatprep.subr.mxu0 0.0
        %4923 = vmatpush1.msra.mxu0 0.0
        %4924 = vmatprep.subr.mxu0 0.0
        %4925 = vmatpush1.msra.mxu0 0.0
        %4926 = vmatprep.subr.mxu0 0.0
        %4927 = vmatpush1.msra.mxu0 0.0
        %4928 = vmatprep.subr.mxu0 0.0
        %4929 = vmatpush1.msra.mxu0 0.0
        %4930 = vmatprep.subr.mxu0 0.0
        %4931 = vmatpush1.msra.mxu0 0.0
        %4932 = vmatprep.subr.mxu0 0.0
        %4933 = vmatpush1.msra.mxu0 0.0
        %4934 = vmatprep.subr.mxu0 0.0
        %4935 = vmatpush1.msra.mxu0 0.0
        %4936 = vmatprep.subr.mxu0 0.0
        %4937 = vmatpush1.msra.mxu0 0.0
        %4938 = vmatprep.subr.mxu0 0.0
        %4939 = vmatpush1.msra.mxu0 0.0
        %4940 = vmatprep.subr.mxu0 0.0
        %4941 = vmatpush1.msra.mxu0 0.0
        %4942 = vmatprep.subr.mxu0 0.0
        %4943 = vmatpush1.msra.mxu0 0.0
        %4944 = vmatprep.subr.mxu0 0.0
        %4945 = vmatpush1.msra.mxu0 0.0
        %4946 = vmatprep.subr.mxu0 0.0
        %4947 = vmatpush1.msra.mxu0 0.0
        %4948 = vmatprep.subr.mxu0 0.0
        %4949 = vmatpush1.msra.mxu0 0.0
        %4950 = vmatprep.subr.mxu0 0.0
        %4951 = vmatpush1.msra.mxu0 0.0
        %4952 = vmatprep.subr.mxu0 0.0
        %4953 = vmatpush1.msra.mxu0 0.0
        %4954 = vmatprep.subr.mxu0 0.0
        %4955 = vmatpush1.msra.mxu0 0.0
        %4956 = vmatprep.subr.mxu0 0.0
        %4957 = vmatpush1.msra.mxu0 0.0
        %4958 = vmatprep.subr.mxu0 0.0
        %4959 = vmatpush1.msra.mxu0 0.0
        %4960 = vmatprep.subr.mxu0 0.0
        %4961 = vmatpush1.msra.mxu0 0.0
        %4962 = vmatprep.subr.mxu0 0.0
        %4963 = vmatpush1.msra.mxu0 0.0
        %4964 = vmatprep.subr.mxu0 0.0
        %4965 = vmatpush1.msra.mxu0 0.0
        %4966 = vmatprep.subr.mxu0 0.0
        %4967 = vmatpush1.msra.mxu0 0.0
        %4968 = vmatprep.subr.mxu0 0.0
        %4969 = vmatpush1.msra.mxu0 0.0
        %4970 = vmatprep.subr.mxu0 0.0
        %4971 = vmatpush1.msra.mxu0 0.0
        %4972 = vmatprep.subr.mxu0 0.0
        %4973 = vmatpush1.msra.mxu0 0.0
        %4974 = vmatprep.subr.mxu0 0.0
        %4975 = vmatpush1.msra.mxu0 0.0
        %4976 = vmatprep.mubr.f32.mxu0 0.0
        %4977 = vmatmul.mubr.f32.gmra.mrb[0].mxu0 %v4910
        %v4978 = vpop.f32.mrb[0].mxu0
        %v4979 = vadd.f32 %v4489, %v4978
        %v4980 = vpop.f32.mrb[0].mxu0
        %4981 = vdwg.mxu0
        %v4983 = vrot.slane %v4979, 5
        %v4985 = vadd.f32 %v4482, %v4983
        %v4986 = vsub.f32 0.0, %v4985
        %v4987 = vmul.f32 %v4986, 1.442695
        %v4988 = vpow.pop %v4987
        %v4989 = vadd.f32 %v4988, 1.0
        %v4990 = vrcp.pop %v4989
        %v4991 = vmul.f32 1.0, %v4990
        %4992 = vrot.lane.b32.xlu0 %v4983, 96
        %v4993 = vpop.permute.xlu0 %4992
        %v4995 = vmul.f32 %v4991, %v4993
        %4997 = vrot.lane.b32.xlu0 %v4995, 32
        %v4998 = vpop.permute.xlu0 %4997
        %v5000 = vadd.f32 %v4482, %v4998
        %v5001 = vtanh.pop %v5000
        %v5002 = vsub.f32 1.0, %v4991
        %5004 = vrot.lane.b32.xlu0 %v5001, 112
        %v5005 = vpop.permute.xlu0 %5004
        %v5007 = vmul.f32 %v5002, %v5005
        %v5008 = vrot.slane %v4905, 1
        %v5010 = vmul.f32 %v4991, %v5008
        %v5011 = vadd.f32 %v5007, %v5010
        %v5013 = vrot.slane %v5011, 3
        %5014 = vrot.lane.b32.xlu0 %v5013, 112
        %v5015 = vpop.permute.xlu0 %5014
        %v5016 = vsel %vm941, %v5015, 0
        %5018 = vmatprep.subr.mxu0 0.0
        %5019 = vmatpush1.msra.mxu0 %v4486
        %5020 = vmatprep.subr.mxu0 0.0
        %5021 = vmatpush1.msra.mxu0 %v4487
        %5022 = vmatprep.subr.mxu0 0.0
        %5023 = vmatpush1.msra.mxu0 0.0
        %5024 = vmatprep.subr.mxu0 0.0
        %5025 = vmatpush1.msra.mxu0 0.0
        %5026 = vmatprep.subr.mxu0 0.0
        %5027 = vmatpush1.msra.mxu0 0.0
        %5028 = vmatprep.subr.mxu0 0.0
        %5029 = vmatpush1.msra.mxu0 0.0
        %5030 = vmatprep.subr.mxu0 0.0
        %5031 = vmatpush1.msra.mxu0 0.0
        %5032 = vmatprep.subr.mxu0 0.0
        %5033 = vmatpush1.msra.mxu0 0.0
        %5034 = vmatprep.subr.mxu0 0.0
        %5035 = vmatpush1.msra.mxu0 0.0
        %5036 = vmatprep.subr.mxu0 0.0
        %5037 = vmatpush1.msra.mxu0 0.0
        %5038 = vmatprep.subr.mxu0 0.0
        %5039 = vmatpush1.msra.mxu0 0.0
        %5040 = vmatprep.subr.mxu0 0.0
        %5041 = vmatpush1.msra.mxu0 0.0
        %5042 = vmatprep.subr.mxu0 0.0
        %5043 = vmatpush1.msra.mxu0 0.0
        %5044 = vmatprep.subr.mxu0 0.0
        %5045 = vmatpush1.msra.mxu0 0.0
        %5046 = vmatprep.subr.mxu0 0.0
        %5047 = vmatpush1.msra.mxu0 0.0
        %5048 = vmatprep.subr.mxu0 0.0
        %5049 = vmatpush1.msra.mxu0 0.0
        %5050 = vmatprep.subr.mxu0 0.0
        %5051 = vmatpush1.msra.mxu0 0.0
        %5052 = vmatprep.subr.mxu0 0.0
        %5053 = vmatpush1.msra.mxu0 0.0
        %5054 = vmatprep.subr.mxu0 0.0
        %5055 = vmatpush1.msra.mxu0 0.0
        %5056 = vmatprep.subr.mxu0 0.0
        %5057 = vmatpush1.msra.mxu0 0.0
        %5058 = vmatprep.subr.mxu0 0.0
        %5059 = vmatpush1.msra.mxu0 0.0
        %5060 = vmatprep.subr.mxu0 0.0
        %5061 = vmatpush1.msra.mxu0 0.0
        %5062 = vmatprep.subr.mxu0 0.0
        %5063 = vmatpush1.msra.mxu0 0.0
        %5064 = vmatprep.subr.mxu0 0.0
        %5065 = vmatpush1.msra.mxu0 0.0
        %5066 = vmatprep.subr.mxu0 0.0
        %5067 = vmatpush1.msra.mxu0 0.0
        %5068 = vmatprep.subr.mxu0 0.0
        %5069 = vmatpush1.msra.mxu0 0.0
        %5070 = vmatprep.subr.mxu0 0.0
        %5071 = vmatpush1.msra.mxu0 0.0
        %5072 = vmatprep.subr.mxu0 0.0
        %5073 = vmatpush1.msra.mxu0 0.0
        %5074 = vmatprep.subr.mxu0 0.0
        %5075 = vmatpush1.msra.mxu0 0.0
        %5076 = vmatprep.subr.mxu0 0.0
        %5077 = vmatpush1.msra.mxu0 0.0
        %5078 = vmatprep.subr.mxu0 0.0
        %5079 = vmatpush1.msra.mxu0 0.0
        %5080 = vmatprep.subr.mxu0 0.0
        %5081 = vmatpush1.msra.mxu0 0.0
        %5082 = vmatprep.mubr.f32.mxu0 0.0
        %5083 = vmatmul.mubr.f32.gmra.mrb[0].mxu0 %v5016
        %v5084 = vpop.f32.mrb[0].mxu0
        %v5085 = vadd.f32 %v4489, %v5084
        %v5086 = vpop.f32.mrb[0].mxu0
        %5087 = vdwg.mxu0
        %v5089 = vrot.slane %v5085, 6
        %v5091 = vadd.f32 %v4482, %v5089
        %v5092 = vsub.f32 0.0, %v5091
        %v5093 = vmul.f32 %v5092, 1.442695
        %v5094 = vpow.pop %v5093
        %v5095 = vadd.f32 %v5094, 1.0
        %v5096 = vrcp.pop %v5095
        %v5097 = vmul.f32 1.0, %v5096
        %5098 = vrot.lane.b32.xlu0 %v5089, 96
        %v5099 = vpop.permute.xlu0 %5098
        %v5101 = vmul.f32 %v5097, %v5099
        %5103 = vrot.lane.b32.xlu0 %v5101, 32
        %v5104 = vpop.permute.xlu0 %5103
        %v5106 = vadd.f32 %v4482, %v5104
        %v5107 = vtanh.pop %v5106
        %v5108 = vsub.f32 1.0, %v5097
        %5110 = vrot.lane.b32.xlu0 %v5107, 112
        %v5111 = vpop.permute.xlu0 %5110
        %v5113 = vmul.f32 %v5108, %v5111
        %v5114 = vrot.slane %v5011, 1
        %v5116 = vmul.f32 %v5097, %v5114
        %v5117 = vadd.f32 %v5113, %v5116
        %v5119 = vrot.slane %v5117, 2
        %5120 = vrot.lane.b32.xlu0 %v5119, 112
        %v5121 = vpop.permute.xlu0 %5120
        %v5122 = vsel %vm941, %v5121, 0
        %5124 = vmatprep.subr.mxu0 0.0
        %5125 = vmatpush1.msra.mxu0 %v4486
        %5126 = vmatprep.subr.mxu0 0.0
        %5127 = vmatpush1.msra.mxu0 %v4487
        %5128 = vmatprep.subr.mxu0 0.0
        %5129 = vmatpush1.msra.mxu0 0.0
        %5130 = vmatprep.subr.mxu0 0.0
        %5131 = vmatpush1.msra.mxu0 0.0
        %5132 = vmatprep.subr.mxu0 0.0
        %5133 = vmatpush1.msra.mxu0 0.0
        %5134 = vmatprep.subr.mxu0 0.0
        %5135 = vmatpush1.msra.mxu0 0.0
        %5136 = vmatprep.subr.mxu0 0.0
        %5137 = vmatpush1.msra.mxu0 0.0
        %5138 = vmatprep.subr.mxu0 0.0
        %5139 = vmatpush1.msra.mxu0 0.0
        %5140 = vmatprep.subr.mxu0 0.0
        %5141 = vmatpush1.msra.mxu0 0.0
        %5142 = vmatprep.subr.mxu0 0.0
        %5143 = vmatpush1.msra.mxu0 0.0
        %5144 = vmatprep.subr.mxu0 0.0
        %5145 = vmatpush1.msra.mxu0 0.0
        %5146 = vmatprep.subr.mxu0 0.0
        %5147 = vmatpush1.msra.mxu0 0.0
        %5148 = vmatprep.subr.mxu0 0.0
        %5149 = vmatpush1.msra.mxu0 0.0
        %5150 = vmatprep.subr.mxu0 0.0
        %5151 = vmatpush1.msra.mxu0 0.0
        %5152 = vmatprep.subr.mxu0 0.0
        %5153 = vmatpush1.msra.mxu0 0.0
        %5154 = vmatprep.subr.mxu0 0.0
        %5155 = vmatpush1.msra.mxu0 0.0
        %5156 = vmatprep.subr.mxu0 0.0
        %5157 = vmatpush1.msra.mxu0 0.0
        %5158 = vmatprep.subr.mxu0 0.0
        %5159 = vmatpush1.msra.mxu0 0.0
        %5160 = vmatprep.subr.mxu0 0.0
        %5161 = vmatpush1.msra.mxu0 0.0
        %5162 = vmatprep.subr.mxu0 0.0
        %5163 = vmatpush1.msra.mxu0 0.0
        %5164 = vmatprep.subr.mxu0 0.0
        %5165 = vmatpush1.msra.mxu0 0.0
        %5166 = vmatprep.subr.mxu0 0.0
        %5167 = vmatpush1.msra.mxu0 0.0
        %5168 = vmatprep.subr.mxu0 0.0
        %5169 = vmatpush1.msra.mxu0 0.0
        %5170 = vmatprep.subr.mxu0 0.0
        %5171 = vmatpush1.msra.mxu0 0.0
        %5172 = vmatprep.subr.mxu0 0.0
        %5173 = vmatpush1.msra.mxu0 0.0
        %5174 = vmatprep.subr.mxu0 0.0
        %5175 = vmatpush1.msra.mxu0 0.0
        %5176 = vmatprep.subr.mxu0 0.0
        %5177 = vmatpush1.msra.mxu0 0.0
        %5178 = vmatprep.subr.mxu0 0.0
        %5179 = vmatpush1.msra.mxu0 0.0
        %5180 = vmatprep.subr.mxu0 0.0
        %5181 = vmatpush1.msra.mxu0 0.0
        %5182 = vmatprep.subr.mxu0 0.0
        %5183 = vmatpush1.msra.mxu0 0.0
        %5184 = vmatprep.subr.mxu0 0.0
        %5185 = vmatpush1.msra.mxu0 0.0
        %5186 = vmatprep.subr.mxu0 0.0
        %5187 = vmatpush1.msra.mxu0 0.0
        %5188 = vmatprep.mubr.f32.mxu0 0.0
        %5189 = vmatmul.mubr.f32.gmra.mrb[0].mxu0 %v5122
        %v5190 = vpop.f32.mrb[0].mxu0
        %v5191 = vadd.f32 %v4489, %v5190
        %v5192 = vpop.f32.mrb[0].mxu0
        %5193 = vdwg.mxu0
        %v5195 = vrot.slane %v5191, 7
        %v5197 = vadd.f32 %v4482, %v5195
        %v5198 = vsub.f32 0.0, %v5197
        %v5199 = vmul.f32 %v5198, 1.442695
        %v5200 = vpow.pop %v5199
        %v5201 = vadd.f32 %v5200, 1.0
        %v5202 = vrcp.pop %v5201
        %v5203 = vmul.f32 1.0, %v5202
        %5204 = vrot.lane.b32.xlu0 %v5195, 96
        %v5205 = vpop.permute.xlu0 %5204
        %v5207 = vmul.f32 %v5203, %v5205
        %5209 = vrot.lane.b32.xlu0 %v5207, 32
        %v5210 = vpop.permute.xlu0 %5209
        %v5212 = vadd.f32 %v4482, %v5210
        %v5213 = vtanh.pop %v5212
        %v5214 = vsub.f32 1.0, %v5203
        %5216 = vrot.lane.b32.xlu0 %v5213, 112
        %v5217 = vpop.permute.xlu0 %5216
        %v5219 = vmul.f32 %v5214, %v5217
        %v5220 = vrot.slane %v5117, 1
        %v5222 = vmul.f32 %v5203, %v5220
        %v5223 = vadd.f32 %v5219, %v5222
        %v5225 = vrot.slane %v5223, 1
        %5226 = vrot.lane.b32.xlu0 %v5225, 112
        %v5227 = vpop.permute.xlu0 %5226
        %v5228 = vsel %vm941, %v5227, 0
        %5230 = vmatprep.subr.mxu0 0.0
        %5231 = vmatpush1.msra.mxu0 %v4486
        %5232 = vmatprep.subr.mxu0 0.0
        %5233 = vmatpush1.msra.mxu0 %v4487
        %5234 = vmatprep.subr.mxu0 0.0
        %5235 = vmatpush1.msra.mxu0 0.0
        %5236 = vmatprep.subr.mxu0 0.0
        %5237 = vmatpush1.msra.mxu0 0.0
        %5238 = vmatprep.subr.mxu0 0.0
        %5239 = vmatpush1.msra.mxu0 0.0
        %5240 = vmatprep.subr.mxu0 0.0
        %5241 = vmatpush1.msra.mxu0 0.0
        %5242 = vmatprep.subr.mxu0 0.0
        %5243 = vmatpush1.msra.mxu0 0.0
        %5244 = vmatprep.subr.mxu0 0.0
        %5245 = vmatpush1.msra.mxu0 0.0
        %5246 = vmatprep.subr.mxu0 0.0
        %5247 = vmatpush1.msra.mxu0 0.0
        %5248 = vmatprep.subr.mxu0 0.0
        %5249 = vmatpush1.msra.mxu0 0.0
        %5250 = vmatprep.subr.mxu0 0.0
        %5251 = vmatpush1.msra.mxu0 0.0
        %5252 = vmatprep.subr.mxu0 0.0
        %5253 = vmatpush1.msra.mxu0 0.0
        %5254 = vmatprep.subr.mxu0 0.0
        %5255 = vmatpush1.msra.mxu0 0.0
        %5256 = vmatprep.subr.mxu0 0.0
        %5257 = vmatpush1.msra.mxu0 0.0
        %5258 = vmatprep.subr.mxu0 0.0
        %5259 = vmatpush1.msra.mxu0 0.0
        %5260 = vmatprep.subr.mxu0 0.0
        %5261 = vmatpush1.msra.mxu0 0.0
        %5262 = vmatprep.subr.mxu0 0.0
        %5263 = vmatpush1.msra.mxu0 0.0
        %5264 = vmatprep.subr.mxu0 0.0
        %5265 = vmatpush1.msra.mxu0 0.0
        %5266 = vmatprep.subr.mxu0 0.0
        %5267 = vmatpush1.msra.mxu0 0.0
        %5268 = vmatprep.subr.mxu0 0.0
        %5269 = vmatpush1.msra.mxu0 0.0
        %5270 = vmatprep.subr.mxu0 0.0
        %5271 = vmatpush1.msra.mxu0 0.0
        %5272 = vmatprep.subr.mxu0 0.0
        %5273 = vmatpush1.msra.mxu0 0.0
        %5274 = vmatprep.subr.mxu0 0.0
        %5275 = vmatpush1.msra.mxu0 0.0
        %5276 = vmatprep.subr.mxu0 0.0
        %5277 = vmatpush1.msra.mxu0 0.0
        %5278 = vmatprep.subr.mxu0 0.0
        %5279 = vmatpush1.msra.mxu0 0.0
        %5280 = vmatprep.subr.mxu0 0.0
        %5281 = vmatpush1.msra.mxu0 0.0
        %5282 = vmatprep.subr.mxu0 0.0
        %5283 = vmatpush1.msra.mxu0 0.0
        %5284 = vmatprep.subr.mxu0 0.0
        %5285 = vmatpush1.msra.mxu0 0.0
        %5286 = vmatprep.subr.mxu0 0.0
        %5287 = vmatpush1.msra.mxu0 0.0
        %5288 = vmatprep.subr.mxu0 0.0
        %5289 = vmatpush1.msra.mxu0 0.0
        %5290 = vmatprep.subr.mxu0 0.0
        %5291 = vmatpush1.msra.mxu0 0.0
        %5292 = vmatprep.subr.mxu0 0.0
        %5293 = vmatpush1.msra.mxu0 0.0
        %5294 = vmatprep.mubr.f32.mxu0 0.0
        %5295 = vmatmul.mubr.f32.gmra.mrb[0].mxu0 %v5228
        %v5296 = vpop.f32.mrb[0].mxu0
        %v5297 = vadd.f32 %v4489, %v5296
        %v5298 = vpop.f32.mrb[0].mxu0
        %5299 = vdwg.mxu0
        %v5300 = vadd.f32 %v4482, %v5297
        %v5301 = vsub.f32 0.0, %v5300
        %v5302 = vmul.f32 %v5301, 1.442695
        %v5303 = vpow.pop %v5302
        %v5304 = vadd.f32 %v5303, 1.0
        %v5305 = vrcp.pop %v5304
        %v5306 = vmul.f32 1.0, %v5305
        %5308 = vrot.lane.b32.xlu0 %v5297, 96
        %v5309 = vpop.permute.xlu0 %5308
        %v5311 = vmul.f32 %v5306, %v5309
        %5313 = vrot.lane.b32.xlu0 %v5311, 32
        %v5314 = vpop.permute.xlu0 %5313
        %v5316 = vadd.f32 %v4482, %v5314
        %v5317 = vtanh.pop %v5316
        %v5318 = vsub.f32 1.0, %v5306
        %5320 = vrot.lane.b32.xlu0 %v5317, 112
        %v5321 = vpop.permute.xlu0 %5320
        %v5323 = vmul.f32 %v5318, %v5321
        %v5325 = vmul.f32 %v5306, %v5225
        %v5326 = vadd.f32 %v5323, %v5325
        %v5327 = vsel %vm3356, %v5326, %v5223
        %v5328 = vsel %vm3218, %v5327, %v5117
        %v5329 = vsel %vm4396, %v5328, %v5011
        %v5330 = vsel %vm3244, %v5329, %v4905
        %v5331 = vsel %vm3237, %v5330, %v4799
        %v5332 = vsel %vm3230, %v5331, %v4693
        %v5333 = vsel %vm3223, %v5332, %v4587
        %5335 = vrot.lane.b32.xlu0 %v4401, 112
        %v5336 = vpop.permute.xlu0 %5335
        %v5338 = vsel %vm941, %v5336, %v5333
        %s5339 = scalar_lea.vmem %s39, 64
        %v5340 = vld [vmem:[%s5339] sm:$0xff]
        %v5341 = vld [vmem:[%s5339 + $0x8] sm:$0xff]
        %v5342 = vld [vmem:[%s5339 + $0x10] sm:$0xff]
        %v5343 = vld [vmem:[%s5339 + $0x18] sm:$0xff]
        %s5344 = scalar_lea.vmem %s43, 2
        %v5345 = vld [vmem:[%s5344] sm:$0x1]
        %v5347 = vlaneseq
        %v5348 = vshrl.u32 %v5347, 7
        %v5349 = vsub.s32 0, %v5348
        %v5350 = vrot.slane %v5345, %v5349
        %v5353 = vsel %vm1026, %v5338, 0
        %5355 = vmatprep.subr.mxu0 0.0
        %5356 = vmatpush1.msra.mxu0 %v5340
        %5357 = vmatprep.subr.mxu0 0.0
        %5358 = vmatpush1.msra.mxu0 %v5341
        %5359 = vmatprep.subr.mxu0 0.0
        %5360 = vmatpush1.msra.mxu0 %v5342
        %5361 = vmatprep.subr.mxu0 0.0
        %5362 = vmatpush1.msra.mxu0 %v5343
        %5363 = vmatprep.subr.mxu0 0.0
        %5364 = vmatpush1.msra.mxu0 0.0
        %5365 = vmatprep.subr.mxu0 0.0
        %5366 = vmatpush1.msra.mxu0 0.0
        %5367 = vmatprep.subr.mxu0 0.0
        %5368 = vmatpush1.msra.mxu0 0.0
        %5369 = vmatprep.subr.mxu0 0.0
        %5370 = vmatpush1.msra.mxu0 0.0
        %5371 = vmatprep.subr.mxu0 0.0
        %5372 = vmatpush1.msra.mxu0 0.0
        %5373 = vmatprep.subr.mxu0 0.0
        %5374 = vmatpush1.msra.mxu0 0.0
        %5375 = vmatprep.subr.mxu0 0.0
        %5376 = vmatpush1.msra.mxu0 0.0
        %5377 = vmatprep.subr.mxu0 0.0
        %5378 = vmatpush1.msra.mxu0 0.0
        %5379 = vmatprep.subr.mxu0 0.0
        %5380 = vmatpush1.msra.mxu0 0.0
        %5381 = vmatprep.subr.mxu0 0.0
        %5382 = vmatpush1.msra.mxu0 0.0
        %5383 = vmatprep.subr.mxu0 0.0
        %5384 = vmatpush1.msra.mxu0 0.0
        %5385 = vmatprep.subr.mxu0 0.0
        %5386 = vmatpush1.msra.mxu0 0.0
        %5387 = vmatprep.subr.mxu0 0.0
        %5388 = vmatpush1.msra.mxu0 0.0
        %5389 = vmatprep.subr.mxu0 0.0
        %5390 = vmatpush1.msra.mxu0 0.0
        %5391 = vmatprep.subr.mxu0 0.0
        %5392 = vmatpush1.msra.mxu0 0.0
        %5393 = vmatprep.subr.mxu0 0.0
        %5394 = vmatpush1.msra.mxu0 0.0
        %5395 = vmatprep.subr.mxu0 0.0
        %5396 = vmatpush1.msra.mxu0 0.0
        %5397 = vmatprep.subr.mxu0 0.0
        %5398 = vmatpush1.msra.mxu0 0.0
        %5399 = vmatprep.subr.mxu0 0.0
        %5400 = vmatpush1.msra.mxu0 0.0
        %5401 = vmatprep.subr.mxu0 0.0
        %5402 = vmatpush1.msra.mxu0 0.0
        %5403 = vmatprep.subr.mxu0 0.0
        %5404 = vmatpush1.msra.mxu0 0.0
        %5405 = vmatprep.subr.mxu0 0.0
        %5406 = vmatpush1.msra.mxu0 0.0
        %5407 = vmatprep.subr.mxu0 0.0
        %5408 = vmatpush1.msra.mxu0 0.0
        %5409 = vmatprep.subr.mxu0 0.0
        %5410 = vmatpush1.msra.mxu0 0.0
        %5411 = vmatprep.subr.mxu0 0.0
        %5412 = vmatpush1.msra.mxu0 0.0
        %5413 = vmatprep.subr.mxu0 0.0
        %5414 = vmatpush1.msra.mxu0 0.0
        %5415 = vmatprep.subr.mxu0 0.0
        %5416 = vmatpush1.msra.mxu0 0.0
        %5417 = vmatprep.subr.mxu0 0.0
        %5418 = vmatpush1.msra.mxu0 0.0
        %5419 = vmatprep.mubr.f32.mxu0 0.0
        %5420 = vmatmul.mubr.f32.gmra.mrb[0].mxu0 %v5353
        %v5421 = vpop.f32.mrb[0].mxu0
        %v5422 = vadd.f32 %v5350, %v5421
        %v5423 = vpop.f32.mrb[0].mxu0
        %5424 = vdwg.mxu0
        %s5425 = scalar_lea.vmem %s41, 32
        %v5426 = vld [vmem:[%s5425] sm:$0xff]
        %v5427 = vld [vmem:[%s5425 + $0x8] sm:$0xff]
        %s5428 = scalar_lea.vmem %s45, 2
        %v5429 = vld [vmem:[%s5428] sm:$0x1]
        %5430 = vmatprep.subr.mxu0 0.0
        %5431 = vmatpush1.msra.mxu0 %v5426
        %5432 = vmatprep.subr.mxu0 0.0
        %5433 = vmatpush1.msra.mxu0 %v5427
        %5434 = vmatprep.subr.mxu0 0.0
        %5435 = vmatpush1.msra.mxu0 0.0
        %5436 = vmatprep.subr.mxu0 0.0
        %5437 = vmatpush1.msra.mxu0 0.0
        %5438 = vmatprep.subr.mxu0 0.0
        %5439 = vmatpush1.msra.mxu0 0.0
        %5440 = vmatprep.subr.mxu0 0.0
        %5441 = vmatpush1.msra.mxu0 0.0
        %5442 = vmatprep.subr.mxu0 0.0
        %5443 = vmatpush1.msra.mxu0 0.0
        %5444 = vmatprep.subr.mxu0 0.0
        %5445 = vmatpush1.msra.mxu0 0.0
        %5446 = vmatprep.subr.mxu0 0.0
        %5447 = vmatpush1.msra.mxu0 0.0
        %5448 = vmatprep.subr.mxu0 0.0
        %5449 = vmatpush1.msra.mxu0 0.0
        %5450 = vmatprep.subr.mxu0 0.0
        %5451 = vmatpush1.msra.mxu0 0.0
        %5452 = vmatprep.subr.mxu0 0.0
        %5453 = vmatpush1.msra.mxu0 0.0
        %5454 = vmatprep.subr.mxu0 0.0
        %5455 = vmatpush1.msra.mxu0 0.0
        %5456 = vmatprep.subr.mxu0 0.0
        %5457 = vmatpush1.msra.mxu0 0.0
        %5458 = vmatprep.subr.mxu0 0.0
        %5459 = vmatpush1.msra.mxu0 0.0
        %5460 = vmatprep.subr.mxu0 0.0
        %5461 = vmatpush1.msra.mxu0 0.0
        %5462 = vmatprep.subr.mxu0 0.0
        %5463 = vmatpush1.msra.mxu0 0.0
        %5464 = vmatprep.subr.mxu0 0.0
        %5465 = vmatpush1.msra.mxu0 0.0
        %5466 = vmatprep.subr.mxu0 0.0
        %5467 = vmatpush1.msra.mxu0 0.0
        %5468 = vmatprep.subr.mxu0 0.0
        %5469 = vmatpush1.msra.mxu0 0.0
        %5470 = vmatprep.subr.mxu0 0.0
        %5471 = vmatpush1.msra.mxu0 0.0
        %5472 = vmatprep.subr.mxu0 0.0
        %5473 = vmatpush1.msra.mxu0 0.0
        %5474 = vmatprep.subr.mxu0 0.0
        %5475 = vmatpush1.msra.mxu0 0.0
        %5476 = vmatprep.subr.mxu0 0.0
        %5477 = vmatpush1.msra.mxu0 0.0
        %5478 = vmatprep.subr.mxu0 0.0
        %5479 = vmatpush1.msra.mxu0 0.0
        %5480 = vmatprep.subr.mxu0 0.0
        %5481 = vmatpush1.msra.mxu0 0.0
        %5482 = vmatprep.subr.mxu0 0.0
        %5483 = vmatpush1.msra.mxu0 0.0
        %5484 = vmatprep.subr.mxu0 0.0
        %5485 = vmatpush1.msra.mxu0 0.0
        %5486 = vmatprep.subr.mxu0 0.0
        %5487 = vmatpush1.msra.mxu0 0.0
        %5488 = vmatprep.subr.mxu0 0.0
        %5489 = vmatpush1.msra.mxu0 0.0
        %5490 = vmatprep.subr.mxu0 0.0
        %5491 = vmatpush1.msra.mxu0 0.0
        %5492 = vmatprep.subr.mxu0 0.0
        %5493 = vmatpush1.msra.mxu0 0.0
        %5494 = vmatprep.mubr.f32.mxu0 0.0
        %5495 = vmatmul.mubr.f32.gmra.mrb[0].mxu0 %v3555
        %v5496 = vpop.f32.mrb[0].mxu0
        %v5497 = vadd.f32 %v5429, %v5496
        %v5498 = vpop.f32.mrb[0].mxu0
        %5499 = vdwg.mxu0
        %v5500 = vadd.f32 %v5422, %v5497
        %v5501 = vsub.f32 0.0, %v5500
        %v5502 = vmul.f32 %v5501, 1.442695
        %v5503 = vpow.pop %v5502
        %v5504 = vadd.f32 %v5503, 1.0
        %v5505 = vrcp.pop %v5504
        %v5506 = vmul.f32 1.0, %v5505
        %5508 = vrot.lane.b32.xlu0 %v5497, 96
        %v5509 = vpop.permute.xlu0 %5508
        %v5511 = vmul.f32 %v5506, %v5509
        %5513 = vrot.lane.b32.xlu0 %v5511, 32
        %v5514 = vpop.permute.xlu0 %5513
        %v5516 = vadd.f32 %v5422, %v5514
        %v5517 = vtanh.pop %v5516
        %v5518 = vsub.f32 1.0, %v5506
        %5520 = vrot.lane.b32.xlu0 %v5517, 112
        %v5521 = vpop.permute.xlu0 %5520
        %v5523 = vmul.f32 %v5518, %v5521
        %v5524 = vmul.f32 %v5506, 0.0
        %v5525 = vadd.f32 %v5523, %v5524
        %5527 = vrot.lane.b32.xlu0 %v5525, 112
        %v5528 = vpop.permute.xlu0 %5527
        %v5529 = vsel %vm941, %v5528, 0
        %5531 = vmatprep.subr.mxu0 0.0
        %5532 = vmatpush1.msra.mxu0 %v5426
        %5533 = vmatprep.subr.mxu0 0.0
        %5534 = vmatpush1.msra.mxu0 %v5427
        %5535 = vmatprep.subr.mxu0 0.0
        %5536 = vmatpush1.msra.mxu0 0.0
        %5537 = vmatprep.subr.mxu0 0.0
        %5538 = vmatpush1.msra.mxu0 0.0
        %5539 = vmatprep.subr.mxu0 0.0
        %5540 = vmatpush1.msra.mxu0 0.0
        %5541 = vmatprep.subr.mxu0 0.0
        %5542 = vmatpush1.msra.mxu0 0.0
        %5543 = vmatprep.subr.mxu0 0.0
        %5544 = vmatpush1.msra.mxu0 0.0
        %5545 = vmatprep.subr.mxu0 0.0
        %5546 = vmatpush1.msra.mxu0 0.0
        %5547 = vmatprep.subr.mxu0 0.0
        %5548 = vmatpush1.msra.mxu0 0.0
        %5549 = vmatprep.subr.mxu0 0.0
        %5550 = vmatpush1.msra.mxu0 0.0
        %5551 = vmatprep.subr.mxu0 0.0
        %5552 = vmatpush1.msra.mxu0 0.0
        %5553 = vmatprep.subr.mxu0 0.0
        %5554 = vmatpush1.msra.mxu0 0.0
        %5555 = vmatprep.subr.mxu0 0.0
        %5556 = vmatpush1.msra.mxu0 0.0
        %5557 = vmatprep.subr.mxu0 0.0
        %5558 = vmatpush1.msra.mxu0 0.0
        %5559 = vmatprep.subr.mxu0 0.0
        %5560 = vmatpush1.msra.mxu0 0.0
        %5561 = vmatprep.subr.mxu0 0.0
        %5562 = vmatpush1.msra.mxu0 0.0
        %5563 = vmatprep.subr.mxu0 0.0
        %5564 = vmatpush1.msra.mxu0 0.0
        %5565 = vmatprep.subr.mxu0 0.0
        %5566 = vmatpush1.msra.mxu0 0.0
        %5567 = vmatprep.subr.mxu0 0.0
        %5568 = vmatpush1.msra.mxu0 0.0
        %5569 = vmatprep.subr.mxu0 0.0
        %5570 = vmatpush1.msra.mxu0 0.0
        %5571 = vmatprep.subr.mxu0 0.0
        %5572 = vmatpush1.msra.mxu0 0.0
        %5573 = vmatprep.subr.mxu0 0.0
        %5574 = vmatpush1.msra.mxu0 0.0
        %5575 = vmatprep.subr.mxu0 0.0
        %5576 = vmatpush1.msra.mxu0 0.0
        %5577 = vmatprep.subr.mxu0 0.0
        %5578 = vmatpush1.msra.mxu0 0.0
        %5579 = vmatprep.subr.mxu0 0.0
        %5580 = vmatpush1.msra.mxu0 0.0
        %5581 = vmatprep.subr.mxu0 0.0
        %5582 = vmatpush1.msra.mxu0 0.0
        %5583 = vmatprep.subr.mxu0 0.0
        %5584 = vmatpush1.msra.mxu0 0.0
        %5585 = vmatprep.subr.mxu0 0.0
        %5586 = vmatpush1.msra.mxu0 0.0
        %5587 = vmatprep.subr.mxu0 0.0
        %5588 = vmatpush1.msra.mxu0 0.0
        %5589 = vmatprep.subr.mxu0 0.0
        %5590 = vmatpush1.msra.mxu0 0.0
        %5591 = vmatprep.subr.mxu0 0.0
        %5592 = vmatpush1.msra.mxu0 0.0
        %5593 = vmatprep.subr.mxu0 0.0
        %5594 = vmatpush1.msra.mxu0 0.0
        %5595 = vmatprep.mubr.f32.mxu0 0.0
        %5596 = vmatmul.mubr.f32.gmra.mrb[0].mxu0 %v5529
        %v5597 = vpop.f32.mrb[0].mxu0
        %v5598 = vadd.f32 %v5429, %v5597
        %v5599 = vpop.f32.mrb[0].mxu0
        %5600 = vdwg.mxu0
        %v5602 = vrot.slane %v5598, 7
        %v5604 = vadd.f32 %v5422, %v5602
        %v5605 = vsub.f32 0.0, %v5604
        %v5606 = vmul.f32 %v5605, 1.442695
        %v5607 = vpow.pop %v5606
        %v5608 = vadd.f32 %v5607, 1.0
        %v5609 = vrcp.pop %v5608
        %v5610 = vmul.f32 1.0, %v5609
        %5611 = vrot.lane.b32.xlu0 %v5602, 96
        %v5612 = vpop.permute.xlu0 %5611
        %v5614 = vmul.f32 %v5610, %v5612
        %5616 = vrot.lane.b32.xlu0 %v5614, 32
        %v5617 = vpop.permute.xlu0 %5616
        %v5619 = vadd.f32 %v5422, %v5617
        %v5620 = vtanh.pop %v5619
        %v5621 = vsub.f32 1.0, %v5610
        %5623 = vrot.lane.b32.xlu0 %v5620, 112
        %v5624 = vpop.permute.xlu0 %5623
        %v5626 = vmul.f32 %v5621, %v5624
        %v5627 = vrot.slane %v5525, 7
        %v5629 = vmul.f32 %v5610, %v5627
        %v5630 = vadd.f32 %v5626, %v5629
        %v5632 = vrot.slane %v5630, 1
        %5633 = vrot.lane.b32.xlu0 %v5632, 112
        %v5634 = vpop.permute.xlu0 %5633
        %v5635 = vsel %vm941, %v5634, 0
        %5637 = vmatprep.subr.mxu0 0.0
        %5638 = vmatpush1.msra.mxu0 %v5426
        %5639 = vmatprep.subr.mxu0 0.0
        %5640 = vmatpush1.msra.mxu0 %v5427
        %5641 = vmatprep.subr.mxu0 0.0
        %5642 = vmatpush1.msra.mxu0 0.0
        %5643 = vmatprep.subr.mxu0 0.0
        %5644 = vmatpush1.msra.mxu0 0.0
        %5645 = vmatprep.subr.mxu0 0.0
        %5646 = vmatpush1.msra.mxu0 0.0
        %5647 = vmatprep.subr.mxu0 0.0
        %5648 = vmatpush1.msra.mxu0 0.0
        %5649 = vmatprep.subr.mxu0 0.0
        %5650 = vmatpush1.msra.mxu0 0.0
        %5651 = vmatprep.subr.mxu0 0.0
        %5652 = vmatpush1.msra.mxu0 0.0
        %5653 = vmatprep.subr.mxu0 0.0
        %5654 = vmatpush1.msra.mxu0 0.0
        %5655 = vmatprep.subr.mxu0 0.0
        %5656 = vmatpush1.msra.mxu0 0.0
        %5657 = vmatprep.subr.mxu0 0.0
        %5658 = vmatpush1.msra.mxu0 0.0
        %5659 = vmatprep.subr.mxu0 0.0
        %5660 = vmatpush1.msra.mxu0 0.0
        %5661 = vmatprep.subr.mxu0 0.0
        %5662 = vmatpush1.msra.mxu0 0.0
        %5663 = vmatprep.subr.mxu0 0.0
        %5664 = vmatpush1.msra.mxu0 0.0
        %5665 = vmatprep.subr.mxu0 0.0
        %5666 = vmatpush1.msra.mxu0 0.0
        %5667 = vmatprep.subr.mxu0 0.0
        %5668 = vmatpush1.msra.mxu0 0.0
        %5669 = vmatprep.subr.mxu0 0.0
        %5670 = vmatpush1.msra.mxu0 0.0
        %5671 = vmatprep.subr.mxu0 0.0
        %5672 = vmatpush1.msra.mxu0 0.0
        %5673 = vmatprep.subr.mxu0 0.0
        %5674 = vmatpush1.msra.mxu0 0.0
        %5675 = vmatprep.subr.mxu0 0.0
        %5676 = vmatpush1.msra.mxu0 0.0
        %5677 = vmatprep.subr.mxu0 0.0
        %5678 = vmatpush1.msra.mxu0 0.0
        %5679 = vmatprep.subr.mxu0 0.0
        %5680 = vmatpush1.msra.mxu0 0.0
        %5681 = vmatprep.subr.mxu0 0.0
        %5682 = vmatpush1.msra.mxu0 0.0
        %5683 = vmatprep.subr.mxu0 0.0
        %5684 = vmatpush1.msra.mxu0 0.0
        %5685 = vmatprep.subr.mxu0 0.0
        %5686 = vmatpush1.msra.mxu0 0.0
        %5687 = vmatprep.subr.mxu0 0.0
        %5688 = vmatpush1.msra.mxu0 0.0
        %5689 = vmatprep.subr.mxu0 0.0
        %5690 = vmatpush1.msra.mxu0 0.0
        %5691 = vmatprep.subr.mxu0 0.0
        %5692 = vmatpush1.msra.mxu0 0.0
        %5693 = vmatprep.subr.mxu0 0.0
        %5694 = vmatpush1.msra.mxu0 0.0
        %5695 = vmatprep.subr.mxu0 0.0
        %5696 = vmatpush1.msra.mxu0 0.0
        %5697 = vmatprep.subr.mxu0 0.0
        %5698 = vmatpush1.msra.mxu0 0.0
        %5699 = vmatprep.subr.mxu0 0.0
        %5700 = vmatpush1.msra.mxu0 0.0
        %5701 = vmatprep.mubr.f32.mxu0 0.0
        %5702 = vmatmul.mubr.f32.gmra.mrb[0].mxu0 %v5635
        %v5703 = vpop.f32.mrb[0].mxu0
        %v5704 = vadd.f32 %v5429, %v5703
        %v5705 = vpop.f32.mrb[0].mxu0
        %5706 = vdwg.mxu0
        %v5708 = vrot.slane %v5704, 6
        %v5710 = vadd.f32 %v5422, %v5708
        %v5711 = vsub.f32 0.0, %v5710
        %v5712 = vmul.f32 %v5711, 1.442695
        %v5713 = vpow.pop %v5712
        %v5714 = vadd.f32 %v5713, 1.0
        %v5715 = vrcp.pop %v5714
        %v5716 = vmul.f32 1.0, %v5715
        %5717 = vrot.lane.b32.xlu0 %v5708, 96
        %v5718 = vpop.permute.xlu0 %5717
        %v5720 = vmul.f32 %v5716, %v5718
        %5722 = vrot.lane.b32.xlu0 %v5720, 32
        %v5723 = vpop.permute.xlu0 %5722
        %v5725 = vadd.f32 %v5422, %v5723
        %v5726 = vtanh.pop %v5725
        %v5727 = vsub.f32 1.0, %v5716
        %5729 = vrot.lane.b32.xlu0 %v5726, 112
        %v5730 = vpop.permute.xlu0 %5729
        %v5732 = vmul.f32 %v5727, %v5730
        %v5733 = vrot.slane %v5630, 7
        %v5735 = vmul.f32 %v5716, %v5733
        %v5736 = vadd.f32 %v5732, %v5735
        %v5738 = vrot.slane %v5736, 2
        %5739 = vrot.lane.b32.xlu0 %v5738, 112
        %v5740 = vpop.permute.xlu0 %5739
        %v5741 = vsel %vm941, %v5740, 0
        %5743 = vmatprep.subr.mxu0 0.0
        %5744 = vmatpush1.msra.mxu0 %v5426
        %5745 = vmatprep.subr.mxu0 0.0
        %5746 = vmatpush1.msra.mxu0 %v5427
        %5747 = vmatprep.subr.mxu0 0.0
        %5748 = vmatpush1.msra.mxu0 0.0
        %5749 = vmatprep.subr.mxu0 0.0
        %5750 = vmatpush1.msra.mxu0 0.0
        %5751 = vmatprep.subr.mxu0 0.0
        %5752 = vmatpush1.msra.mxu0 0.0
        %5753 = vmatprep.subr.mxu0 0.0
        %5754 = vmatpush1.msra.mxu0 0.0
        %5755 = vmatprep.subr.mxu0 0.0
        %5756 = vmatpush1.msra.mxu0 0.0
        %5757 = vmatprep.subr.mxu0 0.0
        %5758 = vmatpush1.msra.mxu0 0.0
        %5759 = vmatprep.subr.mxu0 0.0
        %5760 = vmatpush1.msra.mxu0 0.0
        %5761 = vmatprep.subr.mxu0 0.0
        %5762 = vmatpush1.msra.mxu0 0.0
        %5763 = vmatprep.subr.mxu0 0.0
        %5764 = vmatpush1.msra.mxu0 0.0
        %5765 = vmatprep.subr.mxu0 0.0
        %5766 = vmatpush1.msra.mxu0 0.0
        %5767 = vmatprep.subr.mxu0 0.0
        %5768 = vmatpush1.msra.mxu0 0.0
        %5769 = vmatprep.subr.mxu0 0.0
        %5770 = vmatpush1.msra.mxu0 0.0
        %5771 = vmatprep.subr.mxu0 0.0
        %5772 = vmatpush1.msra.mxu0 0.0
        %5773 = vmatprep.subr.mxu0 0.0
        %5774 = vmatpush1.msra.mxu0 0.0
        %5775 = vmatprep.subr.mxu0 0.0
        %5776 = vmatpush1.msra.mxu0 0.0
        %5777 = vmatprep.subr.mxu0 0.0
        %5778 = vmatpush1.msra.mxu0 0.0
        %5779 = vmatprep.subr.mxu0 0.0
        %5780 = vmatpush1.msra.mxu0 0.0
        %5781 = vmatprep.subr.mxu0 0.0
        %5782 = vmatpush1.msra.mxu0 0.0
        %5783 = vmatprep.subr.mxu0 0.0
        %5784 = vmatpush1.msra.mxu0 0.0
        %5785 = vmatprep.subr.mxu0 0.0
        %5786 = vmatpush1.msra.mxu0 0.0
        %5787 = vmatprep.subr.mxu0 0.0
        %5788 = vmatpush1.msra.mxu0 0.0
        %5789 = vmatprep.subr.mxu0 0.0
        %5790 = vmatpush1.msra.mxu0 0.0
        %5791 = vmatprep.subr.mxu0 0.0
        %5792 = vmatpush1.msra.mxu0 0.0
        %5793 = vmatprep.subr.mxu0 0.0
        %5794 = vmatpush1.msra.mxu0 0.0
        %5795 = vmatprep.subr.mxu0 0.0
        %5796 = vmatpush1.msra.mxu0 0.0
        %5797 = vmatprep.subr.mxu0 0.0
        %5798 = vmatpush1.msra.mxu0 0.0
        %5799 = vmatprep.subr.mxu0 0.0
        %5800 = vmatpush1.msra.mxu0 0.0
        %5801 = vmatprep.subr.mxu0 0.0
        %5802 = vmatpush1.msra.mxu0 0.0
        %5803 = vmatprep.subr.mxu0 0.0
        %5804 = vmatpush1.msra.mxu0 0.0
        %5805 = vmatprep.subr.mxu0 0.0
        %5806 = vmatpush1.msra.mxu0 0.0
        %5807 = vmatprep.mubr.f32.mxu0 0.0
        %5808 = vmatmul.mubr.f32.gmra.mrb[0].mxu0 %v5741
        %v5809 = vpop.f32.mrb[0].mxu0
        %v5810 = vadd.f32 %v5429, %v5809
        %v5811 = vpop.f32.mrb[0].mxu0
        %5812 = vdwg.mxu0
        %v5814 = vrot.slane %v5810, 5
        %v5816 = vadd.f32 %v5422, %v5814
        %v5817 = vsub.f32 0.0, %v5816
        %v5818 = vmul.f32 %v5817, 1.442695
        %v5819 = vpow.pop %v5818
        %v5820 = vadd.f32 %v5819, 1.0
        %v5821 = vrcp.pop %v5820
        %v5822 = vmul.f32 1.0, %v5821
        %5823 = vrot.lane.b32.xlu0 %v5814, 96
        %v5824 = vpop.permute.xlu0 %5823
        %v5826 = vmul.f32 %v5822, %v5824
        %5828 = vrot.lane.b32.xlu0 %v5826, 32
        %v5829 = vpop.permute.xlu0 %5828
        %v5831 = vadd.f32 %v5422, %v5829
        %v5832 = vtanh.pop %v5831
        %v5833 = vsub.f32 1.0, %v5822
        %5835 = vrot.lane.b32.xlu0 %v5832, 112
        %v5836 = vpop.permute.xlu0 %5835
        %v5838 = vmul.f32 %v5833, %v5836
        %v5839 = vrot.slane %v5736, 7
        %v5841 = vmul.f32 %v5822, %v5839
        %v5842 = vadd.f32 %v5838, %v5841
        %v5844 = vrot.slane %v5842, 3
        %5845 = vrot.lane.b32.xlu0 %v5844, 112
        %v5846 = vpop.permute.xlu0 %5845
        %v5847 = vsel %vm941, %v5846, 0
        %5849 = vmatprep.subr.mxu0 0.0
        %5850 = vmatpush1.msra.mxu0 %v5426
        %5851 = vmatprep.subr.mxu0 0.0
        %5852 = vmatpush1.msra.mxu0 %v5427
        %5853 = vmatprep.subr.mxu0 0.0
        %5854 = vmatpush1.msra.mxu0 0.0
        %5855 = vmatprep.subr.mxu0 0.0
        %5856 = vmatpush1.msra.mxu0 0.0
        %5857 = vmatprep.subr.mxu0 0.0
        %5858 = vmatpush1.msra.mxu0 0.0
        %5859 = vmatprep.subr.mxu0 0.0
        %5860 = vmatpush1.msra.mxu0 0.0
        %5861 = vmatprep.subr.mxu0 0.0
        %5862 = vmatpush1.msra.mxu0 0.0
        %5863 = vmatprep.subr.mxu0 0.0
        %5864 = vmatpush1.msra.mxu0 0.0
        %5865 = vmatprep.subr.mxu0 0.0
        %5866 = vmatpush1.msra.mxu0 0.0
        %5867 = vmatprep.subr.mxu0 0.0
        %5868 = vmatpush1.msra.mxu0 0.0
        %5869 = vmatprep.subr.mxu0 0.0
        %5870 = vmatpush1.msra.mxu0 0.0
        %5871 = vmatprep.subr.mxu0 0.0
        %5872 = vmatpush1.msra.mxu0 0.0
        %5873 = vmatprep.subr.mxu0 0.0
        %5874 = vmatpush1.msra.mxu0 0.0
        %5875 = vmatprep.subr.mxu0 0.0
        %5876 = vmatpush1.msra.mxu0 0.0
        %5877 = vmatprep.subr.mxu0 0.0
        %5878 = vmatpush1.msra.mxu0 0.0
        %5879 = vmatprep.subr.mxu0 0.0
        %5880 = vmatpush1.msra.mxu0 0.0
        %5881 = vmatprep.subr.mxu0 0.0
        %5882 = vmatpush1.msra.mxu0 0.0
        %5883 = vmatprep.subr.mxu0 0.0
        %5884 = vmatpush1.msra.mxu0 0.0
        %5885 = vmatprep.subr.mxu0 0.0
        %5886 = vmatpush1.msra.mxu0 0.0
        %5887 = vmatprep.subr.mxu0 0.0
        %5888 = vmatpush1.msra.mxu0 0.0
        %5889 = vmatprep.subr.mxu0 0.0
        %5890 = vmatpush1.msra.mxu0 0.0
        %5891 = vmatprep.subr.mxu0 0.0
        %5892 = vmatpush1.msra.mxu0 0.0
        %5893 = vmatprep.subr.mxu0 0.0
        %5894 = vmatpush1.msra.mxu0 0.0
        %5895 = vmatprep.subr.mxu0 0.0
        %5896 = vmatpush1.msra.mxu0 0.0
        %5897 = vmatprep.subr.mxu0 0.0
        %5898 = vmatpush1.msra.mxu0 0.0
        %5899 = vmatprep.subr.mxu0 0.0
        %5900 = vmatpush1.msra.mxu0 0.0
        %5901 = vmatprep.subr.mxu0 0.0
        %5902 = vmatpush1.msra.mxu0 0.0
        %5903 = vmatprep.subr.mxu0 0.0
        %5904 = vmatpush1.msra.mxu0 0.0
        %5905 = vmatprep.subr.mxu0 0.0
        %5906 = vmatpush1.msra.mxu0 0.0
        %5907 = vmatprep.subr.mxu0 0.0
        %5908 = vmatpush1.msra.mxu0 0.0
        %5909 = vmatprep.subr.mxu0 0.0
        %5910 = vmatpush1.msra.mxu0 0.0
        %5911 = vmatprep.subr.mxu0 0.0
        %5912 = vmatpush1.msra.mxu0 0.0
        %5913 = vmatprep.mubr.f32.mxu0 0.0
        %5914 = vmatmul.mubr.f32.gmra.mrb[0].mxu0 %v5847
        %v5915 = vpop.f32.mrb[0].mxu0
        %v5916 = vadd.f32 %v5429, %v5915
        %v5917 = vpop.f32.mrb[0].mxu0
        %5918 = vdwg.mxu0
        %v5920 = vrot.slane %v5916, 4
        %v5922 = vadd.f32 %v5422, %v5920
        %v5923 = vsub.f32 0.0, %v5922
        %v5924 = vmul.f32 %v5923, 1.442695
        %v5925 = vpow.pop %v5924
        %v5926 = vadd.f32 %v5925, 1.0
        %v5927 = vrcp.pop %v5926
        %v5928 = vmul.f32 1.0, %v5927
        %5929 = vrot.lane.b32.xlu0 %v5920, 96
        %v5930 = vpop.permute.xlu0 %5929
        %v5932 = vmul.f32 %v5928, %v5930
        %5934 = vrot.lane.b32.xlu0 %v5932, 32
        %v5935 = vpop.permute.xlu0 %5934
        %v5937 = vadd.f32 %v5422, %v5935
        %v5938 = vtanh.pop %v5937
        %v5939 = vsub.f32 1.0, %v5928
        %5941 = vrot.lane.b32.xlu0 %v5938, 112
        %v5942 = vpop.permute.xlu0 %5941
        %v5944 = vmul.f32 %v5939, %v5942
        %v5945 = vrot.slane %v5842, 7
        %v5947 = vmul.f32 %v5928, %v5945
        %v5948 = vadd.f32 %v5944, %v5947
        %v5950 = vrot.slane %v5948, 4
        %5951 = vrot.lane.b32.xlu0 %v5950, 112
        %v5952 = vpop.permute.xlu0 %5951
        %v5953 = vsel %vm941, %v5952, 0
        %5955 = vmatprep.subr.mxu0 0.0
        %5956 = vmatpush1.msra.mxu0 %v5426
        %5957 = vmatprep.subr.mxu0 0.0
        %5958 = vmatpush1.msra.mxu0 %v5427
        %5959 = vmatprep.subr.mxu0 0.0
        %5960 = vmatpush1.msra.mxu0 0.0
        %5961 = vmatprep.subr.mxu0 0.0
        %5962 = vmatpush1.msra.mxu0 0.0
        %5963 = vmatprep.subr.mxu0 0.0
        %5964 = vmatpush1.msra.mxu0 0.0
        %5965 = vmatprep.subr.mxu0 0.0
        %5966 = vmatpush1.msra.mxu0 0.0
        %5967 = vmatprep.subr.mxu0 0.0
        %5968 = vmatpush1.msra.mxu0 0.0
        %5969 = vmatprep.subr.mxu0 0.0
        %5970 = vmatpush1.msra.mxu0 0.0
        %5971 = vmatprep.subr.mxu0 0.0
        %5972 = vmatpush1.msra.mxu0 0.0
        %5973 = vmatprep.subr.mxu0 0.0
        %5974 = vmatpush1.msra.mxu0 0.0
        %5975 = vmatprep.subr.mxu0 0.0
        %5976 = vmatpush1.msra.mxu0 0.0
        %5977 = vmatprep.subr.mxu0 0.0
        %5978 = vmatpush1.msra.mxu0 0.0
        %5979 = vmatprep.subr.mxu0 0.0
        %5980 = vmatpush1.msra.mxu0 0.0
        %5981 = vmatprep.subr.mxu0 0.0
        %5982 = vmatpush1.msra.mxu0 0.0
        %5983 = vmatprep.subr.mxu0 0.0
        %5984 = vmatpush1.msra.mxu0 0.0
        %5985 = vmatprep.subr.mxu0 0.0
        %5986 = vmatpush1.msra.mxu0 0.0
        %5987 = vmatprep.subr.mxu0 0.0
        %5988 = vmatpush1.msra.mxu0 0.0
        %5989 = vmatprep.subr.mxu0 0.0
        %5990 = vmatpush1.msra.mxu0 0.0
        %5991 = vmatprep.subr.mxu0 0.0
        %5992 = vmatpush1.msra.mxu0 0.0
        %5993 = vmatprep.subr.mxu0 0.0
        %5994 = vmatpush1.msra.mxu0 0.0
        %5995 = vmatprep.subr.mxu0 0.0
        %5996 = vmatpush1.msra.mxu0 0.0
        %5997 = vmatprep.subr.mxu0 0.0
        %5998 = vmatpush1.msra.mxu0 0.0
        %5999 = vmatprep.subr.mxu0 0.0
        %6000 = vmatpush1.msra.mxu0 0.0
        %6001 = vmatprep.subr.mxu0 0.0
        %6002 = vmatpush1.msra.mxu0 0.0
        %6003 = vmatprep.subr.mxu0 0.0
        %6004 = vmatpush1.msra.mxu0 0.0
        %6005 = vmatprep.subr.mxu0 0.0
        %6006 = vmatpush1.msra.mxu0 0.0
        %6007 = vmatprep.subr.mxu0 0.0
        %6008 = vmatpush1.msra.mxu0 0.0
        %6009 = vmatprep.subr.mxu0 0.0
        %6010 = vmatpush1.msra.mxu0 0.0
        %6011 = vmatprep.subr.mxu0 0.0
        %6012 = vmatpush1.msra.mxu0 0.0
        %6013 = vmatprep.subr.mxu0 0.0
        %6014 = vmatpush1.msra.mxu0 0.0
        %6015 = vmatprep.subr.mxu0 0.0
        %6016 = vmatpush1.msra.mxu0 0.0
        %6017 = vmatprep.subr.mxu0 0.0
        %6018 = vmatpush1.msra.mxu0 0.0
        %6019 = vmatprep.mubr.f32.mxu0 0.0
        %6020 = vmatmul.mubr.f32.gmra.mrb[0].mxu0 %v5953
        %v6021 = vpop.f32.mrb[0].mxu0
        %v6022 = vadd.f32 %v5429, %v6021
        %v6023 = vpop.f32.mrb[0].mxu0
        %6024 = vdwg.mxu0
        %v6026 = vrot.slane %v6022, 3
        %v6028 = vadd.f32 %v5422, %v6026
        %v6029 = vsub.f32 0.0, %v6028
        %v6030 = vmul.f32 %v6029, 1.442695
        %v6031 = vpow.pop %v6030
        %v6032 = vadd.f32 %v6031, 1.0
        %v6033 = vrcp.pop %v6032
        %v6034 = vmul.f32 1.0, %v6033
        %6035 = vrot.lane.b32.xlu0 %v6026, 96
        %v6036 = vpop.permute.xlu0 %6035
        %v6038 = vmul.f32 %v6034, %v6036
        %6040 = vrot.lane.b32.xlu0 %v6038, 32
        %v6041 = vpop.permute.xlu0 %6040
        %v6043 = vadd.f32 %v5422, %v6041
        %v6044 = vtanh.pop %v6043
        %v6045 = vsub.f32 1.0, %v6034
        %6047 = vrot.lane.b32.xlu0 %v6044, 112
        %v6048 = vpop.permute.xlu0 %6047
        %v6050 = vmul.f32 %v6045, %v6048
        %v6051 = vrot.slane %v5948, 7
        %v6053 = vmul.f32 %v6034, %v6051
        %v6054 = vadd.f32 %v6050, %v6053
        %v6056 = vrot.slane %v6054, 5
        %6057 = vrot.lane.b32.xlu0 %v6056, 112
        %v6058 = vpop.permute.xlu0 %6057
        %v6059 = vsel %vm941, %v6058, 0
        %6061 = vmatprep.subr.mxu0 0.0
        %6062 = vmatpush1.msra.mxu0 %v5426
        %6063 = vmatprep.subr.mxu0 0.0
        %6064 = vmatpush1.msra.mxu0 %v5427
        %6065 = vmatprep.subr.mxu0 0.0
        %6066 = vmatpush1.msra.mxu0 0.0
        %6067 = vmatprep.subr.mxu0 0.0
        %6068 = vmatpush1.msra.mxu0 0.0
        %6069 = vmatprep.subr.mxu0 0.0
        %6070 = vmatpush1.msra.mxu0 0.0
        %6071 = vmatprep.subr.mxu0 0.0
        %6072 = vmatpush1.msra.mxu0 0.0
        %6073 = vmatprep.subr.mxu0 0.0
        %6074 = vmatpush1.msra.mxu0 0.0
        %6075 = vmatprep.subr.mxu0 0.0
        %6076 = vmatpush1.msra.mxu0 0.0
        %6077 = vmatprep.subr.mxu0 0.0
        %6078 = vmatpush1.msra.mxu0 0.0
        %6079 = vmatprep.subr.mxu0 0.0
        %6080 = vmatpush1.msra.mxu0 0.0
        %6081 = vmatprep.subr.mxu0 0.0
        %6082 = vmatpush1.msra.mxu0 0.0
        %6083 = vmatprep.subr.mxu0 0.0
        %6084 = vmatpush1.msra.mxu0 0.0
        %6085 = vmatprep.subr.mxu0 0.0
        %6086 = vmatpush1.msra.mxu0 0.0
        %6087 = vmatprep.subr.mxu0 0.0
        %6088 = vmatpush1.msra.mxu0 0.0
        %6089 = vmatprep.subr.mxu0 0.0
        %6090 = vmatpush1.msra.mxu0 0.0
        %6091 = vmatprep.subr.mxu0 0.0
        %6092 = vmatpush1.msra.mxu0 0.0
        %6093 = vmatprep.subr.mxu0 0.0
        %6094 = vmatpush1.msra.mxu0 0.0
        %6095 = vmatprep.subr.mxu0 0.0
        %6096 = vmatpush1.msra.mxu0 0.0
        %6097 = vmatprep.subr.mxu0 0.0
        %6098 = vmatpush1.msra.mxu0 0.0
        %6099 = vmatprep.subr.mxu0 0.0
        %6100 = vmatpush1.msra.mxu0 0.0
        %6101 = vmatprep.subr.mxu0 0.0
        %6102 = vmatpush1.msra.mxu0 0.0
        %6103 = vmatprep.subr.mxu0 0.0
        %6104 = vmatpush1.msra.mxu0 0.0
        %6105 = vmatprep.subr.mxu0 0.0
        %6106 = vmatpush1.msra.mxu0 0.0
        %6107 = vmatprep.subr.mxu0 0.0
        %6108 = vmatpush1.msra.mxu0 0.0
        %6109 = vmatprep.subr.mxu0 0.0
        %6110 = vmatpush1.msra.mxu0 0.0
        %6111 = vmatprep.subr.mxu0 0.0
        %6112 = vmatpush1.msra.mxu0 0.0
        %6113 = vmatprep.subr.mxu0 0.0
        %6114 = vmatpush1.msra.mxu0 0.0
        %6115 = vmatprep.subr.mxu0 0.0
        %6116 = vmatpush1.msra.mxu0 0.0
        %6117 = vmatprep.subr.mxu0 0.0
        %6118 = vmatpush1.msra.mxu0 0.0
        %6119 = vmatprep.subr.mxu0 0.0
        %6120 = vmatpush1.msra.mxu0 0.0
        %6121 = vmatprep.subr.mxu0 0.0
        %6122 = vmatpush1.msra.mxu0 0.0
        %6123 = vmatprep.subr.mxu0 0.0
        %6124 = vmatpush1.msra.mxu0 0.0
        %6125 = vmatprep.mubr.f32.mxu0 0.0
        %6126 = vmatmul.mubr.f32.gmra.mrb[0].mxu0 %v6059
        %v6127 = vpop.f32.mrb[0].mxu0
        %v6128 = vadd.f32 %v5429, %v6127
        %v6129 = vpop.f32.mrb[0].mxu0
        %6130 = vdwg.mxu0
        %v6132 = vrot.slane %v6128, 2
        %v6134 = vadd.f32 %v5422, %v6132
        %v6135 = vsub.f32 0.0, %v6134
        %v6136 = vmul.f32 %v6135, 1.442695
        %v6137 = vpow.pop %v6136
        %v6138 = vadd.f32 %v6137, 1.0
        %v6139 = vrcp.pop %v6138
        %v6140 = vmul.f32 1.0, %v6139
        %6141 = vrot.lane.b32.xlu0 %v6132, 96
        %v6142 = vpop.permute.xlu0 %6141
        %v6144 = vmul.f32 %v6140, %v6142
        %6146 = vrot.lane.b32.xlu0 %v6144, 32
        %v6147 = vpop.permute.xlu0 %6146
        %v6149 = vadd.f32 %v5422, %v6147
        %v6150 = vtanh.pop %v6149
        %v6151 = vsub.f32 1.0, %v6140
        %6153 = vrot.lane.b32.xlu0 %v6150, 112
        %v6154 = vpop.permute.xlu0 %6153
        %v6156 = vmul.f32 %v6151, %v6154
        %v6157 = vrot.slane %v6054, 7
        %v6159 = vmul.f32 %v6140, %v6157
        %v6160 = vadd.f32 %v6156, %v6159
        %v6162 = vrot.slane %v6160, 6
        %6163 = vrot.lane.b32.xlu0 %v6162, 112
        %v6164 = vpop.permute.xlu0 %6163
        %v6165 = vsel %vm941, %v6164, 0
        %6167 = vmatprep.subr.mxu0 0.0
        %6168 = vmatpush1.msra.mxu0 %v5426
        %6169 = vmatprep.subr.mxu0 0.0
        %6170 = vmatpush1.msra.mxu0 %v5427
        %6171 = vmatprep.subr.mxu0 0.0
        %6172 = vmatpush1.msra.mxu0 0.0
        %6173 = vmatprep.subr.mxu0 0.0
        %6174 = vmatpush1.msra.mxu0 0.0
        %6175 = vmatprep.subr.mxu0 0.0
        %6176 = vmatpush1.msra.mxu0 0.0
        %6177 = vmatprep.subr.mxu0 0.0
        %6178 = vmatpush1.msra.mxu0 0.0
        %6179 = vmatprep.subr.mxu0 0.0
        %6180 = vmatpush1.msra.mxu0 0.0
        %6181 = vmatprep.subr.mxu0 0.0
        %6182 = vmatpush1.msra.mxu0 0.0
        %6183 = vmatprep.subr.mxu0 0.0
        %6184 = vmatpush1.msra.mxu0 0.0
        %6185 = vmatprep.subr.mxu0 0.0
        %6186 = vmatpush1.msra.mxu0 0.0
        %6187 = vmatprep.subr.mxu0 0.0
        %6188 = vmatpush1.msra.mxu0 0.0
        %6189 = vmatprep.subr.mxu0 0.0
        %6190 = vmatpush1.msra.mxu0 0.0
        %6191 = vmatprep.subr.mxu0 0.0
        %6192 = vmatpush1.msra.mxu0 0.0
        %6193 = vmatprep.subr.mxu0 0.0
        %6194 = vmatpush1.msra.mxu0 0.0
        %6195 = vmatprep.subr.mxu0 0.0
        %6196 = vmatpush1.msra.mxu0 0.0
        %6197 = vmatprep.subr.mxu0 0.0
        %6198 = vmatpush1.msra.mxu0 0.0
        %6199 = vmatprep.subr.mxu0 0.0
        %6200 = vmatpush1.msra.mxu0 0.0
        %6201 = vmatprep.subr.mxu0 0.0
        %6202 = vmatpush1.msra.mxu0 0.0
        %6203 = vmatprep.subr.mxu0 0.0
        %6204 = vmatpush1.msra.mxu0 0.0
        %6205 = vmatprep.subr.mxu0 0.0
        %6206 = vmatpush1.msra.mxu0 0.0
        %6207 = vmatprep.subr.mxu0 0.0
        %6208 = vmatpush1.msra.mxu0 0.0
        %6209 = vmatprep.subr.mxu0 0.0
        %6210 = vmatpush1.msra.mxu0 0.0
        %6211 = vmatprep.subr.mxu0 0.0
        %6212 = vmatpush1.msra.mxu0 0.0
        %6213 = vmatprep.subr.mxu0 0.0
        %6214 = vmatpush1.msra.mxu0 0.0
        %6215 = vmatprep.subr.mxu0 0.0
        %6216 = vmatpush1.msra.mxu0 0.0
        %6217 = vmatprep.subr.mxu0 0.0
        %6218 = vmatpush1.msra.mxu0 0.0
        %6219 = vmatprep.subr.mxu0 0.0
        %6220 = vmatpush1.msra.mxu0 0.0
        %6221 = vmatprep.subr.mxu0 0.0
        %6222 = vmatpush1.msra.mxu0 0.0
        %6223 = vmatprep.subr.mxu0 0.0
        %6224 = vmatpush1.msra.mxu0 0.0
        %6225 = vmatprep.subr.mxu0 0.0
        %6226 = vmatpush1.msra.mxu0 0.0
        %6227 = vmatprep.subr.mxu0 0.0
        %6228 = vmatpush1.msra.mxu0 0.0
        %6229 = vmatprep.subr.mxu0 0.0
        %6230 = vmatpush1.msra.mxu0 0.0
        %6231 = vmatprep.mubr.f32.mxu0 0.0
        %6232 = vmatmul.mubr.f32.gmra.mrb[0].mxu0 %v6165
        %v6233 = vpop.f32.mrb[0].mxu0
        %v6234 = vadd.f32 %v5429, %v6233
        %v6235 = vpop.f32.mrb[0].mxu0
        %6236 = vdwg.mxu0
        %v6238 = vrot.slane %v6234, 1
        %v6240 = vadd.f32 %v5422, %v6238
        %v6241 = vsub.f32 0.0, %v6240
        %v6242 = vmul.f32 %v6241, 1.442695
        %v6243 = vpow.pop %v6242
        %v6244 = vadd.f32 %v6243, 1.0
        %v6245 = vrcp.pop %v6244
        %v6246 = vmul.f32 1.0, %v6245
        %6247 = vrot.lane.b32.xlu0 %v6238, 96
        %v6248 = vpop.permute.xlu0 %6247
        %v6250 = vmul.f32 %v6246, %v6248
        %6252 = vrot.lane.b32.xlu0 %v6250, 32
        %v6253 = vpop.permute.xlu0 %6252
        %v6255 = vadd.f32 %v5422, %v6253
        %v6256 = vtanh.pop %v6255
        %v6257 = vsub.f32 1.0, %v6246
        %6259 = vrot.lane.b32.xlu0 %v6256, 112
        %v6260 = vpop.permute.xlu0 %6259
        %v6262 = vmul.f32 %v6257, %v6260
        %v6263 = vrot.slane %v6160, 7
        %v6265 = vmul.f32 %v6246, %v6263
        %v6266 = vadd.f32 %v6262, %v6265
        %v6267 = vsel %vm3356, %v5525, %v5630
        %v6268 = vsel %vm3218, %v6267, %v5736
        %v6269 = vsel %vm4396, %v6268, %v5842
        %v6270 = vsel %vm3244, %v6269, %v5948
        %v6271 = vsel %vm3237, %v6270, %v6054
        %v6272 = vsel %vm3230, %v6271, %v6160
        %v6273 = vsel %vm3223, %v6272, %v6266
        %s6274 = scalar_lea.vmem %s39, 96
        %v6275 = vld [vmem:[%s6274] sm:$0xff]
        %v6276 = vld [vmem:[%s6274 + $0x8] sm:$0xff]
        %v6277 = vld [vmem:[%s6274 + $0x10] sm:$0xff]
        %v6278 = vld [vmem:[%s6274 + $0x18] sm:$0xff]
        %s6279 = scalar_lea.vmem %s43, 3
        %v6280 = vld [vmem:[%s6279] sm:$0x1]
        %v6282 = vlaneseq
        %v6283 = vshrl.u32 %v6282, 7
        %v6284 = vsub.s32 0, %v6283
        %v6285 = vrot.slane %v6280, %v6284
        %6287 = vmatprep.subr.mxu0 0.0
        %6288 = vmatpush1.msra.mxu0 %v6275
        %6289 = vmatprep.subr.mxu0 0.0
        %6290 = vmatpush1.msra.mxu0 %v6276
        %6291 = vmatprep.subr.mxu0 0.0
        %6292 = vmatpush1.msra.mxu0 %v6277
        %6293 = vmatprep.subr.mxu0 0.0
        %6294 = vmatpush1.msra.mxu0 %v6278
        %6295 = vmatprep.subr.mxu0 0.0
        %6296 = vmatpush1.msra.mxu0 0.0
        %6297 = vmatprep.subr.mxu0 0.0
        %6298 = vmatpush1.msra.mxu0 0.0
        %6299 = vmatprep.subr.mxu0 0.0
        %6300 = vmatpush1.msra.mxu0 0.0
        %6301 = vmatprep.subr.mxu0 0.0
        %6302 = vmatpush1.msra.mxu0 0.0
        %6303 = vmatprep.subr.mxu0 0.0
        %6304 = vmatpush1.msra.mxu0 0.0
        %6305 = vmatprep.subr.mxu0 0.0
        %6306 = vmatpush1.msra.mxu0 0.0
        %6307 = vmatprep.subr.mxu0 0.0
        %6308 = vmatpush1.msra.mxu0 0.0
        %6309 = vmatprep.subr.mxu0 0.0
        %6310 = vmatpush1.msra.mxu0 0.0
        %6311 = vmatprep.subr.mxu0 0.0
        %6312 = vmatpush1.msra.mxu0 0.0
        %6313 = vmatprep.subr.mxu0 0.0
        %6314 = vmatpush1.msra.mxu0 0.0
        %6315 = vmatprep.subr.mxu0 0.0
        %6316 = vmatpush1.msra.mxu0 0.0
        %6317 = vmatprep.subr.mxu0 0.0
        %6318 = vmatpush1.msra.mxu0 0.0
        %6319 = vmatprep.subr.mxu0 0.0
        %6320 = vmatpush1.msra.mxu0 0.0
        %6321 = vmatprep.subr.mxu0 0.0
        %6322 = vmatpush1.msra.mxu0 0.0
        %6323 = vmatprep.subr.mxu0 0.0
        %6324 = vmatpush1.msra.mxu0 0.0
        %6325 = vmatprep.subr.mxu0 0.0
        %6326 = vmatpush1.msra.mxu0 0.0
        %6327 = vmatprep.subr.mxu0 0.0
        %6328 = vmatpush1.msra.mxu0 0.0
        %6329 = vmatprep.subr.mxu0 0.0
        %6330 = vmatpush1.msra.mxu0 0.0
        %6331 = vmatprep.subr.mxu0 0.0
        %6332 = vmatpush1.msra.mxu0 0.0
        %6333 = vmatprep.subr.mxu0 0.0
        %6334 = vmatpush1.msra.mxu0 0.0
        %6335 = vmatprep.subr.mxu0 0.0
        %6336 = vmatpush1.msra.mxu0 0.0
        %6337 = vmatprep.subr.mxu0 0.0
        %6338 = vmatpush1.msra.mxu0 0.0
        %6339 = vmatprep.subr.mxu0 0.0
        %6340 = vmatpush1.msra.mxu0 0.0
        %6341 = vmatprep.subr.mxu0 0.0
        %6342 = vmatpush1.msra.mxu0 0.0
        %6343 = vmatprep.subr.mxu0 0.0
        %6344 = vmatpush1.msra.mxu0 0.0
        %6345 = vmatprep.subr.mxu0 0.0
        %6346 = vmatpush1.msra.mxu0 0.0
        %6347 = vmatprep.subr.mxu0 0.0
        %6348 = vmatpush1.msra.mxu0 0.0
        %6349 = vmatprep.subr.mxu0 0.0
        %6350 = vmatpush1.msra.mxu0 0.0
        %6351 = vmatprep.mubr.f32.mxu0 0.0
        %6352 = vmatmul.mubr.f32.gmra.mrb[0].mxu0 %v5353
        %v6353 = vpop.f32.mrb[0].mxu0
        %v6354 = vadd.f32 %v6285, %v6353
        %v6355 = vpop.f32.mrb[0].mxu0
        %6356 = vdwg.mxu0
        %s6357 = scalar_lea.vmem %s41, 48
        %v6358 = vld [vmem:[%s6357] sm:$0xff]
        %v6359 = vld [vmem:[%s6357 + $0x8] sm:$0xff]
        %s6360 = scalar_lea.vmem %s45, 3
        %v6361 = vld [vmem:[%s6360] sm:$0x1]
        %6362 = vmatprep.subr.mxu0 0.0
        %6363 = vmatpush1.msra.mxu0 %v6358
        %6364 = vmatprep.subr.mxu0 0.0
        %6365 = vmatpush1.msra.mxu0 %v6359
        %6366 = vmatprep.subr.mxu0 0.0
        %6367 = vmatpush1.msra.mxu0 0.0
        %6368 = vmatprep.subr.mxu0 0.0
        %6369 = vmatpush1.msra.mxu0 0.0
        %6370 = vmatprep.subr.mxu0 0.0
        %6371 = vmatpush1.msra.mxu0 0.0
        %6372 = vmatprep.subr.mxu0 0.0
        %6373 = vmatpush1.msra.mxu0 0.0
        %6374 = vmatprep.subr.mxu0 0.0
        %6375 = vmatpush1.msra.mxu0 0.0
        %6376 = vmatprep.subr.mxu0 0.0
        %6377 = vmatpush1.msra.mxu0 0.0
        %6378 = vmatprep.subr.mxu0 0.0
        %6379 = vmatpush1.msra.mxu0 0.0
        %6380 = vmatprep.subr.mxu0 0.0
        %6381 = vmatpush1.msra.mxu0 0.0
        %6382 = vmatprep.subr.mxu0 0.0
        %6383 = vmatpush1.msra.mxu0 0.0
        %6384 = vmatprep.subr.mxu0 0.0
        %6385 = vmatpush1.msra.mxu0 0.0
        %6386 = vmatprep.subr.mxu0 0.0
        %6387 = vmatpush1.msra.mxu0 0.0
        %6388 = vmatprep.subr.mxu0 0.0
        %6389 = vmatpush1.msra.mxu0 0.0
        %6390 = vmatprep.subr.mxu0 0.0
        %6391 = vmatpush1.msra.mxu0 0.0
        %6392 = vmatprep.subr.mxu0 0.0
        %6393 = vmatpush1.msra.mxu0 0.0
        %6394 = vmatprep.subr.mxu0 0.0
        %6395 = vmatpush1.msra.mxu0 0.0
        %6396 = vmatprep.subr.mxu0 0.0
        %6397 = vmatpush1.msra.mxu0 0.0
        %6398 = vmatprep.subr.mxu0 0.0
        %6399 = vmatpush1.msra.mxu0 0.0
        %6400 = vmatprep.subr.mxu0 0.0
        %6401 = vmatpush1.msra.mxu0 0.0
        %6402 = vmatprep.subr.mxu0 0.0
        %6403 = vmatpush1.msra.mxu0 0.0
        %6404 = vmatprep.subr.mxu0 0.0
        %6405 = vmatpush1.msra.mxu0 0.0
        %6406 = vmatprep.subr.mxu0 0.0
        %6407 = vmatpush1.msra.mxu0 0.0
        %6408 = vmatprep.subr.mxu0 0.0
        %6409 = vmatpush1.msra.mxu0 0.0
        %6410 = vmatprep.subr.mxu0 0.0
        %6411 = vmatpush1.msra.mxu0 0.0
        %6412 = vmatprep.subr.mxu0 0.0
        %6413 = vmatpush1.msra.mxu0 0.0
        %6414 = vmatprep.subr.mxu0 0.0
        %6415 = vmatpush1.msra.mxu0 0.0
        %6416 = vmatprep.subr.mxu0 0.0
        %6417 = vmatpush1.msra.mxu0 0.0
        %6418 = vmatprep.subr.mxu0 0.0
        %6419 = vmatpush1.msra.mxu0 0.0
        %6420 = vmatprep.subr.mxu0 0.0
        %6421 = vmatpush1.msra.mxu0 0.0
        %6422 = vmatprep.subr.mxu0 0.0
        %6423 = vmatpush1.msra.mxu0 0.0
        %6424 = vmatprep.subr.mxu0 0.0
        %6425 = vmatpush1.msra.mxu0 0.0
        %6426 = vmatprep.mubr.f32.mxu0 0.0
        %6427 = vmatmul.mubr.f32.gmra.mrb[0].mxu0 %v3555
        %v6428 = vpop.f32.mrb[0].mxu0
        %v6429 = vadd.f32 %v6361, %v6428
        %v6430 = vpop.f32.mrb[0].mxu0
        %6431 = vdwg.mxu0
        %v6433 = vrot.slane %v6429, 1
        %v6435 = vadd.f32 %v6354, %v6433
        %v6436 = vsub.f32 0.0, %v6435
        %v6437 = vmul.f32 %v6436, 1.442695
        %v6438 = vpow.pop %v6437
        %v6439 = vadd.f32 %v6438, 1.0
        %v6440 = vrcp.pop %v6439
        %v6441 = vmul.f32 1.0, %v6440
        %6442 = vrot.lane.b32.xlu0 %v6433, 96
        %v6443 = vpop.permute.xlu0 %6442
        %v6445 = vmul.f32 %v6441, %v6443
        %6447 = vrot.lane.b32.xlu0 %v6445, 32
        %v6448 = vpop.permute.xlu0 %6447
        %v6450 = vadd.f32 %v6354, %v6448
        %v6451 = vtanh.pop %v6450
        %v6452 = vsub.f32 1.0, %v6441
        %6454 = vrot.lane.b32.xlu0 %v6451, 112
        %v6455 = vpop.permute.xlu0 %6454
        %v6457 = vmul.f32 %v6452, %v6455
        %v6458 = vmul.f32 %v6441, 0.0
        %v6459 = vadd.f32 %v6457, %v6458
        %v6461 = vrot.slane %v6459, 7
        %6462 = vrot.lane.b32.xlu0 %v6461, 112
        %v6463 = vpop.permute.xlu0 %6462
        %v6464 = vsel %vm941, %v6463, 0
        %6466 = vmatprep.subr.mxu0 0.0
        %6467 = vmatpush1.msra.mxu0 %v6358
        %6468 = vmatprep.subr.mxu0 0.0
        %6469 = vmatpush1.msra.mxu0 %v6359
        %6470 = vmatprep.subr.mxu0 0.0
        %6471 = vmatpush1.msra.mxu0 0.0
        %6472 = vmatprep.subr.mxu0 0.0
        %6473 = vmatpush1.msra.mxu0 0.0
        %6474 = vmatprep.subr.mxu0 0.0
        %6475 = vmatpush1.msra.mxu0 0.0
        %6476 = vmatprep.subr.mxu0 0.0
        %6477 = vmatpush1.msra.mxu0 0.0
        %6478 = vmatprep.subr.mxu0 0.0
        %6479 = vmatpush1.msra.mxu0 0.0
        %6480 = vmatprep.subr.mxu0 0.0
        %6481 = vmatpush1.msra.mxu0 0.0
        %6482 = vmatprep.subr.mxu0 0.0
        %6483 = vmatpush1.msra.mxu0 0.0
        %6484 = vmatprep.subr.mxu0 0.0
        %6485 = vmatpush1.msra.mxu0 0.0
        %6486 = vmatprep.subr.mxu0 0.0
        %6487 = vmatpush1.msra.mxu0 0.0
        %6488 = vmatprep.subr.mxu0 0.0
        %6489 = vmatpush1.msra.mxu0 0.0
        %6490 = vmatprep.subr.mxu0 0.0
        %6491 = vmatpush1.msra.mxu0 0.0
        %6492 = vmatprep.subr.mxu0 0.0
        %6493 = vmatpush1.msra.mxu0 0.0
        %6494 = vmatprep.subr.mxu0 0.0
        %6495 = vmatpush1.msra.mxu0 0.0
        %6496 = vmatprep.subr.mxu0 0.0
        %6497 = vmatpush1.msra.mxu0 0.0
        %6498 = vmatprep.subr.mxu0 0.0
        %6499 = vmatpush1.msra.mxu0 0.0
        %6500 = vmatprep.subr.mxu0 0.0
        %6501 = vmatpush1.msra.mxu0 0.0
        %6502 = vmatprep.subr.mxu0 0.0
        %6503 = vmatpush1.msra.mxu0 0.0
        %6504 = vmatprep.subr.mxu0 0.0
        %6505 = vmatpush1.msra.mxu0 0.0
        %6506 = vmatprep.subr.mxu0 0.0
        %6507 = vmatpush1.msra.mxu0 0.0
        %6508 = vmatprep.subr.mxu0 0.0
        %6509 = vmatpush1.msra.mxu0 0.0
        %6510 = vmatprep.subr.mxu0 0.0
        %6511 = vmatpush1.msra.mxu0 0.0
        %6512 = vmatprep.subr.mxu0 0.0
        %6513 = vmatpush1.msra.mxu0 0.0
        %6514 = vmatprep.subr.mxu0 0.0
        %6515 = vmatpush1.msra.mxu0 0.0
        %6516 = vmatprep.subr.mxu0 0.0
        %6517 = vmatpush1.msra.mxu0 0.0
        %6518 = vmatprep.subr.mxu0 0.0
        %6519 = vmatpush1.msra.mxu0 0.0
        %6520 = vmatprep.subr.mxu0 0.0
        %6521 = vmatpush1.msra.mxu0 0.0
        %6522 = vmatprep.subr.mxu0 0.0
        %6523 = vmatpush1.msra.mxu0 0.0
        %6524 = vmatprep.subr.mxu0 0.0
        %6525 = vmatpush1.msra.mxu0 0.0
        %6526 = vmatprep.subr.mxu0 0.0
        %6527 = vmatpush1.msra.mxu0 0.0
        %6528 = vmatprep.subr.mxu0 0.0
        %6529 = vmatpush1.msra.mxu0 0.0
        %6530 = vmatprep.mubr.f32.mxu0 0.0
        %6531 = vmatmul.mubr.f32.gmra.mrb[0].mxu0 %v6464
        %v6532 = vpop.f32.mrb[0].mxu0
        %v6533 = vadd.f32 %v6361, %v6532
        %v6534 = vpop.f32.mrb[0].mxu0
        %6535 = vdwg.mxu0
        %v6537 = vrot.slane %v6533, 2
        %v6539 = vadd.f32 %v6354, %v6537
        %v6540 = vsub.f32 0.0, %v6539
        %v6541 = vmul.f32 %v6540, 1.442695
        %v6542 = vpow.pop %v6541
        %v6543 = vadd.f32 %v6542, 1.0
        %v6544 = vrcp.pop %v6543
        %v6545 = vmul.f32 1.0, %v6544
        %6546 = vrot.lane.b32.xlu0 %v6537, 96
        %v6547 = vpop.permute.xlu0 %6546
        %v6549 = vmul.f32 %v6545, %v6547
        %6551 = vrot.lane.b32.xlu0 %v6549, 32
        %v6552 = vpop.permute.xlu0 %6551
        %v6554 = vadd.f32 %v6354, %v6552
        %v6555 = vtanh.pop %v6554
        %v6556 = vsub.f32 1.0, %v6545
        %6558 = vrot.lane.b32.xlu0 %v6555, 112
        %v6559 = vpop.permute.xlu0 %6558
        %v6561 = vmul.f32 %v6556, %v6559
        %v6562 = vrot.slane %v6459, 1
        %v6564 = vmul.f32 %v6545, %v6562
        %v6565 = vadd.f32 %v6561, %v6564
        %v6567 = vrot.slane %v6565, 6
        %6568 = vrot.lane.b32.xlu0 %v6567, 112
        %v6569 = vpop.permute.xlu0 %6568
        %v6570 = vsel %vm941, %v6569, 0
        %6572 = vmatprep.subr.mxu0 0.0
        %6573 = vmatpush1.msra.mxu0 %v6358
        %6574 = vmatprep.subr.mxu0 0.0
        %6575 = vmatpush1.msra.mxu0 %v6359
        %6576 = vmatprep.subr.mxu0 0.0
        %6577 = vmatpush1.msra.mxu0 0.0
        %6578 = vmatprep.subr.mxu0 0.0
        %6579 = vmatpush1.msra.mxu0 0.0
        %6580 = vmatprep.subr.mxu0 0.0
        %6581 = vmatpush1.msra.mxu0 0.0
        %6582 = vmatprep.subr.mxu0 0.0
        %6583 = vmatpush1.msra.mxu0 0.0
        %6584 = vmatprep.subr.mxu0 0.0
        %6585 = vmatpush1.msra.mxu0 0.0
        %6586 = vmatprep.subr.mxu0 0.0
        %6587 = vmatpush1.msra.mxu0 0.0
        %6588 = vmatprep.subr.mxu0 0.0
        %6589 = vmatpush1.msra.mxu0 0.0
        %6590 = vmatprep.subr.mxu0 0.0
        %6591 = vmatpush1.msra.mxu0 0.0
        %6592 = vmatprep.subr.mxu0 0.0
        %6593 = vmatpush1.msra.mxu0 0.0
        %6594 = vmatprep.subr.mxu0 0.0
        %6595 = vmatpush1.msra.mxu0 0.0
        %6596 = vmatprep.subr.mxu0 0.0
        %6597 = vmatpush1.msra.mxu0 0.0
        %6598 = vmatprep.subr.mxu0 0.0
        %6599 = vmatpush1.msra.mxu0 0.0
        %6600 = vmatprep.subr.mxu0 0.0
        %6601 = vmatpush1.msra.mxu0 0.0
        %6602 = vmatprep.subr.mxu0 0.0
        %6603 = vmatpush1.msra.mxu0 0.0
        %6604 = vmatprep.subr.mxu0 0.0
        %6605 = vmatpush1.msra.mxu0 0.0
        %6606 = vmatprep.subr.mxu0 0.0
        %6607 = vmatpush1.msra.mxu0 0.0
        %6608 = vmatprep.subr.mxu0 0.0
        %6609 = vmatpush1.msra.mxu0 0.0
        %6610 = vmatprep.subr.mxu0 0.0
        %6611 = vmatpush1.msra.mxu0 0.0
        %6612 = vmatprep.subr.mxu0 0.0
        %6613 = vmatpush1.msra.mxu0 0.0
        %6614 = vmatprep.subr.mxu0 0.0
        %6615 = vmatpush1.msra.mxu0 0.0
        %6616 = vmatprep.subr.mxu0 0.0
        %6617 = vmatpush1.msra.mxu0 0.0
        %6618 = vmatprep.subr.mxu0 0.0
        %6619 = vmatpush1.msra.mxu0 0.0
        %6620 = vmatprep.subr.mxu0 0.0
        %6621 = vmatpush1.msra.mxu0 0.0
        %6622 = vmatprep.subr.mxu0 0.0
        %6623 = vmatpush1.msra.mxu0 0.0
        %6624 = vmatprep.subr.mxu0 0.0
        %6625 = vmatpush1.msra.mxu0 0.0
        %6626 = vmatprep.subr.mxu0 0.0
        %6627 = vmatpush1.msra.mxu0 0.0
        %6628 = vmatprep.subr.mxu0 0.0
        %6629 = vmatpush1.msra.mxu0 0.0
        %6630 = vmatprep.subr.mxu0 0.0
        %6631 = vmatpush1.msra.mxu0 0.0
        %6632 = vmatprep.subr.mxu0 0.0
        %6633 = vmatpush1.msra.mxu0 0.0
        %6634 = vmatprep.subr.mxu0 0.0
        %6635 = vmatpush1.msra.mxu0 0.0
        %6636 = vmatprep.mubr.f32.mxu0 0.0
        %6637 = vmatmul.mubr.f32.gmra.mrb[0].mxu0 %v6570
        %v6638 = vpop.f32.mrb[0].mxu0
        %v6639 = vadd.f32 %v6361, %v6638
        %v6640 = vpop.f32.mrb[0].mxu0
        %6641 = vdwg.mxu0
        %v6643 = vrot.slane %v6639, 3
        %v6645 = vadd.f32 %v6354, %v6643
        %v6646 = vsub.f32 0.0, %v6645
        %v6647 = vmul.f32 %v6646, 1.442695
        %v6648 = vpow.pop %v6647
        %v6649 = vadd.f32 %v6648, 1.0
        %v6650 = vrcp.pop %v6649
        %v6651 = vmul.f32 1.0, %v6650
        %6652 = vrot.lane.b32.xlu0 %v6643, 96
        %v6653 = vpop.permute.xlu0 %6652
        %v6655 = vmul.f32 %v6651, %v6653
        %6657 = vrot.lane.b32.xlu0 %v6655, 32
        %v6658 = vpop.permute.xlu0 %6657
        %v6660 = vadd.f32 %v6354, %v6658
        %v6661 = vtanh.pop %v6660
        %v6662 = vsub.f32 1.0, %v6651
        %6664 = vrot.lane.b32.xlu0 %v6661, 112
        %v6665 = vpop.permute.xlu0 %6664
        %v6667 = vmul.f32 %v6662, %v6665
        %v6668 = vrot.slane %v6565, 1
        %v6670 = vmul.f32 %v6651, %v6668
        %v6671 = vadd.f32 %v6667, %v6670
        %v6673 = vrot.slane %v6671, 5
        %6674 = vrot.lane.b32.xlu0 %v6673, 112
        %v6675 = vpop.permute.xlu0 %6674
        %v6676 = vsel %vm941, %v6675, 0
        %6678 = vmatprep.subr.mxu0 0.0
        %6679 = vmatpush1.msra.mxu0 %v6358
        %6680 = vmatprep.subr.mxu0 0.0
        %6681 = vmatpush1.msra.mxu0 %v6359
        %6682 = vmatprep.subr.mxu0 0.0
        %6683 = vmatpush1.msra.mxu0 0.0
        %6684 = vmatprep.subr.mxu0 0.0
        %6685 = vmatpush1.msra.mxu0 0.0
        %6686 = vmatprep.subr.mxu0 0.0
        %6687 = vmatpush1.msra.mxu0 0.0
        %6688 = vmatprep.subr.mxu0 0.0
        %6689 = vmatpush1.msra.mxu0 0.0
        %6690 = vmatprep.subr.mxu0 0.0
        %6691 = vmatpush1.msra.mxu0 0.0
        %6692 = vmatprep.subr.mxu0 0.0
        %6693 = vmatpush1.msra.mxu0 0.0
        %6694 = vmatprep.subr.mxu0 0.0
        %6695 = vmatpush1.msra.mxu0 0.0
        %6696 = vmatprep.subr.mxu0 0.0
        %6697 = vmatpush1.msra.mxu0 0.0
        %6698 = vmatprep.subr.mxu0 0.0
        %6699 = vmatpush1.msra.mxu0 0.0
        %6700 = vmatprep.subr.mxu0 0.0
        %6701 = vmatpush1.msra.mxu0 0.0
        %6702 = vmatprep.subr.mxu0 0.0
        %6703 = vmatpush1.msra.mxu0 0.0
        %6704 = vmatprep.subr.mxu0 0.0
        %6705 = vmatpush1.msra.mxu0 0.0
        %6706 = vmatprep.subr.mxu0 0.0
        %6707 = vmatpush1.msra.mxu0 0.0
        %6708 = vmatprep.subr.mxu0 0.0
        %6709 = vmatpush1.msra.mxu0 0.0
        %6710 = vmatprep.subr.mxu0 0.0
        %6711 = vmatpush1.msra.mxu0 0.0
        %6712 = vmatprep.subr.mxu0 0.0
        %6713 = vmatpush1.msra.mxu0 0.0
        %6714 = vmatprep.subr.mxu0 0.0
        %6715 = vmatpush1.msra.mxu0 0.0
        %6716 = vmatprep.subr.mxu0 0.0
        %6717 = vmatpush1.msra.mxu0 0.0
        %6718 = vmatprep.subr.mxu0 0.0
        %6719 = vmatpush1.msra.mxu0 0.0
        %6720 = vmatprep.subr.mxu0 0.0
        %6721 = vmatpush1.msra.mxu0 0.0
        %6722 = vmatprep.subr.mxu0 0.0
        %6723 = vmatpush1.msra.mxu0 0.0
        %6724 = vmatprep.subr.mxu0 0.0
        %6725 = vmatpush1.msra.mxu0 0.0
        %6726 = vmatprep.subr.mxu0 0.0
        %6727 = vmatpush1.msra.mxu0 0.0
        %6728 = vmatprep.subr.mxu0 0.0
        %6729 = vmatpush1.msra.mxu0 0.0
        %6730 = vmatprep.subr.mxu0 0.0
        %6731 = vmatpush1.msra.mxu0 0.0
        %6732 = vmatprep.subr.mxu0 0.0
        %6733 = vmatpush1.msra.mxu0 0.0
        %6734 = vmatprep.subr.mxu0 0.0
        %6735 = vmatpush1.msra.mxu0 0.0
        %6736 = vmatprep.subr.mxu0 0.0
        %6737 = vmatpush1.msra.mxu0 0.0
        %6738 = vmatprep.subr.mxu0 0.0
        %6739 = vmatpush1.msra.mxu0 0.0
        %6740 = vmatprep.subr.mxu0 0.0
        %6741 = vmatpush1.msra.mxu0 0.0
        %6742 = vmatprep.mubr.f32.mxu0 0.0
        %6743 = vmatmul.mubr.f32.gmra.mrb[0].mxu0 %v6676
        %v6744 = vpop.f32.mrb[0].mxu0
        %v6745 = vadd.f32 %v6361, %v6744
        %v6746 = vpop.f32.mrb[0].mxu0
        %6747 = vdwg.mxu0
        %v6749 = vrot.slane %v6745, 4
        %v6751 = vadd.f32 %v6354, %v6749
        %v6752 = vsub.f32 0.0, %v6751
        %v6753 = vmul.f32 %v6752, 1.442695
        %v6754 = vpow.pop %v6753
        %v6755 = vadd.f32 %v6754, 1.0
        %v6756 = vrcp.pop %v6755
        %v6757 = vmul.f32 1.0, %v6756
        %6758 = vrot.lane.b32.xlu0 %v6749, 96
        %v6759 = vpop.permute.xlu0 %6758
        %v6761 = vmul.f32 %v6757, %v6759
        %6763 = vrot.lane.b32.xlu0 %v6761, 32
        %v6764 = vpop.permute.xlu0 %6763
        %v6766 = vadd.f32 %v6354, %v6764
        %v6767 = vtanh.pop %v6766
        %v6768 = vsub.f32 1.0, %v6757
        %6770 = vrot.lane.b32.xlu0 %v6767, 112
        %v6771 = vpop.permute.xlu0 %6770
        %v6773 = vmul.f32 %v6768, %v6771
        %v6774 = vrot.slane %v6671, 1
        %v6776 = vmul.f32 %v6757, %v6774
        %v6777 = vadd.f32 %v6773, %v6776
        %v6779 = vrot.slane %v6777, 4
        %6780 = vrot.lane.b32.xlu0 %v6779, 112
        %v6781 = vpop.permute.xlu0 %6780
        %v6782 = vsel %vm941, %v6781, 0
        %6784 = vmatprep.subr.mxu0 0.0
        %6785 = vmatpush1.msra.mxu0 %v6358
        %6786 = vmatprep.subr.mxu0 0.0
        %6787 = vmatpush1.msra.mxu0 %v6359
        %6788 = vmatprep.subr.mxu0 0.0
        %6789 = vmatpush1.msra.mxu0 0.0
        %6790 = vmatprep.subr.mxu0 0.0
        %6791 = vmatpush1.msra.mxu0 0.0
        %6792 = vmatprep.subr.mxu0 0.0
        %6793 = vmatpush1.msra.mxu0 0.0
        %6794 = vmatprep.subr.mxu0 0.0
        %6795 = vmatpush1.msra.mxu0 0.0
        %6796 = vmatprep.subr.mxu0 0.0
        %6797 = vmatpush1.msra.mxu0 0.0
        %6798 = vmatprep.subr.mxu0 0.0
        %6799 = vmatpush1.msra.mxu0 0.0
        %6800 = vmatprep.subr.mxu0 0.0
        %6801 = vmatpush1.msra.mxu0 0.0
        %6802 = vmatprep.subr.mxu0 0.0
        %6803 = vmatpush1.msra.mxu0 0.0
        %6804 = vmatprep.subr.mxu0 0.0
        %6805 = vmatpush1.msra.mxu0 0.0
        %6806 = vmatprep.subr.mxu0 0.0
        %6807 = vmatpush1.msra.mxu0 0.0
        %6808 = vmatprep.subr.mxu0 0.0
        %6809 = vmatpush1.msra.mxu0 0.0
        %6810 = vmatprep.subr.mxu0 0.0
        %6811 = vmatpush1.msra.mxu0 0.0
        %6812 = vmatprep.subr.mxu0 0.0
        %6813 = vmatpush1.msra.mxu0 0.0
        %6814 = vmatprep.subr.mxu0 0.0
        %6815 = vmatpush1.msra.mxu0 0.0
        %6816 = vmatprep.subr.mxu0 0.0
        %6817 = vmatpush1.msra.mxu0 0.0
        %6818 = vmatprep.subr.mxu0 0.0
        %6819 = vmatpush1.msra.mxu0 0.0
        %6820 = vmatprep.subr.mxu0 0.0
        %6821 = vmatpush1.msra.mxu0 0.0
        %6822 = vmatprep.subr.mxu0 0.0
        %6823 = vmatpush1.msra.mxu0 0.0
        %6824 = vmatprep.subr.mxu0 0.0
        %6825 = vmatpush1.msra.mxu0 0.0
        %6826 = vmatprep.subr.mxu0 0.0
        %6827 = vmatpush1.msra.mxu0 0.0
        %6828 = vmatprep.subr.mxu0 0.0
        %6829 = vmatpush1.msra.mxu0 0.0
        %6830 = vmatprep.subr.mxu0 0.0
        %6831 = vmatpush1.msra.mxu0 0.0
        %6832 = vmatprep.subr.mxu0 0.0
        %6833 = vmatpush1.msra.mxu0 0.0
        %6834 = vmatprep.subr.mxu0 0.0
        %6835 = vmatpush1.msra.mxu0 0.0
        %6836 = vmatprep.subr.mxu0 0.0
        %6837 = vmatpush1.msra.mxu0 0.0
        %6838 = vmatprep.subr.mxu0 0.0
        %6839 = vmatpush1.msra.mxu0 0.0
        %6840 = vmatprep.subr.mxu0 0.0
        %6841 = vmatpush1.msra.mxu0 0.0
        %6842 = vmatprep.subr.mxu0 0.0
        %6843 = vmatpush1.msra.mxu0 0.0
        %6844 = vmatprep.subr.mxu0 0.0
        %6845 = vmatpush1.msra.mxu0 0.0
        %6846 = vmatprep.subr.mxu0 0.0
        %6847 = vmatpush1.msra.mxu0 0.0
        %6848 = vmatprep.mubr.f32.mxu0 0.0
        %6849 = vmatmul.mubr.f32.gmra.mrb[0].mxu0 %v6782
        %v6850 = vpop.f32.mrb[0].mxu0
        %v6851 = vadd.f32 %v6361, %v6850
        %v6852 = vpop.f32.mrb[0].mxu0
        %6853 = vdwg.mxu0
        %v6855 = vrot.slane %v6851, 5
        %v6857 = vadd.f32 %v6354, %v6855
        %v6858 = vsub.f32 0.0, %v6857
        %v6859 = vmul.f32 %v6858, 1.442695
        %v6860 = vpow.pop %v6859
        %v6861 = vadd.f32 %v6860, 1.0
        %v6862 = vrcp.pop %v6861
        %v6863 = vmul.f32 1.0, %v6862
        %6864 = vrot.lane.b32.xlu0 %v6855, 96
        %v6865 = vpop.permute.xlu0 %6864
        %v6867 = vmul.f32 %v6863, %v6865
        %6869 = vrot.lane.b32.xlu0 %v6867, 32
        %v6870 = vpop.permute.xlu0 %6869
        %v6872 = vadd.f32 %v6354, %v6870
        %v6873 = vtanh.pop %v6872
        %v6874 = vsub.f32 1.0, %v6863
        %6876 = vrot.lane.b32.xlu0 %v6873, 112
        %v6877 = vpop.permute.xlu0 %6876
        %v6879 = vmul.f32 %v6874, %v6877
        %v6880 = vrot.slane %v6777, 1
        %v6882 = vmul.f32 %v6863, %v6880
        %v6883 = vadd.f32 %v6879, %v6882
        %v6885 = vrot.slane %v6883, 3
        %6886 = vrot.lane.b32.xlu0 %v6885, 112
        %v6887 = vpop.permute.xlu0 %6886
        %v6888 = vsel %vm941, %v6887, 0
        %6890 = vmatprep.subr.mxu0 0.0
        %6891 = vmatpush1.msra.mxu0 %v6358
        %6892 = vmatprep.subr.mxu0 0.0
        %6893 = vmatpush1.msra.mxu0 %v6359
        %6894 = vmatprep.subr.mxu0 0.0
        %6895 = vmatpush1.msra.mxu0 0.0
        %6896 = vmatprep.subr.mxu0 0.0
        %6897 = vmatpush1.msra.mxu0 0.0
        %6898 = vmatprep.subr.mxu0 0.0
        %6899 = vmatpush1.msra.mxu0 0.0
        %6900 = vmatprep.subr.mxu0 0.0
        %6901 = vmatpush1.msra.mxu0 0.0
        %6902 = vmatprep.subr.mxu0 0.0
        %6903 = vmatpush1.msra.mxu0 0.0
        %6904 = vmatprep.subr.mxu0 0.0
        %6905 = vmatpush1.msra.mxu0 0.0
        %6906 = vmatprep.subr.mxu0 0.0
        %6907 = vmatpush1.msra.mxu0 0.0
        %6908 = vmatprep.subr.mxu0 0.0
        %6909 = vmatpush1.msra.mxu0 0.0
        %6910 = vmatprep.subr.mxu0 0.0
        %6911 = vmatpush1.msra.mxu0 0.0
        %6912 = vmatprep.subr.mxu0 0.0
        %6913 = vmatpush1.msra.mxu0 0.0
        %6914 = vmatprep.subr.mxu0 0.0
        %6915 = vmatpush1.msra.mxu0 0.0
        %6916 = vmatprep.subr.mxu0 0.0
        %6917 = vmatpush1.msra.mxu0 0.0
        %6918 = vmatprep.subr.mxu0 0.0
        %6919 = vmatpush1.msra.mxu0 0.0
        %6920 = vmatprep.subr.mxu0 0.0
        %6921 = vmatpush1.msra.mxu0 0.0
        %6922 = vmatprep.subr.mxu0 0.0
        %6923 = vmatpush1.msra.mxu0 0.0
        %6924 = vmatprep.subr.mxu0 0.0
        %6925 = vmatpush1.msra.mxu0 0.0
        %6926 = vmatprep.subr.mxu0 0.0
        %6927 = vmatpush1.msra.mxu0 0.0
        %6928 = vmatprep.subr.mxu0 0.0
        %6929 = vmatpush1.msra.mxu0 0.0
        %6930 = vmatprep.subr.mxu0 0.0
        %6931 = vmatpush1.msra.mxu0 0.0
        %6932 = vmatprep.subr.mxu0 0.0
        %6933 = vmatpush1.msra.mxu0 0.0
        %6934 = vmatprep.subr.mxu0 0.0
        %6935 = vmatpush1.msra.mxu0 0.0
        %6936 = vmatprep.subr.mxu0 0.0
        %6937 = vmatpush1.msra.mxu0 0.0
        %6938 = vmatprep.subr.mxu0 0.0
        %6939 = vmatpush1.msra.mxu0 0.0
        %6940 = vmatprep.subr.mxu0 0.0
        %6941 = vmatpush1.msra.mxu0 0.0
        %6942 = vmatprep.subr.mxu0 0.0
        %6943 = vmatpush1.msra.mxu0 0.0
        %6944 = vmatprep.subr.mxu0 0.0
        %6945 = vmatpush1.msra.mxu0 0.0
        %6946 = vmatprep.subr.mxu0 0.0
        %6947 = vmatpush1.msra.mxu0 0.0
        %6948 = vmatprep.subr.mxu0 0.0
        %6949 = vmatpush1.msra.mxu0 0.0
        %6950 = vmatprep.subr.mxu0 0.0
        %6951 = vmatpush1.msra.mxu0 0.0
        %6952 = vmatprep.subr.mxu0 0.0
        %6953 = vmatpush1.msra.mxu0 0.0
        %6954 = vmatprep.mubr.f32.mxu0 0.0
        %6955 = vmatmul.mubr.f32.gmra.mrb[0].mxu0 %v6888
        %v6956 = vpop.f32.mrb[0].mxu0
        %v6957 = vadd.f32 %v6361, %v6956
        %v6958 = vpop.f32.mrb[0].mxu0
        %6959 = vdwg.mxu0
        %v6961 = vrot.slane %v6957, 6
        %v6963 = vadd.f32 %v6354, %v6961
        %v6964 = vsub.f32 0.0, %v6963
        %v6965 = vmul.f32 %v6964, 1.442695
        %v6966 = vpow.pop %v6965
        %v6967 = vadd.f32 %v6966, 1.0
        %v6968 = vrcp.pop %v6967
        %v6969 = vmul.f32 1.0, %v6968
        %6970 = vrot.lane.b32.xlu0 %v6961, 96
        %v6971 = vpop.permute.xlu0 %6970
        %v6973 = vmul.f32 %v6969, %v6971
        %6975 = vrot.lane.b32.xlu0 %v6973, 32
        %v6976 = vpop.permute.xlu0 %6975
        %v6978 = vadd.f32 %v6354, %v6976
        %v6979 = vtanh.pop %v6978
        %v6980 = vsub.f32 1.0, %v6969
        %6982 = vrot.lane.b32.xlu0 %v6979, 112
        %v6983 = vpop.permute.xlu0 %6982
        %v6985 = vmul.f32 %v6980, %v6983
        %v6986 = vrot.slane %v6883, 1
        %v6988 = vmul.f32 %v6969, %v6986
        %v6989 = vadd.f32 %v6985, %v6988
        %v6991 = vrot.slane %v6989, 2
        %6992 = vrot.lane.b32.xlu0 %v6991, 112
        %v6993 = vpop.permute.xlu0 %6992
        %v6994 = vsel %vm941, %v6993, 0
        %6996 = vmatprep.subr.mxu0 0.0
        %6997 = vmatpush1.msra.mxu0 %v6358
        %6998 = vmatprep.subr.mxu0 0.0
        %6999 = vmatpush1.msra.mxu0 %v6359
        %7000 = vmatprep.subr.mxu0 0.0
        %7001 = vmatpush1.msra.mxu0 0.0
        %7002 = vmatprep.subr.mxu0 0.0
        %7003 = vmatpush1.msra.mxu0 0.0
        %7004 = vmatprep.subr.mxu0 0.0
        %7005 = vmatpush1.msra.mxu0 0.0
        %7006 = vmatprep.subr.mxu0 0.0
        %7007 = vmatpush1.msra.mxu0 0.0
        %7008 = vmatprep.subr.mxu0 0.0
        %7009 = vmatpush1.msra.mxu0 0.0
        %7010 = vmatprep.subr.mxu0 0.0
        %7011 = vmatpush1.msra.mxu0 0.0
        %7012 = vmatprep.subr.mxu0 0.0
        %7013 = vmatpush1.msra.mxu0 0.0
        %7014 = vmatprep.subr.mxu0 0.0
        %7015 = vmatpush1.msra.mxu0 0.0
        %7016 = vmatprep.subr.mxu0 0.0
        %7017 = vmatpush1.msra.mxu0 0.0
        %7018 = vmatprep.subr.mxu0 0.0
        %7019 = vmatpush1.msra.mxu0 0.0
        %7020 = vmatprep.subr.mxu0 0.0
        %7021 = vmatpush1.msra.mxu0 0.0
        %7022 = vmatprep.subr.mxu0 0.0
        %7023 = vmatpush1.msra.mxu0 0.0
        %7024 = vmatprep.subr.mxu0 0.0
        %7025 = vmatpush1.msra.mxu0 0.0
        %7026 = vmatprep.subr.mxu0 0.0
        %7027 = vmatpush1.msra.mxu0 0.0
        %7028 = vmatprep.subr.mxu0 0.0
        %7029 = vmatpush1.msra.mxu0 0.0
        %7030 = vmatprep.subr.mxu0 0.0
        %7031 = vmatpush1.msra.mxu0 0.0
        %7032 = vmatprep.subr.mxu0 0.0
        %7033 = vmatpush1.msra.mxu0 0.0
        %7034 = vmatprep.subr.mxu0 0.0
        %7035 = vmatpush1.msra.mxu0 0.0
        %7036 = vmatprep.subr.mxu0 0.0
        %7037 = vmatpush1.msra.mxu0 0.0
        %7038 = vmatprep.subr.mxu0 0.0
        %7039 = vmatpush1.msra.mxu0 0.0
        %7040 = vmatprep.subr.mxu0 0.0
        %7041 = vmatpush1.msra.mxu0 0.0
        %7042 = vmatprep.subr.mxu0 0.0
        %7043 = vmatpush1.msra.mxu0 0.0
        %7044 = vmatprep.subr.mxu0 0.0
        %7045 = vmatpush1.msra.mxu0 0.0
        %7046 = vmatprep.subr.mxu0 0.0
        %7047 = vmatpush1.msra.mxu0 0.0
        %7048 = vmatprep.subr.mxu0 0.0
        %7049 = vmatpush1.msra.mxu0 0.0
        %7050 = vmatprep.subr.mxu0 0.0
        %7051 = vmatpush1.msra.mxu0 0.0
        %7052 = vmatprep.subr.mxu0 0.0
        %7053 = vmatpush1.msra.mxu0 0.0
        %7054 = vmatprep.subr.mxu0 0.0
        %7055 = vmatpush1.msra.mxu0 0.0
        %7056 = vmatprep.subr.mxu0 0.0
        %7057 = vmatpush1.msra.mxu0 0.0
        %7058 = vmatprep.subr.mxu0 0.0
        %7059 = vmatpush1.msra.mxu0 0.0
        %7060 = vmatprep.mubr.f32.mxu0 0.0
        %7061 = vmatmul.mubr.f32.gmra.mrb[0].mxu0 %v6994
        %v7062 = vpop.f32.mrb[0].mxu0
        %v7063 = vadd.f32 %v6361, %v7062
        %v7064 = vpop.f32.mrb[0].mxu0
        %7065 = vdwg.mxu0
        %v7067 = vrot.slane %v7063, 7
        %v7069 = vadd.f32 %v6354, %v7067
        %v7070 = vsub.f32 0.0, %v7069
        %v7071 = vmul.f32 %v7070, 1.442695
        %v7072 = vpow.pop %v7071
        %v7073 = vadd.f32 %v7072, 1.0
        %v7074 = vrcp.pop %v7073
        %v7075 = vmul.f32 1.0, %v7074
        %7076 = vrot.lane.b32.xlu0 %v7067, 96
        %v7077 = vpop.permute.xlu0 %7076
        %v7079 = vmul.f32 %v7075, %v7077
        %7081 = vrot.lane.b32.xlu0 %v7079, 32
        %v7082 = vpop.permute.xlu0 %7081
        %v7084 = vadd.f32 %v6354, %v7082
        %v7085 = vtanh.pop %v7084
        %v7086 = vsub.f32 1.0, %v7075
        %7088 = vrot.lane.b32.xlu0 %v7085, 112
        %v7089 = vpop.permute.xlu0 %7088
        %v7091 = vmul.f32 %v7086, %v7089
        %v7092 = vrot.slane %v6989, 1
        %v7094 = vmul.f32 %v7075, %v7092
        %v7095 = vadd.f32 %v7091, %v7094
        %v7097 = vrot.slane %v7095, 1
        %7098 = vrot.lane.b32.xlu0 %v7097, 112
        %v7099 = vpop.permute.xlu0 %7098
        %v7100 = vsel %vm941, %v7099, 0
        %7102 = vmatprep.subr.mxu0 0.0
        %7103 = vmatpush1.msra.mxu0 %v6358
        %7104 = vmatprep.subr.mxu0 0.0
        %7105 = vmatpush1.msra.mxu0 %v6359
        %7106 = vmatprep.subr.mxu0 0.0
        %7107 = vmatpush1.msra.mxu0 0.0
        %7108 = vmatprep.subr.mxu0 0.0
        %7109 = vmatpush1.msra.mxu0 0.0
        %7110 = vmatprep.subr.mxu0 0.0
        %7111 = vmatpush1.msra.mxu0 0.0
        %7112 = vmatprep.subr.mxu0 0.0
        %7113 = vmatpush1.msra.mxu0 0.0
        %7114 = vmatprep.subr.mxu0 0.0
        %7115 = vmatpush1.msra.mxu0 0.0
        %7116 = vmatprep.subr.mxu0 0.0
        %7117 = vmatpush1.msra.mxu0 0.0
        %7118 = vmatprep.subr.mxu0 0.0
        %7119 = vmatpush1.msra.mxu0 0.0
        %7120 = vmatprep.subr.mxu0 0.0
        %7121 = vmatpush1.msra.mxu0 0.0
        %7122 = vmatprep.subr.mxu0 0.0
        %7123 = vmatpush1.msra.mxu0 0.0
        %7124 = vmatprep.subr.mxu0 0.0
        %7125 = vmatpush1.msra.mxu0 0.0
        %7126 = vmatprep.subr.mxu0 0.0
        %7127 = vmatpush1.msra.mxu0 0.0
        %7128 = vmatprep.subr.mxu0 0.0
        %7129 = vmatpush1.msra.mxu0 0.0
        %7130 = vmatprep.subr.mxu0 0.0
        %7131 = vmatpush1.msra.mxu0 0.0
        %7132 = vmatprep.subr.mxu0 0.0
        %7133 = vmatpush1.msra.mxu0 0.0
        %7134 = vmatprep.subr.mxu0 0.0
        %7135 = vmatpush1.msra.mxu0 0.0
        %7136 = vmatprep.subr.mxu0 0.0
        %7137 = vmatpush1.msra.mxu0 0.0
        %7138 = vmatprep.subr.mxu0 0.0
        %7139 = vmatpush1.msra.mxu0 0.0
        %7140 = vmatprep.subr.mxu0 0.0
        %7141 = vmatpush1.msra.mxu0 0.0
        %7142 = vmatprep.subr.mxu0 0.0
        %7143 = vmatpush1.msra.mxu0 0.0
        %7144 = vmatprep.subr.mxu0 0.0
        %7145 = vmatpush1.msra.mxu0 0.0
        %7146 = vmatprep.subr.mxu0 0.0
        %7147 = vmatpush1.msra.mxu0 0.0
        %7148 = vmatprep.subr.mxu0 0.0
        %7149 = vmatpush1.msra.mxu0 0.0
        %7150 = vmatprep.subr.mxu0 0.0
        %7151 = vmatpush1.msra.mxu0 0.0
        %7152 = vmatprep.subr.mxu0 0.0
        %7153 = vmatpush1.msra.mxu0 0.0
        %7154 = vmatprep.subr.mxu0 0.0
        %7155 = vmatpush1.msra.mxu0 0.0
        %7156 = vmatprep.subr.mxu0 0.0
        %7157 = vmatpush1.msra.mxu0 0.0
        %7158 = vmatprep.subr.mxu0 0.0
        %7159 = vmatpush1.msra.mxu0 0.0
        %7160 = vmatprep.subr.mxu0 0.0
        %7161 = vmatpush1.msra.mxu0 0.0
        %7162 = vmatprep.subr.mxu0 0.0
        %7163 = vmatpush1.msra.mxu0 0.0
        %7164 = vmatprep.subr.mxu0 0.0
        %7165 = vmatpush1.msra.mxu0 0.0
        %7166 = vmatprep.mubr.f32.mxu0 0.0
        %7167 = vmatmul.mubr.f32.gmra.mrb[0].mxu0 %v7100
        %v7168 = vpop.f32.mrb[0].mxu0
        %v7169 = vadd.f32 %v6361, %v7168
        %v7170 = vpop.f32.mrb[0].mxu0
        %7171 = vdwg.mxu0
        %v7172 = vadd.f32 %v6354, %v7169
        %v7173 = vsub.f32 0.0, %v7172
        %v7174 = vmul.f32 %v7173, 1.442695
        %v7175 = vpow.pop %v7174
        %v7176 = vadd.f32 %v7175, 1.0
        %v7177 = vrcp.pop %v7176
        %v7178 = vmul.f32 1.0, %v7177
        %7180 = vrot.lane.b32.xlu0 %v7169, 96
        %v7181 = vpop.permute.xlu0 %7180
        %v7183 = vmul.f32 %v7178, %v7181
        %7185 = vrot.lane.b32.xlu0 %v7183, 32
        %v7186 = vpop.permute.xlu0 %7185
        %v7188 = vadd.f32 %v6354, %v7186
        %v7189 = vtanh.pop %v7188
        %v7190 = vsub.f32 1.0, %v7178
        %7192 = vrot.lane.b32.xlu0 %v7189, 112
        %v7193 = vpop.permute.xlu0 %7192
        %v7195 = vmul.f32 %v7190, %v7193
        %v7197 = vmul.f32 %v7178, %v7097
        %v7198 = vadd.f32 %v7195, %v7197
        %v7199 = vsel %vm3356, %v7198, %v7095
        %v7200 = vsel %vm3218, %v7199, %v6989
        %v7201 = vsel %vm4396, %v7200, %v6883
        %v7202 = vsel %vm3244, %v7201, %v6777
        %v7203 = vsel %vm3237, %v7202, %v6671
        %v7204 = vsel %vm3230, %v7203, %v6565
        %v7205 = vsel %vm3223, %v7204, %v6459
        %7207 = vrot.lane.b32.xlu0 %v6273, 112
        %v7208 = vpop.permute.xlu0 %7207
        %v7210 = vsel %vm941, %v7208, %v7205
        %v7211 = vld [vmem:[%s47] sm:$0xff]
        %v7212 = vld [vmem:[%s47 + $0x8] sm:$0xff]
        %v7213 = vld [vmem:[%s47 + $0x10] sm:$0xff]
        %v7214 = vld [vmem:[%s47 + $0x18] sm:$0xff]
        %v7215 = vld [vmem:[%s49] sm:$0xff]
        %v7216 = vld [vmem:[%s49 + $0x8] sm:$0xff]
        %v7217 = vld [vmem:[%s49 + $0x10] sm:$0xff]
        %v7218 = vld [vmem:[%s49 + $0x18] sm:$0xff]
        %v7220 = vsel %vm1026, %v7210, 0
        %7222 = vmatprep.subr.mxu0 0.0
        %7223 = vmatpush1.msra.mxu0 %v7215
        %7224 = vmatprep.subr.mxu0 0.0
        %7225 = vmatpush1.msra.mxu0 %v7216
        %7226 = vmatprep.subr.mxu0 0.0
        %7227 = vmatpush1.msra.mxu0 %v7217
        %7228 = vmatprep.subr.mxu0 0.0
        %7229 = vmatpush1.msra.mxu0 %v7218
        %7230 = vmatprep.subr.mxu0 0.0
        %7231 = vmatpush1.msra.mxu0 0.0
        %7232 = vmatprep.subr.mxu0 0.0
        %7233 = vmatpush1.msra.mxu0 0.0
        %7234 = vmatprep.subr.mxu0 0.0
        %7235 = vmatpush1.msra.mxu0 0.0
        %7236 = vmatprep.subr.mxu0 0.0
        %7237 = vmatpush1.msra.mxu0 0.0
        %7238 = vmatprep.subr.mxu0 0.0
        %7239 = vmatpush1.msra.mxu0 0.0
        %7240 = vmatprep.subr.mxu0 0.0
        %7241 = vmatpush1.msra.mxu0 0.0
        %7242 = vmatprep.subr.mxu0 0.0
        %7243 = vmatpush1.msra.mxu0 0.0
        %7244 = vmatprep.subr.mxu0 0.0
        %7245 = vmatpush1.msra.mxu0 0.0
        %7246 = vmatprep.subr.mxu0 0.0
        %7247 = vmatpush1.msra.mxu0 0.0
        %7248 = vmatprep.subr.mxu0 0.0
        %7249 = vmatpush1.msra.mxu0 0.0
        %7250 = vmatprep.subr.mxu0 0.0
        %7251 = vmatpush1.msra.mxu0 0.0
        %7252 = vmatprep.subr.mxu0 0.0
        %7253 = vmatpush1.msra.mxu0 0.0
        %7254 = vmatprep.subr.mxu0 0.0
        %7255 = vmatpush1.msra.mxu0 0.0
        %7256 = vmatprep.subr.mxu0 0.0
        %7257 = vmatpush1.msra.mxu0 0.0
        %7258 = vmatprep.subr.mxu0 0.0
        %7259 = vmatpush1.msra.mxu0 0.0
        %7260 = vmatprep.subr.mxu0 0.0
        %7261 = vmatpush1.msra.mxu0 0.0
        %7262 = vmatprep.subr.mxu0 0.0
        %7263 = vmatpush1.msra.mxu0 0.0
        %7264 = vmatprep.subr.mxu0 0.0
        %7265 = vmatpush1.msra.mxu0 0.0
        %7266 = vmatprep.subr.mxu0 0.0
        %7267 = vmatpush1.msra.mxu0 0.0
        %7268 = vmatprep.subr.mxu0 0.0
        %7269 = vmatpush1.msra.mxu0 0.0
        %7270 = vmatprep.subr.mxu0 0.0
        %7271 = vmatpush1.msra.mxu0 0.0
        %7272 = vmatprep.subr.mxu0 0.0
        %7273 = vmatpush1.msra.mxu0 0.0
        %7274 = vmatprep.subr.mxu0 0.0
        %7275 = vmatpush1.msra.mxu0 0.0
        %7276 = vmatprep.subr.mxu0 0.0
        %7277 = vmatpush1.msra.mxu0 0.0
        %7278 = vmatprep.subr.mxu0 0.0
        %7279 = vmatpush1.msra.mxu0 0.0
        %7280 = vmatprep.subr.mxu0 0.0
        %7281 = vmatpush1.msra.mxu0 0.0
        %7282 = vmatprep.subr.mxu0 0.0
        %7283 = vmatpush1.msra.mxu0 0.0
        %7284 = vmatprep.subr.mxu0 0.0
        %7285 = vmatpush1.msra.mxu0 0.0
        %7286 = vmatprep.mubr.f32.mxu0 0.0
        %7287 = vmatmul.mubr.f32.gmra.mrb[0].mxu0 %v7220
        %v7288 = vpop.f32.mrb[0].mxu0
        %v7289 = vadd.f32 0.0, %v7288
        %v7290 = vpop.f32.mrb[0].mxu0
        %7291 = vdwg.mxu0
        %7292 = vmatprep.subr.mxu0 0.0
        %7293 = vmatpush1.msra.mxu0 %v7211
        %7294 = vmatprep.subr.mxu0 0.0
        %7295 = vmatpush1.msra.mxu0 %v7212
        %7296 = vmatprep.subr.mxu0 0.0
        %7297 = vmatpush1.msra.mxu0 %v7213
        %7298 = vmatprep.subr.mxu0 0.0
        %7299 = vmatpush1.msra.mxu0 %v7214
        %7300 = vmatprep.subr.mxu0 0.0
        %7301 = vmatpush1.msra.mxu0 0.0
        %7302 = vmatprep.subr.mxu0 0.0
        %7303 = vmatpush1.msra.mxu0 0.0
        %7304 = vmatprep.subr.mxu0 0.0
        %7305 = vmatpush1.msra.mxu0 0.0
        %7306 = vmatprep.subr.mxu0 0.0
        %7307 = vmatpush1.msra.mxu0 0.0
        %7308 = vmatprep.subr.mxu0 0.0
        %7309 = vmatpush1.msra.mxu0 0.0
        %7310 = vmatprep.subr.mxu0 0.0
        %7311 = vmatpush1.msra.mxu0 0.0
        %7312 = vmatprep.subr.mxu0 0.0
        %7313 = vmatpush1.msra.mxu0 0.0
        %7314 = vmatprep.subr.mxu0 0.0
        %7315 = vmatpush1.msra.mxu0 0.0
        %7316 = vmatprep.subr.mxu0 0.0
        %7317 = vmatpush1.msra.mxu0 0.0
        %7318 = vmatprep.subr.mxu0 0.0
        %7319 = vmatpush1.msra.mxu0 0.0
        %7320 = vmatprep.subr.mxu0 0.0
        %7321 = vmatpush1.msra.mxu0 0.0
        %7322 = vmatprep.subr.mxu0 0.0
        %7323 = vmatpush1.msra.mxu0 0.0
        %7324 = vmatprep.subr.mxu0 0.0
        %7325 = vmatpush1.msra.mxu0 0.0
        %7326 = vmatprep.subr.mxu0 0.0
        %7327 = vmatpush1.msra.mxu0 0.0
        %7328 = vmatprep.subr.mxu0 0.0
        %7329 = vmatpush1.msra.mxu0 0.0
        %7330 = vmatprep.subr.mxu0 0.0
        %7331 = vmatpush1.msra.mxu0 0.0
        %7332 = vmatprep.subr.mxu0 0.0
        %7333 = vmatpush1.msra.mxu0 0.0
        %7334 = vmatprep.subr.mxu0 0.0
        %7335 = vmatpush1.msra.mxu0 0.0
        %7336 = vmatprep.subr.mxu0 0.0
        %7337 = vmatpush1.msra.mxu0 0.0
        %7338 = vmatprep.subr.mxu0 0.0
        %7339 = vmatpush1.msra.mxu0 0.0
        %7340 = vmatprep.subr.mxu0 0.0
        %7341 = vmatpush1.msra.mxu0 0.0
        %7342 = vmatprep.subr.mxu0 0.0
        %7343 = vmatpush1.msra.mxu0 0.0
        %7344 = vmatprep.subr.mxu0 0.0
        %7345 = vmatpush1.msra.mxu0 0.0
        %7346 = vmatprep.subr.mxu0 0.0
        %7347 = vmatpush1.msra.mxu0 0.0
        %7348 = vmatprep.subr.mxu0 0.0
        %7349 = vmatpush1.msra.mxu0 0.0
        %7350 = vmatprep.subr.mxu0 0.0
        %7351 = vmatpush1.msra.mxu0 0.0
        %7352 = vmatprep.subr.mxu0 0.0
        %7353 = vmatpush1.msra.mxu0 0.0
        %7354 = vmatprep.subr.mxu0 0.0
        %7355 = vmatpush1.msra.mxu0 0.0
        %7356 = vmatprep.mubr.f32.mxu0 0.0
        %7357 = vmatmul.mubr.f32.gmra.mrb[0].mxu0 %v3479
        %v7358 = vpop.f32.mrb[0].mxu0
        %v7359 = vadd.f32 %v7289, %v7358
        %v7360 = vpop.f32.mrb[0].mxu0
        %7361 = vdwg.mxu0
        %v7362 = vld [vmem:[%s51] sm:$0x1]
        %v7364 = vlaneseq
        %v7365 = vshrl.u32 %v7364, 7
        %v7366 = vsub.s32 0, %v7365
        %v7367 = vrot.slane %v7362, %v7366
        %v7369 = vmul.f32 %v3467, %v7367
        %v7370 = vadd.f32 %v7359, %v7369
        %v7371 = vld [vmem:[%s53] sm:$0x1]
        %v7373 = vlaneseq
        %v7374 = vshrl.u32 %v7373, 7
        %v7375 = vsub.s32 0, %v7374
        %v7376 = vrot.slane %v7371, %v7375
        %v7378 = vadd.f32 %v7370, %v7376
        %v7379 = vld [vmem:[%s55] sm:$0x1]
        %v7380 = vld [vmem:[%s57] sm:$0x1]
        %v7381 = vsel %vm1026, %v7378, 0.0
        %7382 = vadd.xlane.f32.xlu0 %v7381
        %v7383 = vpop.xlane.xlu0 %7382
        %v7384 = vmul.f32 %v7383, %v1870
        %v7385 = vsub.f32 %v7378, %v7384
        %v7386 = vmul.f32 %v7385, %v7385
        %v7387 = vsel %vm1026, %v7386, 0.0
        %7388 = vadd.xlane.f32.xlu0 %v7387
        %v7389 = vpop.xlane.xlu0 %7388
        %v7390 = vmul.f32 %v7389, %v1870
        %v7391 = vadd.f32 %v7390, 1e-05
        %v7392 = vrsqrt.pop %v7391
        %v7393 = vmul.f32 %v7385, %v7392
        %v7395 = vlaneseq
        %v7396 = vshrl.u32 %v7395, 7
        %v7397 = vsub.s32 0, %v7396
        %v7398 = vrot.slane %v7379, %v7397
        %v7400 = vmul.f32 %v7393, %v7398
        %v7402 = vlaneseq
        %v7403 = vshrl.u32 %v7402, 7
        %v7404 = vsub.s32 0, %v7403
        %v7405 = vrot.slane %v7380, %v7404
        %v7407 = vadd.f32 %v7400, %v7405
        %v7408 = vmul.f32 %v7407, 0.5
        %v7409 = vmul.f32 %v7407, 0.044715
        %v7410 = vmul.f32 %v7409, %v7407
        %v7411 = vmul.f32 %v7410, %v7407
        %v7412 = vadd.f32 %v7407, %v7411
        %v7413 = vmul.f32 %v7412, 0.7978846
        %v7414 = vtanh.pop %v7413
        %v7415 = vadd.f32 %v7414, 1.0
        %v7416 = vmul.f32 %v7408, %v7415
        %7417 = vst.msk [vmem:[%s925] sm:$0xff] %vm1026, %v7416
        %7418 = vmatprep.subr.mxu0 0.0
        %7419 = vmatpush1.xpose.msra.mxu0 %v3479
        %7420 = vmatprep.subr.mxu0 0.0
        %7421 = vmatpush1.xpose.msra.mxu0 0.0
        %7422 = vmatprep.subr.mxu0 0.0
        %7423 = vmatpush1.xpose.msra.mxu0 0.0
        %7424 = vmatprep.subr.mxu0 0.0
        %7425 = vmatpush1.xpose.msra.mxu0 0.0
        %7426 = vmatprep.subr.mxu0 0.0
        %7427 = vmatpush1.xpose.msra.mxu0 0.0
        %7428 = vmatprep.subr.mxu0 0.0
        %7429 = vmatpush1.xpose.msra.mxu0 0.0
        %7430 = vmatprep.subr.mxu0 0.0
        %7431 = vmatpush1.xpose.msra.mxu0 0.0
        %7432 = vmatprep.subr.mxu0 0.0
        %7433 = vmatpush1.xpose.msra.mxu0 0.0
        %7434 = vmatprep.subr.mxu0 0.0
        %7435 = vmatpush1.xpose.msra.mxu0 0.0
        %7436 = vmatprep.subr.mxu0 0.0
        %7437 = vmatpush1.xpose.msra.mxu0 0.0
        %7438 = vmatprep.subr.mxu0 0.0
        %7439 = vmatpush1.xpose.msra.mxu0 0.0
        %7440 = vmatprep.subr.mxu0 0.0
        %7441 = vmatpush1.xpose.msra.mxu0 0.0
        %7442 = vmatprep.subr.mxu0 0.0
        %7443 = vmatpush1.xpose.msra.mxu0 0.0
        %7444 = vmatprep.subr.mxu0 0.0
        %7445 = vmatpush1.xpose.msra.mxu0 0.0
        %7446 = vmatprep.subr.mxu0 0.0
        %7447 = vmatpush1.xpose.msra.mxu0 0.0
        %7448 = vmatprep.subr.mxu0 0.0
        %7449 = vmatpush1.xpose.msra.mxu0 0.0
        %7450 = vmatprep.subr.mxu0 0.0
        %7451 = vmatpush1.xpose.msra.mxu0 0.0
        %7452 = vmatprep.subr.mxu0 0.0
        %7453 = vmatpush1.xpose.msra.mxu0 0.0
        %7454 = vmatprep.subr.mxu0 0.0
        %7455 = vmatpush1.xpose.msra.mxu0 0.0
        %7456 = vmatprep.subr.mxu0 0.0
        %7457 = vmatpush1.xpose.msra.mxu0 0.0
        %7458 = vmatprep.subr.mxu0 0.0
        %7459 = vmatpush1.xpose.msra.mxu0 0.0
        %7460 = vmatprep.subr.mxu0 0.0
        %7461 = vmatpush1.xpose.msra.mxu0 0.0
        %7462 = vmatprep.subr.mxu0 0.0
        %7463 = vmatpush1.xpose.msra.mxu0 0.0
        %7464 = vmatprep.subr.mxu0 0.0
        %7465 = vmatpush1.xpose.msra.mxu0 0.0
        %7466 = vmatprep.subr.mxu0 0.0
        %7467 = vmatpush1.xpose.msra.mxu0 0.0
        %7468 = vmatprep.subr.mxu0 0.0
        %7469 = vmatpush1.xpose.msra.mxu0 0.0
        %7470 = vmatprep.subr.mxu0 0.0
        %7471 = vmatpush1.xpose.msra.mxu0 0.0
        %7472 = vmatprep.subr.mxu0 0.0
        %7473 = vmatpush1.xpose.msra.mxu0 0.0
        %7474 = vmatprep.subr.mxu0 0.0
        %7475 = vmatpush1.xpose.msra.mxu0 0.0
        %7476 = vmatprep.subr.mxu0 0.0
        %7477 = vmatpush1.xpose.msra.mxu0 0.0
        %7478 = vmatprep.subr.mxu0 0.0
        %7479 = vmatpush1.xpose.msra.mxu0 0.0
        %7480 = vmatprep.subr.mxu0 0.0
        %7481 = vmatpush1.xpose.msra.mxu0 0.0
        %7482 = vmatprep.mubr.f32.mxu0 0.0
        %7483 = vmatmul.mubr.f32.gmra.mrb[0].mxu0 %v3479
        %v7484 = vpop.f32.mrb[0].mxu0
        %v7485 = vadd.f32 0.0, %v7484
        %v7486 = vpop.f32.mrb[0].mxu0
        %7487 = vdwg.mxu0
        %v7488 = vmul.f32 %v7485, 0.17677669
        %v7489 = vsel %vm1109, %v7488, -inf
        %7490 = vmax.xlane.f32.xlu0 %v7489
        %v7491 = vpop.xlane.xlu0 %7490
        %v7492 = vsub.f32 %v7488, %v7491
        %v7493 = vmul.f32 %v7492, 1.442695
        %v7494 = vpow.pop %v7493
        %v7495 = vsel %vm1109, %v7494, 0.0
        %7496 = vadd.xlane.f32.xlu0 %v7495
        %v7497 = vpop.xlane.xlu0 %7496
        %v7498 = vrcp.pop %v7497
        %v7499 = vmul.f32 %v7494, %v7498
        %7500 = vst.msk [vmem:[%s932] sm:$0xff] %vm1109, %v7499
        %s7501 = sand.u32 %s701, 1
        %s7502 = scalar_lea.sflag [#allocation3], %s7501
        %s7503 = sand.u32 %s701, 1
        %s7504 = smul.addr %s7503, 8
        %s7505 = scalar_lea.vmem [#allocation2], %s7504
        %s7506 = sand.u32 %s727, 1
        %s7507 = scalar_lea.sflag [#allocation5], %s7506
        %s7508 = sand.u32 %s727, 1
        %s7509 = smul.addr %s7508, 8
        %s7510 = scalar_lea.vmem [#allocation4], %s7509
        // Predicated region
        $region137: #{market_dynamics_encoder_forward.1} parent=135 // pred_check
          %p7511 = pneg %p711
        $region138: #{market_dynamics_encoder_forward.1} parent=135 // pred_check_branch
          %7513 = sbr.rel (%p7511) target = $region140
        $region139: #{market_dynamics_encoder_forward.1} parent=135 // pred_region
          %s7515 = ssub.s32 128, 128
          %7516 = vsyncadd %s7502, %s7515
          %s7517 = smul.addr %s79, 128
          %s7518 = scalar_lea.hbm %s59, %s7517
          %s7520 = sshll.u32 %s7505, 4
          %s7521 = int_to_ptr.vmem [resolvable:$true] %s7520
          %7523 = dma.vmem_to_hbm [thread:$0]  %s7521, 128, %s7518, %s7502
        $region140: #{market_dynamics_encoder_forward.1} parent=135 // pred_fallthru
          _
        // Predicated region
        $region141: #{market_dynamics_encoder_forward.1} parent=135 // pred_check
          %p7524 = pneg %p737
        $region142: #{market_dynamics_encoder_forward.1} parent=135 // pred_check_branch
          %7526 = sbr.rel (%p7524) target = $region144
        $region143: #{market_dynamics_encoder_forward.1} parent=135 // pred_region
          %s7528 = ssub.s32 128, 128
          %7529 = vsyncadd %s7507, %s7528
          %s7530 = smul.addr %s79, 128
          %s7531 = scalar_lea.hbm %s61, %s7530
          %s7533 = sshll.u32 %s7510, 4
          %s7534 = int_to_ptr.vmem [resolvable:$true] %s7533
          %7536 = dma.vmem_to_hbm [thread:$0]  %s7534, 128, %s7531, %s7507
        $region144: #{market_dynamics_encoder_forward.1} parent=135 // pred_fallthru
          _
      $region136: #{market_dynamics_encoder_forward.1} parent=5 // pred_fallthru
        _
      %p7537 = scmp.le.s32.totalorder 2, %s74
      // Predicated region
      $region145: #{market_dynamics_encoder_forward.1} parent=5 // pred_check
        %p7538 = pneg %p7537
      $region146: #{market_dynamics_encoder_forward.1} parent=5 // pred_check_branch
        %7540 = sbr.rel (%p7538) target = $region148
      $region147: #{market_dynamics_encoder_forward.1} parent=5 // pred_region
        %s7541 = ssub.s32 %s74, 2
        // Predicated region
        $region149: #{market_dynamics_encoder_forward.1} parent=147 // pred_check
          %p7542 = pneg %p717
        $region150: #{market_dynamics_encoder_forward.1} parent=147 // pred_check_branch
          %7544 = sbr.rel (%p7542) target = $region152
        $region151: #{market_dynamics_encoder_forward.1} parent=147 // pred_region
          %s7545 = sand.u32 %s702, 1
          %s7546 = scalar_lea.sflag [#allocation3], %s7545
          %s7547 = sand.u32 %s702, 1
          %s7548 = smul.addr %s7547, 8
          %s7549 = scalar_lea.vmem [#allocation2], %s7548
          %7550 = dma.done %s7546, 128
        $region152: #{market_dynamics_encoder_forward.1} parent=147 // pred_fallthru
          _
        // Predicated region
        $region153: #{market_dynamics_encoder_forward.1} parent=147 // pred_check
          %p7551 = pneg %p743
        $region154: #{market_dynamics_encoder_forward.1} parent=147 // pred_check_branch
          %7553 = sbr.rel (%p7551) target = $region156
        $region155: #{market_dynamics_encoder_forward.1} parent=147 // pred_region
          %s7554 = sand.u32 %s728, 1
          %s7555 = scalar_lea.sflag [#allocation5], %s7554
          %s7556 = sand.u32 %s728, 1
          %s7557 = smul.addr %s7556, 8
          %s7558 = scalar_lea.vmem [#allocation4], %s7557
          %7559 = dma.done %s7555, 128
        $region156: #{market_dynamics_encoder_forward.1} parent=147 // pred_fallthru
          _
      $region148: #{market_dynamics_encoder_forward.1} parent=5 // pred_fallthru
        _
    $region6: #{market_dynamics_encoder_forward.1} parent=1 // loop_footer
      %s78 = sadd.s32 1, %s74
    $region7: #{market_dynamics_encoder_forward.1} parent=1 // loop_footer_branch
      %73 = sbr.rel target = $region3
    $region8: #{market_dynamics_encoder_forward.1} parent=1 // loop_exit
      _
    %7560 = vsyncpa [#allocation3], 1
    %s7561 = scalar_lea.sflag [#allocation3], 1
    %7562 = vsyncpa %s7561, 1
    %7563 = vsyncpa [#allocation5], 1
    %s7564 = scalar_lea.sflag [#allocation5], 1
    %7565 = vsyncpa %s7564, 1

</llo_original>
